<compile_context>
chip_gen: v7x
topology: tpu7x:2x2x1
jax: 0.10.0
libtpu: 0.0.40
codegen_flags: <defaults>
</compile_context>

<pallas_src>
import numpy as np
import jax
import jax.numpy as jnp
from jax.experimental import pallas as pl
from jax.experimental.pallas import tpu as pltpu


# ---------------------------------------------------------------------------
# Kernel factory: one grid step = one batch tile of B images, all 5 blocks.
# ---------------------------------------------------------------------------
def _make_critic_kernel(b_tile, layer_cfg):
    """layer_cfg: tuple of (taps, cin, sout) for blocks 2..4."""
    f32, bf16 = jnp.float32, jnp.bfloat16

    def leaky(v):                                        # LeakyReLU(0.2)
        return jnp.where(v > 0, v, 0.2 * v)

    def kernel(p1_ref, w1_ref,
               g2_ref, w2_ref, gm2_ref, bt2_ref,
               g3_ref, w3_ref, gm3_ref, bt3_ref,
               g4_ref, w4_ref, gm4_ref, bt4_ref,
               w5_ref, out_ref,
               q2_ref, q3_ref, q4_ref):
        # ---- block 1: conv on host-prepared patches + LeakyReLU (no norm) -
        # w1 is the conv weight replicated block-diagonally over the batch
        # tile, so one matmul handles all B images: (B*C1, B*K1) @ (B*K1, S1).
        x = leaky(jnp.dot(w1_ref[...], p1_ref[0], preferred_element_type=f32))

        # ---- blocks 2..4: conv + InstanceNorm2d(affine) + LeakyReLU --------
        blocks = ((g2_ref, w2_ref, gm2_ref, bt2_ref, q2_ref),
                  (g3_ref, w3_ref, gm3_ref, bt3_ref, q3_ref),
                  (g4_ref, w4_ref, gm4_ref, bt4_ref, q4_ref))
        for (g_ref, w_ref, gm_ref, bt_ref, q_ref), (taps, cin, sout) in zip(
                blocks, layer_cfg):
            # (1) one wide, lane-dense im2col gather matmul (all taps at once)
            pb = jnp.dot(x.astype(bf16), g_ref[...],
                         preferred_element_type=f32).astype(bf16)
            # (2) restack the tap slices onto the sublane axis of the scratch
            #     patch buffer (taps*B*Cin, Sout) — cheap VPU/XLU copies.
            rows = b_tile * cin
            for t in range(taps):
                q_ref[t * rows:(t + 1) * rows, :] = pb[:, t * sout:(t + 1) * sout]
            # (3) one conv matmul with the host-folded block weight
            acc = jnp.dot(w_ref[...], q_ref[...], preferred_element_type=f32)
            # InstanceNorm2d: per (image, channel) row stats over the spatial
            # lanes, two-pass (centred) variance, eps=1e-5, affine.
            mean = jnp.mean(acc, axis=1, keepdims=True)
            cent = acc - mean
            var = jnp.mean(cent * cent, axis=1, keepdims=True)
            y = cent * jax.lax.rsqrt(var + 1e-5)
            x = leaky(y * gm_ref[...] + bt_ref[...])

        # ---- block 5: 2x2 'valid' conv over the 2x2 map, Cout == 1 ---------
        # Collapses to an elementwise multiply + per-image reduce (VPU/XLU).
        c4, s5 = w5_ref.shape[0] // b_tile, w5_ref.shape[1]
        y = (x * w5_ref[...]).reshape(b_tile, c4, s5)
        res = jnp.sum(jnp.sum(y, axis=2), axis=1)                 # (B,)
        out_ref[...] = res.reshape(1, 1, b_tile)

    return kernel


# ---------------------------------------------------------------------------
# Host-side helpers (plain JAX / numpy — run once, outside the kernel).
# ---------------------------------------------------------------------------
def _im2col(x_nhwc, kk, stride, pad):
    """XLA-side im2col for the *raw input only* (layer 1)."""
    x = jnp.pad(x_nhwc, ((0, 0), (pad, pad), (pad, pad), (0, 0)))
    n, h, w, c = x.shape
    oh = (h - kk) // stride + 1
    ow = (w - kk) // stride + 1
    cols = []
    for i in range(kk):
        for j in range(kk):
            cols.append(x[:, i:i + stride * (oh - 1) + 1:stride,
                            j:j + stride * (ow - 1) + 1:stride, :])
    p = jnp.stack(cols, axis=3)                         # (N, oh, ow, taps, C)
    return p.reshape(n, oh * ow, kk * kk * c)           # (N, S, K) K=(di,dj,ci)


def _build_gather(hin, win, kk, stride, pad):
    """Per-tap 0/1 matrices: (C, Hin*Win) @ G[t] -> (C, OH*OW) is the im2col
    of tap t (zero padding == all-zero rows)."""
    oh = (hin + 2 * pad - kk) // stride + 1
    ow = (win + 2 * pad - kk) // stride + 1
    g = np.zeros((kk * kk, hin * win, oh * ow), np.float32)
    for di in range(kk):
        for dj in range(kk):
            t = di * kk + dj
            for a in range(oh):
                h = stride * a + di - pad
                if not (0 <= h < hin):
                    continue
                for b in range(ow):
                    w = stride * b + dj - pad
                    if 0 <= w < win:
                        g[t, h * win + w, a * ow + b] = 1.0
    return g


class CriticPallas:
    """Pallas port of the PyTorch Critic (5 bias-free conv blocks), fused into
    a single TPU kernel with VMEM-resident intermediates and batch tiling."""

    def __init__(self, f, k, s, p, h_in, key, b_tile=4):
        self.f, self.k, self.s, self.p = f, k, s, p
        self.b_tile = b_tile
        B = b_tile
        keys = jax.random.split(key, 5)

        # deterministic synthetic conv weights, OIHW like PyTorch, no bias
        raw = []
        for i in range(5):
            cin, cout, kk = f[i], f[i + 1], k[i]
            w = jax.random.normal(keys[i], (cout, cin, kk, kk), jnp.float32)
            raw.append(np.asarray(w) / np.sqrt(np.float32(cin * kk * kk)))

        # spatial size after each block (square maps)
        hs = [h_in]
        for i in range(5):
            hs.append((hs[-1] + 2 * p[i] - k[i]) // s[i] + 1)
        self.hs = hs
        self.k1 = k[0] * k[0] * f[0]            # layer-1 patch depth (di,dj,ci)
        self.s1 = hs[1] * hs[1]                 # layer-1 output spatial

        eye = np.eye(B, dtype=np.float32)

        # block 1: (Cout, kh*kw*Cin) matmul weight, replicated block-diagonally
        # over the batch tile -> (B*C1, B*K1).
        w1 = np.transpose(raw[0], (0, 2, 3, 1)).reshape(f[1], self.k1)
        self.w1 = jnp.asarray(np.kron(eye, w1), jnp.bfloat16)

        # blocks 2..4: wide gather constants, folded block conv weights,
        # InstanceNorm affine params (tiled over the batch tile).
        self.gw, self.wmap, self.gamma, self.beta = [], [], [], []
        cfg = []
        for i in range(1, 4):
            cin, cout, kk = f[i], f[i + 1], k[i]
            taps = kk * kk
            sin, sout = hs[i] * hs[i], hs[i + 1] * hs[i + 1]
            cfg.append((taps, cin, sout))
            # concatenated gather: (Sin, taps*Sout), lane-dense output
            g = _build_gather(hs[i], hs[i], kk, s[i], p[i])   # (taps, Sin, Sout)
            gw = np.transpose(g, (1, 0, 2)).reshape(sin, taps * sout)
            self.gw.append(jnp.asarray(gw, jnp.bfloat16))
            # folded conv weight: rows (b, co), cols (t, b', ci), block-diag in b
            wt = np.transpose(raw[i], (2, 3, 0, 1)).reshape(taps, cout, cin)
            wmap = np.zeros((B * cout, taps * B * cin), np.float32)
            for t in range(taps):
                wmap[:, t * B * cin:(t + 1) * B * cin] = np.kron(eye, wt[t])
            self.wmap.append(jnp.asarray(wmap, jnp.bfloat16))
            # InstanceNorm2d(affine=True) default init: weight=1, bias=0
            self.gamma.append(jnp.ones((B * cout, 1), jnp.float32))
            self.beta.append(jnp.zeros((B * cout, 1), jnp.float32))
        self.layer_cfg = tuple(cfg)

        # block 5: kernel covers the whole remaining map, pad 0, Cout == 1
        # -> the conv collapses to an elementwise multiply + per-image reduce.
        assert f[5] == 1 and p[4] == 0 and k[4] == hs[4] and hs[5] == 1, (
            "final block must collapse the feature map to a single scalar")
        w5 = raw[4][0].reshape(f[4], k[4] * k[4])               # (C4, 4)
        self.w5 = jnp.asarray(np.tile(w5, (B, 1)), jnp.float32)  # (B*C4, 4)

        self._kernel = _make_critic_kernel(B, self.layer_cfg)

    def __call__(self, x_nchw):
        n = x_nchw.shape[0]
        B = self.b_tile
        assert n % B == 0, "batch must be a multiple of b_tile"
        t_tiles = n // B            # keep >= 2 so both v7x TensorCores get work

        # layer-1 im2col on the host (XLA), shipped as bf16 with the batch
        # tile stacked on the sublane (patch-K) axis: (T, B*K1, S1).
        x = jnp.transpose(x_nchw, (0, 2, 3, 1))                  # NCHW -> NHWC
        patches = _im2col(x, self.k[0], self.s[0], self.p[0])    # (N, S1, K1)
        p1 = jnp.transpose(patches, (0, 2, 1)).reshape(
            t_tiles, B * self.k1, self.s1).astype(jnp.bfloat16)

        consts = [self.w1,
                  self.gw[0], self.wmap[0], self.gamma[0], self.beta[0],
                  self.gw[1], self.wmap[1], self.gamma[1], self.beta[1],
                  self.gw[2], self.wmap[2], self.gamma[2], self.beta[2],
                  self.w5]

        def const_spec(a):
            zeros = (0,) * a.ndim
            # constant index_map -> single buffer; double-buffering constants
            # only wastes VMEM (matters on v7x's smaller VMEM).
            return pl.BlockSpec(a.shape, lambda i: zeros,
                                pipeline_mode=pl.Buffered(1))

        # per-block VMEM scratch patch buffers (taps*B*Cin, Sout), bf16
        scratch = [pltpu.VMEM((taps * B * cin, sout), jnp.bfloat16)
                   for (taps, cin, sout) in self.layer_cfg]

        # advisory cost estimate: MXU flops + rsqrt count + real IO bytes
        def mm(m, kk, nn):
            return 2 * m * kk * nn
        flops_tile = mm(self.w1.shape[0], self.w1.shape[1], self.s1)
        for gw, wm, (taps, cin, sout) in zip(self.gw, self.wmap, self.layer_cfg):
            flops_tile += mm(B * cin, gw.shape[0], gw.shape[1])
            flops_tile += mm(wm.shape[0], wm.shape[1], sout)
        cost = pl.CostEstimate(
            flops=int(t_tiles * flops_tile),
            transcendentals=int(t_tiles * sum(w.shape[0] for w in self.wmap)),
            bytes_accessed=int(p1.size * 2
                               + sum(c.size * c.dtype.itemsize for c in consts)
                               + n * 4))

        out = pl.pallas_call(
            self._kernel,
            out_shape=jax.ShapeDtypeStruct((t_tiles, 1, B), jnp.float32),
            grid=(t_tiles,),
            in_specs=[pl.BlockSpec((1, B * self.k1, self.s1),
                                   lambda i: (i, 0, 0))]
                     + [const_spec(a) for a in consts],
            out_specs=pl.BlockSpec((1, 1, B), lambda i: (i, 0, 0)),
            scratch_shapes=scratch,
            compiler_params=pltpu.CompilerParams(
                dimension_semantics=("parallel",)),
            cost_estimate=cost,
        )(p1, *consts)
        return out.reshape(n, self.f[5], 1, 1)


if __name__ == "__main__":
    # DCGAN-style critic hyper-params consistent with the module's __init__:
    # f: channels per stage, k/s/p: kernel/stride/pad per conv.
    f = [4, 8, 16, 32, 64, 1]
    k = [4, 4, 4, 4, 2]
    s = [2, 2, 2, 2, 1]
    p = [1, 1, 1, 1, 0]

    key = jax.random.PRNGKey(0)
    k_x, k_params = jax.random.split(key)
    x = jax.random.normal(k_x, (8, 4, 32, 32), jnp.float32)      # NCHW input

    # b_tile=4 -> grid of 2 batch tiles (>= 2 so v7x megacore stays busy)
    critic = CriticPallas(f, k, s, p, h_in=32, key=k_params, b_tile=4)
    fwd = jax.jit(critic.__call__)
    out = fwd(x)                                                 # (8, 1, 1, 1)
    jax.block_until_ready(out)
    assert out.shape == (8, 1, 1, 1), out.shape
    assert bool(jnp.all(jnp.isfinite(out)))
    print("KERNEL_OK")
</pallas_src>

<mosaic_0001>
module attributes {stable_mosaic.version = 11 : i64} {
  func.func @kernel(%arg0: i32, %arg1: memref<1x256x256xbf16, #tpu.memory_space<vmem>>, %arg2: memref<32x256xbf16, #tpu.memory_space<vmem>>, %arg3: memref<256x1024xbf16, #tpu.memory_space<vmem>>, %arg4: memref<64x512xbf16, #tpu.memory_space<vmem>>, %arg5: memref<64x1xf32, #tpu.memory_space<vmem>>, %arg6: memref<64x1xf32, #tpu.memory_space<vmem>>, %arg7: memref<64x256xbf16, #tpu.memory_space<vmem>>, %arg8: memref<128x1024xbf16, #tpu.memory_space<vmem>>, %arg9: memref<128x1xf32, #tpu.memory_space<vmem>>, %arg10: memref<128x1xf32, #tpu.memory_space<vmem>>, %arg11: memref<16x64xbf16, #tpu.memory_space<vmem>>, %arg12: memref<256x2048xbf16, #tpu.memory_space<vmem>>, %arg13: memref<256x1xf32, #tpu.memory_space<vmem>>, %arg14: memref<256x1xf32, #tpu.memory_space<vmem>>, %arg15: memref<256x4xf32, #tpu.memory_space<vmem>>, %arg16: memref<1x1x4xf32, #tpu.memory_space<vmem>>, %arg17: memref<512x64xbf16, #tpu.memory_space<vmem>>, %arg18: memref<1024x16xbf16, #tpu.memory_space<vmem>>, %arg19: memref<2048x4xbf16, #tpu.memory_space<vmem>>) attributes {dimension_semantics = [#tpu.dimension_semantics<parallel>], iteration_bounds = array<i64: 2>, scalar_prefetch = 0 : i64, scratch_operands = 3 : i64, tpu.core_type = #tpu.core_type<tc>, window_params = [{transform_indices = @transform_0, window_bounds = array<i64: 1, 256, 256>}, {pipeline_mode = #tpu.pipeline_mode<synchronous>, transform_indices = @transform_1, window_bounds = array<i64: 32, 256>}, {pipeline_mode = #tpu.pipeline_mode<synchronous>, transform_indices = @transform_2, window_bounds = array<i64: 256, 1024>}, {pipeline_mode = #tpu.pipeline_mode<synchronous>, transform_indices = @transform_3, window_bounds = array<i64: 64, 512>}, {pipeline_mode = #tpu.pipeline_mode<synchronous>, transform_indices = @transform_4, window_bounds = array<i64: 64, 1>}, {pipeline_mode = #tpu.pipeline_mode<synchronous>, transform_indices = @transform_5, window_bounds = array<i64: 64, 1>}, {pipeline_mode = #tpu.pipeline_mode<synchronous>, transform_indices = @transform_6, window_bounds = array<i64: 64, 256>}, {pipeline_mode = #tpu.pipeline_mode<synchronous>, transform_indices = @transform_7, window_bounds = array<i64: 128, 1024>}, {pipeline_mode = #tpu.pipeline_mode<synchronous>, transform_indices = @transform_8, window_bounds = array<i64: 128, 1>}, {pipeline_mode = #tpu.pipeline_mode<synchronous>, transform_indices = @transform_9, window_bounds = array<i64: 128, 1>}, {pipeline_mode = #tpu.pipeline_mode<synchronous>, transform_indices = @transform_10, window_bounds = array<i64: 16, 64>}, {pipeline_mode = #tpu.pipeline_mode<synchronous>, transform_indices = @transform_11, window_bounds = array<i64: 256, 2048>}, {pipeline_mode = #tpu.pipeline_mode<synchronous>, transform_indices = @transform_12, window_bounds = array<i64: 256, 1>}, {pipeline_mode = #tpu.pipeline_mode<synchronous>, transform_indices = @transform_13, window_bounds = array<i64: 256, 1>}, {pipeline_mode = #tpu.pipeline_mode<synchronous>, transform_indices = @transform_14, window_bounds = array<i64: 256, 4>}, {transform_indices = @transform_15, window_bounds = array<i64: 1, 1, 4>}]} {
    %c0 = arith.constant 0 : index
    %c0_0 = arith.constant 0 : index
    %0 = vector.load %arg2[%c0, %c0_0] : memref<32x256xbf16, #tpu.memory_space<vmem>>, vector<32x256xbf16>
    %c0_1 = arith.constant 0 : index
    %c0_2 = arith.constant 0 : index
    %c0_3 = arith.constant 0 : index
    %1 = vector.load %arg1[%c0_1, %c0_2, %c0_3] : memref<1x256x256xbf16, #tpu.memory_space<vmem>>, vector<1x256x256xbf16>
    %2 = vector.shape_cast %1 : vector<1x256x256xbf16> to vector<256x256xbf16>
    %cst = arith.constant dense<0.000000e+00> : vector<32x256xf32>
    %3 = tpu.matmul %0, %2, %cst {dimension_numbers = #tpu.dot_dimension_numbers<[1], [0], [0], [1], [0, 0, 1, 1], [], []>} : vector<32x256xbf16>, vector<256x256xbf16>, vector<32x256xf32> -> vector<32x256xf32>
    %cst_4 = arith.constant 0.000000e+00 : f32
    %4 = vector.broadcast %cst_4 : f32 to vector<32x256xf32>
    %5 = arith.cmpf ogt, %3, %4 : vector<32x256xf32>
    %cst_5 = arith.constant 2.000000e-01 : f32
    %6 = vector.broadcast %cst_5 : f32 to vector<32x256xf32>
    %7 = arith.mulf %6, %3 : vector<32x256xf32>
    %8 = arith.select %5, %3, %7 : vector<32x256xi1>, vector<32x256xf32>
    %9 = arith.truncf %8 : vector<32x256xf32> to vector<32x256xbf16>
    %c0_6 = arith.constant 0 : index
    %c0_7 = arith.constant 0 : index
    %10 = vector.load %arg3[%c0_6, %c0_7] : memref<256x1024xbf16, #tpu.memory_space<vmem>>, vector<256x1024xbf16>
    %cst_8 = arith.constant dense<0.000000e+00> : vector<32x1024xf32>
    %11 = tpu.matmul %9, %10, %cst_8 {dimension_numbers = #tpu.dot_dimension_numbers<[1], [0], [0], [1], [0, 0, 1, 1], [], []>} : vector<32x256xbf16>, vector<256x1024xbf16>, vector<32x1024xf32> -> vector<32x1024xf32>
    %12 = arith.truncf %11 : vector<32x1024xf32> to vector<32x1024xbf16>
    %13 = vector.extract_strided_slice %12 {offsets = [0, 0], sizes = [32, 64], strides = [1, 1]} : vector<32x1024xbf16> to vector<32x64xbf16>
    %c0_9 = arith.constant 0 : index
    %c0_10 = arith.constant 0 : index
    %14 = vector.load %arg17[%c0_9, %c0_10] : memref<512x64xbf16, #tpu.memory_space<vmem>>, vector<32x64xbf16>
    tpu.vector_store %arg17[%c0_9, %c0_10], %13 {strides = array<i32>} : memref<512x64xbf16, #tpu.memory_space<vmem>>, vector<32x64xbf16>,
    %15 = vector.extract_strided_slice %12 {offsets = [0, 64], sizes = [32, 64], strides = [1, 1]} : vector<32x1024xbf16> to vector<32x64xbf16>
    %c32 = arith.constant 32 : index
    %c0_11 = arith.constant 0 : index
    %16 = vector.load %arg17[%c32, %c0_11] : memref<512x64xbf16, #tpu.memory_space<vmem>>, vector<32x64xbf16>
    tpu.vector_store %arg17[%c32, %c0_11], %15 {strides = array<i32>} : memref<512x64xbf16, #tpu.memory_space<vmem>>, vector<32x64xbf16>,
    %17 = vector.extract_strided_slice %12 {offsets = [0, 128], sizes = [32, 64], strides = [1, 1]} : vector<32x1024xbf16> to vector<32x64xbf16>
    %c64 = arith.constant 64 : index
    %c0_12 = arith.constant 0 : index
    %18 = vector.load %arg17[%c64, %c0_12] : memref<512x64xbf16, #tpu.memory_space<vmem>>, vector<32x64xbf16>
    tpu.vector_store %arg17[%c64, %c0_12], %17 {strides = array<i32>} : memref<512x64xbf16, #tpu.memory_space<vmem>>, vector<32x64xbf16>,
    %19 = vector.extract_strided_slice %12 {offsets = [0, 192], sizes = [32, 64], strides = [1, 1]} : vector<32x1024xbf16> to vector<32x64xbf16>
    %c96 = arith.constant 96 : index
    %c0_13 = arith.constant 0 : index
    %20 = vector.load %arg17[%c96, %c0_13] : memref<512x64xbf16, #tpu.memory_space<vmem>>, vector<32x64xbf16>
    tpu.vector_store %arg17[%c96, %c0_13], %19 {strides = array<i32>} : memref<512x64xbf16, #tpu.memory_space<vmem>>, vector<32x64xbf16>,
    %21 = vector.extract_strided_slice %12 {offsets = [0, 256], sizes = [32, 64], strides = [1, 1]} : vector<32x1024xbf16> to vector<32x64xbf16>
    %c128 = arith.constant 128 : index
    %c0_14 = arith.constant 0 : index
    %22 = vector.load %arg17[%c128, %c0_14] : memref<512x64xbf16, #tpu.memory_space<vmem>>, vector<32x64xbf16>
    tpu.vector_store %arg17[%c128, %c0_14], %21 {strides = array<i32>} : memref<512x64xbf16, #tpu.memory_space<vmem>>, vector<32x64xbf16>,
    %23 = vector.extract_strided_slice %12 {offsets = [0, 320], sizes = [32, 64], strides = [1, 1]} : vector<32x1024xbf16> to vector<32x64xbf16>
    %c160 = arith.constant 160 : index
    %c0_15 = arith.constant 0 : index
    %24 = vector.load %arg17[%c160, %c0_15] : memref<512x64xbf16, #tpu.memory_space<vmem>>, vector<32x64xbf16>
    tpu.vector_store %arg17[%c160, %c0_15], %23 {strides = array<i32>} : memref<512x64xbf16, #tpu.memory_space<vmem>>, vector<32x64xbf16>,
    %25 = vector.extract_strided_slice %12 {offsets = [0, 384], sizes = [32, 64], strides = [1, 1]} : vector<32x1024xbf16> to vector<32x64xbf16>
    %c192 = arith.constant 192 : index
    %c0_16 = arith.constant 0 : index
    %26 = vector.load %arg17[%c192, %c0_16] : memref<512x64xbf16, #tpu.memory_space<vmem>>, vector<32x64xbf16>
    tpu.vector_store %arg17[%c192, %c0_16], %25 {strides = array<i32>} : memref<512x64xbf16, #tpu.memory_space<vmem>>, vector<32x64xbf16>,
    %27 = vector.extract_strided_slice %12 {offsets = [0, 448], sizes = [32, 64], strides = [1, 1]} : vector<32x1024xbf16> to vector<32x64xbf16>
    %c224 = arith.constant 224 : index
    %c0_17 = arith.constant 0 : index
    %28 = vector.load %arg17[%c224, %c0_17] : memref<512x64xbf16, #tpu.memory_space<vmem>>, vector<32x64xbf16>
    tpu.vector_store %arg17[%c224, %c0_17], %27 {strides = array<i32>} : memref<512x64xbf16, #tpu.memory_space<vmem>>, vector<32x64xbf16>,
    %29 = vector.extract_strided_slice %12 {offsets = [0, 512], sizes = [32, 64], strides = [1, 1]} : vector<32x1024xbf16> to vector<32x64xbf16>
    %c256 = arith.constant 256 : index
    %c0_18 = arith.constant 0 : index
    %30 = vector.load %arg17[%c256, %c0_18] : memref<512x64xbf16, #tpu.memory_space<vmem>>, vector<32x64xbf16>
    tpu.vector_store %arg17[%c256, %c0_18], %29 {strides = array<i32>} : memref<512x64xbf16, #tpu.memory_space<vmem>>, vector<32x64xbf16>,
    %31 = vector.extract_strided_slice %12 {offsets = [0, 576], sizes = [32, 64], strides = [1, 1]} : vector<32x1024xbf16> to vector<32x64xbf16>
    %c288 = arith.constant 288 : index
    %c0_19 = arith.constant 0 : index
    %32 = vector.load %arg17[%c288, %c0_19] : memref<512x64xbf16, #tpu.memory_space<vmem>>, vector<32x64xbf16>
    tpu.vector_store %arg17[%c288, %c0_19], %31 {strides = array<i32>} : memref<512x64xbf16, #tpu.memory_space<vmem>>, vector<32x64xbf16>,
    %33 = vector.extract_strided_slice %12 {offsets = [0, 640], sizes = [32, 64], strides = [1, 1]} : vector<32x1024xbf16> to vector<32x64xbf16>
    %c320 = arith.constant 320 : index
    %c0_20 = arith.constant 0 : index
    %34 = vector.load %arg17[%c320, %c0_20] : memref<512x64xbf16, #tpu.memory_space<vmem>>, vector<32x64xbf16>
    tpu.vector_store %arg17[%c320, %c0_20], %33 {strides = array<i32>} : memref<512x64xbf16, #tpu.memory_space<vmem>>, vector<32x64xbf16>,
    %35 = vector.extract_strided_slice %12 {offsets = [0, 704], sizes = [32, 64], strides = [1, 1]} : vector<32x1024xbf16> to vector<32x64xbf16>
    %c352 = arith.constant 352 : index
    %c0_21 = arith.constant 0 : index
    %36 = vector.load %arg17[%c352, %c0_21] : memref<512x64xbf16, #tpu.memory_space<vmem>>, vector<32x64xbf16>
    tpu.vector_store %arg17[%c352, %c0_21], %35 {strides = array<i32>} : memref<512x64xbf16, #tpu.memory_space<vmem>>, vector<32x64xbf16>,
    %37 = vector.extract_strided_slice %12 {offsets = [0, 768], sizes = [32, 64], strides = [1, 1]} : vector<32x1024xbf16> to vector<32x64xbf16>
    %c384 = arith.constant 384 : index
    %c0_22 = arith.constant 0 : index
    %38 = vector.load %arg17[%c384, %c0_22] : memref<512x64xbf16, #tpu.memory_space<vmem>>, vector<32x64xbf16>
    tpu.vector_store %arg17[%c384, %c0_22], %37 {strides = array<i32>} : memref<512x64xbf16, #tpu.memory_space<vmem>>, vector<32x64xbf16>,
    %39 = vector.extract_strided_slice %12 {offsets = [0, 832], sizes = [32, 64], strides = [1, 1]} : vector<32x1024xbf16> to vector<32x64xbf16>
    %c416 = arith.constant 416 : index
    %c0_23 = arith.constant 0 : index
    %40 = vector.load %arg17[%c416, %c0_23] : memref<512x64xbf16, #tpu.memory_space<vmem>>, vector<32x64xbf16>
    tpu.vector_store %arg17[%c416, %c0_23], %39 {strides = array<i32>} : memref<512x64xbf16, #tpu.memory_space<vmem>>, vector<32x64xbf16>,
    %41 = vector.extract_strided_slice %12 {offsets = [0, 896], sizes = [32, 64], strides = [1, 1]} : vector<32x1024xbf16> to vector<32x64xbf16>
    %c448 = arith.constant 448 : index
    %c0_24 = arith.constant 0 : index
    %42 = vector.load %arg17[%c448, %c0_24] : memref<512x64xbf16, #tpu.memory_space<vmem>>, vector<32x64xbf16>
    tpu.vector_store %arg17[%c448, %c0_24], %41 {strides = array<i32>} : memref<512x64xbf16, #tpu.memory_space<vmem>>, vector<32x64xbf16>,
    %43 = vector.extract_strided_slice %12 {offsets = [0, 960], sizes = [32, 64], strides = [1, 1]} : vector<32x1024xbf16> to vector<32x64xbf16>
    %c480 = arith.constant 480 : index
    %c0_25 = arith.constant 0 : index
    %44 = vector.load %arg17[%c480, %c0_25] : memref<512x64xbf16, #tpu.memory_space<vmem>>, vector<32x64xbf16>
    tpu.vector_store %arg17[%c480, %c0_25], %43 {strides = array<i32>} : memref<512x64xbf16, #tpu.memory_space<vmem>>, vector<32x64xbf16>,
    %c0_26 = arith.constant 0 : index
    %c0_27 = arith.constant 0 : index
    %45 = vector.load %arg4[%c0_26, %c0_27] : memref<64x512xbf16, #tpu.memory_space<vmem>>, vector<64x512xbf16>
    %c0_28 = arith.constant 0 : index
    %c0_29 = arith.constant 0 : index
    %46 = vector.load %arg17[%c0_28, %c0_29] : memref<512x64xbf16, #tpu.memory_space<vmem>>, vector<512x64xbf16>
    %cst_30 = arith.constant dense<0.000000e+00> : vector<64x64xf32>
    %47 = tpu.matmul %45, %46, %cst_30 {dimension_numbers = #tpu.dot_dimension_numbers<[1], [0], [0], [1], [0, 0, 1, 1], [], []>} : vector<64x512xbf16>, vector<512x64xbf16>, vector<64x64xf32> -> vector<64x64xf32>
    %cst_31 = arith.constant dense<0.000000e+00> : vector<64xf32>
    %48 = vector.multi_reduction <add>, %47, %cst_31 [1] : vector<64x64xf32> to vector<64xf32>
    %49 = vector.shape_cast %48 : vector<64xf32> to vector<64x1xf32>
    %cst_32 = arith.constant 6.400000e+01 : f32
    %50 = vector.broadcast %cst_32 : f32 to vector<64x1xf32>
    %51 = arith.divf %49, %50 : vector<64x1xf32>
    %52 = vector.broadcast %51 : vector<64x1xf32> to vector<64x64xf32>
    %53 = arith.subf %47, %52 : vector<64x64xf32>
    %54 = arith.mulf %53, %53 : vector<64x64xf32>
    %cst_33 = arith.constant dense<0.000000e+00> : vector<64xf32>
    %55 = vector.multi_reduction <add>, %54, %cst_33 [1] : vector<64x64xf32> to vector<64xf32>
    %56 = vector.shape_cast %55 : vector<64xf32> to vector<64x1xf32>
    %cst_34 = arith.constant 6.400000e+01 : f32
    %57 = vector.broadcast %cst_34 : f32 to vector<64x1xf32>
    %58 = arith.divf %56, %57 : vector<64x1xf32>
    %cst_35 = arith.constant 9.99999974E-6 : f32
    %59 = vector.broadcast %cst_35 : f32 to vector<64x1xf32>
    %60 = arith.addf %58, %59 : vector<64x1xf32>
    %61 = math.rsqrt %60 : vector<64x1xf32>
    %62 = vector.broadcast %61 : vector<64x1xf32> to vector<64x64xf32>
    %63 = arith.mulf %53, %62 : vector<64x64xf32>
    %c0_36 = arith.constant 0 : index
    %c0_37 = arith.constant 0 : index
    %64 = vector.load %arg5[%c0_36, %c0_37] : memref<64x1xf32, #tpu.memory_space<vmem>>, vector<64x1xf32>
    %65 = vector.broadcast %64 : vector<64x1xf32> to vector<64x64xf32>
    %66 = arith.mulf %63, %65 : vector<64x64xf32>
    %c0_38 = arith.constant 0 : index
    %c0_39 = arith.constant 0 : index
    %67 = vector.load %arg6[%c0_38, %c0_39] : memref<64x1xf32, #tpu.memory_space<vmem>>, vector<64x1xf32>
    %68 = vector.broadcast %67 : vector<64x1xf32> to vector<64x64xf32>
    %69 = arith.addf %66, %68 : vector<64x64xf32>
    %cst_40 = arith.constant 0.000000e+00 : f32
    %70 = vector.broadcast %cst_40 : f32 to vector<64x64xf32>
    %71 = arith.cmpf ogt, %69, %70 : vector<64x64xf32>
    %cst_41 = arith.constant 2.000000e-01 : f32
    %72 = vector.broadcast %cst_41 : f32 to vector<64x64xf32>
    %73 = arith.mulf %72, %69 : vector<64x64xf32>
    %74 = arith.select %71, %69, %73 : vector<64x64xi1>, vector<64x64xf32>
    %75 = arith.truncf %74 : vector<64x64xf32> to vector<64x64xbf16>
    %c0_42 = arith.constant 0 : index
    %c0_43 = arith.constant 0 : index
    %76 = vector.load %arg7[%c0_42, %c0_43] : memref<64x256xbf16, #tpu.memory_space<vmem>>, vector<64x256xbf16>
    %cst_44 = arith.constant dense<0.000000e+00> : vector<64x256xf32>
    %77 = tpu.matmul %75, %76, %cst_44 {dimension_numbers = #tpu.dot_dimension_numbers<[1], [0], [0], [1], [0, 0, 1, 1], [], []>} : vector<64x64xbf16>, vector<64x256xbf16>, vector<64x256xf32> -> vector<64x256xf32>
    %78 = arith.truncf %77 : vector<64x256xf32> to vector<64x256xbf16>
    %79 = vector.extract_strided_slice %78 {offsets = [0, 0], sizes = [64, 16], strides = [1, 1]} : vector<64x256xbf16> to vector<64x16xbf16>
    %c0_45 = arith.constant 0 : index
    %c0_46 = arith.constant 0 : index
    %80 = vector.load %arg18[%c0_45, %c0_46] : memref<1024x16xbf16, #tpu.memory_space<vmem>>, vector<64x16xbf16>
    tpu.vector_store %arg18[%c0_45, %c0_46], %79 {strides = array<i32>} : memref<1024x16xbf16, #tpu.memory_space<vmem>>, vector<64x16xbf16>,
    %81 = vector.extract_strided_slice %78 {offsets = [0, 16], sizes = [64, 16], strides = [1, 1]} : vector<64x256xbf16> to vector<64x16xbf16>
    %c64_47 = arith.constant 64 : index
    %c0_48 = arith.constant 0 : index
    %82 = vector.load %arg18[%c64_47, %c0_48] : memref<1024x16xbf16, #tpu.memory_space<vmem>>, vector<64x16xbf16>
    tpu.vector_store %arg18[%c64_47, %c0_48], %81 {strides = array<i32>} : memref<1024x16xbf16, #tpu.memory_space<vmem>>, vector<64x16xbf16>,
    %83 = vector.extract_strided_slice %78 {offsets = [0, 32], sizes = [64, 16], strides = [1, 1]} : vector<64x256xbf16> to vector<64x16xbf16>
    %c128_49 = arith.constant 128 : index
    %c0_50 = arith.constant 0 : index
    %84 = vector.load %arg18[%c128_49, %c0_50] : memref<1024x16xbf16, #tpu.memory_space<vmem>>, vector<64x16xbf16>
    tpu.vector_store %arg18[%c128_49, %c0_50], %83 {strides = array<i32>} : memref<1024x16xbf16, #tpu.memory_space<vmem>>, vector<64x16xbf16>,
    %85 = vector.extract_strided_slice %78 {offsets = [0, 48], sizes = [64, 16], strides = [1, 1]} : vector<64x256xbf16> to vector<64x16xbf16>
    %c192_51 = arith.constant 192 : index
    %c0_52 = arith.constant 0 : index
    %86 = vector.load %arg18[%c192_51, %c0_52] : memref<1024x16xbf16, #tpu.memory_space<vmem>>, vector<64x16xbf16>
    tpu.vector_store %arg18[%c192_51, %c0_52], %85 {strides = array<i32>} : memref<1024x16xbf16, #tpu.memory_space<vmem>>, vector<64x16xbf16>,
    %87 = vector.extract_strided_slice %78 {offsets = [0, 64], sizes = [64, 16], strides = [1, 1]} : vector<64x256xbf16> to vector<64x16xbf16>
    %c256_53 = arith.constant 256 : index
    %c0_54 = arith.constant 0 : index
    %88 = vector.load %arg18[%c256_53, %c0_54] : memref<1024x16xbf16, #tpu.memory_space<vmem>>, vector<64x16xbf16>
    tpu.vector_store %arg18[%c256_53, %c0_54], %87 {strides = array<i32>} : memref<1024x16xbf16, #tpu.memory_space<vmem>>, vector<64x16xbf16>,
    %89 = vector.extract_strided_slice %78 {offsets = [0, 80], sizes = [64, 16], strides = [1, 1]} : vector<64x256xbf16> to vector<64x16xbf16>
    %c320_55 = arith.constant 320 : index
    %c0_56 = arith.constant 0 : index
    %90 = vector.load %arg18[%c320_55, %c0_56] : memref<1024x16xbf16, #tpu.memory_space<vmem>>, vector<64x16xbf16>
    tpu.vector_store %arg18[%c320_55, %c0_56], %89 {strides = array<i32>} : memref<1024x16xbf16, #tpu.memory_space<vmem>>, vector<64x16xbf16>,
    %91 = vector.extract_strided_slice %78 {offsets = [0, 96], sizes = [64, 16], strides = [1, 1]} : vector<64x256xbf16> to vector<64x16xbf16>
    %c384_57 = arith.constant 384 : index
    %c0_58 = arith.constant 0 : index
    %92 = vector.load %arg18[%c384_57, %c0_58] : memref<1024x16xbf16, #tpu.memory_space<vmem>>, vector<64x16xbf16>
    tpu.vector_store %arg18[%c384_57, %c0_58], %91 {strides = array<i32>} : memref<1024x16xbf16, #tpu.memory_space<vmem>>, vector<64x16xbf16>,
    %93 = vector.extract_strided_slice %78 {offsets = [0, 112], sizes = [64, 16], strides = [1, 1]} : vector<64x256xbf16> to vector<64x16xbf16>
    %c448_59 = arith.constant 448 : index
    %c0_60 = arith.constant 0 : index
    %94 = vector.load %arg18[%c448_59, %c0_60] : memref<1024x16xbf16, #tpu.memory_space<vmem>>, vector<64x16xbf16>
    tpu.vector_store %arg18[%c448_59, %c0_60], %93 {strides = array<i32>} : memref<1024x16xbf16, #tpu.memory_space<vmem>>, vector<64x16xbf16>,
    %95 = vector.extract_strided_slice %78 {offsets = [0, 128], sizes = [64, 16], strides = [1, 1]} : vector<64x256xbf16> to vector<64x16xbf16>
    %c512 = arith.constant 512 : index
    %c0_61 = arith.constant 0 : index
    %96 = vector.load %arg18[%c512, %c0_61] : memref<1024x16xbf16, #tpu.memory_space<vmem>>, vector<64x16xbf16>
    tpu.vector_store %arg18[%c512, %c0_61], %95 {strides = array<i32>} : memref<1024x16xbf16, #tpu.memory_space<vmem>>, vector<64x16xbf16>,
    %97 = vector.extract_strided_slice %78 {offsets = [0, 144], sizes = [64, 16], strides = [1, 1]} : vector<64x256xbf16> to vector<64x16xbf16>
    %c576 = arith.constant 576 : index
    %c0_62 = arith.constant 0 : index
    %98 = vector.load %arg18[%c576, %c0_62] : memref<1024x16xbf16, #tpu.memory_space<vmem>>, vector<64x16xbf16>
    tpu.vector_store %arg18[%c576, %c0_62], %97 {strides = array<i32>} : memref<1024x16xbf16, #tpu.memory_space<vmem>>, vector<64x16xbf16>,
    %99 = vector.extract_strided_slice %78 {offsets = [0, 160], sizes = [64, 16], strides = [1, 1]} : vector<64x256xbf16> to vector<64x16xbf16>
    %c640 = arith.constant 640 : index
    %c0_63 = arith.constant 0 : index
    %100 = vector.load %arg18[%c640, %c0_63] : memref<1024x16xbf16, #tpu.memory_space<vmem>>, vector<64x16xbf16>
    tpu.vector_store %arg18[%c640, %c0_63], %99 {strides = array<i32>} : memref<1024x16xbf16, #tpu.memory_space<vmem>>, vector<64x16xbf16>,
    %101 = vector.extract_strided_slice %78 {offsets = [0, 176], sizes = [64, 16], strides = [1, 1]} : vector<64x256xbf16> to vector<64x16xbf16>
    %c704 = arith.constant 704 : index
    %c0_64 = arith.constant 0 : index
    %102 = vector.load %arg18[%c704, %c0_64] : memref<1024x16xbf16, #tpu.memory_space<vmem>>, vector<64x16xbf16>
    tpu.vector_store %arg18[%c704, %c0_64], %101 {strides = array<i32>} : memref<1024x16xbf16, #tpu.memory_space<vmem>>, vector<64x16xbf16>,
    %103 = vector.extract_strided_slice %78 {offsets = [0, 192], sizes = [64, 16], strides = [1, 1]} : vector<64x256xbf16> to vector<64x16xbf16>
    %c768 = arith.constant 768 : index
    %c0_65 = arith.constant 0 : index
    %104 = vector.load %arg18[%c768, %c0_65] : memref<1024x16xbf16, #tpu.memory_space<vmem>>, vector<64x16xbf16>
    tpu.vector_store %arg18[%c768, %c0_65], %103 {strides = array<i32>} : memref<1024x16xbf16, #tpu.memory_space<vmem>>, vector<64x16xbf16>,
    %105 = vector.extract_strided_slice %78 {offsets = [0, 208], sizes = [64, 16], strides = [1, 1]} : vector<64x256xbf16> to vector<64x16xbf16>
    %c832 = arith.constant 832 : index
    %c0_66 = arith.constant 0 : index
    %106 = vector.load %arg18[%c832, %c0_66] : memref<1024x16xbf16, #tpu.memory_space<vmem>>, vector<64x16xbf16>
    tpu.vector_store %arg18[%c832, %c0_66], %105 {strides = array<i32>} : memref<1024x16xbf16, #tpu.memory_space<vmem>>, vector<64x16xbf16>,
    %107 = vector.extract_strided_slice %78 {offsets = [0, 224], sizes = [64, 16], strides = [1, 1]} : vector<64x256xbf16> to vector<64x16xbf16>
    %c896 = arith.constant 896 : index
    %c0_67 = arith.constant 0 : index
    %108 = vector.load %arg18[%c896, %c0_67] : memref<1024x16xbf16, #tpu.memory_space<vmem>>, vector<64x16xbf16>
    tpu.vector_store %arg18[%c896, %c0_67], %107 {strides = array<i32>} : memref<1024x16xbf16, #tpu.memory_space<vmem>>, vector<64x16xbf16>,
    %109 = vector.extract_strided_slice %78 {offsets = [0, 240], sizes = [64, 16], strides = [1, 1]} : vector<64x256xbf16> to vector<64x16xbf16>
    %c960 = arith.constant 960 : index
    %c0_68 = arith.constant 0 : index
    %110 = vector.load %arg18[%c960, %c0_68] : memref<1024x16xbf16, #tpu.memory_space<vmem>>, vector<64x16xbf16>
    tpu.vector_store %arg18[%c960, %c0_68], %109 {strides = array<i32>} : memref<1024x16xbf16, #tpu.memory_space<vmem>>, vector<64x16xbf16>,
    %c0_69 = arith.constant 0 : index
    %c0_70 = arith.constant 0 : index
    %111 = vector.load %arg8[%c0_69, %c0_70] : memref<128x1024xbf16, #tpu.memory_space<vmem>>, vector<128x1024xbf16>
    %c0_71 = arith.constant 0 : index
    %c0_72 = arith.constant 0 : index
    %112 = vector.load %arg18[%c0_71, %c0_72] : memref<1024x16xbf16, #tpu.memory_space<vmem>>, vector<1024x16xbf16>
    %cst_73 = arith.constant dense<0.000000e+00> : vector<128x16xf32>
    %113 = tpu.matmul %111, %112, %cst_73 {dimension_numbers = #tpu.dot_dimension_numbers<[1], [0], [0], [1], [0, 0, 1, 1], [], []>} : vector<128x1024xbf16>, vector<1024x16xbf16>, vector<128x16xf32> -> vector<128x16xf32>
    %cst_74 = arith.constant dense<0.000000e+00> : vector<128xf32>
    %114 = vector.multi_reduction <add>, %113, %cst_74 [1] : vector<128x16xf32> to vector<128xf32>
    %115 = vector.shape_cast %114 : vector<128xf32> to vector<128x1xf32>
    %cst_75 = arith.constant 1.600000e+01 : f32
    %116 = vector.broadcast %cst_75 : f32 to vector<128x1xf32>
    %117 = arith.divf %115, %116 : vector<128x1xf32>
    %118 = vector.broadcast %117 : vector<128x1xf32> to vector<128x16xf32>
    %119 = arith.subf %113, %118 : vector<128x16xf32>
    %120 = arith.mulf %119, %119 : vector<128x16xf32>
    %cst_76 = arith.constant dense<0.000000e+00> : vector<128xf32>
    %121 = vector.multi_reduction <add>, %120, %cst_76 [1] : vector<128x16xf32> to vector<128xf32>
    %122 = vector.shape_cast %121 : vector<128xf32> to vector<128x1xf32>
    %cst_77 = arith.constant 1.600000e+01 : f32
    %123 = vector.broadcast %cst_77 : f32 to vector<128x1xf32>
    %124 = arith.divf %122, %123 : vector<128x1xf32>
    %cst_78 = arith.constant 9.99999974E-6 : f32
    %125 = vector.broadcast %cst_78 : f32 to vector<128x1xf32>
    %126 = arith.addf %124, %125 : vector<128x1xf32>
    %127 = math.rsqrt %126 : vector<128x1xf32>
    %128 = vector.broadcast %127 : vector<128x1xf32> to vector<128x16xf32>
    %129 = arith.mulf %119, %128 : vector<128x16xf32>
    %c0_79 = arith.constant 0 : index
    %c0_80 = arith.constant 0 : index
    %130 = vector.load %arg9[%c0_79, %c0_80] : memref<128x1xf32, #tpu.memory_space<vmem>>, vector<128x1xf32>
    %131 = vector.broadcast %130 : vector<128x1xf32> to vector<128x16xf32>
    %132 = arith.mulf %129, %131 : vector<128x16xf32>
    %c0_81 = arith.constant 0 : index
    %c0_82 = arith.constant 0 : index
    %133 = vector.load %arg10[%c0_81, %c0_82] : memref<128x1xf32, #tpu.memory_space<vmem>>, vector<128x1xf32>
    %134 = vector.broadcast %133 : vector<128x1xf32> to vector<128x16xf32>
    %135 = arith.addf %132, %134 : vector<128x16xf32>
    %cst_83 = arith.constant 0.000000e+00 : f32
    %136 = vector.broadcast %cst_83 : f32 to vector<128x16xf32>
    %137 = arith.cmpf ogt, %135, %136 : vector<128x16xf32>
    %cst_84 = arith.constant 2.000000e-01 : f32
    %138 = vector.broadcast %cst_84 : f32 to vector<128x16xf32>
    %139 = arith.mulf %138, %135 : vector<128x16xf32>
    %140 = arith.select %137, %135, %139 : vector<128x16xi1>, vector<128x16xf32>
    %141 = arith.truncf %140 : vector<128x16xf32> to vector<128x16xbf16>
    %c0_85 = arith.constant 0 : index
    %c0_86 = arith.constant 0 : index
    %142 = vector.load %arg11[%c0_85, %c0_86] : memref<16x64xbf16, #tpu.memory_space<vmem>>, vector<16x64xbf16>
    %cst_87 = arith.constant dense<0.000000e+00> : vector<128x64xf32>
    %143 = tpu.matmul %141, %142, %cst_87 {dimension_numbers = #tpu.dot_dimension_numbers<[1], [0], [0], [1], [0, 0, 1, 1], [], []>} : vector<128x16xbf16>, vector<16x64xbf16>, vector<128x64xf32> -> vector<128x64xf32>
    %144 = arith.truncf %143 : vector<128x64xf32> to vector<128x64xbf16>
    %145 = vector.extract_strided_slice %144 {offsets = [0, 0], sizes = [128, 4], strides = [1, 1]} : vector<128x64xbf16> to vector<128x4xbf16>
    %c0_88 = arith.constant 0 : index
    %c0_89 = arith.constant 0 : index
    %146 = vector.load %arg19[%c0_88, %c0_89] : memref<2048x4xbf16, #tpu.memory_space<vmem>>, vector<128x4xbf16>
    tpu.vector_store %arg19[%c0_88, %c0_89], %145 {strides = array<i32>} : memref<2048x4xbf16, #tpu.memory_space<vmem>>, vector<128x4xbf16>,
    %147 = vector.extract_strided_slice %144 {offsets = [0, 4], sizes = [128, 4], strides = [1, 1]} : vector<128x64xbf16> to vector<128x4xbf16>
    %c128_90 = arith.constant 128 : index
    %c0_91 = arith.constant 0 : index
    %148 = vector.load %arg19[%c128_90, %c0_91] : memref<2048x4xbf16, #tpu.memory_space<vmem>>, vector<128x4xbf16>
    tpu.vector_store %arg19[%c128_90, %c0_91], %147 {strides = array<i32>} : memref<2048x4xbf16, #tpu.memory_space<vmem>>, vector<128x4xbf16>,
    %149 = vector.extract_strided_slice %144 {offsets = [0, 8], sizes = [128, 4], strides = [1, 1]} : vector<128x64xbf16> to vector<128x4xbf16>
    %c256_92 = arith.constant 256 : index
    %c0_93 = arith.constant 0 : index
    %150 = vector.load %arg19[%c256_92, %c0_93] : memref<2048x4xbf16, #tpu.memory_space<vmem>>, vector<128x4xbf16>
    tpu.vector_store %arg19[%c256_92, %c0_93], %149 {strides = array<i32>} : memref<2048x4xbf16, #tpu.memory_space<vmem>>, vector<128x4xbf16>,
    %151 = vector.extract_strided_slice %144 {offsets = [0, 12], sizes = [128, 4], strides = [1, 1]} : vector<128x64xbf16> to vector<128x4xbf16>
    %c384_94 = arith.constant 384 : index
    %c0_95 = arith.constant 0 : index
    %152 = vector.load %arg19[%c384_94, %c0_95] : memref<2048x4xbf16, #tpu.memory_space<vmem>>, vector<128x4xbf16>
    tpu.vector_store %arg19[%c384_94, %c0_95], %151 {strides = array<i32>} : memref<2048x4xbf16, #tpu.memory_space<vmem>>, vector<128x4xbf16>,
    %153 = vector.extract_strided_slice %144 {offsets = [0, 16], sizes = [128, 4], strides = [1, 1]} : vector<128x64xbf16> to vector<128x4xbf16>
    %c512_96 = arith.constant 512 : index
    %c0_97 = arith.constant 0 : index
    %154 = vector.load %arg19[%c512_96, %c0_97] : memref<2048x4xbf16, #tpu.memory_space<vmem>>, vector<128x4xbf16>
    tpu.vector_store %arg19[%c512_96, %c0_97], %153 {strides = array<i32>} : memref<2048x4xbf16, #tpu.memory_space<vmem>>, vector<128x4xbf16>,
    %155 = vector.extract_strided_slice %144 {offsets = [0, 20], sizes = [128, 4], strides = [1, 1]} : vector<128x64xbf16> to vector<128x4xbf16>
    %c640_98 = arith.constant 640 : index
    %c0_99 = arith.constant 0 : index
    %156 = vector.load %arg19[%c640_98, %c0_99] : memref<2048x4xbf16, #tpu.memory_space<vmem>>, vector<128x4xbf16>
    tpu.vector_store %arg19[%c640_98, %c0_99], %155 {strides = array<i32>} : memref<2048x4xbf16, #tpu.memory_space<vmem>>, vector<128x4xbf16>,
    %157 = vector.extract_strided_slice %144 {offsets = [0, 24], sizes = [128, 4], strides = [1, 1]} : vector<128x64xbf16> to vector<128x4xbf16>
    %c768_100 = arith.constant 768 : index
    %c0_101 = arith.constant 0 : index
    %158 = vector.load %arg19[%c768_100, %c0_101] : memref<2048x4xbf16, #tpu.memory_space<vmem>>, vector<128x4xbf16>
    tpu.vector_store %arg19[%c768_100, %c0_101], %157 {strides = array<i32>} : memref<2048x4xbf16, #tpu.memory_space<vmem>>, vector<128x4xbf16>,
    %159 = vector.extract_strided_slice %144 {offsets = [0, 28], sizes = [128, 4], strides = [1, 1]} : vector<128x64xbf16> to vector<128x4xbf16>
    %c896_102 = arith.constant 896 : index
    %c0_103 = arith.constant 0 : index
    %160 = vector.load %arg19[%c896_102, %c0_103] : memref<2048x4xbf16, #tpu.memory_space<vmem>>, vector<128x4xbf16>
    tpu.vector_store %arg19[%c896_102, %c0_103], %159 {strides = array<i32>} : memref<2048x4xbf16, #tpu.memory_space<vmem>>, vector<128x4xbf16>,
    %161 = vector.extract_strided_slice %144 {offsets = [0, 32], sizes = [128, 4], strides = [1, 1]} : vector<128x64xbf16> to vector<128x4xbf16>
    %c1024 = arith.constant 1024 : index
    %c0_104 = arith.constant 0 : index
    %162 = vector.load %arg19[%c1024, %c0_104] : memref<2048x4xbf16, #tpu.memory_space<vmem>>, vector<128x4xbf16>
    tpu.vector_store %arg19[%c1024, %c0_104], %161 {strides = array<i32>} : memref<2048x4xbf16, #tpu.memory_space<vmem>>, vector<128x4xbf16>,
    %163 = vector.extract_strided_slice %144 {offsets = [0, 36], sizes = [128, 4], strides = [1, 1]} : vector<128x64xbf16> to vector<128x4xbf16>
    %c1152 = arith.constant 1152 : index
    %c0_105 = arith.constant 0 : index
    %164 = vector.load %arg19[%c1152, %c0_105] : memref<2048x4xbf16, #tpu.memory_space<vmem>>, vector<128x4xbf16>
    tpu.vector_store %arg19[%c1152, %c0_105], %163 {strides = array<i32>} : memref<2048x4xbf16, #tpu.memory_space<vmem>>, vector<128x4xbf16>,
    %165 = vector.extract_strided_slice %144 {offsets = [0, 40], sizes = [128, 4], strides = [1, 1]} : vector<128x64xbf16> to vector<128x4xbf16>
    %c1280 = arith.constant 1280 : index
    %c0_106 = arith.constant 0 : index
    %166 = vector.load %arg19[%c1280, %c0_106] : memref<2048x4xbf16, #tpu.memory_space<vmem>>, vector<128x4xbf16>
    tpu.vector_store %arg19[%c1280, %c0_106], %165 {strides = array<i32>} : memref<2048x4xbf16, #tpu.memory_space<vmem>>, vector<128x4xbf16>,
    %167 = vector.extract_strided_slice %144 {offsets = [0, 44], sizes = [128, 4], strides = [1, 1]} : vector<128x64xbf16> to vector<128x4xbf16>
    %c1408 = arith.constant 1408 : index
    %c0_107 = arith.constant 0 : index
    %168 = vector.load %arg19[%c1408, %c0_107] : memref<2048x4xbf16, #tpu.memory_space<vmem>>, vector<128x4xbf16>
    tpu.vector_store %arg19[%c1408, %c0_107], %167 {strides = array<i32>} : memref<2048x4xbf16, #tpu.memory_space<vmem>>, vector<128x4xbf16>,
    %169 = vector.extract_strided_slice %144 {offsets = [0, 48], sizes = [128, 4], strides = [1, 1]} : vector<128x64xbf16> to vector<128x4xbf16>
    %c1536 = arith.constant 1536 : index
    %c0_108 = arith.constant 0 : index
    %170 = vector.load %arg19[%c1536, %c0_108] : memref<2048x4xbf16, #tpu.memory_space<vmem>>, vector<128x4xbf16>
    tpu.vector_store %arg19[%c1536, %c0_108], %169 {strides = array<i32>} : memref<2048x4xbf16, #tpu.memory_space<vmem>>, vector<128x4xbf16>,
    %171 = vector.extract_strided_slice %144 {offsets = [0, 52], sizes = [128, 4], strides = [1, 1]} : vector<128x64xbf16> to vector<128x4xbf16>
    %c1664 = arith.constant 1664 : index
    %c0_109 = arith.constant 0 : index
    %172 = vector.load %arg19[%c1664, %c0_109] : memref<2048x4xbf16, #tpu.memory_space<vmem>>, vector<128x4xbf16>
    tpu.vector_store %arg19[%c1664, %c0_109], %171 {strides = array<i32>} : memref<2048x4xbf16, #tpu.memory_space<vmem>>, vector<128x4xbf16>,
    %173 = vector.extract_strided_slice %144 {offsets = [0, 56], sizes = [128, 4], strides = [1, 1]} : vector<128x64xbf16> to vector<128x4xbf16>
    %c1792 = arith.constant 1792 : index
    %c0_110 = arith.constant 0 : index
    %174 = vector.load %arg19[%c1792, %c0_110] : memref<2048x4xbf16, #tpu.memory_space<vmem>>, vector<128x4xbf16>
    tpu.vector_store %arg19[%c1792, %c0_110], %173 {strides = array<i32>} : memref<2048x4xbf16, #tpu.memory_space<vmem>>, vector<128x4xbf16>,
    %175 = vector.extract_strided_slice %144 {offsets = [0, 60], sizes = [128, 4], strides = [1, 1]} : vector<128x64xbf16> to vector<128x4xbf16>
    %c1920 = arith.constant 1920 : index
    %c0_111 = arith.constant 0 : index
    %176 = vector.load %arg19[%c1920, %c0_111] : memref<2048x4xbf16, #tpu.memory_space<vmem>>, vector<128x4xbf16>
    tpu.vector_store %arg19[%c1920, %c0_111], %175 {strides = array<i32>} : memref<2048x4xbf16, #tpu.memory_space<vmem>>, vector<128x4xbf16>,
    %c0_112 = arith.constant 0 : index
    %c0_113 = arith.constant 0 : index
    %177 = vector.load %arg12[%c0_112, %c0_113] : memref<256x2048xbf16, #tpu.memory_space<vmem>>, vector<256x2048xbf16>
    %c0_114 = arith.constant 0 : index
    %c0_115 = arith.constant 0 : index
    %178 = vector.load %arg19[%c0_114, %c0_115] : memref<2048x4xbf16, #tpu.memory_space<vmem>>, vector<2048x4xbf16>
    %cst_116 = arith.constant dense<0.000000e+00> : vector<256x4xf32>
    %179 = tpu.matmul %177, %178, %cst_116 {dimension_numbers = #tpu.dot_dimension_numbers<[1], [0], [0], [1], [0, 0, 1, 1], [], []>} : vector<256x2048xbf16>, vector<2048x4xbf16>, vector<256x4xf32> -> vector<256x4xf32>
    %cst_117 = arith.constant dense<0.000000e+00> : vector<256xf32>
    %180 = vector.multi_reduction <add>, %179, %cst_117 [1] : vector<256x4xf32> to vector<256xf32>
    %181 = vector.shape_cast %180 : vector<256xf32> to vector<256x1xf32>
    %cst_118 = arith.constant 4.000000e+00 : f32
    %182 = vector.broadcast %cst_118 : f32 to vector<256x1xf32>
    %183 = arith.divf %181, %182 : vector<256x1xf32>
    %184 = vector.broadcast %183 : vector<256x1xf32> to vector<256x4xf32>
    %185 = arith.subf %179, %184 : vector<256x4xf32>
    %186 = arith.mulf %185, %185 : vector<256x4xf32>
    %cst_119 = arith.constant dense<0.000000e+00> : vector<256xf32>
    %187 = vector.multi_reduction <add>, %186, %cst_119 [1] : vector<256x4xf32> to vector<256xf32>
    %188 = vector.shape_cast %187 : vector<256xf32> to vector<256x1xf32>
    %cst_120 = arith.constant 4.000000e+00 : f32
    %189 = vector.broadcast %cst_120 : f32 to vector<256x1xf32>
    %190 = arith.divf %188, %189 : vector<256x1xf32>
    %cst_121 = arith.constant 9.99999974E-6 : f32
    %191 = vector.broadcast %cst_121 : f32 to vector<256x1xf32>
    %192 = arith.addf %190, %191 : vector<256x1xf32>
    %193 = math.rsqrt %192 : vector<256x1xf32>
    %194 = vector.broadcast %193 : vector<256x1xf32> to vector<256x4xf32>
    %195 = arith.mulf %185, %194 : vector<256x4xf32>
    %c0_122 = arith.constant 0 : index
    %c0_123 = arith.constant 0 : index
    %196 = vector.load %arg13[%c0_122, %c0_123] : memref<256x1xf32, #tpu.memory_space<vmem>>, vector<256x1xf32>
    %197 = vector.broadcast %196 : vector<256x1xf32> to vector<256x4xf32>
    %198 = arith.mulf %195, %197 : vector<256x4xf32>
    %c0_124 = arith.constant 0 : index
    %c0_125 = arith.constant 0 : index
    %199 = vector.load %arg14[%c0_124, %c0_125] : memref<256x1xf32, #tpu.memory_space<vmem>>, vector<256x1xf32>
    %200 = vector.broadcast %199 : vector<256x1xf32> to vector<256x4xf32>
    %201 = arith.addf %198, %200 : vector<256x4xf32>
    %cst_126 = arith.constant 0.000000e+00 : f32
    %202 = vector.broadcast %cst_126 : f32 to vector<256x4xf32>
    %203 = arith.cmpf ogt, %201, %202 : vector<256x4xf32>
    %cst_127 = arith.constant 2.000000e-01 : f32
    %204 = vector.broadcast %cst_127 : f32 to vector<256x4xf32>
    %205 = arith.mulf %204, %201 : vector<256x4xf32>
    %206 = arith.select %203, %201, %205 : vector<256x4xi1>, vector<256x4xf32>
    %c0_128 = arith.constant 0 : index
    %c0_129 = arith.constant 0 : index
    %207 = vector.load %arg15[%c0_128, %c0_129] : memref<256x4xf32, #tpu.memory_space<vmem>>, vector<256x4xf32>
    %208 = arith.mulf %206, %207 : vector<256x4xf32>
    %209 = vector.shape_cast %208 : vector<256x4xf32> to vector<4x64x4xf32>
    %cst_130 = arith.constant dense<0.000000e+00> : vector<4x64xf32>
    %210 = vector.multi_reduction <add>, %209, %cst_130 [2] : vector<4x64x4xf32> to vector<4x64xf32>
    %cst_131 = arith.constant dense<0.000000e+00> : vector<4xf32>
    %211 = vector.multi_reduction <add>, %210, %cst_131 [1] : vector<4x64xf32> to vector<4xf32>
    %212 = vector.shape_cast %211 : vector<4xf32> to vector<1x1x4xf32>
    %c0_132 = arith.constant 0 : index
    %c0_133 = arith.constant 0 : index
    %c0_134 = arith.constant 0 : index
    %213 = vector.load %arg16[%c0_132, %c0_133, %c0_134] : memref<1x1x4xf32, #tpu.memory_space<vmem>>, vector<1x1x4xf32>
    tpu.vector_store %arg16[%c0_132, %c0_133, %c0_134], %212 {strides = array<i32>} : memref<1x1x4xf32, #tpu.memory_space<vmem>>, vector<1x1x4xf32>,
    return
  }
  func.func @transform_0(%arg0: i32) -> (i32, i32, i32) {
    %c0_i32 = arith.constant 0 : i32
    %c0_i32_0 = arith.constant 0 : i32
    %c0_i32_1 = arith.constant 0 : i32
    return %arg0, %c0_i32, %c0_i32_0 : i32, i32, i32
  }
  func.func @transform_1(%arg0: i32) -> (i32, i32) {
    %c0_i32 = arith.constant 0 : i32
    %c0_i32_0 = arith.constant 0 : i32
    %c0_i32_1 = arith.constant 0 : i32
    return %c0_i32, %c0_i32_0 : i32, i32
  }
  func.func @transform_2(%arg0: i32) -> (i32, i32) {
    %c0_i32 = arith.constant 0 : i32
    %c0_i32_0 = arith.constant 0 : i32
    %c0_i32_1 = arith.constant 0 : i32
    return %c0_i32, %c0_i32_0 : i32, i32
  }
  func.func @transform_3(%arg0: i32) -> (i32, i32) {
    %c0_i32 = arith.constant 0 : i32
    %c0_i32_0 = arith.constant 0 : i32
    %c0_i32_1 = arith.constant 0 : i32
    return %c0_i32, %c0_i32_0 : i32, i32
  }
  func.func @transform_4(%arg0: i32) -> (i32, i32) {
    %c0_i32 = arith.constant 0 : i32
    %c0_i32_0 = arith.constant 0 : i32
    %c0_i32_1 = arith.constant 0 : i32
    return %c0_i32, %c0_i32_0 : i32, i32
  }
  func.func @transform_5(%arg0: i32) -> (i32, i32) {
    %c0_i32 = arith.constant 0 : i32
    %c0_i32_0 = arith.constant 0 : i32
    %c0_i32_1 = arith.constant 0 : i32
    return %c0_i32, %c0_i32_0 : i32, i32
  }
  func.func @transform_6(%arg0: i32) -> (i32, i32) {
    %c0_i32 = arith.constant 0 : i32
    %c0_i32_0 = arith.constant 0 : i32
    %c0_i32_1 = arith.constant 0 : i32
    return %c0_i32, %c0_i32_0 : i32, i32
  }
  func.func @transform_7(%arg0: i32) -> (i32, i32) {
    %c0_i32 = arith.constant 0 : i32
    %c0_i32_0 = arith.constant 0 : i32
    %c0_i32_1 = arith.constant 0 : i32
    return %c0_i32, %c0_i32_0 : i32, i32
  }
  func.func @transform_8(%arg0: i32) -> (i32, i32) {
    %c0_i32 = arith.constant 0 : i32
    %c0_i32_0 = arith.constant 0 : i32
    %c0_i32_1 = arith.constant 0 : i32
    return %c0_i32, %c0_i32_0 : i32, i32
  }
  func.func @transform_9(%arg0: i32) -> (i32, i32) {
    %c0_i32 = arith.constant 0 : i32
    %c0_i32_0 = arith.constant 0 : i32
    %c0_i32_1 = arith.constant 0 : i32
    return %c0_i32, %c0_i32_0 : i32, i32
  }
  func.func @transform_10(%arg0: i32) -> (i32, i32) {
    %c0_i32 = arith.constant 0 : i32
    %c0_i32_0 = arith.constant 0 : i32
    %c0_i32_1 = arith.constant 0 : i32
    return %c0_i32, %c0_i32_0 : i32, i32
  }
  func.func @transform_11(%arg0: i32) -> (i32, i32) {
    %c0_i32 = arith.constant 0 : i32
    %c0_i32_0 = arith.constant 0 : i32
    %c0_i32_1 = arith.constant 0 : i32
    return %c0_i32, %c0_i32_0 : i32, i32
  }
  func.func @transform_12(%arg0: i32) -> (i32, i32) {
    %c0_i32 = arith.constant 0 : i32
    %c0_i32_0 = arith.constant 0 : i32
    %c0_i32_1 = arith.constant 0 : i32
    return %c0_i32, %c0_i32_0 : i32, i32
  }
  func.func @transform_13(%arg0: i32) -> (i32, i32) {
    %c0_i32 = arith.constant 0 : i32
    %c0_i32_0 = arith.constant 0 : i32
    %c0_i32_1 = arith.constant 0 : i32
    return %c0_i32, %c0_i32_0 : i32, i32
  }
  func.func @transform_14(%arg0: i32) -> (i32, i32) {
    %c0_i32 = arith.constant 0 : i32
    %c0_i32_0 = arith.constant 0 : i32
    %c0_i32_1 = arith.constant 0 : i32
    return %c0_i32, %c0_i32_0 : i32, i32
  }
  func.func @transform_15(%arg0: i32) -> (i32, i32, i32) {
    %c0_i32 = arith.constant 0 : i32
    %c0_i32_0 = arith.constant 0 : i32
    %c0_i32_1 = arith.constant 0 : i32
    return %arg0, %c0_i32, %c0_i32_0 : i32, i32, i32
  }
}

</mosaic_0001>

<llo_original>
// kernel: a_call__.1
$region0: #{a_call__.1}
  #allocation0 [shape = 'u32[]', space=smem, size = 0x4, offset = 0x4, fixed_abs, tag = 'smem constant byte address 0x4 - core index']
  #allocation1 [shape = 'u32[144,128]{1,0:T(1,128)}', space=vmem, size = 0x12000, scoped, tag = 'internal scratch']
  #allocation2 [shape = 'bf16[512,64]{1,0:T(16,128)(2,1)}', space=vmem, size = 0x20000, scoped, tag = 'scratch operand']
  #allocation3 [shape = 'bf16[1024,16]{1,0:T(16,128)(2,1)}', space=vmem, size = 0x40000, scoped, tag = 'scratch operand']
  #allocation4 [shape = 'bf16[2048,4]{1,0:T(16,128)(2,1)}', space=vmem, size = 0x80000, scoped, tag = 'scratch operand']
  %s0 = inlined_call_operand.vmem [shape: bf16[2,256,256], index: 0, kind: input, shape index: {}]
  %s1 = inlined_call_operand.vmem [shape: bf16[32,256], index: 1, kind: input, shape index: {}]
  %s2 = inlined_call_operand.vmem [shape: bf16[256,1024], index: 2, kind: input, shape index: {}]
  %s3 = inlined_call_operand.vmem [shape: bf16[64,512], index: 3, kind: input, shape index: {}]
  %s4 = inlined_call_operand.vmem [shape: f32[64,1], index: 4, kind: input, shape index: {}]
  %s5 = inlined_call_operand.vmem [shape: f32[64,1], index: 5, kind: input, shape index: {}]
  %s6 = inlined_call_operand.vmem [shape: bf16[64,256], index: 6, kind: input, shape index: {}]
  %s7 = inlined_call_operand.vmem [shape: bf16[128,1024], index: 7, kind: input, shape index: {}]
  %s8 = inlined_call_operand.vmem [shape: f32[128,1], index: 8, kind: input, shape index: {}]
  %s9 = inlined_call_operand.vmem [shape: f32[128,1], index: 9, kind: input, shape index: {}]
  %s10 = inlined_call_operand.vmem [shape: bf16[16,64], index: 10, kind: input, shape index: {}]
  %s11 = inlined_call_operand.vmem [shape: bf16[256,2048], index: 11, kind: input, shape index: {}]
  %s12 = inlined_call_operand.vmem [shape: f32[256,1], index: 12, kind: input, shape index: {}]
  %s13 = inlined_call_operand.vmem [shape: f32[256,1], index: 13, kind: input, shape index: {}]
  %s14 = inlined_call_operand.vmem [shape: f32[256,4], index: 14, kind: input, shape index: {}]
  %s15 = inlined_call_operand.vmem [shape: f32[2,1,4], index: 15, kind: output, shape index: {}]
  %s16 = sld [smem:[#allocation0]]
  $region93: #{a_call__.1} parent=0
    _
  %s18 = ssub.s32 1, %s16
  %s19 = scalar_select 0, %s18, %s16
  loop: start=0, step=1, limit=4
  $region2: #{a_call__.1} parent=0 // loop_pre_header
    _
  $region3: #{a_call__.1} parent=0 // loop_header
    %s21 = sphi 0, %s25
    %p22 = scmp.ge.s32.totalorder %s21, 4
    %s31 = sphi 0, %s33
    %s34 = sphi 0, %s31
    %s35 = sphi 0, %s34
    %s51 = sphi 0, %s35
    %s55 = sphi 0, %s55
    %s57 = sphi 0, %s55
    %s58 = sphi 0, %s57
    %s72 = sphi 0, %s58
    %s76 = sphi 0, %s76
    %s78 = sphi 0, %s76
    %s79 = sphi 0, %s78
    %s93 = sphi 0, %s79
    %s97 = sphi 0, %s97
    %s99 = sphi 0, %s97
    %s100 = sphi 0, %s99
    %s114 = sphi 0, %s100
    %s118 = sphi 0, %s118
    %s120 = sphi 0, %s118
    %s121 = sphi 0, %s120
    %s135 = sphi 0, %s121
    %s139 = sphi 0, %s139
    %s141 = sphi 0, %s139
    %s142 = sphi 0, %s141
    %s156 = sphi 0, %s142
    %s160 = sphi 0, %s160
    %s162 = sphi 0, %s160
    %s163 = sphi 0, %s162
    %s177 = sphi 0, %s163
    %s181 = sphi 0, %s181
    %s183 = sphi 0, %s181
    %s184 = sphi 0, %s183
    %s198 = sphi 0, %s184
    %s202 = sphi 0, %s202
    %s204 = sphi 0, %s202
    %s205 = sphi 0, %s204
    %s219 = sphi 0, %s205
    %s223 = sphi 0, %s223
    %s225 = sphi 0, %s223
    %s226 = sphi 0, %s225
    %s240 = sphi 0, %s226
    %s244 = sphi 0, %s244
    %s246 = sphi 0, %s244
    %s247 = sphi 0, %s246
    %s261 = sphi 0, %s247
    %s265 = sphi 0, %s265
    %s267 = sphi 0, %s265
    %s268 = sphi 0, %s267
    %s282 = sphi 0, %s268
    %s286 = sphi 0, %s286
    %s288 = sphi 0, %s286
    %s289 = sphi 0, %s288
    %s303 = sphi 0, %s289
    %s307 = sphi 0, %s307
    %s309 = sphi 0, %s307
    %s310 = sphi 0, %s309
    %s324 = sphi 0, %s310
    %s328 = sphi 0, %s328
    %s330 = sphi 0, %s328
    %s331 = sphi 0, %s330
    %s345 = sphi 0, %s331
    %s351 = sphi 0, %s353
    %s354 = sphi 0, %s351
    %s355 = sphi 0, %s354
    %s371 = sphi 0, %s355
  $region4: #{a_call__.1} parent=0 // loop_header_branch
    %24 = sbr.rel (%p22) target = $region8
  $region5: #{a_call__.1} parent=0 // loop_body
    %s26 = ssub.s32 %s21, 1
    %s27 = ssub.s32 %s21, 2
    %s28 = sadd.s32 %s21, 1
    %s29 = ssub.s32 %s21, %s28
    %p30 = scmp.eq.s32.totalorder %s29, 0
    %s32 = sadd.s32 %s31, 1
    %s33 = scalar_select %p30, %s31, %s32
    %p36 = pneg %p30
    %p37 = scmp.eq.s32.totalorder %s21, 1
    %p38 = por %p36, %p37
    %p39 = scmp.ne.s32.totalorder %s31, %s34
    %p40 = scmp.eq.s32.totalorder %s21, 0
    %p41 = por %p39, %p40
    %p42 = scmp.ne.s32.totalorder %s31, %s34
    %p43 = scmp.eq.s32.totalorder %s26, 1
    %p44 = por %p42, %p43
    %p45 = scmp.ne.s32.totalorder %s34, %s35
    %p46 = scmp.eq.s32.totalorder %s26, 0
    %p47 = por %p45, %p46
    %p48 = scmp.ne.s32.totalorder %s34, %s35
    %p49 = scmp.eq.s32.totalorder %s27, 1
    %p50 = por %p48, %p49
    %p52 = scmp.ne.s32.totalorder %s35, %s51
    %p53 = scmp.eq.s32.totalorder %s27, 0
    %p54 = por %p52, %p53
    %s56 = sadd.s32 %s55, 1
    %p59 = scmp.eq.s32.totalorder %s21, 1
    %p60 = scmp.ne.s32.totalorder %s55, %s57
    %p61 = scmp.eq.s32.totalorder %s21, 0
    %p62 = por %p60, %p61
    %p63 = scmp.ne.s32.totalorder %s55, %s57
    %p64 = scmp.eq.s32.totalorder %s26, 1
    %p65 = por %p63, %p64
    %p66 = scmp.ne.s32.totalorder %s57, %s58
    %p67 = scmp.eq.s32.totalorder %s26, 0
    %p68 = por %p66, %p67
    %p69 = scmp.ne.s32.totalorder %s57, %s58
    %p70 = scmp.eq.s32.totalorder %s27, 1
    %p71 = por %p69, %p70
    %p73 = scmp.ne.s32.totalorder %s58, %s72
    %p74 = scmp.eq.s32.totalorder %s27, 0
    %p75 = por %p73, %p74
    %s77 = sadd.s32 %s76, 1
    %p80 = scmp.eq.s32.totalorder %s21, 1
    %p81 = scmp.ne.s32.totalorder %s76, %s78
    %p82 = scmp.eq.s32.totalorder %s21, 0
    %p83 = por %p81, %p82
    %p84 = scmp.ne.s32.totalorder %s76, %s78
    %p85 = scmp.eq.s32.totalorder %s26, 1
    %p86 = por %p84, %p85
    %p87 = scmp.ne.s32.totalorder %s78, %s79
    %p88 = scmp.eq.s32.totalorder %s26, 0
    %p89 = por %p87, %p88
    %p90 = scmp.ne.s32.totalorder %s78, %s79
    %p91 = scmp.eq.s32.totalorder %s27, 1
    %p92 = por %p90, %p91
    %p94 = scmp.ne.s32.totalorder %s79, %s93
    %p95 = scmp.eq.s32.totalorder %s27, 0
    %p96 = por %p94, %p95
    %s98 = sadd.s32 %s97, 1
    %p101 = scmp.eq.s32.totalorder %s21, 1
    %p102 = scmp.ne.s32.totalorder %s97, %s99
    %p103 = scmp.eq.s32.totalorder %s21, 0
    %p104 = por %p102, %p103
    %p105 = scmp.ne.s32.totalorder %s97, %s99
    %p106 = scmp.eq.s32.totalorder %s26, 1
    %p107 = por %p105, %p106
    %p108 = scmp.ne.s32.totalorder %s99, %s100
    %p109 = scmp.eq.s32.totalorder %s26, 0
    %p110 = por %p108, %p109
    %p111 = scmp.ne.s32.totalorder %s99, %s100
    %p112 = scmp.eq.s32.totalorder %s27, 1
    %p113 = por %p111, %p112
    %p115 = scmp.ne.s32.totalorder %s100, %s114
    %p116 = scmp.eq.s32.totalorder %s27, 0
    %p117 = por %p115, %p116
    %s119 = sadd.s32 %s118, 1
    %p122 = scmp.eq.s32.totalorder %s21, 1
    %p123 = scmp.ne.s32.totalorder %s118, %s120
    %p124 = scmp.eq.s32.totalorder %s21, 0
    %p125 = por %p123, %p124
    %p126 = scmp.ne.s32.totalorder %s118, %s120
    %p127 = scmp.eq.s32.totalorder %s26, 1
    %p128 = por %p126, %p127
    %p129 = scmp.ne.s32.totalorder %s120, %s121
    %p130 = scmp.eq.s32.totalorder %s26, 0
    %p131 = por %p129, %p130
    %p132 = scmp.ne.s32.totalorder %s120, %s121
    %p133 = scmp.eq.s32.totalorder %s27, 1
    %p134 = por %p132, %p133
    %p136 = scmp.ne.s32.totalorder %s121, %s135
    %p137 = scmp.eq.s32.totalorder %s27, 0
    %p138 = por %p136, %p137
    %s140 = sadd.s32 %s139, 1
    %p143 = scmp.eq.s32.totalorder %s21, 1
    %p144 = scmp.ne.s32.totalorder %s139, %s141
    %p145 = scmp.eq.s32.totalorder %s21, 0
    %p146 = por %p144, %p145
    %p147 = scmp.ne.s32.totalorder %s139, %s141
    %p148 = scmp.eq.s32.totalorder %s26, 1
    %p149 = por %p147, %p148
    %p150 = scmp.ne.s32.totalorder %s141, %s142
    %p151 = scmp.eq.s32.totalorder %s26, 0
    %p152 = por %p150, %p151
    %p153 = scmp.ne.s32.totalorder %s141, %s142
    %p154 = scmp.eq.s32.totalorder %s27, 1
    %p155 = por %p153, %p154
    %p157 = scmp.ne.s32.totalorder %s142, %s156
    %p158 = scmp.eq.s32.totalorder %s27, 0
    %p159 = por %p157, %p158
    %s161 = sadd.s32 %s160, 1
    %p164 = scmp.eq.s32.totalorder %s21, 1
    %p165 = scmp.ne.s32.totalorder %s160, %s162
    %p166 = scmp.eq.s32.totalorder %s21, 0
    %p167 = por %p165, %p166
    %p168 = scmp.ne.s32.totalorder %s160, %s162
    %p169 = scmp.eq.s32.totalorder %s26, 1
    %p170 = por %p168, %p169
    %p171 = scmp.ne.s32.totalorder %s162, %s163
    %p172 = scmp.eq.s32.totalorder %s26, 0
    %p173 = por %p171, %p172
    %p174 = scmp.ne.s32.totalorder %s162, %s163
    %p175 = scmp.eq.s32.totalorder %s27, 1
    %p176 = por %p174, %p175
    %p178 = scmp.ne.s32.totalorder %s163, %s177
    %p179 = scmp.eq.s32.totalorder %s27, 0
    %p180 = por %p178, %p179
    %s182 = sadd.s32 %s181, 1
    %p185 = scmp.eq.s32.totalorder %s21, 1
    %p186 = scmp.ne.s32.totalorder %s181, %s183
    %p187 = scmp.eq.s32.totalorder %s21, 0
    %p188 = por %p186, %p187
    %p189 = scmp.ne.s32.totalorder %s181, %s183
    %p190 = scmp.eq.s32.totalorder %s26, 1
    %p191 = por %p189, %p190
    %p192 = scmp.ne.s32.totalorder %s183, %s184
    %p193 = scmp.eq.s32.totalorder %s26, 0
    %p194 = por %p192, %p193
    %p195 = scmp.ne.s32.totalorder %s183, %s184
    %p196 = scmp.eq.s32.totalorder %s27, 1
    %p197 = por %p195, %p196
    %p199 = scmp.ne.s32.totalorder %s184, %s198
    %p200 = scmp.eq.s32.totalorder %s27, 0
    %p201 = por %p199, %p200
    %s203 = sadd.s32 %s202, 1
    %p206 = scmp.eq.s32.totalorder %s21, 1
    %p207 = scmp.ne.s32.totalorder %s202, %s204
    %p208 = scmp.eq.s32.totalorder %s21, 0
    %p209 = por %p207, %p208
    %p210 = scmp.ne.s32.totalorder %s202, %s204
    %p211 = scmp.eq.s32.totalorder %s26, 1
    %p212 = por %p210, %p211
    %p213 = scmp.ne.s32.totalorder %s204, %s205
    %p214 = scmp.eq.s32.totalorder %s26, 0
    %p215 = por %p213, %p214
    %p216 = scmp.ne.s32.totalorder %s204, %s205
    %p217 = scmp.eq.s32.totalorder %s27, 1
    %p218 = por %p216, %p217
    %p220 = scmp.ne.s32.totalorder %s205, %s219
    %p221 = scmp.eq.s32.totalorder %s27, 0
    %p222 = por %p220, %p221
    %s224 = sadd.s32 %s223, 1
    %p227 = scmp.eq.s32.totalorder %s21, 1
    %p228 = scmp.ne.s32.totalorder %s223, %s225
    %p229 = scmp.eq.s32.totalorder %s21, 0
    %p230 = por %p228, %p229
    %p231 = scmp.ne.s32.totalorder %s223, %s225
    %p232 = scmp.eq.s32.totalorder %s26, 1
    %p233 = por %p231, %p232
    %p234 = scmp.ne.s32.totalorder %s225, %s226
    %p235 = scmp.eq.s32.totalorder %s26, 0
    %p236 = por %p234, %p235
    %p237 = scmp.ne.s32.totalorder %s225, %s226
    %p238 = scmp.eq.s32.totalorder %s27, 1
    %p239 = por %p237, %p238
    %p241 = scmp.ne.s32.totalorder %s226, %s240
    %p242 = scmp.eq.s32.totalorder %s27, 0
    %p243 = por %p241, %p242
    %s245 = sadd.s32 %s244, 1
    %p248 = scmp.eq.s32.totalorder %s21, 1
    %p249 = scmp.ne.s32.totalorder %s244, %s246
    %p250 = scmp.eq.s32.totalorder %s21, 0
    %p251 = por %p249, %p250
    %p252 = scmp.ne.s32.totalorder %s244, %s246
    %p253 = scmp.eq.s32.totalorder %s26, 1
    %p254 = por %p252, %p253
    %p255 = scmp.ne.s32.totalorder %s246, %s247
    %p256 = scmp.eq.s32.totalorder %s26, 0
    %p257 = por %p255, %p256
    %p258 = scmp.ne.s32.totalorder %s246, %s247
    %p259 = scmp.eq.s32.totalorder %s27, 1
    %p260 = por %p258, %p259
    %p262 = scmp.ne.s32.totalorder %s247, %s261
    %p263 = scmp.eq.s32.totalorder %s27, 0
    %p264 = por %p262, %p263
    %s266 = sadd.s32 %s265, 1
    %p269 = scmp.eq.s32.totalorder %s21, 1
    %p270 = scmp.ne.s32.totalorder %s265, %s267
    %p271 = scmp.eq.s32.totalorder %s21, 0
    %p272 = por %p270, %p271
    %p273 = scmp.ne.s32.totalorder %s265, %s267
    %p274 = scmp.eq.s32.totalorder %s26, 1
    %p275 = por %p273, %p274
    %p276 = scmp.ne.s32.totalorder %s267, %s268
    %p277 = scmp.eq.s32.totalorder %s26, 0
    %p278 = por %p276, %p277
    %p279 = scmp.ne.s32.totalorder %s267, %s268
    %p280 = scmp.eq.s32.totalorder %s27, 1
    %p281 = por %p279, %p280
    %p283 = scmp.ne.s32.totalorder %s268, %s282
    %p284 = scmp.eq.s32.totalorder %s27, 0
    %p285 = por %p283, %p284
    %s287 = sadd.s32 %s286, 1
    %p290 = scmp.eq.s32.totalorder %s21, 1
    %p291 = scmp.ne.s32.totalorder %s286, %s288
    %p292 = scmp.eq.s32.totalorder %s21, 0
    %p293 = por %p291, %p292
    %p294 = scmp.ne.s32.totalorder %s286, %s288
    %p295 = scmp.eq.s32.totalorder %s26, 1
    %p296 = por %p294, %p295
    %p297 = scmp.ne.s32.totalorder %s288, %s289
    %p298 = scmp.eq.s32.totalorder %s26, 0
    %p299 = por %p297, %p298
    %p300 = scmp.ne.s32.totalorder %s288, %s289
    %p301 = scmp.eq.s32.totalorder %s27, 1
    %p302 = por %p300, %p301
    %p304 = scmp.ne.s32.totalorder %s289, %s303
    %p305 = scmp.eq.s32.totalorder %s27, 0
    %p306 = por %p304, %p305
    %s308 = sadd.s32 %s307, 1
    %p311 = scmp.eq.s32.totalorder %s21, 1
    %p312 = scmp.ne.s32.totalorder %s307, %s309
    %p313 = scmp.eq.s32.totalorder %s21, 0
    %p314 = por %p312, %p313
    %p315 = scmp.ne.s32.totalorder %s307, %s309
    %p316 = scmp.eq.s32.totalorder %s26, 1
    %p317 = por %p315, %p316
    %p318 = scmp.ne.s32.totalorder %s309, %s310
    %p319 = scmp.eq.s32.totalorder %s26, 0
    %p320 = por %p318, %p319
    %p321 = scmp.ne.s32.totalorder %s309, %s310
    %p322 = scmp.eq.s32.totalorder %s27, 1
    %p323 = por %p321, %p322
    %p325 = scmp.ne.s32.totalorder %s310, %s324
    %p326 = scmp.eq.s32.totalorder %s27, 0
    %p327 = por %p325, %p326
    %s329 = sadd.s32 %s328, 1
    %p332 = scmp.eq.s32.totalorder %s21, 1
    %p333 = scmp.ne.s32.totalorder %s328, %s330
    %p334 = scmp.eq.s32.totalorder %s21, 0
    %p335 = por %p333, %p334
    %p336 = scmp.ne.s32.totalorder %s328, %s330
    %p337 = scmp.eq.s32.totalorder %s26, 1
    %p338 = por %p336, %p337
    %p339 = scmp.ne.s32.totalorder %s330, %s331
    %p340 = scmp.eq.s32.totalorder %s26, 0
    %p341 = por %p339, %p340
    %p342 = scmp.ne.s32.totalorder %s330, %s331
    %p343 = scmp.eq.s32.totalorder %s27, 1
    %p344 = por %p342, %p343
    %p346 = scmp.ne.s32.totalorder %s331, %s345
    %p347 = scmp.eq.s32.totalorder %s27, 0
    %p348 = por %p346, %p347
    %s349 = ssub.s32 %s21, %s28
    %p350 = scmp.eq.s32.totalorder %s349, 0
    %s352 = sadd.s32 %s351, 1
    %s353 = scalar_select %p350, %s351, %s352
    %p356 = pneg %p350
    %p357 = scmp.eq.s32.totalorder %s21, 1
    %p358 = por %p356, %p357
    %p359 = scmp.ne.s32.totalorder %s351, %s354
    %p360 = scmp.eq.s32.totalorder %s21, 0
    %p361 = por %p359, %p360
    %p362 = scmp.ne.s32.totalorder %s351, %s354
    %p363 = scmp.eq.s32.totalorder %s26, 1
    %p364 = por %p362, %p363
    %p365 = scmp.ne.s32.totalorder %s354, %s355
    %p366 = scmp.eq.s32.totalorder %s26, 0
    %p367 = por %p365, %p366
    %p368 = scmp.ne.s32.totalorder %s354, %s355
    %p369 = scmp.eq.s32.totalorder %s27, 1
    %p370 = por %p368, %p369
    %p372 = scmp.ne.s32.totalorder %s355, %s371
    %p373 = scmp.eq.s32.totalorder %s27, 0
    %p374 = por %p372, %p373
    %p375 = scmp.le.s32.totalorder 1, %s21
    %p376 = scmp.lt.s32.totalorder %s21, 3
    %p377 = pnand %p375, %p376
    %p378 = pneg %p377
    // Predicated region
    $region9: #{a_call__.1} parent=5 // pred_check
      _
    $region10: #{a_call__.1} parent=5 // pred_check_branch
      %380 = sbr.rel (%p377) target = $region12
    $region11: #{a_call__.1} parent=5 // pred_region
      %s381 = ssub.s32 %s21, 1
      // Predicated region
      $region13: #{a_call__.1} parent=11 // pred_check
        %p382 = pneg %p68
      $region14: #{a_call__.1} parent=11 // pred_check_branch
        %384 = sbr.rel (%p382) target = $region16
      $region15: #{a_call__.1} parent=11 // pred_region
        _
      $region16: #{a_call__.1} parent=11 // pred_fallthru
        _
      // Predicated region
      $region17: #{a_call__.1} parent=11 // pred_check
        %p385 = pneg %p89
      $region18: #{a_call__.1} parent=11 // pred_check_branch
        %387 = sbr.rel (%p385) target = $region20
      $region19: #{a_call__.1} parent=11 // pred_region
        _
      $region20: #{a_call__.1} parent=11 // pred_fallthru
        _
      // Predicated region
      $region21: #{a_call__.1} parent=11 // pred_check
        %p388 = pneg %p110
      $region22: #{a_call__.1} parent=11 // pred_check_branch
        %390 = sbr.rel (%p388) target = $region24
      $region23: #{a_call__.1} parent=11 // pred_region
        _
      $region24: #{a_call__.1} parent=11 // pred_fallthru
        _
      // Predicated region
      $region25: #{a_call__.1} parent=11 // pred_check
        %p391 = pneg %p131
      $region26: #{a_call__.1} parent=11 // pred_check_branch
        %393 = sbr.rel (%p391) target = $region28
      $region27: #{a_call__.1} parent=11 // pred_region
        _
      $region28: #{a_call__.1} parent=11 // pred_fallthru
        _
      // Predicated region
      $region29: #{a_call__.1} parent=11 // pred_check
        %p394 = pneg %p152
      $region30: #{a_call__.1} parent=11 // pred_check_branch
        %396 = sbr.rel (%p394) target = $region32
      $region31: #{a_call__.1} parent=11 // pred_region
        _
      $region32: #{a_call__.1} parent=11 // pred_fallthru
        _
      // Predicated region
      $region33: #{a_call__.1} parent=11 // pred_check
        %p397 = pneg %p173
      $region34: #{a_call__.1} parent=11 // pred_check_branch
        %399 = sbr.rel (%p397) target = $region36
      $region35: #{a_call__.1} parent=11 // pred_region
        _
      $region36: #{a_call__.1} parent=11 // pred_fallthru
        _
      // Predicated region
      $region37: #{a_call__.1} parent=11 // pred_check
        %p400 = pneg %p194
      $region38: #{a_call__.1} parent=11 // pred_check_branch
        %402 = sbr.rel (%p400) target = $region40
      $region39: #{a_call__.1} parent=11 // pred_region
        _
      $region40: #{a_call__.1} parent=11 // pred_fallthru
        _
      // Predicated region
      $region41: #{a_call__.1} parent=11 // pred_check
        %p403 = pneg %p215
      $region42: #{a_call__.1} parent=11 // pred_check_branch
        %405 = sbr.rel (%p403) target = $region44
      $region43: #{a_call__.1} parent=11 // pred_region
        _
      $region44: #{a_call__.1} parent=11 // pred_fallthru
        _
      // Predicated region
      $region45: #{a_call__.1} parent=11 // pred_check
        %p406 = pneg %p236
      $region46: #{a_call__.1} parent=11 // pred_check_branch
        %408 = sbr.rel (%p406) target = $region48
      $region47: #{a_call__.1} parent=11 // pred_region
        _
      $region48: #{a_call__.1} parent=11 // pred_fallthru
        _
      // Predicated region
      $region49: #{a_call__.1} parent=11 // pred_check
        %p409 = pneg %p257
      $region50: #{a_call__.1} parent=11 // pred_check_branch
        %411 = sbr.rel (%p409) target = $region52
      $region51: #{a_call__.1} parent=11 // pred_region
        _
      $region52: #{a_call__.1} parent=11 // pred_fallthru
        _
      // Predicated region
      $region53: #{a_call__.1} parent=11 // pred_check
        %p412 = pneg %p278
      $region54: #{a_call__.1} parent=11 // pred_check_branch
        %414 = sbr.rel (%p412) target = $region56
      $region55: #{a_call__.1} parent=11 // pred_region
        _
      $region56: #{a_call__.1} parent=11 // pred_fallthru
        _
      // Predicated region
      $region57: #{a_call__.1} parent=11 // pred_check
        %p415 = pneg %p299
      $region58: #{a_call__.1} parent=11 // pred_check_branch
        %417 = sbr.rel (%p415) target = $region60
      $region59: #{a_call__.1} parent=11 // pred_region
        _
      $region60: #{a_call__.1} parent=11 // pred_fallthru
        _
      // Predicated region
      $region61: #{a_call__.1} parent=11 // pred_check
        %p418 = pneg %p320
      $region62: #{a_call__.1} parent=11 // pred_check_branch
        %420 = sbr.rel (%p418) target = $region64
      $region63: #{a_call__.1} parent=11 // pred_region
        _
      $region64: #{a_call__.1} parent=11 // pred_fallthru
        _
      // Predicated region
      $region65: #{a_call__.1} parent=11 // pred_check
        %p421 = pneg %p341
      $region66: #{a_call__.1} parent=11 // pred_check_branch
        %423 = sbr.rel (%p421) target = $region68
      $region67: #{a_call__.1} parent=11 // pred_region
        _
      $region68: #{a_call__.1} parent=11 // pred_fallthru
        _
    $region12: #{a_call__.1} parent=5 // pred_fallthru
      _
    %p424 = scmp.lt.s32.totalorder %s21, 2
    // Predicated region
    $region69: #{a_call__.1} parent=5 // pred_check
      %p425 = pneg %p424
    $region70: #{a_call__.1} parent=5 // pred_check_branch
      %427 = sbr.rel (%p425) target = $region72
    $region71: #{a_call__.1} parent=5 // pred_region
      // Predicated region
      $region73: #{a_call__.1} parent=71 // pred_check
        %p428 = pneg %p41
      $region74: #{a_call__.1} parent=71 // pred_check_branch
        %430 = sbr.rel (%p428) target = $region76
      $region75: #{a_call__.1} parent=71 // pred_region
        %p431 = scmp.lt.s32.totalorder %s21, 1
        %s432 = scalar_select %p431, %s21, 1
        %s433 = smul.addr %s432, 64
        %s434 = smul.addr %s433, 4
        %s435 = scalar_lea.vmem %s0, %s434
      $region76: #{a_call__.1} parent=71 // pred_fallthru
        _
    $region72: #{a_call__.1} parent=5 // pred_fallthru
      _
    %p436 = scmp.le.s32.totalorder 1, %s21
    %p437 = scmp.lt.s32.totalorder %s21, 3
    %p438 = pnand %p436, %p437
    %p439 = pneg %p438
    // Predicated region
    $region77: #{a_call__.1} parent=5 // pred_check
      _
    $region78: #{a_call__.1} parent=5 // pred_check_branch
      %441 = sbr.rel (%p438) target = $region80
    $region79: #{a_call__.1} parent=5 // pred_region
      %s442 = ssub.s32 %s21, 1
      %p443 = scmp.lt.s32.totalorder %s26, 1
      %s444 = scalar_select %p443, %s26, 1
      %s445 = smul.addr %s444, 64
      %s446 = smul.addr %s445, 4
      %s447 = scalar_lea.vmem %s0, %s446
      %p448 = pneg %p47
      %p449 = pneg %p44
      %p450 = pneg %p68
      %p451 = pneg %p65
      %p452 = pneg %p89
      %p453 = pneg %p86
      %p454 = pneg %p110
      %p455 = pneg %p107
      %p456 = pneg %p131
      %p457 = pneg %p128
      %p458 = pneg %p152
      %p459 = pneg %p149
      %p460 = pneg %p173
      %p461 = pneg %p170
      %p462 = pneg %p194
      %p463 = pneg %p191
      %p464 = pneg %p215
      %p465 = pneg %p212
      %p466 = pneg %p236
      %p467 = pneg %p233
      %p468 = pneg %p257
      %p469 = pneg %p254
      %p470 = pneg %p278
      %p471 = pneg %p275
      %p472 = pneg %p299
      %p473 = pneg %p296
      %p474 = pneg %p320
      %p475 = pneg %p317
      %p476 = pneg %p341
      %p477 = pneg %p338
      %p478 = pneg %p367
      %p479 = pneg %p364
      %p480 = scmp.lt.s32.totalorder %s26, 1
      %s481 = scalar_select %p480, %s26, 1
      %s482 = scalar_lea.vmem %s15, %s481
      %p483 = scmp.lt.s32.totalorder %s26, 1
      %s484 = scalar_select %p483, %s26, 1
      %s485 = smul.addr %s484, 64
      %s486 = smul.addr %s485, 4
      %s487 = scalar_lea.vmem %s0, %s486
      %p488 = scmp.lt.s32.totalorder %s26, 1
      %s489 = scalar_select %p488, %s26, 1
      %s490 = scalar_lea.vmem %s15, %s489
      %v492 = vld [vmem:[%s1] sm:$0xff]
      %v493 = vld [vmem:[%s1 + $0x8] sm:$0xff]
      %v494 = vld [vmem:[%s1 + $0x10] sm:$0xff]
      %v495 = vld [vmem:[%s1 + $0x18] sm:$0xff]
      %v496 = vld [vmem:[%s487] sm:$0xff]
      %v497 = vld [vmem:[%s487 + $0x8] sm:$0xff]
      %v498 = vld [vmem:[%s487 + $0x10] sm:$0xff]
      %v499 = vld [vmem:[%s487 + $0x18] sm:$0xff]
      %v500 = vld [vmem:[%s487 + $0x20] sm:$0xff]
      %v501 = vld [vmem:[%s487 + $0x28] sm:$0xff]
      %v502 = vld [vmem:[%s487 + $0x30] sm:$0xff]
      %v503 = vld [vmem:[%s487 + $0x38] sm:$0xff]
      %v504 = vld [vmem:[%s487 + $0x40] sm:$0xff]
      %v505 = vld [vmem:[%s487 + $0x48] sm:$0xff]
      %v506 = vld [vmem:[%s487 + $0x50] sm:$0xff]
      %v507 = vld [vmem:[%s487 + $0x58] sm:$0xff]
      %v508 = vld [vmem:[%s487 + $0x60] sm:$0xff]
      %v509 = vld [vmem:[%s487 + $0x68] sm:$0xff]
      %v510 = vld [vmem:[%s487 + $0x70] sm:$0xff]
      %v511 = vld [vmem:[%s487 + $0x78] sm:$0xff]
      %v512 = vld [vmem:[%s487 + $0x80] sm:$0xff]
      %v513 = vld [vmem:[%s487 + $0x88] sm:$0xff]
      %v514 = vld [vmem:[%s487 + $0x90] sm:$0xff]
      %v515 = vld [vmem:[%s487 + $0x98] sm:$0xff]
      %v516 = vld [vmem:[%s487 + $0xa0] sm:$0xff]
      %v517 = vld [vmem:[%s487 + $0xa8] sm:$0xff]
      %v518 = vld [vmem:[%s487 + $0xb0] sm:$0xff]
      %v519 = vld [vmem:[%s487 + $0xb8] sm:$0xff]
      %v520 = vld [vmem:[%s487 + $0xc0] sm:$0xff]
      %v521 = vld [vmem:[%s487 + $0xc8] sm:$0xff]
      %v522 = vld [vmem:[%s487 + $0xd0] sm:$0xff]
      %v523 = vld [vmem:[%s487 + $0xd8] sm:$0xff]
      %v524 = vld [vmem:[%s487 + $0xe0] sm:$0xff]
      %v525 = vld [vmem:[%s487 + $0xe8] sm:$0xff]
      %v526 = vld [vmem:[%s487 + $0xf0] sm:$0xff]
      %v527 = vld [vmem:[%s487 + $0xf8] sm:$0xff]
      %v532 = vunpack.c.l.b16 %v492
      %v533 = vunpack.c.h.b16 %v492
      %v534 = vunpack.c.l.b16 %v493
      %v535 = vunpack.c.h.b16 %v493
      %v536 = vunpack.c.l.b16 %v494
      %v537 = vunpack.c.h.b16 %v494
      %v538 = vunpack.c.l.b16 %v495
      %v539 = vunpack.c.h.b16 %v495
      %v540 = vpack.c.b16 %v534, %v532
      %v541 = vpack.c.b16 %v535, %v533
      %v542 = vpack.c.b16 %v538, %v536
      %v543 = vpack.c.b16 %v539, %v537
      %v580 = vunpack.c.l.b16 %v496
      %v581 = vunpack.c.h.b16 %v496
      %v582 = vunpack.c.l.b16 %v497
      %v583 = vunpack.c.h.b16 %v497
      %v584 = vunpack.c.l.b16 %v498
      %v585 = vunpack.c.h.b16 %v498
      %v586 = vunpack.c.l.b16 %v499
      %v587 = vunpack.c.h.b16 %v499
      %v588 = vunpack.c.l.b16 %v500
      %v589 = vunpack.c.h.b16 %v500
      %v590 = vunpack.c.l.b16 %v501
      %v591 = vunpack.c.h.b16 %v501
      %v592 = vunpack.c.l.b16 %v502
      %v593 = vunpack.c.h.b16 %v502
      %v594 = vunpack.c.l.b16 %v503
      %v595 = vunpack.c.h.b16 %v503
      %v596 = vunpack.c.l.b16 %v504
      %v597 = vunpack.c.h.b16 %v504
      %v598 = vunpack.c.l.b16 %v505
      %v599 = vunpack.c.h.b16 %v505
      %v600 = vunpack.c.l.b16 %v506
      %v601 = vunpack.c.h.b16 %v506
      %v602 = vunpack.c.l.b16 %v507
      %v603 = vunpack.c.h.b16 %v507
      %v604 = vunpack.c.l.b16 %v508
      %v605 = vunpack.c.h.b16 %v508
      %v606 = vunpack.c.l.b16 %v509
      %v607 = vunpack.c.h.b16 %v509
      %v608 = vunpack.c.l.b16 %v510
      %v609 = vunpack.c.h.b16 %v510
      %v610 = vunpack.c.l.b16 %v511
      %v611 = vunpack.c.h.b16 %v511
      %v612 = vunpack.c.l.b16 %v512
      %v613 = vunpack.c.h.b16 %v512
      %v614 = vunpack.c.l.b16 %v513
      %v615 = vunpack.c.h.b16 %v513
      %v616 = vunpack.c.l.b16 %v514
      %v617 = vunpack.c.h.b16 %v514
      %v618 = vunpack.c.l.b16 %v515
      %v619 = vunpack.c.h.b16 %v515
      %v620 = vunpack.c.l.b16 %v516
      %v621 = vunpack.c.h.b16 %v516
      %v622 = vunpack.c.l.b16 %v517
      %v623 = vunpack.c.h.b16 %v517
      %v624 = vunpack.c.l.b16 %v518
      %v625 = vunpack.c.h.b16 %v518
      %v626 = vunpack.c.l.b16 %v519
      %v627 = vunpack.c.h.b16 %v519
      %v628 = vunpack.c.l.b16 %v520
      %v629 = vunpack.c.h.b16 %v520
      %v630 = vunpack.c.l.b16 %v521
      %v631 = vunpack.c.h.b16 %v521
      %v632 = vunpack.c.l.b16 %v522
      %v633 = vunpack.c.h.b16 %v522
      %v634 = vunpack.c.l.b16 %v523
      %v635 = vunpack.c.h.b16 %v523
      %v636 = vunpack.c.l.b16 %v524
      %v637 = vunpack.c.h.b16 %v524
      %v638 = vunpack.c.l.b16 %v525
      %v639 = vunpack.c.h.b16 %v525
      %v640 = vunpack.c.l.b16 %v526
      %v641 = vunpack.c.h.b16 %v526
      %v642 = vunpack.c.l.b16 %v527
      %v643 = vunpack.c.h.b16 %v527
      %v644 = vpack.c.b16 %v582, %v580
      %v645 = vpack.c.b16 %v583, %v581
      %v646 = vpack.c.b16 %v586, %v584
      %v647 = vpack.c.b16 %v587, %v585
      %v648 = vpack.c.b16 %v590, %v588
      %v649 = vpack.c.b16 %v591, %v589
      %v650 = vpack.c.b16 %v594, %v592
      %v651 = vpack.c.b16 %v595, %v593
      %v652 = vpack.c.b16 %v598, %v596
      %v653 = vpack.c.b16 %v599, %v597
      %v654 = vpack.c.b16 %v602, %v600
      %v655 = vpack.c.b16 %v603, %v601
      %v656 = vpack.c.b16 %v606, %v604
      %v657 = vpack.c.b16 %v607, %v605
      %v658 = vpack.c.b16 %v610, %v608
      %v659 = vpack.c.b16 %v611, %v609
      %v660 = vpack.c.b16 %v614, %v612
      %v661 = vpack.c.b16 %v615, %v613
      %v662 = vpack.c.b16 %v618, %v616
      %v663 = vpack.c.b16 %v619, %v617
      %v664 = vpack.c.b16 %v622, %v620
      %v665 = vpack.c.b16 %v623, %v621
      %v666 = vpack.c.b16 %v626, %v624
      %v667 = vpack.c.b16 %v627, %v625
      %v668 = vpack.c.b16 %v630, %v628
      %v669 = vpack.c.b16 %v631, %v629
      %v670 = vpack.c.b16 %v634, %v632
      %v671 = vpack.c.b16 %v635, %v633
      %v672 = vpack.c.b16 %v638, %v636
      %v673 = vpack.c.b16 %v639, %v637
      %v674 = vpack.c.b16 %v642, %v640
      %v675 = vpack.c.b16 %v643, %v641
      %708 = vmatprep.subr.bf16.mxu0 %v645
      %709 = vmatpush1.bf16.msra.mxu0 %v644
      %710 = vmatprep.subr.bf16.mxu0 %v647
      %711 = vmatpush1.bf16.msra.mxu0 %v646
      %712 = vmatprep.subr.bf16.mxu0 %v649
      %713 = vmatpush1.bf16.msra.mxu0 %v648
      %714 = vmatprep.subr.bf16.mxu0 %v651
      %715 = vmatpush1.bf16.msra.mxu0 %v650
      %716 = vmatprep.subr.bf16.mxu0 %v653
      %717 = vmatpush1.bf16.msra.mxu0 %v652
      %718 = vmatprep.subr.bf16.mxu0 %v655
      %719 = vmatpush1.bf16.msra.mxu0 %v654
      %720 = vmatprep.subr.bf16.mxu0 %v657
      %721 = vmatpush1.bf16.msra.mxu0 %v656
      %722 = vmatprep.subr.bf16.mxu0 %v659
      %723 = vmatpush1.bf16.msra.mxu0 %v658
      %724 = vmatprep.subr.bf16.mxu0 %v661
      %725 = vmatpush1.bf16.msra.mxu0 %v660
      %726 = vmatprep.subr.bf16.mxu0 %v663
      %727 = vmatpush1.bf16.msra.mxu0 %v662
      %728 = vmatprep.subr.bf16.mxu0 %v665
      %729 = vmatpush1.bf16.msra.mxu0 %v664
      %730 = vmatprep.subr.bf16.mxu0 %v667
      %731 = vmatpush1.bf16.msra.mxu0 %v666
      %732 = vmatprep.subr.bf16.mxu0 %v669
      %733 = vmatpush1.bf16.msra.mxu0 %v668
      %734 = vmatprep.subr.bf16.mxu0 %v671
      %735 = vmatpush1.bf16.msra.mxu0 %v670
      %736 = vmatprep.subr.bf16.mxu0 %v673
      %737 = vmatpush1.bf16.msra.mxu0 %v672
      %738 = vmatprep.subr.bf16.mxu0 %v675
      %739 = vmatpush1.bf16.msra.mxu0 %v674
      %740 = vmatprep.mubr.bf16.mxu0 %v541
      %741 = vmatmul.mubr.bf16.gmra.mrb[0].mxu0 %v540
      %v742 = vpop.f32.mrb[0].mxu0
      %v743 = vadd.f32 0.0, %v742
      %v744 = vpop.f32.mrb[0].mxu0
      %v745 = vadd.f32 0.0, %v744
      %v746 = vpop.f32.mrb[0].mxu0
      %v747 = vadd.f32 0.0, %v746
      %v748 = vpop.f32.mrb[0].mxu0
      %v749 = vadd.f32 0.0, %v748
      %750 = vmatprep.mubr.bf16.mxu0 %v543
      %751 = vmatmul.mubr.bf16.gmra.mrb[0].mxu0 %v542
      %v752 = vpop.f32.mrb[0].mxu0
      %v753 = vadd.f32 0.0, %v752
      %v754 = vpop.f32.mrb[0].mxu0
      %v755 = vadd.f32 0.0, %v754
      %v756 = vpop.f32.mrb[0].mxu0
      %v757 = vadd.f32 0.0, %v756
      %v758 = vpop.f32.mrb[0].mxu0
      %v759 = vadd.f32 0.0, %v758
      %760 = vdwg.mxu0
      %vm761 = vcmp.gt.f32.partialorder %v743, 0.0
      %vm762 = vcmp.gt.f32.partialorder %v745, 0.0
      %vm763 = vcmp.gt.f32.partialorder %v747, 0.0
      %vm764 = vcmp.gt.f32.partialorder %v749, 0.0
      %vm765 = vcmp.gt.f32.partialorder %v753, 0.0
      %vm766 = vcmp.gt.f32.partialorder %v755, 0.0
      %vm767 = vcmp.gt.f32.partialorder %v757, 0.0
      %vm768 = vcmp.gt.f32.partialorder %v759, 0.0
      %v769 = vmul.f32 %v743, 0.2
      %v770 = vmul.f32 %v745, 0.2
      %v771 = vmul.f32 %v747, 0.2
      %v772 = vmul.f32 %v749, 0.2
      %v773 = vmul.f32 %v753, 0.2
      %v774 = vmul.f32 %v755, 0.2
      %v775 = vmul.f32 %v757, 0.2
      %v776 = vmul.f32 %v759, 0.2
      %v777 = vsel %vm761, %v743, %v769
      %v778 = vsel %vm762, %v745, %v770
      %v779 = vsel %vm763, %v747, %v771
      %v780 = vsel %vm764, %v749, %v772
      %v781 = vsel %vm765, %v753, %v773
      %v782 = vsel %vm766, %v755, %v774
      %v783 = vsel %vm767, %v757, %v775
      %v784 = vsel %vm768, %v759, %v776
      %v785 = vpack.c.bf16 %v779, %v777
      %v786 = vpack.c.bf16 %v780, %v778
      %v787 = vpack.c.bf16 %v783, %v781
      %v788 = vpack.c.bf16 %v784, %v782
      %v789 = vld [vmem:[%s2] sm:$0xff]
      %v790 = vld [vmem:[%s2 + $0x8] sm:$0xff]
      %v791 = vld [vmem:[%s2 + $0x10] sm:$0xff]
      %v792 = vld [vmem:[%s2 + $0x18] sm:$0xff]
      %v793 = vld [vmem:[%s2 + $0x20] sm:$0xff]
      %v794 = vld [vmem:[%s2 + $0x28] sm:$0xff]
      %v795 = vld [vmem:[%s2 + $0x30] sm:$0xff]
      %v796 = vld [vmem:[%s2 + $0x38] sm:$0xff]
      %v797 = vld [vmem:[%s2 + $0x40] sm:$0xff]
      %v798 = vld [vmem:[%s2 + $0x48] sm:$0xff]
      %v799 = vld [vmem:[%s2 + $0x50] sm:$0xff]
      %v800 = vld [vmem:[%s2 + $0x58] sm:$0xff]
      %v801 = vld [vmem:[%s2 + $0x60] sm:$0xff]
      %v802 = vld [vmem:[%s2 + $0x68] sm:$0xff]
      %v803 = vld [vmem:[%s2 + $0x70] sm:$0xff]
      %v804 = vld [vmem:[%s2 + $0x78] sm:$0xff]
      %v805 = vld [vmem:[%s2 + $0x80] sm:$0xff]
      %v806 = vld [vmem:[%s2 + $0x88] sm:$0xff]
      %v807 = vld [vmem:[%s2 + $0x90] sm:$0xff]
      %v808 = vld [vmem:[%s2 + $0x98] sm:$0xff]
      %v809 = vld [vmem:[%s2 + $0xa0] sm:$0xff]
      %v810 = vld [vmem:[%s2 + $0xa8] sm:$0xff]
      %v811 = vld [vmem:[%s2 + $0xb0] sm:$0xff]
      %v812 = vld [vmem:[%s2 + $0xb8] sm:$0xff]
      %v813 = vld [vmem:[%s2 + $0xc0] sm:$0xff]
      %v814 = vld [vmem:[%s2 + $0xc8] sm:$0xff]
      %v815 = vld [vmem:[%s2 + $0xd0] sm:$0xff]
      %v816 = vld [vmem:[%s2 + $0xd8] sm:$0xff]
      %v817 = vld [vmem:[%s2 + $0xe0] sm:$0xff]
      %v818 = vld [vmem:[%s2 + $0xe8] sm:$0xff]
      %v819 = vld [vmem:[%s2 + $0xf0] sm:$0xff]
      %v820 = vld [vmem:[%s2 + $0xf8] sm:$0xff]
      %v821 = vld [vmem:[%s2 + $0x100] sm:$0xff]
      %v822 = vld [vmem:[%s2 + $0x108] sm:$0xff]
      %v823 = vld [vmem:[%s2 + $0x110] sm:$0xff]
      %v824 = vld [vmem:[%s2 + $0x118] sm:$0xff]
      %v825 = vld [vmem:[%s2 + $0x120] sm:$0xff]
      %v826 = vld [vmem:[%s2 + $0x128] sm:$0xff]
      %v827 = vld [vmem:[%s2 + $0x130] sm:$0xff]
      %v828 = vld [vmem:[%s2 + $0x138] sm:$0xff]
      %v829 = vld [vmem:[%s2 + $0x140] sm:$0xff]
      %v830 = vld [vmem:[%s2 + $0x148] sm:$0xff]
      %v831 = vld [vmem:[%s2 + $0x150] sm:$0xff]
      %v832 = vld [vmem:[%s2 + $0x158] sm:$0xff]
      %v833 = vld [vmem:[%s2 + $0x160] sm:$0xff]
      %v834 = vld [vmem:[%s2 + $0x168] sm:$0xff]
      %v835 = vld [vmem:[%s2 + $0x170] sm:$0xff]
      %v836 = vld [vmem:[%s2 + $0x178] sm:$0xff]
      %v837 = vld [vmem:[%s2 + $0x180] sm:$0xff]
      %v838 = vld [vmem:[%s2 + $0x188] sm:$0xff]
      %v839 = vld [vmem:[%s2 + $0x190] sm:$0xff]
      %v840 = vld [vmem:[%s2 + $0x198] sm:$0xff]
      %v841 = vld [vmem:[%s2 + $0x1a0] sm:$0xff]
      %v842 = vld [vmem:[%s2 + $0x1a8] sm:$0xff]
      %v843 = vld [vmem:[%s2 + $0x1b0] sm:$0xff]
      %v844 = vld [vmem:[%s2 + $0x1b8] sm:$0xff]
      %v845 = vld [vmem:[%s2 + $0x1c0] sm:$0xff]
      %v846 = vld [vmem:[%s2 + $0x1c8] sm:$0xff]
      %v847 = vld [vmem:[%s2 + $0x1d0] sm:$0xff]
      %v848 = vld [vmem:[%s2 + $0x1d8] sm:$0xff]
      %v849 = vld [vmem:[%s2 + $0x1e0] sm:$0xff]
      %v850 = vld [vmem:[%s2 + $0x1e8] sm:$0xff]
      %v851 = vld [vmem:[%s2 + $0x1f0] sm:$0xff]
      %v852 = vld [vmem:[%s2 + $0x1f8] sm:$0xff]
      %v853 = vld [vmem:[%s2 + $0x200] sm:$0xff]
      %v854 = vld [vmem:[%s2 + $0x208] sm:$0xff]
      %v855 = vld [vmem:[%s2 + $0x210] sm:$0xff]
      %v856 = vld [vmem:[%s2 + $0x218] sm:$0xff]
      %v857 = vld [vmem:[%s2 + $0x220] sm:$0xff]
      %v858 = vld [vmem:[%s2 + $0x228] sm:$0xff]
      %v859 = vld [vmem:[%s2 + $0x230] sm:$0xff]
      %v860 = vld [vmem:[%s2 + $0x238] sm:$0xff]
      %v861 = vld [vmem:[%s2 + $0x240] sm:$0xff]
      %v862 = vld [vmem:[%s2 + $0x248] sm:$0xff]
      %v863 = vld [vmem:[%s2 + $0x250] sm:$0xff]
      %v864 = vld [vmem:[%s2 + $0x258] sm:$0xff]
      %v865 = vld [vmem:[%s2 + $0x260] sm:$0xff]
      %v866 = vld [vmem:[%s2 + $0x268] sm:$0xff]
      %v867 = vld [vmem:[%s2 + $0x270] sm:$0xff]
      %v868 = vld [vmem:[%s2 + $0x278] sm:$0xff]
      %v869 = vld [vmem:[%s2 + $0x280] sm:$0xff]
      %v870 = vld [vmem:[%s2 + $0x288] sm:$0xff]
      %v871 = vld [vmem:[%s2 + $0x290] sm:$0xff]
      %v872 = vld [vmem:[%s2 + $0x298] sm:$0xff]
      %v873 = vld [vmem:[%s2 + $0x2a0] sm:$0xff]
      %v874 = vld [vmem:[%s2 + $0x2a8] sm:$0xff]
      %v875 = vld [vmem:[%s2 + $0x2b0] sm:$0xff]
      %v876 = vld [vmem:[%s2 + $0x2b8] sm:$0xff]
      %v877 = vld [vmem:[%s2 + $0x2c0] sm:$0xff]
      %v878 = vld [vmem:[%s2 + $0x2c8] sm:$0xff]
      %v879 = vld [vmem:[%s2 + $0x2d0] sm:$0xff]
      %v880 = vld [vmem:[%s2 + $0x2d8] sm:$0xff]
      %v881 = vld [vmem:[%s2 + $0x2e0] sm:$0xff]
      %v882 = vld [vmem:[%s2 + $0x2e8] sm:$0xff]
      %v883 = vld [vmem:[%s2 + $0x2f0] sm:$0xff]
      %v884 = vld [vmem:[%s2 + $0x2f8] sm:$0xff]
      %v885 = vld [vmem:[%s2 + $0x300] sm:$0xff]
      %v886 = vld [vmem:[%s2 + $0x308] sm:$0xff]
      %v887 = vld [vmem:[%s2 + $0x310] sm:$0xff]
      %v888 = vld [vmem:[%s2 + $0x318] sm:$0xff]
      %v889 = vld [vmem:[%s2 + $0x320] sm:$0xff]
      %v890 = vld [vmem:[%s2 + $0x328] sm:$0xff]
      %v891 = vld [vmem:[%s2 + $0x330] sm:$0xff]
      %v892 = vld [vmem:[%s2 + $0x338] sm:$0xff]
      %v893 = vld [vmem:[%s2 + $0x340] sm:$0xff]
      %v894 = vld [vmem:[%s2 + $0x348] sm:$0xff]
      %v895 = vld [vmem:[%s2 + $0x350] sm:$0xff]
      %v896 = vld [vmem:[%s2 + $0x358] sm:$0xff]
      %v897 = vld [vmem:[%s2 + $0x360] sm:$0xff]
      %v898 = vld [vmem:[%s2 + $0x368] sm:$0xff]
      %v899 = vld [vmem:[%s2 + $0x370] sm:$0xff]
      %v900 = vld [vmem:[%s2 + $0x378] sm:$0xff]
      %v901 = vld [vmem:[%s2 + $0x380] sm:$0xff]
      %v902 = vld [vmem:[%s2 + $0x388] sm:$0xff]
      %v903 = vld [vmem:[%s2 + $0x390] sm:$0xff]
      %v904 = vld [vmem:[%s2 + $0x398] sm:$0xff]
      %v905 = vld [vmem:[%s2 + $0x3a0] sm:$0xff]
      %v906 = vld [vmem:[%s2 + $0x3a8] sm:$0xff]
      %v907 = vld [vmem:[%s2 + $0x3b0] sm:$0xff]
      %v908 = vld [vmem:[%s2 + $0x3b8] sm:$0xff]
      %v909 = vld [vmem:[%s2 + $0x3c0] sm:$0xff]
      %v910 = vld [vmem:[%s2 + $0x3c8] sm:$0xff]
      %v911 = vld [vmem:[%s2 + $0x3d0] sm:$0xff]
      %v912 = vld [vmem:[%s2 + $0x3d8] sm:$0xff]
      %v913 = vld [vmem:[%s2 + $0x3e0] sm:$0xff]
      %v914 = vld [vmem:[%s2 + $0x3e8] sm:$0xff]
      %v915 = vld [vmem:[%s2 + $0x3f0] sm:$0xff]
      %v916 = vld [vmem:[%s2 + $0x3f8] sm:$0xff]
      %v1045 = vunpack.c.l.b16 %v789
      %v1046 = vunpack.c.h.b16 %v789
      %v1047 = vunpack.c.l.b16 %v790
      %v1048 = vunpack.c.h.b16 %v790
      %v1049 = vunpack.c.l.b16 %v791
      %v1050 = vunpack.c.h.b16 %v791
      %v1051 = vunpack.c.l.b16 %v792
      %v1052 = vunpack.c.h.b16 %v792
      %v1053 = vunpack.c.l.b16 %v793
      %v1054 = vunpack.c.h.b16 %v793
      %v1055 = vunpack.c.l.b16 %v794
      %v1056 = vunpack.c.h.b16 %v794
      %v1057 = vunpack.c.l.b16 %v795
      %v1058 = vunpack.c.h.b16 %v795
      %v1059 = vunpack.c.l.b16 %v796
      %v1060 = vunpack.c.h.b16 %v796
      %v1061 = vunpack.c.l.b16 %v797
      %v1062 = vunpack.c.h.b16 %v797
      %v1063 = vunpack.c.l.b16 %v798
      %v1064 = vunpack.c.h.b16 %v798
      %v1065 = vunpack.c.l.b16 %v799
      %v1066 = vunpack.c.h.b16 %v799
      %v1067 = vunpack.c.l.b16 %v800
      %v1068 = vunpack.c.h.b16 %v800
      %v1069 = vunpack.c.l.b16 %v801
      %v1070 = vunpack.c.h.b16 %v801
      %v1071 = vunpack.c.l.b16 %v802
      %v1072 = vunpack.c.h.b16 %v802
      %v1073 = vunpack.c.l.b16 %v803
      %v1074 = vunpack.c.h.b16 %v803
      %v1075 = vunpack.c.l.b16 %v804
      %v1076 = vunpack.c.h.b16 %v804
      %v1077 = vunpack.c.l.b16 %v805
      %v1078 = vunpack.c.h.b16 %v805
      %v1079 = vunpack.c.l.b16 %v806
      %v1080 = vunpack.c.h.b16 %v806
      %v1081 = vunpack.c.l.b16 %v807
      %v1082 = vunpack.c.h.b16 %v807
      %v1083 = vunpack.c.l.b16 %v808
      %v1084 = vunpack.c.h.b16 %v808
      %v1085 = vunpack.c.l.b16 %v809
      %v1086 = vunpack.c.h.b16 %v809
      %v1087 = vunpack.c.l.b16 %v810
      %v1088 = vunpack.c.h.b16 %v810
      %v1089 = vunpack.c.l.b16 %v811
      %v1090 = vunpack.c.h.b16 %v811
      %v1091 = vunpack.c.l.b16 %v812
      %v1092 = vunpack.c.h.b16 %v812
      %v1093 = vunpack.c.l.b16 %v813
      %v1094 = vunpack.c.h.b16 %v813
      %v1095 = vunpack.c.l.b16 %v814
      %v1096 = vunpack.c.h.b16 %v814
      %v1097 = vunpack.c.l.b16 %v815
      %v1098 = vunpack.c.h.b16 %v815
      %v1099 = vunpack.c.l.b16 %v816
      %v1100 = vunpack.c.h.b16 %v816
      %v1101 = vunpack.c.l.b16 %v817
      %v1102 = vunpack.c.h.b16 %v817
      %v1103 = vunpack.c.l.b16 %v818
      %v1104 = vunpack.c.h.b16 %v818
      %v1105 = vunpack.c.l.b16 %v819
      %v1106 = vunpack.c.h.b16 %v819
      %v1107 = vunpack.c.l.b16 %v820
      %v1108 = vunpack.c.h.b16 %v820
      %v1109 = vunpack.c.l.b16 %v821
      %v1110 = vunpack.c.h.b16 %v821
      %v1111 = vunpack.c.l.b16 %v822
      %v1112 = vunpack.c.h.b16 %v822
      %v1113 = vunpack.c.l.b16 %v823
      %v1114 = vunpack.c.h.b16 %v823
      %v1115 = vunpack.c.l.b16 %v824
      %v1116 = vunpack.c.h.b16 %v824
      %v1117 = vunpack.c.l.b16 %v825
      %v1118 = vunpack.c.h.b16 %v825
      %v1119 = vunpack.c.l.b16 %v826
      %v1120 = vunpack.c.h.b16 %v826
      %v1121 = vunpack.c.l.b16 %v827
      %v1122 = vunpack.c.h.b16 %v827
      %v1123 = vunpack.c.l.b16 %v828
      %v1124 = vunpack.c.h.b16 %v828
      %v1125 = vunpack.c.l.b16 %v829
      %v1126 = vunpack.c.h.b16 %v829
      %v1127 = vunpack.c.l.b16 %v830
      %v1128 = vunpack.c.h.b16 %v830
      %v1129 = vunpack.c.l.b16 %v831
      %v1130 = vunpack.c.h.b16 %v831
      %v1131 = vunpack.c.l.b16 %v832
      %v1132 = vunpack.c.h.b16 %v832
      %v1133 = vunpack.c.l.b16 %v833
      %v1134 = vunpack.c.h.b16 %v833
      %v1135 = vunpack.c.l.b16 %v834
      %v1136 = vunpack.c.h.b16 %v834
      %v1137 = vunpack.c.l.b16 %v835
      %v1138 = vunpack.c.h.b16 %v835
      %v1139 = vunpack.c.l.b16 %v836
      %v1140 = vunpack.c.h.b16 %v836
      %v1141 = vunpack.c.l.b16 %v837
      %v1142 = vunpack.c.h.b16 %v837
      %v1143 = vunpack.c.l.b16 %v838
      %v1144 = vunpack.c.h.b16 %v838
      %v1145 = vunpack.c.l.b16 %v839
      %v1146 = vunpack.c.h.b16 %v839
      %v1147 = vunpack.c.l.b16 %v840
      %v1148 = vunpack.c.h.b16 %v840
      %v1149 = vunpack.c.l.b16 %v841
      %v1150 = vunpack.c.h.b16 %v841
      %v1151 = vunpack.c.l.b16 %v842
      %v1152 = vunpack.c.h.b16 %v842
      %v1153 = vunpack.c.l.b16 %v843
      %v1154 = vunpack.c.h.b16 %v843
      %v1155 = vunpack.c.l.b16 %v844
      %v1156 = vunpack.c.h.b16 %v844
      %v1157 = vunpack.c.l.b16 %v845
      %v1158 = vunpack.c.h.b16 %v845
      %v1159 = vunpack.c.l.b16 %v846
      %v1160 = vunpack.c.h.b16 %v846
      %v1161 = vunpack.c.l.b16 %v847
      %v1162 = vunpack.c.h.b16 %v847
      %v1163 = vunpack.c.l.b16 %v848
      %v1164 = vunpack.c.h.b16 %v848
      %v1165 = vunpack.c.l.b16 %v849
      %v1166 = vunpack.c.h.b16 %v849
      %v1167 = vunpack.c.l.b16 %v850
      %v1168 = vunpack.c.h.b16 %v850
      %v1169 = vunpack.c.l.b16 %v851
      %v1170 = vunpack.c.h.b16 %v851
      %v1171 = vunpack.c.l.b16 %v852
      %v1172 = vunpack.c.h.b16 %v852
      %v1173 = vunpack.c.l.b16 %v853
      %v1174 = vunpack.c.h.b16 %v853
      %v1175 = vunpack.c.l.b16 %v854
      %v1176 = vunpack.c.h.b16 %v854
      %v1177 = vunpack.c.l.b16 %v855
      %v1178 = vunpack.c.h.b16 %v855
      %v1179 = vunpack.c.l.b16 %v856
      %v1180 = vunpack.c.h.b16 %v856
      %v1181 = vunpack.c.l.b16 %v857
      %v1182 = vunpack.c.h.b16 %v857
      %v1183 = vunpack.c.l.b16 %v858
      %v1184 = vunpack.c.h.b16 %v858
      %v1185 = vunpack.c.l.b16 %v859
      %v1186 = vunpack.c.h.b16 %v859
      %v1187 = vunpack.c.l.b16 %v860
      %v1188 = vunpack.c.h.b16 %v860
      %v1189 = vunpack.c.l.b16 %v861
      %v1190 = vunpack.c.h.b16 %v861
      %v1191 = vunpack.c.l.b16 %v862
      %v1192 = vunpack.c.h.b16 %v862
      %v1193 = vunpack.c.l.b16 %v863
      %v1194 = vunpack.c.h.b16 %v863
      %v1195 = vunpack.c.l.b16 %v864
      %v1196 = vunpack.c.h.b16 %v864
      %v1197 = vunpack.c.l.b16 %v865
      %v1198 = vunpack.c.h.b16 %v865
      %v1199 = vunpack.c.l.b16 %v866
      %v1200 = vunpack.c.h.b16 %v866
      %v1201 = vunpack.c.l.b16 %v867
      %v1202 = vunpack.c.h.b16 %v867
      %v1203 = vunpack.c.l.b16 %v868
      %v1204 = vunpack.c.h.b16 %v868
      %v1205 = vunpack.c.l.b16 %v869
      %v1206 = vunpack.c.h.b16 %v869
      %v1207 = vunpack.c.l.b16 %v870
      %v1208 = vunpack.c.h.b16 %v870
      %v1209 = vunpack.c.l.b16 %v871
      %v1210 = vunpack.c.h.b16 %v871
      %v1211 = vunpack.c.l.b16 %v872
      %v1212 = vunpack.c.h.b16 %v872
      %v1213 = vunpack.c.l.b16 %v873
      %v1214 = vunpack.c.h.b16 %v873
      %v1215 = vunpack.c.l.b16 %v874
      %v1216 = vunpack.c.h.b16 %v874
      %v1217 = vunpack.c.l.b16 %v875
      %v1218 = vunpack.c.h.b16 %v875
      %v1219 = vunpack.c.l.b16 %v876
      %v1220 = vunpack.c.h.b16 %v876
      %v1221 = vunpack.c.l.b16 %v877
      %v1222 = vunpack.c.h.b16 %v877
      %v1223 = vunpack.c.l.b16 %v878
      %v1224 = vunpack.c.h.b16 %v878
      %v1225 = vunpack.c.l.b16 %v879
      %v1226 = vunpack.c.h.b16 %v879
      %v1227 = vunpack.c.l.b16 %v880
      %v1228 = vunpack.c.h.b16 %v880
      %v1229 = vunpack.c.l.b16 %v881
      %v1230 = vunpack.c.h.b16 %v881
      %v1231 = vunpack.c.l.b16 %v882
      %v1232 = vunpack.c.h.b16 %v882
      %v1233 = vunpack.c.l.b16 %v883
      %v1234 = vunpack.c.h.b16 %v883
      %v1235 = vunpack.c.l.b16 %v884
      %v1236 = vunpack.c.h.b16 %v884
      %v1237 = vunpack.c.l.b16 %v885
      %v1238 = vunpack.c.h.b16 %v885
      %v1239 = vunpack.c.l.b16 %v886
      %v1240 = vunpack.c.h.b16 %v886
      %v1241 = vunpack.c.l.b16 %v887
      %v1242 = vunpack.c.h.b16 %v887
      %v1243 = vunpack.c.l.b16 %v888
      %v1244 = vunpack.c.h.b16 %v888
      %v1245 = vunpack.c.l.b16 %v889
      %v1246 = vunpack.c.h.b16 %v889
      %v1247 = vunpack.c.l.b16 %v890
      %v1248 = vunpack.c.h.b16 %v890
      %v1249 = vunpack.c.l.b16 %v891
      %v1250 = vunpack.c.h.b16 %v891
      %v1251 = vunpack.c.l.b16 %v892
      %v1252 = vunpack.c.h.b16 %v892
      %v1253 = vunpack.c.l.b16 %v893
      %v1254 = vunpack.c.h.b16 %v893
      %v1255 = vunpack.c.l.b16 %v894
      %v1256 = vunpack.c.h.b16 %v894
      %v1257 = vunpack.c.l.b16 %v895
      %v1258 = vunpack.c.h.b16 %v895
      %v1259 = vunpack.c.l.b16 %v896
      %v1260 = vunpack.c.h.b16 %v896
      %v1261 = vunpack.c.l.b16 %v897
      %v1262 = vunpack.c.h.b16 %v897
      %v1263 = vunpack.c.l.b16 %v898
      %v1264 = vunpack.c.h.b16 %v898
      %v1265 = vunpack.c.l.b16 %v899
      %v1266 = vunpack.c.h.b16 %v899
      %v1267 = vunpack.c.l.b16 %v900
      %v1268 = vunpack.c.h.b16 %v900
      %v1269 = vunpack.c.l.b16 %v901
      %v1270 = vunpack.c.h.b16 %v901
      %v1271 = vunpack.c.l.b16 %v902
      %v1272 = vunpack.c.h.b16 %v902
      %v1273 = vunpack.c.l.b16 %v903
      %v1274 = vunpack.c.h.b16 %v903
      %v1275 = vunpack.c.l.b16 %v904
      %v1276 = vunpack.c.h.b16 %v904
      %v1277 = vunpack.c.l.b16 %v905
      %v1278 = vunpack.c.h.b16 %v905
      %v1279 = vunpack.c.l.b16 %v906
      %v1280 = vunpack.c.h.b16 %v906
      %v1281 = vunpack.c.l.b16 %v907
      %v1282 = vunpack.c.h.b16 %v907
      %v1283 = vunpack.c.l.b16 %v908
      %v1284 = vunpack.c.h.b16 %v908
      %v1285 = vunpack.c.l.b16 %v909
      %v1286 = vunpack.c.h.b16 %v909
      %v1287 = vunpack.c.l.b16 %v910
      %v1288 = vunpack.c.h.b16 %v910
      %v1289 = vunpack.c.l.b16 %v911
      %v1290 = vunpack.c.h.b16 %v911
      %v1291 = vunpack.c.l.b16 %v912
      %v1292 = vunpack.c.h.b16 %v912
      %v1293 = vunpack.c.l.b16 %v913
      %v1294 = vunpack.c.h.b16 %v913
      %v1295 = vunpack.c.l.b16 %v914
      %v1296 = vunpack.c.h.b16 %v914
      %v1297 = vunpack.c.l.b16 %v915
      %v1298 = vunpack.c.h.b16 %v915
      %v1299 = vunpack.c.l.b16 %v916
      %v1300 = vunpack.c.h.b16 %v916
      %v1301 = vpack.c.b16 %v1053, %v1045
      %v1302 = vpack.c.b16 %v1054, %v1046
      %v1303 = vpack.c.b16 %v1055, %v1047
      %v1304 = vpack.c.b16 %v1056, %v1048
      %v1305 = vpack.c.b16 %v1057, %v1049
      %v1306 = vpack.c.b16 %v1058, %v1050
      %v1307 = vpack.c.b16 %v1059, %v1051
      %v1308 = vpack.c.b16 %v1060, %v1052
      %v1309 = vpack.c.b16 %v1069, %v1061
      %v1310 = vpack.c.b16 %v1070, %v1062
      %v1311 = vpack.c.b16 %v1071, %v1063
      %v1312 = vpack.c.b16 %v1072, %v1064
      %v1313 = vpack.c.b16 %v1073, %v1065
      %v1314 = vpack.c.b16 %v1074, %v1066
      %v1315 = vpack.c.b16 %v1075, %v1067
      %v1316 = vpack.c.b16 %v1076, %v1068
      %v1317 = vpack.c.b16 %v1085, %v1077
      %v1318 = vpack.c.b16 %v1086, %v1078
      %v1319 = vpack.c.b16 %v1087, %v1079
      %v1320 = vpack.c.b16 %v1088, %v1080
      %v1321 = vpack.c.b16 %v1089, %v1081
      %v1322 = vpack.c.b16 %v1090, %v1082
      %v1323 = vpack.c.b16 %v1091, %v1083
      %v1324 = vpack.c.b16 %v1092, %v1084
      %v1325 = vpack.c.b16 %v1101, %v1093
      %v1326 = vpack.c.b16 %v1102, %v1094
      %v1327 = vpack.c.b16 %v1103, %v1095
      %v1328 = vpack.c.b16 %v1104, %v1096
      %v1329 = vpack.c.b16 %v1105, %v1097
      %v1330 = vpack.c.b16 %v1106, %v1098
      %v1331 = vpack.c.b16 %v1107, %v1099
      %v1332 = vpack.c.b16 %v1108, %v1100
      %v1333 = vpack.c.b16 %v1117, %v1109
      %v1334 = vpack.c.b16 %v1118, %v1110
      %v1335 = vpack.c.b16 %v1119, %v1111
      %v1336 = vpack.c.b16 %v1120, %v1112
      %v1337 = vpack.c.b16 %v1121, %v1113
      %v1338 = vpack.c.b16 %v1122, %v1114
      %v1339 = vpack.c.b16 %v1123, %v1115
      %v1340 = vpack.c.b16 %v1124, %v1116
      %v1341 = vpack.c.b16 %v1133, %v1125
      %v1342 = vpack.c.b16 %v1134, %v1126
      %v1343 = vpack.c.b16 %v1135, %v1127
      %v1344 = vpack.c.b16 %v1136, %v1128
      %v1345 = vpack.c.b16 %v1137, %v1129
      %v1346 = vpack.c.b16 %v1138, %v1130
      %v1347 = vpack.c.b16 %v1139, %v1131
      %v1348 = vpack.c.b16 %v1140, %v1132
      %v1349 = vpack.c.b16 %v1149, %v1141
      %v1350 = vpack.c.b16 %v1150, %v1142
      %v1351 = vpack.c.b16 %v1151, %v1143
      %v1352 = vpack.c.b16 %v1152, %v1144
      %v1353 = vpack.c.b16 %v1153, %v1145
      %v1354 = vpack.c.b16 %v1154, %v1146
      %v1355 = vpack.c.b16 %v1155, %v1147
      %v1356 = vpack.c.b16 %v1156, %v1148
      %v1357 = vpack.c.b16 %v1165, %v1157
      %v1358 = vpack.c.b16 %v1166, %v1158
      %v1359 = vpack.c.b16 %v1167, %v1159
      %v1360 = vpack.c.b16 %v1168, %v1160
      %v1361 = vpack.c.b16 %v1169, %v1161
      %v1362 = vpack.c.b16 %v1170, %v1162
      %v1363 = vpack.c.b16 %v1171, %v1163
      %v1364 = vpack.c.b16 %v1172, %v1164
      %v1365 = vpack.c.b16 %v1181, %v1173
      %v1366 = vpack.c.b16 %v1182, %v1174
      %v1367 = vpack.c.b16 %v1183, %v1175
      %v1368 = vpack.c.b16 %v1184, %v1176
      %v1369 = vpack.c.b16 %v1185, %v1177
      %v1370 = vpack.c.b16 %v1186, %v1178
      %v1371 = vpack.c.b16 %v1187, %v1179
      %v1372 = vpack.c.b16 %v1188, %v1180
      %v1373 = vpack.c.b16 %v1197, %v1189
      %v1374 = vpack.c.b16 %v1198, %v1190
      %v1375 = vpack.c.b16 %v1199, %v1191
      %v1376 = vpack.c.b16 %v1200, %v1192
      %v1377 = vpack.c.b16 %v1201, %v1193
      %v1378 = vpack.c.b16 %v1202, %v1194
      %v1379 = vpack.c.b16 %v1203, %v1195
      %v1380 = vpack.c.b16 %v1204, %v1196
      %v1381 = vpack.c.b16 %v1213, %v1205
      %v1382 = vpack.c.b16 %v1214, %v1206
      %v1383 = vpack.c.b16 %v1215, %v1207
      %v1384 = vpack.c.b16 %v1216, %v1208
      %v1385 = vpack.c.b16 %v1217, %v1209
      %v1386 = vpack.c.b16 %v1218, %v1210
      %v1387 = vpack.c.b16 %v1219, %v1211
      %v1388 = vpack.c.b16 %v1220, %v1212
      %v1389 = vpack.c.b16 %v1229, %v1221
      %v1390 = vpack.c.b16 %v1230, %v1222
      %v1391 = vpack.c.b16 %v1231, %v1223
      %v1392 = vpack.c.b16 %v1232, %v1224
      %v1393 = vpack.c.b16 %v1233, %v1225
      %v1394 = vpack.c.b16 %v1234, %v1226
      %v1395 = vpack.c.b16 %v1235, %v1227
      %v1396 = vpack.c.b16 %v1236, %v1228
      %v1397 = vpack.c.b16 %v1245, %v1237
      %v1398 = vpack.c.b16 %v1246, %v1238
      %v1399 = vpack.c.b16 %v1247, %v1239
      %v1400 = vpack.c.b16 %v1248, %v1240
      %v1401 = vpack.c.b16 %v1249, %v1241
      %v1402 = vpack.c.b16 %v1250, %v1242
      %v1403 = vpack.c.b16 %v1251, %v1243
      %v1404 = vpack.c.b16 %v1252, %v1244
      %v1405 = vpack.c.b16 %v1261, %v1253
      %v1406 = vpack.c.b16 %v1262, %v1254
      %v1407 = vpack.c.b16 %v1263, %v1255
      %v1408 = vpack.c.b16 %v1264, %v1256
      %v1409 = vpack.c.b16 %v1265, %v1257
      %v1410 = vpack.c.b16 %v1266, %v1258
      %v1411 = vpack.c.b16 %v1267, %v1259
      %v1412 = vpack.c.b16 %v1268, %v1260
      %v1413 = vpack.c.b16 %v1277, %v1269
      %v1414 = vpack.c.b16 %v1278, %v1270
      %v1415 = vpack.c.b16 %v1279, %v1271
      %v1416 = vpack.c.b16 %v1280, %v1272
      %v1417 = vpack.c.b16 %v1281, %v1273
      %v1418 = vpack.c.b16 %v1282, %v1274
      %v1419 = vpack.c.b16 %v1283, %v1275
      %v1420 = vpack.c.b16 %v1284, %v1276
      %v1421 = vpack.c.b16 %v1293, %v1285
      %v1422 = vpack.c.b16 %v1294, %v1286
      %v1423 = vpack.c.b16 %v1295, %v1287
      %v1424 = vpack.c.b16 %v1296, %v1288
      %v1425 = vpack.c.b16 %v1297, %v1289
      %v1426 = vpack.c.b16 %v1298, %v1290
      %v1427 = vpack.c.b16 %v1299, %v1291
      %v1428 = vpack.c.b16 %v1300, %v1292
      %1557 = vmatprep.subr.bf16.mxu0 %v1302
      %1558 = vmatpush1.bf16.msra.mxu0 %v1301
      %1559 = vmatprep.subr.bf16.mxu0 %v1310
      %1560 = vmatpush1.bf16.msra.mxu0 %v1309
      %1561 = vmatprep.subr.bf16.mxu0 %v1318
      %1562 = vmatpush1.bf16.msra.mxu0 %v1317
      %1563 = vmatprep.subr.bf16.mxu0 %v1326
      %1564 = vmatpush1.bf16.msra.mxu0 %v1325
      %1565 = vmatprep.subr.bf16.mxu0 %v1334
      %1566 = vmatpush1.bf16.msra.mxu0 %v1333
      %1567 = vmatprep.subr.bf16.mxu0 %v1342
      %1568 = vmatpush1.bf16.msra.mxu0 %v1341
      %1569 = vmatprep.subr.bf16.mxu0 %v1350
      %1570 = vmatpush1.bf16.msra.mxu0 %v1349
      %1571 = vmatprep.subr.bf16.mxu0 %v1358
      %1572 = vmatpush1.bf16.msra.mxu0 %v1357
      %1573 = vmatprep.subr.bf16.mxu0 %v1366
      %1574 = vmatpush1.bf16.msra.mxu0 %v1365
      %1575 = vmatprep.subr.bf16.mxu0 %v1374
      %1576 = vmatpush1.bf16.msra.mxu0 %v1373
      %1577 = vmatprep.subr.bf16.mxu0 %v1382
      %1578 = vmatpush1.bf16.msra.mxu0 %v1381
      %1579 = vmatprep.subr.bf16.mxu0 %v1390
      %1580 = vmatpush1.bf16.msra.mxu0 %v1389
      %1581 = vmatprep.subr.bf16.mxu0 %v1398
      %1582 = vmatpush1.bf16.msra.mxu0 %v1397
      %1583 = vmatprep.subr.bf16.mxu0 %v1406
      %1584 = vmatpush1.bf16.msra.mxu0 %v1405
      %1585 = vmatprep.subr.bf16.mxu0 %v1414
      %1586 = vmatpush1.bf16.msra.mxu0 %v1413
      %1587 = vmatprep.subr.bf16.mxu0 %v1422
      %1588 = vmatpush1.bf16.msra.mxu0 %v1421
      %1589 = vmatprep.mubr.bf16.mxu0 %v786
      %1590 = vmatmul.mubr.bf16.gmra.mrb[0].mxu0 %v785
      %v1591 = vpop.f32.mrb[0].mxu0
      %v1592 = vadd.f32 0.0, %v1591
      %v1593 = vpop.f32.mrb[0].mxu0
      %v1594 = vadd.f32 0.0, %v1593
      %v1595 = vpop.f32.mrb[0].mxu0
      %v1596 = vadd.f32 0.0, %v1595
      %v1597 = vpop.f32.mrb[0].mxu0
      %v1598 = vadd.f32 0.0, %v1597
      %1599 = vmatprep.mubr.bf16.mxu0 %v788
      %1600 = vmatmul.mubr.bf16.gmra.mrb[0].mxu0 %v787
      %v1601 = vpop.f32.mrb[0].mxu0
      %v1602 = vadd.f32 0.0, %v1601
      %v1603 = vpop.f32.mrb[0].mxu0
      %v1604 = vadd.f32 0.0, %v1603
      %v1605 = vpop.f32.mrb[0].mxu0
      %v1606 = vadd.f32 0.0, %v1605
      %v1607 = vpop.f32.mrb[0].mxu0
      %v1608 = vadd.f32 0.0, %v1607
      %1609 = vdwg.mxu0
      %1610 = vmatprep.subr.bf16.mxu0 %v1304
      %1611 = vmatpush1.bf16.msra.mxu0 %v1303
      %1612 = vmatprep.subr.bf16.mxu0 %v1312
      %1613 = vmatpush1.bf16.msra.mxu0 %v1311
      %1614 = vmatprep.subr.bf16.mxu0 %v1320
      %1615 = vmatpush1.bf16.msra.mxu0 %v1319
      %1616 = vmatprep.subr.bf16.mxu0 %v1328
      %1617 = vmatpush1.bf16.msra.mxu0 %v1327
      %1618 = vmatprep.subr.bf16.mxu0 %v1336
      %1619 = vmatpush1.bf16.msra.mxu0 %v1335
      %1620 = vmatprep.subr.bf16.mxu0 %v1344
      %1621 = vmatpush1.bf16.msra.mxu0 %v1343
      %1622 = vmatprep.subr.bf16.mxu0 %v1352
      %1623 = vmatpush1.bf16.msra.mxu0 %v1351
      %1624 = vmatprep.subr.bf16.mxu0 %v1360
      %1625 = vmatpush1.bf16.msra.mxu0 %v1359
      %1626 = vmatprep.subr.bf16.mxu0 %v1368
      %1627 = vmatpush1.bf16.msra.mxu0 %v1367
      %1628 = vmatprep.subr.bf16.mxu0 %v1376
      %1629 = vmatpush1.bf16.msra.mxu0 %v1375
      %1630 = vmatprep.subr.bf16.mxu0 %v1384
      %1631 = vmatpush1.bf16.msra.mxu0 %v1383
      %1632 = vmatprep.subr.bf16.mxu0 %v1392
      %1633 = vmatpush1.bf16.msra.mxu0 %v1391
      %1634 = vmatprep.subr.bf16.mxu0 %v1400
      %1635 = vmatpush1.bf16.msra.mxu0 %v1399
      %1636 = vmatprep.subr.bf16.mxu0 %v1408
      %1637 = vmatpush1.bf16.msra.mxu0 %v1407
      %1638 = vmatprep.subr.bf16.mxu0 %v1416
      %1639 = vmatpush1.bf16.msra.mxu0 %v1415
      %1640 = vmatprep.subr.bf16.mxu0 %v1424
      %1641 = vmatpush1.bf16.msra.mxu0 %v1423
      %1642 = vmatprep.mubr.bf16.mxu0 %v786
      %1643 = vmatmul.mubr.bf16.gmra.mrb[0].mxu0 %v785
      %v1644 = vpop.f32.mrb[0].mxu0
      %v1645 = vadd.f32 0.0, %v1644
      %v1646 = vpop.f32.mrb[0].mxu0
      %v1647 = vadd.f32 0.0, %v1646
      %v1648 = vpop.f32.mrb[0].mxu0
      %v1649 = vadd.f32 0.0, %v1648
      %v1650 = vpop.f32.mrb[0].mxu0
      %v1651 = vadd.f32 0.0, %v1650
      %1652 = vmatprep.mubr.bf16.mxu0 %v788
      %1653 = vmatmul.mubr.bf16.gmra.mrb[0].mxu0 %v787
      %v1654 = vpop.f32.mrb[0].mxu0
      %v1655 = vadd.f32 0.0, %v1654
      %v1656 = vpop.f32.mrb[0].mxu0
      %v1657 = vadd.f32 0.0, %v1656
      %v1658 = vpop.f32.mrb[0].mxu0
      %v1659 = vadd.f32 0.0, %v1658
      %v1660 = vpop.f32.mrb[0].mxu0
      %v1661 = vadd.f32 0.0, %v1660
      %1662 = vdwg.mxu0
      %1663 = vmatprep.subr.bf16.mxu0 %v1306
      %1664 = vmatpush1.bf16.msra.mxu0 %v1305
      %1665 = vmatprep.subr.bf16.mxu0 %v1314
      %1666 = vmatpush1.bf16.msra.mxu0 %v1313
      %1667 = vmatprep.subr.bf16.mxu0 %v1322
      %1668 = vmatpush1.bf16.msra.mxu0 %v1321
      %1669 = vmatprep.subr.bf16.mxu0 %v1330
      %1670 = vmatpush1.bf16.msra.mxu0 %v1329
      %1671 = vmatprep.subr.bf16.mxu0 %v1338
      %1672 = vmatpush1.bf16.msra.mxu0 %v1337
      %1673 = vmatprep.subr.bf16.mxu0 %v1346
      %1674 = vmatpush1.bf16.msra.mxu0 %v1345
      %1675 = vmatprep.subr.bf16.mxu0 %v1354
      %1676 = vmatpush1.bf16.msra.mxu0 %v1353
      %1677 = vmatprep.subr.bf16.mxu0 %v1362
      %1678 = vmatpush1.bf16.msra.mxu0 %v1361
      %1679 = vmatprep.subr.bf16.mxu0 %v1370
      %1680 = vmatpush1.bf16.msra.mxu0 %v1369
      %1681 = vmatprep.subr.bf16.mxu0 %v1378
      %1682 = vmatpush1.bf16.msra.mxu0 %v1377
      %1683 = vmatprep.subr.bf16.mxu0 %v1386
      %1684 = vmatpush1.bf16.msra.mxu0 %v1385
      %1685 = vmatprep.subr.bf16.mxu0 %v1394
      %1686 = vmatpush1.bf16.msra.mxu0 %v1393
      %1687 = vmatprep.subr.bf16.mxu0 %v1402
      %1688 = vmatpush1.bf16.msra.mxu0 %v1401
      %1689 = vmatprep.subr.bf16.mxu0 %v1410
      %1690 = vmatpush1.bf16.msra.mxu0 %v1409
      %1691 = vmatprep.subr.bf16.mxu0 %v1418
      %1692 = vmatpush1.bf16.msra.mxu0 %v1417
      %1693 = vmatprep.subr.bf16.mxu0 %v1426
      %1694 = vmatpush1.bf16.msra.mxu0 %v1425
      %1695 = vmatprep.mubr.bf16.mxu0 %v786
      %1696 = vmatmul.mubr.bf16.gmra.mrb[0].mxu0 %v785
      %v1697 = vpop.f32.mrb[0].mxu0
      %v1698 = vadd.f32 0.0, %v1697
      %v1699 = vpop.f32.mrb[0].mxu0
      %v1700 = vadd.f32 0.0, %v1699
      %v1701 = vpop.f32.mrb[0].mxu0
      %v1702 = vadd.f32 0.0, %v1701
      %v1703 = vpop.f32.mrb[0].mxu0
      %v1704 = vadd.f32 0.0, %v1703
      %1705 = vmatprep.mubr.bf16.mxu0 %v788
      %1706 = vmatmul.mubr.bf16.gmra.mrb[0].mxu0 %v787
      %v1707 = vpop.f32.mrb[0].mxu0
      %v1708 = vadd.f32 0.0, %v1707
      %v1709 = vpop.f32.mrb[0].mxu0
      %v1710 = vadd.f32 0.0, %v1709
      %v1711 = vpop.f32.mrb[0].mxu0
      %v1712 = vadd.f32 0.0, %v1711
      %v1713 = vpop.f32.mrb[0].mxu0
      %v1714 = vadd.f32 0.0, %v1713
      %1715 = vdwg.mxu0
      %1716 = vmatprep.subr.bf16.mxu0 %v1308
      %1717 = vmatpush1.bf16.msra.mxu0 %v1307
      %1718 = vmatprep.subr.bf16.mxu0 %v1316
      %1719 = vmatpush1.bf16.msra.mxu0 %v1315
      %1720 = vmatprep.subr.bf16.mxu0 %v1324
      %1721 = vmatpush1.bf16.msra.mxu0 %v1323
      %1722 = vmatprep.subr.bf16.mxu0 %v1332
      %1723 = vmatpush1.bf16.msra.mxu0 %v1331
      %1724 = vmatprep.subr.bf16.mxu0 %v1340
      %1725 = vmatpush1.bf16.msra.mxu0 %v1339
      %1726 = vmatprep.subr.bf16.mxu0 %v1348
      %1727 = vmatpush1.bf16.msra.mxu0 %v1347
      %1728 = vmatprep.subr.bf16.mxu0 %v1356
      %1729 = vmatpush1.bf16.msra.mxu0 %v1355
      %1730 = vmatprep.subr.bf16.mxu0 %v1364
      %1731 = vmatpush1.bf16.msra.mxu0 %v1363
      %1732 = vmatprep.subr.bf16.mxu0 %v1372
      %1733 = vmatpush1.bf16.msra.mxu0 %v1371
      %1734 = vmatprep.subr.bf16.mxu0 %v1380
      %1735 = vmatpush1.bf16.msra.mxu0 %v1379
      %1736 = vmatprep.subr.bf16.mxu0 %v1388
      %1737 = vmatpush1.bf16.msra.mxu0 %v1387
      %1738 = vmatprep.subr.bf16.mxu0 %v1396
      %1739 = vmatpush1.bf16.msra.mxu0 %v1395
      %1740 = vmatprep.subr.bf16.mxu0 %v1404
      %1741 = vmatpush1.bf16.msra.mxu0 %v1403
      %1742 = vmatprep.subr.bf16.mxu0 %v1412
      %1743 = vmatpush1.bf16.msra.mxu0 %v1411
      %1744 = vmatprep.subr.bf16.mxu0 %v1420
      %1745 = vmatpush1.bf16.msra.mxu0 %v1419
      %1746 = vmatprep.subr.bf16.mxu0 %v1428
      %1747 = vmatpush1.bf16.msra.mxu0 %v1427
      %1748 = vmatprep.mubr.bf16.mxu0 %v786
      %1749 = vmatmul.mubr.bf16.gmra.mrb[0].mxu0 %v785
      %v1750 = vpop.f32.mrb[0].mxu0
      %v1751 = vadd.f32 0.0, %v1750
      %v1752 = vpop.f32.mrb[0].mxu0
      %v1753 = vadd.f32 0.0, %v1752
      %v1754 = vpop.f32.mrb[0].mxu0
      %v1755 = vadd.f32 0.0, %v1754
      %v1756 = vpop.f32.mrb[0].mxu0
      %v1757 = vadd.f32 0.0, %v1756
      %1758 = vmatprep.mubr.bf16.mxu0 %v788
      %1759 = vmatmul.mubr.bf16.gmra.mrb[0].mxu0 %v787
      %v1760 = vpop.f32.mrb[0].mxu0
      %v1761 = vadd.f32 0.0, %v1760
      %v1762 = vpop.f32.mrb[0].mxu0
      %v1763 = vadd.f32 0.0, %v1762
      %v1764 = vpop.f32.mrb[0].mxu0
      %v1765 = vadd.f32 0.0, %v1764
      %v1766 = vpop.f32.mrb[0].mxu0
      %v1767 = vadd.f32 0.0, %v1766
      %1768 = vdwg.mxu0
      %v1769 = vpack.c.bf16 %v1596, %v1592
      %v1770 = vpack.c.bf16 %v1598, %v1594
      %v1771 = vpack.c.bf16 %v1649, %v1645
      %v1772 = vpack.c.bf16 %v1651, %v1647
      %v1773 = vpack.c.bf16 %v1702, %v1698
      %v1774 = vpack.c.bf16 %v1704, %v1700
      %v1775 = vpack.c.bf16 %v1755, %v1751
      %v1776 = vpack.c.bf16 %v1757, %v1753
      %v1777 = vpack.c.bf16 %v1606, %v1602
      %v1778 = vpack.c.bf16 %v1608, %v1604
      %v1779 = vpack.c.bf16 %v1659, %v1655
      %v1780 = vpack.c.bf16 %v1661, %v1657
      %v1781 = vpack.c.bf16 %v1712, %v1708
      %v1782 = vpack.c.bf16 %v1714, %v1710
      %v1783 = vpack.c.bf16 %v1765, %v1761
      %v1784 = vpack.c.bf16 %v1767, %v1763
      %vm1785 = vcmask 523264
      %1786 = vst.msk [vmem:[#allocation2] sm:$0xff] %vm1785, %v1769
      %1787 = vst.msk [vmem:[#allocation2 + $0x8] sm:$0xff] %vm1785, %v1777
      %1790 = vrot.lane.b32.xlu0 %v1769, 64
      %v1791 = vpop.permute.xlu0 %1790
      %1792 = vrot.lane.b32.xlu0 %v1777, 64
      %v1793 = vpop.permute.xlu0 %1792
      %1796 = vst.msk [vmem:[#allocation2 + $0x10] sm:$0xff] %vm1785, %v1791
      %1797 = vst.msk [vmem:[#allocation2 + $0x18] sm:$0xff] %vm1785, %v1793
      %1798 = vst.msk [vmem:[#allocation2 + $0x20] sm:$0xff] %vm1785, %v1770
      %1799 = vst.msk [vmem:[#allocation2 + $0x28] sm:$0xff] %vm1785, %v1778
      %1802 = vrot.lane.b32.xlu0 %v1770, 64
      %v1803 = vpop.permute.xlu0 %1802
      %1804 = vrot.lane.b32.xlu0 %v1778, 64
      %v1805 = vpop.permute.xlu0 %1804
      %1808 = vst.msk [vmem:[#allocation2 + $0x30] sm:$0xff] %vm1785, %v1803
      %1809 = vst.msk [vmem:[#allocation2 + $0x38] sm:$0xff] %vm1785, %v1805
      %1810 = vst.msk [vmem:[#allocation2 + $0x40] sm:$0xff] %vm1785, %v1771
      %1811 = vst.msk [vmem:[#allocation2 + $0x48] sm:$0xff] %vm1785, %v1779
      %1814 = vrot.lane.b32.xlu0 %v1771, 64
      %v1815 = vpop.permute.xlu0 %1814
      %1816 = vrot.lane.b32.xlu0 %v1779, 64
      %v1817 = vpop.permute.xlu0 %1816
      %1820 = vst.msk [vmem:[#allocation2 + $0x50] sm:$0xff] %vm1785, %v1815
      %1821 = vst.msk [vmem:[#allocation2 + $0x58] sm:$0xff] %vm1785, %v1817
      %1822 = vst.msk [vmem:[#allocation2 + $0x60] sm:$0xff] %vm1785, %v1772
      %1823 = vst.msk [vmem:[#allocation2 + $0x68] sm:$0xff] %vm1785, %v1780
      %1826 = vrot.lane.b32.xlu0 %v1772, 64
      %v1827 = vpop.permute.xlu0 %1826
      %1828 = vrot.lane.b32.xlu0 %v1780, 64
      %v1829 = vpop.permute.xlu0 %1828
      %1832 = vst.msk [vmem:[#allocation2 + $0x70] sm:$0xff] %vm1785, %v1827
      %1833 = vst.msk [vmem:[#allocation2 + $0x78] sm:$0xff] %vm1785, %v1829
      %1834 = vst.msk [vmem:[#allocation2 + $0x80] sm:$0xff] %vm1785, %v1773
      %1835 = vst.msk [vmem:[#allocation2 + $0x88] sm:$0xff] %vm1785, %v1781
      %1838 = vrot.lane.b32.xlu0 %v1773, 64
      %v1839 = vpop.permute.xlu0 %1838
      %1840 = vrot.lane.b32.xlu0 %v1781, 64
      %v1841 = vpop.permute.xlu0 %1840
      %1844 = vst.msk [vmem:[#allocation2 + $0x90] sm:$0xff] %vm1785, %v1839
      %1845 = vst.msk [vmem:[#allocation2 + $0x98] sm:$0xff] %vm1785, %v1841
      %1846 = vst.msk [vmem:[#allocation2 + $0xa0] sm:$0xff] %vm1785, %v1774
      %1847 = vst.msk [vmem:[#allocation2 + $0xa8] sm:$0xff] %vm1785, %v1782
      %1850 = vrot.lane.b32.xlu0 %v1774, 64
      %v1851 = vpop.permute.xlu0 %1850
      %1852 = vrot.lane.b32.xlu0 %v1782, 64
      %v1853 = vpop.permute.xlu0 %1852
      %1856 = vst.msk [vmem:[#allocation2 + $0xb0] sm:$0xff] %vm1785, %v1851
      %1857 = vst.msk [vmem:[#allocation2 + $0xb8] sm:$0xff] %vm1785, %v1853
      %1858 = vst.msk [vmem:[#allocation2 + $0xc0] sm:$0xff] %vm1785, %v1775
      %1859 = vst.msk [vmem:[#allocation2 + $0xc8] sm:$0xff] %vm1785, %v1783
      %1862 = vrot.lane.b32.xlu0 %v1775, 64
      %v1863 = vpop.permute.xlu0 %1862
      %1864 = vrot.lane.b32.xlu0 %v1783, 64
      %v1865 = vpop.permute.xlu0 %1864
      %1868 = vst.msk [vmem:[#allocation2 + $0xd0] sm:$0xff] %vm1785, %v1863
      %1869 = vst.msk [vmem:[#allocation2 + $0xd8] sm:$0xff] %vm1785, %v1865
      %1870 = vst.msk [vmem:[#allocation2 + $0xe0] sm:$0xff] %vm1785, %v1776
      %1871 = vst.msk [vmem:[#allocation2 + $0xe8] sm:$0xff] %vm1785, %v1784
      %1874 = vrot.lane.b32.xlu0 %v1776, 64
      %v1875 = vpop.permute.xlu0 %1874
      %1876 = vrot.lane.b32.xlu0 %v1784, 64
      %v1877 = vpop.permute.xlu0 %1876
      %1880 = vst.msk [vmem:[#allocation2 + $0xf0] sm:$0xff] %vm1785, %v1875
      %1881 = vst.msk [vmem:[#allocation2 + $0xf8] sm:$0xff] %vm1785, %v1877
      %v1882 = vld [vmem:[%s3] sm:$0xff]
      %v1883 = vld [vmem:[%s3 + $0x8] sm:$0xff]
      %v1884 = vld [vmem:[%s3 + $0x10] sm:$0xff]
      %v1885 = vld [vmem:[%s3 + $0x18] sm:$0xff]
      %v1886 = vld [vmem:[%s3 + $0x20] sm:$0xff]
      %v1887 = vld [vmem:[%s3 + $0x28] sm:$0xff]
      %v1888 = vld [vmem:[%s3 + $0x30] sm:$0xff]
      %v1889 = vld [vmem:[%s3 + $0x38] sm:$0xff]
      %v1890 = vld [vmem:[%s3 + $0x40] sm:$0xff]
      %v1891 = vld [vmem:[%s3 + $0x48] sm:$0xff]
      %v1892 = vld [vmem:[%s3 + $0x50] sm:$0xff]
      %v1893 = vld [vmem:[%s3 + $0x58] sm:$0xff]
      %v1894 = vld [vmem:[%s3 + $0x60] sm:$0xff]
      %v1895 = vld [vmem:[%s3 + $0x68] sm:$0xff]
      %v1896 = vld [vmem:[%s3 + $0x70] sm:$0xff]
      %v1897 = vld [vmem:[%s3 + $0x78] sm:$0xff]
      %v1898 = vld [vmem:[#allocation2] sm:$0xff]
      %v1899 = vld [vmem:[#allocation2 + $0x8] sm:$0xff]
      %v1900 = vld [vmem:[#allocation2 + $0x10] sm:$0xff]
      %v1901 = vld [vmem:[#allocation2 + $0x18] sm:$0xff]
      %v1902 = vld [vmem:[#allocation2 + $0x20] sm:$0xff]
      %v1903 = vld [vmem:[#allocation2 + $0x28] sm:$0xff]
      %v1904 = vld [vmem:[#allocation2 + $0x30] sm:$0xff]
      %v1905 = vld [vmem:[#allocation2 + $0x38] sm:$0xff]
      %v1906 = vld [vmem:[#allocation2 + $0x40] sm:$0xff]
      %v1907 = vld [vmem:[#allocation2 + $0x48] sm:$0xff]
      %v1908 = vld [vmem:[#allocation2 + $0x50] sm:$0xff]
      %v1909 = vld [vmem:[#allocation2 + $0x58] sm:$0xff]
      %v1910 = vld [vmem:[#allocation2 + $0x60] sm:$0xff]
      %v1911 = vld [vmem:[#allocation2 + $0x68] sm:$0xff]
      %v1912 = vld [vmem:[#allocation2 + $0x70] sm:$0xff]
      %v1913 = vld [vmem:[#allocation2 + $0x78] sm:$0xff]
      %v1914 = vld [vmem:[#allocation2 + $0x80] sm:$0xff]
      %v1915 = vld [vmem:[#allocation2 + $0x88] sm:$0xff]
      %v1916 = vld [vmem:[#allocation2 + $0x90] sm:$0xff]
      %v1917 = vld [vmem:[#allocation2 + $0x98] sm:$0xff]
      %v1918 = vld [vmem:[#allocation2 + $0xa0] sm:$0xff]
      %v1919 = vld [vmem:[#allocation2 + $0xa8] sm:$0xff]
      %v1920 = vld [vmem:[#allocation2 + $0xb0] sm:$0xff]
      %v1921 = vld [vmem:[#allocation2 + $0xb8] sm:$0xff]
      %v1922 = vld [vmem:[#allocation2 + $0xc0] sm:$0xff]
      %v1923 = vld [vmem:[#allocation2 + $0xc8] sm:$0xff]
      %v1924 = vld [vmem:[#allocation2 + $0xd0] sm:$0xff]
      %v1925 = vld [vmem:[#allocation2 + $0xd8] sm:$0xff]
      %v1926 = vld [vmem:[#allocation2 + $0xe0] sm:$0xff]
      %v1927 = vld [vmem:[#allocation2 + $0xe8] sm:$0xff]
      %v1928 = vld [vmem:[#allocation2 + $0xf0] sm:$0xff]
      %v1929 = vld [vmem:[#allocation2 + $0xf8] sm:$0xff]
      %v1946 = vunpack.c.l.b16 %v1882
      %v1947 = vunpack.c.h.b16 %v1882
      %v1948 = vunpack.c.l.b16 %v1883
      %v1949 = vunpack.c.h.b16 %v1883
      %v1950 = vunpack.c.l.b16 %v1884
      %v1951 = vunpack.c.h.b16 %v1884
      %v1952 = vunpack.c.l.b16 %v1885
      %v1953 = vunpack.c.h.b16 %v1885
      %v1954 = vunpack.c.l.b16 %v1886
      %v1955 = vunpack.c.h.b16 %v1886
      %v1956 = vunpack.c.l.b16 %v1887
      %v1957 = vunpack.c.h.b16 %v1887
      %v1958 = vunpack.c.l.b16 %v1888
      %v1959 = vunpack.c.h.b16 %v1888
      %v1960 = vunpack.c.l.b16 %v1889
      %v1961 = vunpack.c.h.b16 %v1889
      %v1962 = vunpack.c.l.b16 %v1890
      %v1963 = vunpack.c.h.b16 %v1890
      %v1964 = vunpack.c.l.b16 %v1891
      %v1965 = vunpack.c.h.b16 %v1891
      %v1966 = vunpack.c.l.b16 %v1892
      %v1967 = vunpack.c.h.b16 %v1892
      %v1968 = vunpack.c.l.b16 %v1893
      %v1969 = vunpack.c.h.b16 %v1893
      %v1970 = vunpack.c.l.b16 %v1894
      %v1971 = vunpack.c.h.b16 %v1894
      %v1972 = vunpack.c.l.b16 %v1895
      %v1973 = vunpack.c.h.b16 %v1895
      %v1974 = vunpack.c.l.b16 %v1896
      %v1975 = vunpack.c.h.b16 %v1896
      %v1976 = vunpack.c.l.b16 %v1897
      %v1977 = vunpack.c.h.b16 %v1897
      %v1978 = vpack.c.b16 %v1950, %v1946
      %v1979 = vpack.c.b16 %v1951, %v1947
      %v1980 = vpack.c.b16 %v1952, %v1948
      %v1981 = vpack.c.b16 %v1953, %v1949
      %v1982 = vpack.c.b16 %v1958, %v1954
      %v1983 = vpack.c.b16 %v1959, %v1955
      %v1984 = vpack.c.b16 %v1960, %v1956
      %v1985 = vpack.c.b16 %v1961, %v1957
      %v1986 = vpack.c.b16 %v1966, %v1962
      %v1987 = vpack.c.b16 %v1967, %v1963
      %v1988 = vpack.c.b16 %v1968, %v1964
      %v1989 = vpack.c.b16 %v1969, %v1965
      %v1990 = vpack.c.b16 %v1974, %v1970
      %v1991 = vpack.c.b16 %v1975, %v1971
      %v1992 = vpack.c.b16 %v1976, %v1972
      %v1993 = vpack.c.b16 %v1977, %v1973
      %2010 = vmatprep.subr.bf16.mxu0 0
      %2011 = vmatpush1.bf16.msra.mxu0 %v1898
      %2012 = vmatprep.subr.bf16.mxu0 0
      %2013 = vmatpush1.bf16.msra.mxu0 %v1899
      %2014 = vmatprep.subr.bf16.mxu0 0
      %2015 = vmatpush1.bf16.msra.mxu0 %v1900
      %2016 = vmatprep.subr.bf16.mxu0 0
      %2017 = vmatpush1.bf16.msra.mxu0 %v1901
      %2018 = vmatprep.subr.bf16.mxu0 0
      %2019 = vmatpush1.bf16.msra.mxu0 %v1902
      %2020 = vmatprep.subr.bf16.mxu0 0
      %2021 = vmatpush1.bf16.msra.mxu0 %v1903
      %2022 = vmatprep.subr.bf16.mxu0 0
      %2023 = vmatpush1.bf16.msra.mxu0 %v1904
      %2024 = vmatprep.subr.bf16.mxu0 0
      %2025 = vmatpush1.bf16.msra.mxu0 %v1905
      %2026 = vmatprep.subr.bf16.mxu0 0
      %2027 = vmatpush1.bf16.msra.mxu0 %v1906
      %2028 = vmatprep.subr.bf16.mxu0 0
      %2029 = vmatpush1.bf16.msra.mxu0 %v1907
      %2030 = vmatprep.subr.bf16.mxu0 0
      %2031 = vmatpush1.bf16.msra.mxu0 %v1908
      %2032 = vmatprep.subr.bf16.mxu0 0
      %2033 = vmatpush1.bf16.msra.mxu0 %v1909
      %2034 = vmatprep.subr.bf16.mxu0 0
      %2035 = vmatpush1.bf16.msra.mxu0 %v1910
      %2036 = vmatprep.subr.bf16.mxu0 0
      %2037 = vmatpush1.bf16.msra.mxu0 %v1911
      %2038 = vmatprep.subr.bf16.mxu0 0
      %2039 = vmatpush1.bf16.msra.mxu0 %v1912
      %2040 = vmatprep.subr.bf16.mxu0 0
      %2041 = vmatpush1.bf16.msra.mxu0 %v1913
      %2042 = vmatprep.mubr.bf16.mxu0 %v1979
      %2043 = vmatmul.mubr.bf16.gmra.mrb[0].mxu0 %v1978
      %v2044 = vpop.f32.mrb[0].mxu0
      %v2045 = vadd.f32 0.0, %v2044
      %v2046 = vpop.f32.mrb[0].mxu0
      %v2047 = vpop.f32.mrb[0].mxu0
      %v2048 = vadd.f32 0.0, %v2047
      %v2049 = vpop.f32.mrb[0].mxu0
      %2050 = vmatprep.mubr.bf16.mxu0 %v1983
      %2051 = vmatmul.mubr.bf16.gmra.mrb[0].mxu0 %v1982
      %v2052 = vpop.f32.mrb[0].mxu0
      %v2053 = vadd.f32 0.0, %v2052
      %v2054 = vpop.f32.mrb[0].mxu0
      %v2055 = vpop.f32.mrb[0].mxu0
      %v2056 = vadd.f32 0.0, %v2055
      %v2057 = vpop.f32.mrb[0].mxu0
      %2058 = vmatprep.mubr.bf16.mxu0 %v1987
      %2059 = vmatmul.mubr.bf16.gmra.mrb[0].mxu0 %v1986
      %v2060 = vpop.f32.mrb[0].mxu0
      %v2061 = vadd.f32 0.0, %v2060
      %v2062 = vpop.f32.mrb[0].mxu0
      %v2063 = vpop.f32.mrb[0].mxu0
      %v2064 = vadd.f32 0.0, %v2063
      %v2065 = vpop.f32.mrb[0].mxu0
      %2066 = vmatprep.mubr.bf16.mxu0 %v1991
      %2067 = vmatmul.mubr.bf16.gmra.mrb[0].mxu0 %v1990
      %v2068 = vpop.f32.mrb[0].mxu0
      %v2069 = vadd.f32 0.0, %v2068
      %v2070 = vpop.f32.mrb[0].mxu0
      %v2071 = vpop.f32.mrb[0].mxu0
      %v2072 = vadd.f32 0.0, %v2071
      %v2073 = vpop.f32.mrb[0].mxu0
      %2074 = vdwg.mxu0
      %2075 = vmatprep.subr.bf16.mxu0 0
      %2076 = vmatpush1.bf16.msra.mxu0 %v1914
      %2077 = vmatprep.subr.bf16.mxu0 0
      %2078 = vmatpush1.bf16.msra.mxu0 %v1915
      %2079 = vmatprep.subr.bf16.mxu0 0
      %2080 = vmatpush1.bf16.msra.mxu0 %v1916
      %2081 = vmatprep.subr.bf16.mxu0 0
      %2082 = vmatpush1.bf16.msra.mxu0 %v1917
      %2083 = vmatprep.subr.bf16.mxu0 0
      %2084 = vmatpush1.bf16.msra.mxu0 %v1918
      %2085 = vmatprep.subr.bf16.mxu0 0
      %2086 = vmatpush1.bf16.msra.mxu0 %v1919
      %2087 = vmatprep.subr.bf16.mxu0 0
      %2088 = vmatpush1.bf16.msra.mxu0 %v1920
      %2089 = vmatprep.subr.bf16.mxu0 0
      %2090 = vmatpush1.bf16.msra.mxu0 %v1921
      %2091 = vmatprep.subr.bf16.mxu0 0
      %2092 = vmatpush1.bf16.msra.mxu0 %v1922
      %2093 = vmatprep.subr.bf16.mxu0 0
      %2094 = vmatpush1.bf16.msra.mxu0 %v1923
      %2095 = vmatprep.subr.bf16.mxu0 0
      %2096 = vmatpush1.bf16.msra.mxu0 %v1924
      %2097 = vmatprep.subr.bf16.mxu0 0
      %2098 = vmatpush1.bf16.msra.mxu0 %v1925
      %2099 = vmatprep.subr.bf16.mxu0 0
      %2100 = vmatpush1.bf16.msra.mxu0 %v1926
      %2101 = vmatprep.subr.bf16.mxu0 0
      %2102 = vmatpush1.bf16.msra.mxu0 %v1927
      %2103 = vmatprep.subr.bf16.mxu0 0
      %2104 = vmatpush1.bf16.msra.mxu0 %v1928
      %2105 = vmatprep.subr.bf16.mxu0 0
      %2106 = vmatpush1.bf16.msra.mxu0 %v1929
      %2107 = vmatprep.mubr.bf16.mxu0 %v1981
      %2108 = vmatmul.mubr.bf16.gmra.mrb[0].mxu0 %v1980
      %v2109 = vpop.f32.mrb[0].mxu0
      %v2110 = vadd.f32 %v2045, %v2109
      %v2111 = vpop.f32.mrb[0].mxu0
      %v2112 = vpop.f32.mrb[0].mxu0
      %v2113 = vadd.f32 %v2048, %v2112
      %v2114 = vpop.f32.mrb[0].mxu0
      %2115 = vmatprep.mubr.bf16.mxu0 %v1985
      %2116 = vmatmul.mubr.bf16.gmra.mrb[0].mxu0 %v1984
      %v2117 = vpop.f32.mrb[0].mxu0
      %v2118 = vadd.f32 %v2053, %v2117
      %v2119 = vpop.f32.mrb[0].mxu0
      %v2120 = vpop.f32.mrb[0].mxu0
      %v2121 = vadd.f32 %v2056, %v2120
      %v2122 = vpop.f32.mrb[0].mxu0
      %2123 = vmatprep.mubr.bf16.mxu0 %v1989
      %2124 = vmatmul.mubr.bf16.gmra.mrb[0].mxu0 %v1988
      %v2125 = vpop.f32.mrb[0].mxu0
      %v2126 = vadd.f32 %v2061, %v2125
      %v2127 = vpop.f32.mrb[0].mxu0
      %v2128 = vpop.f32.mrb[0].mxu0
      %v2129 = vadd.f32 %v2064, %v2128
      %v2130 = vpop.f32.mrb[0].mxu0
      %2131 = vmatprep.mubr.bf16.mxu0 %v1993
      %2132 = vmatmul.mubr.bf16.gmra.mrb[0].mxu0 %v1992
      %v2133 = vpop.f32.mrb[0].mxu0
      %v2134 = vadd.f32 %v2069, %v2133
      %v2135 = vpop.f32.mrb[0].mxu0
      %v2136 = vpop.f32.mrb[0].mxu0
      %v2137 = vadd.f32 %v2072, %v2136
      %v2138 = vpop.f32.mrb[0].mxu0
      %2139 = vdwg.mxu0
      %v2140 = vsel %vm1785, %v2110, 0.0
      %2141 = vadd.xlane.f32.xlu0 %v2140
      %v2142 = vpop.xlane.xlu0 %2141
      %v2143 = vsel %vm1785, %v2113, 0.0
      %2144 = vadd.xlane.f32.xlu0 %v2143
      %v2145 = vpop.xlane.xlu0 %2144
      %v2146 = vsel %vm1785, %v2118, 0.0
      %2147 = vadd.xlane.f32.xlu0 %v2146
      %v2148 = vpop.xlane.xlu0 %2147
      %v2149 = vsel %vm1785, %v2121, 0.0
      %2150 = vadd.xlane.f32.xlu0 %v2149
      %v2151 = vpop.xlane.xlu0 %2150
      %v2152 = vsel %vm1785, %v2126, 0.0
      %2153 = vadd.xlane.f32.xlu0 %v2152
      %v2154 = vpop.xlane.xlu0 %2153
      %v2155 = vsel %vm1785, %v2129, 0.0
      %2156 = vadd.xlane.f32.xlu0 %v2155
      %v2157 = vpop.xlane.xlu0 %2156
      %v2158 = vsel %vm1785, %v2134, 0.0
      %2159 = vadd.xlane.f32.xlu0 %v2158
      %v2160 = vpop.xlane.xlu0 %2159
      %v2161 = vsel %vm1785, %v2137, 0.0
      %2162 = vadd.xlane.f32.xlu0 %v2161
      %v2163 = vpop.xlane.xlu0 %2162
      %v2164 = vrcp.pop 64.0
      %v2165 = vmul.f32 %v2142, %v2164
      %v2166 = vmul.f32 %v2145, %v2164
      %v2167 = vmul.f32 %v2148, %v2164
      %v2168 = vmul.f32 %v2151, %v2164
      %v2169 = vmul.f32 %v2154, %v2164
      %v2170 = vmul.f32 %v2157, %v2164
      %v2171 = vmul.f32 %v2160, %v2164
      %v2172 = vmul.f32 %v2163, %v2164
      %v2173 = vsub.f32 %v2110, %v2165
      %v2174 = vsub.f32 %v2113, %v2166
      %v2175 = vsub.f32 %v2118, %v2167
      %v2176 = vsub.f32 %v2121, %v2168
      %v2177 = vsub.f32 %v2126, %v2169
      %v2178 = vsub.f32 %v2129, %v2170
      %v2179 = vsub.f32 %v2134, %v2171
      %v2180 = vsub.f32 %v2137, %v2172
      %v2181 = vmul.f32 %v2173, %v2173
      %v2182 = vmul.f32 %v2174, %v2174
      %v2183 = vmul.f32 %v2175, %v2175
      %v2184 = vmul.f32 %v2176, %v2176
      %v2185 = vmul.f32 %v2177, %v2177
      %v2186 = vmul.f32 %v2178, %v2178
      %v2187 = vmul.f32 %v2179, %v2179
      %v2188 = vmul.f32 %v2180, %v2180
      %v2189 = vsel %vm1785, %v2181, 0.0
      %2190 = vadd.xlane.f32.xlu0 %v2189
      %v2191 = vpop.xlane.xlu0 %2190
      %v2192 = vsel %vm1785, %v2182, 0.0
      %2193 = vadd.xlane.f32.xlu0 %v2192
      %v2194 = vpop.xlane.xlu0 %2193
      %v2195 = vsel %vm1785, %v2183, 0.0
      %2196 = vadd.xlane.f32.xlu0 %v2195
      %v2197 = vpop.xlane.xlu0 %2196
      %v2198 = vsel %vm1785, %v2184, 0.0
      %2199 = vadd.xlane.f32.xlu0 %v2198
      %v2200 = vpop.xlane.xlu0 %2199
      %v2201 = vsel %vm1785, %v2185, 0.0
      %2202 = vadd.xlane.f32.xlu0 %v2201
      %v2203 = vpop.xlane.xlu0 %2202
      %v2204 = vsel %vm1785, %v2186, 0.0
      %2205 = vadd.xlane.f32.xlu0 %v2204
      %v2206 = vpop.xlane.xlu0 %2205
      %v2207 = vsel %vm1785, %v2187, 0.0
      %2208 = vadd.xlane.f32.xlu0 %v2207
      %v2209 = vpop.xlane.xlu0 %2208
      %v2210 = vsel %vm1785, %v2188, 0.0
      %2211 = vadd.xlane.f32.xlu0 %v2210
      %v2212 = vpop.xlane.xlu0 %2211
      %v2213 = vmul.f32 %v2191, %v2164
      %v2214 = vmul.f32 %v2194, %v2164
      %v2215 = vmul.f32 %v2197, %v2164
      %v2216 = vmul.f32 %v2200, %v2164
      %v2217 = vmul.f32 %v2203, %v2164
      %v2218 = vmul.f32 %v2206, %v2164
      %v2219 = vmul.f32 %v2209, %v2164
      %v2220 = vmul.f32 %v2212, %v2164
      %v2221 = vadd.f32 %v2213, 1e-05
      %v2222 = vadd.f32 %v2214, 1e-05
      %v2223 = vadd.f32 %v2215, 1e-05
      %v2224 = vadd.f32 %v2216, 1e-05
      %v2225 = vadd.f32 %v2217, 1e-05
      %v2226 = vadd.f32 %v2218, 1e-05
      %v2227 = vadd.f32 %v2219, 1e-05
      %v2228 = vadd.f32 %v2220, 1e-05
      %v2229 = vrsqrt.pop %v2221
      %v2230 = vrsqrt.pop %v2222
      %v2231 = vrsqrt.pop %v2223
      %v2232 = vrsqrt.pop %v2224
      %v2233 = vrsqrt.pop %v2225
      %v2234 = vrsqrt.pop %v2226
      %v2235 = vrsqrt.pop %v2227
      %v2236 = vrsqrt.pop %v2228
      %v2237 = vmul.f32 %v2173, %v2229
      %v2238 = vmul.f32 %v2174, %v2230
      %v2239 = vmul.f32 %v2175, %v2231
      %v2240 = vmul.f32 %v2176, %v2232
      %v2241 = vmul.f32 %v2177, %v2233
      %v2242 = vmul.f32 %v2178, %v2234
      %v2243 = vmul.f32 %v2179, %v2235
      %v2244 = vmul.f32 %v2180, %v2236
      %v2245 = vld [vmem:[%s4] sm:$0xff]
      %v2246 = vld [vmem:[%s4 + $0x8] sm:$0xff]
      %v2247 = vld [vmem:[%s4 + $0x10] sm:$0xff]
      %v2248 = vld [vmem:[%s4 + $0x18] sm:$0xff]
      %v2249 = vld [vmem:[%s4 + $0x20] sm:$0xff]
      %v2250 = vld [vmem:[%s4 + $0x28] sm:$0xff]
      %v2251 = vld [vmem:[%s4 + $0x30] sm:$0xff]
      %v2252 = vld [vmem:[%s4 + $0x38] sm:$0xff]
      %2254 = vset.pattern.permute.xlu0 0
      %2255 = vperm.xlu0 %2254, %v2245
      %v2256 = vpop.permute.xlu0 %2255
      %2259 = vset.pattern.permute.xlu0 0
      %2260 = vperm.xlu0 %2259, %v2246
      %v2261 = vpop.permute.xlu0 %2260
      %2264 = vset.pattern.permute.xlu0 0
      %2265 = vperm.xlu0 %2264, %v2247
      %v2266 = vpop.permute.xlu0 %2265
      %2269 = vset.pattern.permute.xlu0 0
      %2270 = vperm.xlu0 %2269, %v2248
      %v2271 = vpop.permute.xlu0 %2270
      %2274 = vset.pattern.permute.xlu0 0
      %2275 = vperm.xlu0 %2274, %v2249
      %v2276 = vpop.permute.xlu0 %2275
      %2279 = vset.pattern.permute.xlu0 0
      %2280 = vperm.xlu0 %2279, %v2250
      %v2281 = vpop.permute.xlu0 %2280
      %2284 = vset.pattern.permute.xlu0 0
      %2285 = vperm.xlu0 %2284, %v2251
      %v2286 = vpop.permute.xlu0 %2285
      %2289 = vset.pattern.permute.xlu0 0
      %2290 = vperm.xlu0 %2289, %v2252
      %v2291 = vpop.permute.xlu0 %2290
      %v2293 = vmul.f32 %v2237, %v2256
      %v2294 = vmul.f32 %v2238, %v2261
      %v2295 = vmul.f32 %v2239, %v2266
      %v2296 = vmul.f32 %v2240, %v2271
      %v2297 = vmul.f32 %v2241, %v2276
      %v2298 = vmul.f32 %v2242, %v2281
      %v2299 = vmul.f32 %v2243, %v2286
      %v2300 = vmul.f32 %v2244, %v2291
      %v2301 = vld [vmem:[%s5] sm:$0xff]
      %v2302 = vld [vmem:[%s5 + $0x8] sm:$0xff]
      %v2303 = vld [vmem:[%s5 + $0x10] sm:$0xff]
      %v2304 = vld [vmem:[%s5 + $0x18] sm:$0xff]
      %v2305 = vld [vmem:[%s5 + $0x20] sm:$0xff]
      %v2306 = vld [vmem:[%s5 + $0x28] sm:$0xff]
      %v2307 = vld [vmem:[%s5 + $0x30] sm:$0xff]
      %v2308 = vld [vmem:[%s5 + $0x38] sm:$0xff]
      %2310 = vset.pattern.permute.xlu0 0
      %2311 = vperm.xlu0 %2310, %v2301
      %v2312 = vpop.permute.xlu0 %2311
      %2315 = vset.pattern.permute.xlu0 0
      %2316 = vperm.xlu0 %2315, %v2302
      %v2317 = vpop.permute.xlu0 %2316
      %2320 = vset.pattern.permute.xlu0 0
      %2321 = vperm.xlu0 %2320, %v2303
      %v2322 = vpop.permute.xlu0 %2321
      %2325 = vset.pattern.permute.xlu0 0
      %2326 = vperm.xlu0 %2325, %v2304
      %v2327 = vpop.permute.xlu0 %2326
      %2330 = vset.pattern.permute.xlu0 0
      %2331 = vperm.xlu0 %2330, %v2305
      %v2332 = vpop.permute.xlu0 %2331
      %2335 = vset.pattern.permute.xlu0 0
      %2336 = vperm.xlu0 %2335, %v2306
      %v2337 = vpop.permute.xlu0 %2336
      %2340 = vset.pattern.permute.xlu0 0
      %2341 = vperm.xlu0 %2340, %v2307
      %v2342 = vpop.permute.xlu0 %2341
      %2345 = vset.pattern.permute.xlu0 0
      %2346 = vperm.xlu0 %2345, %v2308
      %v2347 = vpop.permute.xlu0 %2346
      %v2349 = vadd.f32 %v2293, %v2312
      %v2350 = vadd.f32 %v2294, %v2317
      %v2351 = vadd.f32 %v2295, %v2322
      %v2352 = vadd.f32 %v2296, %v2327
      %v2353 = vadd.f32 %v2297, %v2332
      %v2354 = vadd.f32 %v2298, %v2337
      %v2355 = vadd.f32 %v2299, %v2342
      %v2356 = vadd.f32 %v2300, %v2347
      %vm2357 = vcmp.gt.f32.partialorder %v2349, 0.0
      %vm2358 = vcmp.gt.f32.partialorder %v2350, 0.0
      %vm2359 = vcmp.gt.f32.partialorder %v2351, 0.0
      %vm2360 = vcmp.gt.f32.partialorder %v2352, 0.0
      %vm2361 = vcmp.gt.f32.partialorder %v2353, 0.0
      %vm2362 = vcmp.gt.f32.partialorder %v2354, 0.0
      %vm2363 = vcmp.gt.f32.partialorder %v2355, 0.0
      %vm2364 = vcmp.gt.f32.partialorder %v2356, 0.0
      %v2365 = vmul.f32 %v2349, 0.2
      %v2366 = vmul.f32 %v2350, 0.2
      %v2367 = vmul.f32 %v2351, 0.2
      %v2368 = vmul.f32 %v2352, 0.2
      %v2369 = vmul.f32 %v2353, 0.2
      %v2370 = vmul.f32 %v2354, 0.2
      %v2371 = vmul.f32 %v2355, 0.2
      %v2372 = vmul.f32 %v2356, 0.2
      %v2373 = vsel %vm2357, %v2349, %v2365
      %v2374 = vsel %vm2358, %v2350, %v2366
      %v2375 = vsel %vm2359, %v2351, %v2367
      %v2376 = vsel %vm2360, %v2352, %v2368
      %v2377 = vsel %vm2361, %v2353, %v2369
      %v2378 = vsel %vm2362, %v2354, %v2370
      %v2379 = vsel %vm2363, %v2355, %v2371
      %v2380 = vsel %vm2364, %v2356, %v2372
      %v2381 = vpack.c.bf16 %v2374, %v2373
      %v2382 = vpack.c.bf16 %v2376, %v2375
      %v2383 = vpack.c.bf16 %v2378, %v2377
      %v2384 = vpack.c.bf16 %v2380, %v2379
      %v2385 = vld [vmem:[%s6] sm:$0xff]
      %v2386 = vld [vmem:[%s6 + $0x8] sm:$0xff]
      %v2387 = vld [vmem:[%s6 + $0x10] sm:$0xff]
      %v2388 = vld [vmem:[%s6 + $0x18] sm:$0xff]
      %v2389 = vld [vmem:[%s6 + $0x20] sm:$0xff]
      %v2390 = vld [vmem:[%s6 + $0x28] sm:$0xff]
      %v2391 = vld [vmem:[%s6 + $0x30] sm:$0xff]
      %v2392 = vld [vmem:[%s6 + $0x38] sm:$0xff]
      %v2401 = vunpack.c.l.b16 %v2385
      %v2402 = vunpack.c.h.b16 %v2385
      %v2403 = vunpack.c.l.b16 %v2386
      %v2404 = vunpack.c.h.b16 %v2386
      %v2405 = vunpack.c.l.b16 %v2387
      %v2406 = vunpack.c.h.b16 %v2387
      %v2407 = vunpack.c.l.b16 %v2388
      %v2408 = vunpack.c.h.b16 %v2388
      %v2409 = vunpack.c.l.b16 %v2389
      %v2410 = vunpack.c.h.b16 %v2389
      %v2411 = vunpack.c.l.b16 %v2390
      %v2412 = vunpack.c.h.b16 %v2390
      %v2413 = vunpack.c.l.b16 %v2391
      %v2414 = vunpack.c.h.b16 %v2391
      %v2415 = vunpack.c.l.b16 %v2392
      %v2416 = vunpack.c.h.b16 %v2392
      %v2417 = vpack.c.b16 %v2403, %v2401
      %v2418 = vpack.c.b16 %v2404, %v2402
      %v2419 = vpack.c.b16 %v2407, %v2405
      %v2420 = vpack.c.b16 %v2408, %v2406
      %v2421 = vpack.c.b16 %v2411, %v2409
      %v2422 = vpack.c.b16 %v2412, %v2410
      %v2423 = vpack.c.b16 %v2415, %v2413
      %v2424 = vpack.c.b16 %v2416, %v2414
      %v2434 = vsel %vm1785, %v2381, 0
      %v2437 = vsel %vm1785, %v2382, 0
      %v2440 = vsel %vm1785, %v2383, 0
      %v2443 = vsel %vm1785, %v2384, 0
      %2445 = vmatprep.subr.bf16.mxu0 %v2418
      %2446 = vmatpush1.bf16.msra.mxu0 %v2417
      %2447 = vmatprep.subr.bf16.mxu0 %v2420
      %2448 = vmatpush1.bf16.msra.mxu0 %v2419
      %2449 = vmatprep.subr.bf16.mxu0 %v2422
      %2450 = vmatpush1.bf16.msra.mxu0 %v2421
      %2451 = vmatprep.subr.bf16.mxu0 %v2424
      %2452 = vmatpush1.bf16.msra.mxu0 %v2423
      %2453 = vmatprep.subr.bf16.mxu0 0
      %2454 = vmatpush1.bf16.msra.mxu0 0
      %2455 = vmatprep.subr.bf16.mxu0 0
      %2456 = vmatpush1.bf16.msra.mxu0 0
      %2457 = vmatprep.subr.bf16.mxu0 0
      %2458 = vmatpush1.bf16.msra.mxu0 0
      %2459 = vmatprep.subr.bf16.mxu0 0
      %2460 = vmatpush1.bf16.msra.mxu0 0
      %2461 = vmatprep.subr.bf16.mxu0 0
      %2462 = vmatpush1.bf16.msra.mxu0 0
      %2463 = vmatprep.subr.bf16.mxu0 0
      %2464 = vmatpush1.bf16.msra.mxu0 0
      %2465 = vmatprep.subr.bf16.mxu0 0
      %2466 = vmatpush1.bf16.msra.mxu0 0
      %2467 = vmatprep.subr.bf16.mxu0 0
      %2468 = vmatpush1.bf16.msra.mxu0 0
      %2469 = vmatprep.subr.bf16.mxu0 0
      %2470 = vmatpush1.bf16.msra.mxu0 0
      %2471 = vmatprep.subr.bf16.mxu0 0
      %2472 = vmatpush1.bf16.msra.mxu0 0
      %2473 = vmatprep.subr.bf16.mxu0 0
      %2474 = vmatpush1.bf16.msra.mxu0 0
      %2475 = vmatprep.subr.bf16.mxu0 0
      %2476 = vmatpush1.bf16.msra.mxu0 0
      %2477 = vmatprep.mubr.bf16.mxu0 0
      %2478 = vmatmul.mubr.bf16.gmra.mrb[0].mxu0 %v2434
      %v2479 = vpop.f32.mrb[0].mxu0
      %v2480 = vadd.f32 0.0, %v2479
      %v2481 = vpop.f32.mrb[0].mxu0
      %v2482 = vadd.f32 0.0, %v2481
      %v2483 = vpop.f32.mrb[0].mxu0
      %v2484 = vadd.f32 0.0, %v2483
      %v2485 = vpop.f32.mrb[0].mxu0
      %v2486 = vadd.f32 0.0, %v2485
      %2487 = vmatprep.mubr.bf16.mxu0 0
      %2488 = vmatmul.mubr.bf16.gmra.mrb[0].mxu0 %v2437
      %v2489 = vpop.f32.mrb[0].mxu0
      %v2490 = vadd.f32 0.0, %v2489
      %v2491 = vpop.f32.mrb[0].mxu0
      %v2492 = vadd.f32 0.0, %v2491
      %v2493 = vpop.f32.mrb[0].mxu0
      %v2494 = vadd.f32 0.0, %v2493
      %v2495 = vpop.f32.mrb[0].mxu0
      %v2496 = vadd.f32 0.0, %v2495
      %2497 = vmatprep.mubr.bf16.mxu0 0
      %2498 = vmatmul.mubr.bf16.gmra.mrb[0].mxu0 %v2440
      %v2499 = vpop.f32.mrb[0].mxu0
      %v2500 = vadd.f32 0.0, %v2499
      %v2501 = vpop.f32.mrb[0].mxu0
      %v2502 = vadd.f32 0.0, %v2501
      %v2503 = vpop.f32.mrb[0].mxu0
      %v2504 = vadd.f32 0.0, %v2503
      %v2505 = vpop.f32.mrb[0].mxu0
      %v2506 = vadd.f32 0.0, %v2505
      %2507 = vmatprep.mubr.bf16.mxu0 0
      %2508 = vmatmul.mubr.bf16.gmra.mrb[0].mxu0 %v2443
      %v2509 = vpop.f32.mrb[0].mxu0
      %v2510 = vadd.f32 0.0, %v2509
      %v2511 = vpop.f32.mrb[0].mxu0
      %v2512 = vadd.f32 0.0, %v2511
      %v2513 = vpop.f32.mrb[0].mxu0
      %v2514 = vadd.f32 0.0, %v2513
      %v2515 = vpop.f32.mrb[0].mxu0
      %v2516 = vadd.f32 0.0, %v2515
      %2517 = vdwg.mxu0
      %v2518 = vpack.c.bf16 %v2484, %v2480
      %v2519 = vpack.c.bf16 %v2486, %v2482
      %v2520 = vpack.c.bf16 %v2494, %v2490
      %v2521 = vpack.c.bf16 %v2496, %v2492
      %v2522 = vpack.c.bf16 %v2504, %v2500
      %v2523 = vpack.c.bf16 %v2506, %v2502
      %v2524 = vpack.c.bf16 %v2514, %v2510
      %v2525 = vpack.c.bf16 %v2516, %v2512
      %vm2526 = vcmask 130048
      %2527 = vst.msk [vmem:[#allocation3] sm:$0xff] %vm2526, %v2518
      %2528 = vst.msk [vmem:[#allocation3 + $0x8] sm:$0xff] %vm2526, %v2520
      %2529 = vst.msk [vmem:[#allocation3 + $0x10] sm:$0xff] %vm2526, %v2522
      %2530 = vst.msk [vmem:[#allocation3 + $0x18] sm:$0xff] %vm2526, %v2524
      %2535 = vrot.lane.b32.xlu0 %v2518, 112
      %v2536 = vpop.permute.xlu0 %2535
      %2537 = vrot.lane.b32.xlu0 %v2520, 112
      %v2538 = vpop.permute.xlu0 %2537
      %2539 = vrot.lane.b32.xlu0 %v2522, 112
      %v2540 = vpop.permute.xlu0 %2539
      %2541 = vrot.lane.b32.xlu0 %v2524, 112
      %v2542 = vpop.permute.xlu0 %2541
      %2547 = vst.msk [vmem:[#allocation3 + $0x20] sm:$0xff] %vm2526, %v2536
      %2548 = vst.msk [vmem:[#allocation3 + $0x28] sm:$0xff] %vm2526, %v2538
      %2549 = vst.msk [vmem:[#allocation3 + $0x30] sm:$0xff] %vm2526, %v2540
      %2550 = vst.msk [vmem:[#allocation3 + $0x38] sm:$0xff] %vm2526, %v2542
      %2551 = vrot.lane.b32.xlu0 %v2518, 96
      %v2552 = vpop.permute.xlu0 %2551
      %2553 = vrot.lane.b32.xlu0 %v2520, 96
      %v2554 = vpop.permute.xlu0 %2553
      %2555 = vrot.lane.b32.xlu0 %v2522, 96
      %v2556 = vpop.permute.xlu0 %2555
      %2557 = vrot.lane.b32.xlu0 %v2524, 96
      %v2558 = vpop.permute.xlu0 %2557
      %2563 = vst.msk [vmem:[#allocation3 + $0x40] sm:$0xff] %vm2526, %v2552
      %2564 = vst.msk [vmem:[#allocation3 + $0x48] sm:$0xff] %vm2526, %v2554
      %2565 = vst.msk [vmem:[#allocation3 + $0x50] sm:$0xff] %vm2526, %v2556
      %2566 = vst.msk [vmem:[#allocation3 + $0x58] sm:$0xff] %vm2526, %v2558
      %2567 = vrot.lane.b32.xlu0 %v2518, 80
      %v2568 = vpop.permute.xlu0 %2567
      %2569 = vrot.lane.b32.xlu0 %v2520, 80
      %v2570 = vpop.permute.xlu0 %2569
      %2571 = vrot.lane.b32.xlu0 %v2522, 80
      %v2572 = vpop.permute.xlu0 %2571
      %2573 = vrot.lane.b32.xlu0 %v2524, 80
      %v2574 = vpop.permute.xlu0 %2573
      %2579 = vst.msk [vmem:[#allocation3 + $0x60] sm:$0xff] %vm2526, %v2568
      %2580 = vst.msk [vmem:[#allocation3 + $0x68] sm:$0xff] %vm2526, %v2570
      %2581 = vst.msk [vmem:[#allocation3 + $0x70] sm:$0xff] %vm2526, %v2572
      %2582 = vst.msk [vmem:[#allocation3 + $0x78] sm:$0xff] %vm2526, %v2574
      %2583 = vrot.lane.b32.xlu0 %v2518, 64
      %v2584 = vpop.permute.xlu0 %2583
      %2585 = vrot.lane.b32.xlu0 %v2520, 64
      %v2586 = vpop.permute.xlu0 %2585
      %2587 = vrot.lane.b32.xlu0 %v2522, 64
      %v2588 = vpop.permute.xlu0 %2587
      %2589 = vrot.lane.b32.xlu0 %v2524, 64
      %v2590 = vpop.permute.xlu0 %2589
      %2595 = vst.msk [vmem:[#allocation3 + $0x80] sm:$0xff] %vm2526, %v2584
      %2596 = vst.msk [vmem:[#allocation3 + $0x88] sm:$0xff] %vm2526, %v2586
      %2597 = vst.msk [vmem:[#allocation3 + $0x90] sm:$0xff] %vm2526, %v2588
      %2598 = vst.msk [vmem:[#allocation3 + $0x98] sm:$0xff] %vm2526, %v2590
      %2599 = vrot.lane.b32.xlu0 %v2518, 48
      %v2600 = vpop.permute.xlu0 %2599
      %2601 = vrot.lane.b32.xlu0 %v2520, 48
      %v2602 = vpop.permute.xlu0 %2601
      %2603 = vrot.lane.b32.xlu0 %v2522, 48
      %v2604 = vpop.permute.xlu0 %2603
      %2605 = vrot.lane.b32.xlu0 %v2524, 48
      %v2606 = vpop.permute.xlu0 %2605
      %2611 = vst.msk [vmem:[#allocation3 + $0xa0] sm:$0xff] %vm2526, %v2600
      %2612 = vst.msk [vmem:[#allocation3 + $0xa8] sm:$0xff] %vm2526, %v2602
      %2613 = vst.msk [vmem:[#allocation3 + $0xb0] sm:$0xff] %vm2526, %v2604
      %2614 = vst.msk [vmem:[#allocation3 + $0xb8] sm:$0xff] %vm2526, %v2606
      %2615 = vrot.lane.b32.xlu0 %v2518, 32
      %v2616 = vpop.permute.xlu0 %2615
      %2617 = vrot.lane.b32.xlu0 %v2520, 32
      %v2618 = vpop.permute.xlu0 %2617
      %2619 = vrot.lane.b32.xlu0 %v2522, 32
      %v2620 = vpop.permute.xlu0 %2619
      %2621 = vrot.lane.b32.xlu0 %v2524, 32
      %v2622 = vpop.permute.xlu0 %2621
      %2627 = vst.msk [vmem:[#allocation3 + $0xc0] sm:$0xff] %vm2526, %v2616
      %2628 = vst.msk [vmem:[#allocation3 + $0xc8] sm:$0xff] %vm2526, %v2618
      %2629 = vst.msk [vmem:[#allocation3 + $0xd0] sm:$0xff] %vm2526, %v2620
      %2630 = vst.msk [vmem:[#allocation3 + $0xd8] sm:$0xff] %vm2526, %v2622
      %2631 = vrot.lane.b32.xlu0 %v2518, 16
      %v2632 = vpop.permute.xlu0 %2631
      %2633 = vrot.lane.b32.xlu0 %v2520, 16
      %v2634 = vpop.permute.xlu0 %2633
      %2635 = vrot.lane.b32.xlu0 %v2522, 16
      %v2636 = vpop.permute.xlu0 %2635
      %2637 = vrot.lane.b32.xlu0 %v2524, 16
      %v2638 = vpop.permute.xlu0 %2637
      %2643 = vst.msk [vmem:[#allocation3 + $0xe0] sm:$0xff] %vm2526, %v2632
      %2644 = vst.msk [vmem:[#allocation3 + $0xe8] sm:$0xff] %vm2526, %v2634
      %2645 = vst.msk [vmem:[#allocation3 + $0xf0] sm:$0xff] %vm2526, %v2636
      %2646 = vst.msk [vmem:[#allocation3 + $0xf8] sm:$0xff] %vm2526, %v2638
      %2647 = vst.msk [vmem:[#allocation3 + $0x100] sm:$0xff] %vm2526, %v2519
      %2648 = vst.msk [vmem:[#allocation3 + $0x108] sm:$0xff] %vm2526, %v2521
      %2649 = vst.msk [vmem:[#allocation3 + $0x110] sm:$0xff] %vm2526, %v2523
      %2650 = vst.msk [vmem:[#allocation3 + $0x118] sm:$0xff] %vm2526, %v2525
      %2655 = vrot.lane.b32.xlu0 %v2519, 112
      %v2656 = vpop.permute.xlu0 %2655
      %2657 = vrot.lane.b32.xlu0 %v2521, 112
      %v2658 = vpop.permute.xlu0 %2657
      %2659 = vrot.lane.b32.xlu0 %v2523, 112
      %v2660 = vpop.permute.xlu0 %2659
      %2661 = vrot.lane.b32.xlu0 %v2525, 112
      %v2662 = vpop.permute.xlu0 %2661
      %2667 = vst.msk [vmem:[#allocation3 + $0x120] sm:$0xff] %vm2526, %v2656
      %2668 = vst.msk [vmem:[#allocation3 + $0x128] sm:$0xff] %vm2526, %v2658
      %2669 = vst.msk [vmem:[#allocation3 + $0x130] sm:$0xff] %vm2526, %v2660
      %2670 = vst.msk [vmem:[#allocation3 + $0x138] sm:$0xff] %vm2526, %v2662
      %2671 = vrot.lane.b32.xlu0 %v2519, 96
      %v2672 = vpop.permute.xlu0 %2671
      %2673 = vrot.lane.b32.xlu0 %v2521, 96
      %v2674 = vpop.permute.xlu0 %2673
      %2675 = vrot.lane.b32.xlu0 %v2523, 96
      %v2676 = vpop.permute.xlu0 %2675
      %2677 = vrot.lane.b32.xlu0 %v2525, 96
      %v2678 = vpop.permute.xlu0 %2677
      %2683 = vst.msk [vmem:[#allocation3 + $0x140] sm:$0xff] %vm2526, %v2672
      %2684 = vst.msk [vmem:[#allocation3 + $0x148] sm:$0xff] %vm2526, %v2674
      %2685 = vst.msk [vmem:[#allocation3 + $0x150] sm:$0xff] %vm2526, %v2676
      %2686 = vst.msk [vmem:[#allocation3 + $0x158] sm:$0xff] %vm2526, %v2678
      %2687 = vrot.lane.b32.xlu0 %v2519, 80
      %v2688 = vpop.permute.xlu0 %2687
      %2689 = vrot.lane.b32.xlu0 %v2521, 80
      %v2690 = vpop.permute.xlu0 %2689
      %2691 = vrot.lane.b32.xlu0 %v2523, 80
      %v2692 = vpop.permute.xlu0 %2691
      %2693 = vrot.lane.b32.xlu0 %v2525, 80
      %v2694 = vpop.permute.xlu0 %2693
      %2699 = vst.msk [vmem:[#allocation3 + $0x160] sm:$0xff] %vm2526, %v2688
      %2700 = vst.msk [vmem:[#allocation3 + $0x168] sm:$0xff] %vm2526, %v2690
      %2701 = vst.msk [vmem:[#allocation3 + $0x170] sm:$0xff] %vm2526, %v2692
      %2702 = vst.msk [vmem:[#allocation3 + $0x178] sm:$0xff] %vm2526, %v2694
      %2703 = vrot.lane.b32.xlu0 %v2519, 64
      %v2704 = vpop.permute.xlu0 %2703
      %2705 = vrot.lane.b32.xlu0 %v2521, 64
      %v2706 = vpop.permute.xlu0 %2705
      %2707 = vrot.lane.b32.xlu0 %v2523, 64
      %v2708 = vpop.permute.xlu0 %2707
      %2709 = vrot.lane.b32.xlu0 %v2525, 64
      %v2710 = vpop.permute.xlu0 %2709
      %2715 = vst.msk [vmem:[#allocation3 + $0x180] sm:$0xff] %vm2526, %v2704
      %2716 = vst.msk [vmem:[#allocation3 + $0x188] sm:$0xff] %vm2526, %v2706
      %2717 = vst.msk [vmem:[#allocation3 + $0x190] sm:$0xff] %vm2526, %v2708
      %2718 = vst.msk [vmem:[#allocation3 + $0x198] sm:$0xff] %vm2526, %v2710
      %2719 = vrot.lane.b32.xlu0 %v2519, 48
      %v2720 = vpop.permute.xlu0 %2719
      %2721 = vrot.lane.b32.xlu0 %v2521, 48
      %v2722 = vpop.permute.xlu0 %2721
      %2723 = vrot.lane.b32.xlu0 %v2523, 48
      %v2724 = vpop.permute.xlu0 %2723
      %2725 = vrot.lane.b32.xlu0 %v2525, 48
      %v2726 = vpop.permute.xlu0 %2725
      %2731 = vst.msk [vmem:[#allocation3 + $0x1a0] sm:$0xff] %vm2526, %v2720
      %2732 = vst.msk [vmem:[#allocation3 + $0x1a8] sm:$0xff] %vm2526, %v2722
      %2733 = vst.msk [vmem:[#allocation3 + $0x1b0] sm:$0xff] %vm2526, %v2724
      %2734 = vst.msk [vmem:[#allocation3 + $0x1b8] sm:$0xff] %vm2526, %v2726
      %2735 = vrot.lane.b32.xlu0 %v2519, 32
      %v2736 = vpop.permute.xlu0 %2735
      %2737 = vrot.lane.b32.xlu0 %v2521, 32
      %v2738 = vpop.permute.xlu0 %2737
      %2739 = vrot.lane.b32.xlu0 %v2523, 32
      %v2740 = vpop.permute.xlu0 %2739
      %2741 = vrot.lane.b32.xlu0 %v2525, 32
      %v2742 = vpop.permute.xlu0 %2741
      %2747 = vst.msk [vmem:[#allocation3 + $0x1c0] sm:$0xff] %vm2526, %v2736
      %2748 = vst.msk [vmem:[#allocation3 + $0x1c8] sm:$0xff] %vm2526, %v2738
      %2749 = vst.msk [vmem:[#allocation3 + $0x1d0] sm:$0xff] %vm2526, %v2740
      %2750 = vst.msk [vmem:[#allocation3 + $0x1d8] sm:$0xff] %vm2526, %v2742
      %2751 = vrot.lane.b32.xlu0 %v2519, 16
      %v2752 = vpop.permute.xlu0 %2751
      %2753 = vrot.lane.b32.xlu0 %v2521, 16
      %v2754 = vpop.permute.xlu0 %2753
      %2755 = vrot.lane.b32.xlu0 %v2523, 16
      %v2756 = vpop.permute.xlu0 %2755
      %2757 = vrot.lane.b32.xlu0 %v2525, 16
      %v2758 = vpop.permute.xlu0 %2757
      %2763 = vst.msk [vmem:[#allocation3 + $0x1e0] sm:$0xff] %vm2526, %v2752
      %2764 = vst.msk [vmem:[#allocation3 + $0x1e8] sm:$0xff] %vm2526, %v2754
      %2765 = vst.msk [vmem:[#allocation3 + $0x1f0] sm:$0xff] %vm2526, %v2756
      %2766 = vst.msk [vmem:[#allocation3 + $0x1f8] sm:$0xff] %vm2526, %v2758
      %v2767 = vld [vmem:[%s7] sm:$0xff]
      %v2768 = vld [vmem:[%s7 + $0x8] sm:$0xff]
      %v2769 = vld [vmem:[%s7 + $0x10] sm:$0xff]
      %v2770 = vld [vmem:[%s7 + $0x18] sm:$0xff]
      %v2771 = vld [vmem:[%s7 + $0x20] sm:$0xff]
      %v2772 = vld [vmem:[%s7 + $0x28] sm:$0xff]
      %v2773 = vld [vmem:[%s7 + $0x30] sm:$0xff]
      %v2774 = vld [vmem:[%s7 + $0x38] sm:$0xff]
      %v2775 = vld [vmem:[%s7 + $0x40] sm:$0xff]
      %v2776 = vld [vmem:[%s7 + $0x48] sm:$0xff]
      %v2777 = vld [vmem:[%s7 + $0x50] sm:$0xff]
      %v2778 = vld [vmem:[%s7 + $0x58] sm:$0xff]
      %v2779 = vld [vmem:[%s7 + $0x60] sm:$0xff]
      %v2780 = vld [vmem:[%s7 + $0x68] sm:$0xff]
      %v2781 = vld [vmem:[%s7 + $0x70] sm:$0xff]
      %v2782 = vld [vmem:[%s7 + $0x78] sm:$0xff]
      %v2783 = vld [vmem:[%s7 + $0x80] sm:$0xff]
      %v2784 = vld [vmem:[%s7 + $0x88] sm:$0xff]
      %v2785 = vld [vmem:[%s7 + $0x90] sm:$0xff]
      %v2786 = vld [vmem:[%s7 + $0x98] sm:$0xff]
      %v2787 = vld [vmem:[%s7 + $0xa0] sm:$0xff]
      %v2788 = vld [vmem:[%s7 + $0xa8] sm:$0xff]
      %v2789 = vld [vmem:[%s7 + $0xb0] sm:$0xff]
      %v2790 = vld [vmem:[%s7 + $0xb8] sm:$0xff]
      %v2791 = vld [vmem:[%s7 + $0xc0] sm:$0xff]
      %v2792 = vld [vmem:[%s7 + $0xc8] sm:$0xff]
      %v2793 = vld [vmem:[%s7 + $0xd0] sm:$0xff]
      %v2794 = vld [vmem:[%s7 + $0xd8] sm:$0xff]
      %v2795 = vld [vmem:[%s7 + $0xe0] sm:$0xff]
      %v2796 = vld [vmem:[%s7 + $0xe8] sm:$0xff]
      %v2797 = vld [vmem:[%s7 + $0xf0] sm:$0xff]
      %v2798 = vld [vmem:[%s7 + $0xf8] sm:$0xff]
      %v2799 = vld [vmem:[%s7 + $0x100] sm:$0xff]
      %v2800 = vld [vmem:[%s7 + $0x108] sm:$0xff]
      %v2801 = vld [vmem:[%s7 + $0x110] sm:$0xff]
      %v2802 = vld [vmem:[%s7 + $0x118] sm:$0xff]
      %v2803 = vld [vmem:[%s7 + $0x120] sm:$0xff]
      %v2804 = vld [vmem:[%s7 + $0x128] sm:$0xff]
      %v2805 = vld [vmem:[%s7 + $0x130] sm:$0xff]
      %v2806 = vld [vmem:[%s7 + $0x138] sm:$0xff]
      %v2807 = vld [vmem:[%s7 + $0x140] sm:$0xff]
      %v2808 = vld [vmem:[%s7 + $0x148] sm:$0xff]
      %v2809 = vld [vmem:[%s7 + $0x150] sm:$0xff]
      %v2810 = vld [vmem:[%s7 + $0x158] sm:$0xff]
      %v2811 = vld [vmem:[%s7 + $0x160] sm:$0xff]
      %v2812 = vld [vmem:[%s7 + $0x168] sm:$0xff]
      %v2813 = vld [vmem:[%s7 + $0x170] sm:$0xff]
      %v2814 = vld [vmem:[%s7 + $0x178] sm:$0xff]
      %v2815 = vld [vmem:[%s7 + $0x180] sm:$0xff]
      %v2816 = vld [vmem:[%s7 + $0x188] sm:$0xff]
      %v2817 = vld [vmem:[%s7 + $0x190] sm:$0xff]
      %v2818 = vld [vmem:[%s7 + $0x198] sm:$0xff]
      %v2819 = vld [vmem:[%s7 + $0x1a0] sm:$0xff]
      %v2820 = vld [vmem:[%s7 + $0x1a8] sm:$0xff]
      %v2821 = vld [vmem:[%s7 + $0x1b0] sm:$0xff]
      %v2822 = vld [vmem:[%s7 + $0x1b8] sm:$0xff]
      %v2823 = vld [vmem:[%s7 + $0x1c0] sm:$0xff]
      %v2824 = vld [vmem:[%s7 + $0x1c8] sm:$0xff]
      %v2825 = vld [vmem:[%s7 + $0x1d0] sm:$0xff]
      %v2826 = vld [vmem:[%s7 + $0x1d8] sm:$0xff]
      %v2827 = vld [vmem:[%s7 + $0x1e0] sm:$0xff]
      %v2828 = vld [vmem:[%s7 + $0x1e8] sm:$0xff]
      %v2829 = vld [vmem:[%s7 + $0x1f0] sm:$0xff]
      %v2830 = vld [vmem:[%s7 + $0x1f8] sm:$0xff]
      %v2831 = vld [vmem:[#allocation3] sm:$0xff]
      %v2832 = vld [vmem:[#allocation3 + $0x8] sm:$0xff]
      %v2833 = vld [vmem:[#allocation3 + $0x10] sm:$0xff]
      %v2834 = vld [vmem:[#allocation3 + $0x18] sm:$0xff]
      %v2835 = vld [vmem:[#allocation3 + $0x20] sm:$0xff]
      %v2836 = vld [vmem:[#allocation3 + $0x28] sm:$0xff]
      %v2837 = vld [vmem:[#allocation3 + $0x30] sm:$0xff]
      %v2838 = vld [vmem:[#allocation3 + $0x38] sm:$0xff]
      %v2839 = vld [vmem:[#allocation3 + $0x40] sm:$0xff]
      %v2840 = vld [vmem:[#allocation3 + $0x48] sm:$0xff]
      %v2841 = vld [vmem:[#allocation3 + $0x50] sm:$0xff]
      %v2842 = vld [vmem:[#allocation3 + $0x58] sm:$0xff]
      %v2843 = vld [vmem:[#allocation3 + $0x60] sm:$0xff]
      %v2844 = vld [vmem:[#allocation3 + $0x68] sm:$0xff]
      %v2845 = vld [vmem:[#allocation3 + $0x70] sm:$0xff]
      %v2846 = vld [vmem:[#allocation3 + $0x78] sm:$0xff]
      %v2847 = vld [vmem:[#allocation3 + $0x80] sm:$0xff]
      %v2848 = vld [vmem:[#allocation3 + $0x88] sm:$0xff]
      %v2849 = vld [vmem:[#allocation3 + $0x90] sm:$0xff]
      %v2850 = vld [vmem:[#allocation3 + $0x98] sm:$0xff]
      %v2851 = vld [vmem:[#allocation3 + $0xa0] sm:$0xff]
      %v2852 = vld [vmem:[#allocation3 + $0xa8] sm:$0xff]
      %v2853 = vld [vmem:[#allocation3 + $0xb0] sm:$0xff]
      %v2854 = vld [vmem:[#allocation3 + $0xb8] sm:$0xff]
      %v2855 = vld [vmem:[#allocation3 + $0xc0] sm:$0xff]
      %v2856 = vld [vmem:[#allocation3 + $0xc8] sm:$0xff]
      %v2857 = vld [vmem:[#allocation3 + $0xd0] sm:$0xff]
      %v2858 = vld [vmem:[#allocation3 + $0xd8] sm:$0xff]
      %v2859 = vld [vmem:[#allocation3 + $0xe0] sm:$0xff]
      %v2860 = vld [vmem:[#allocation3 + $0xe8] sm:$0xff]
      %v2861 = vld [vmem:[#allocation3 + $0xf0] sm:$0xff]
      %v2862 = vld [vmem:[#allocation3 + $0xf8] sm:$0xff]
      %v2863 = vld [vmem:[#allocation3 + $0x100] sm:$0xff]
      %v2864 = vld [vmem:[#allocation3 + $0x108] sm:$0xff]
      %v2865 = vld [vmem:[#allocation3 + $0x110] sm:$0xff]
      %v2866 = vld [vmem:[#allocation3 + $0x118] sm:$0xff]
      %v2867 = vld [vmem:[#allocation3 + $0x120] sm:$0xff]
      %v2868 = vld [vmem:[#allocation3 + $0x128] sm:$0xff]
      %v2869 = vld [vmem:[#allocation3 + $0x130] sm:$0xff]
      %v2870 = vld [vmem:[#allocation3 + $0x138] sm:$0xff]
      %v2871 = vld [vmem:[#allocation3 + $0x140] sm:$0xff]
      %v2872 = vld [vmem:[#allocation3 + $0x148] sm:$0xff]
      %v2873 = vld [vmem:[#allocation3 + $0x150] sm:$0xff]
      %v2874 = vld [vmem:[#allocation3 + $0x158] sm:$0xff]
      %v2875 = vld [vmem:[#allocation3 + $0x160] sm:$0xff]
      %v2876 = vld [vmem:[#allocation3 + $0x168] sm:$0xff]
      %v2877 = vld [vmem:[#allocation3 + $0x170] sm:$0xff]
      %v2878 = vld [vmem:[#allocation3 + $0x178] sm:$0xff]
      %v2879 = vld [vmem:[#allocation3 + $0x180] sm:$0xff]
      %v2880 = vld [vmem:[#allocation3 + $0x188] sm:$0xff]
      %v2881 = vld [vmem:[#allocation3 + $0x190] sm:$0xff]
      %v2882 = vld [vmem:[#allocation3 + $0x198] sm:$0xff]
      %v2883 = vld [vmem:[#allocation3 + $0x1a0] sm:$0xff]
      %v2884 = vld [vmem:[#allocation3 + $0x1a8] sm:$0xff]
      %v2885 = vld [vmem:[#allocation3 + $0x1b0] sm:$0xff]
      %v2886 = vld [vmem:[#allocation3 + $0x1b8] sm:$0xff]
      %v2887 = vld [vmem:[#allocation3 + $0x1c0] sm:$0xff]
      %v2888 = vld [vmem:[#allocation3 + $0x1c8] sm:$0xff]
      %v2889 = vld [vmem:[#allocation3 + $0x1d0] sm:$0xff]
      %v2890 = vld [vmem:[#allocation3 + $0x1d8] sm:$0xff]
      %v2891 = vld [vmem:[#allocation3 + $0x1e0] sm:$0xff]
      %v2892 = vld [vmem:[#allocation3 + $0x1e8] sm:$0xff]
      %v2893 = vld [vmem:[#allocation3 + $0x1f0] sm:$0xff]
      %v2894 = vld [vmem:[#allocation3 + $0x1f8] sm:$0xff]
      %v2959 = vunpack.c.l.b16 %v2767
      %v2960 = vunpack.c.h.b16 %v2767
      %v2961 = vunpack.c.l.b16 %v2768
      %v2962 = vunpack.c.h.b16 %v2768
      %v2963 = vunpack.c.l.b16 %v2769
      %v2964 = vunpack.c.h.b16 %v2769
      %v2965 = vunpack.c.l.b16 %v2770
      %v2966 = vunpack.c.h.b16 %v2770
      %v2967 = vunpack.c.l.b16 %v2771
      %v2968 = vunpack.c.h.b16 %v2771
      %v2969 = vunpack.c.l.b16 %v2772
      %v2970 = vunpack.c.h.b16 %v2772
      %v2971 = vunpack.c.l.b16 %v2773
      %v2972 = vunpack.c.h.b16 %v2773
      %v2973 = vunpack.c.l.b16 %v2774
      %v2974 = vunpack.c.h.b16 %v2774
      %v2975 = vunpack.c.l.b16 %v2775
      %v2976 = vunpack.c.h.b16 %v2775
      %v2977 = vunpack.c.l.b16 %v2776
      %v2978 = vunpack.c.h.b16 %v2776
      %v2979 = vunpack.c.l.b16 %v2777
      %v2980 = vunpack.c.h.b16 %v2777
      %v2981 = vunpack.c.l.b16 %v2778
      %v2982 = vunpack.c.h.b16 %v2778
      %v2983 = vunpack.c.l.b16 %v2779
      %v2984 = vunpack.c.h.b16 %v2779
      %v2985 = vunpack.c.l.b16 %v2780
      %v2986 = vunpack.c.h.b16 %v2780
      %v2987 = vunpack.c.l.b16 %v2781
      %v2988 = vunpack.c.h.b16 %v2781
      %v2989 = vunpack.c.l.b16 %v2782
      %v2990 = vunpack.c.h.b16 %v2782
      %v2991 = vunpack.c.l.b16 %v2783
      %v2992 = vunpack.c.h.b16 %v2783
      %v2993 = vunpack.c.l.b16 %v2784
      %v2994 = vunpack.c.h.b16 %v2784
      %v2995 = vunpack.c.l.b16 %v2785
      %v2996 = vunpack.c.h.b16 %v2785
      %v2997 = vunpack.c.l.b16 %v2786
      %v2998 = vunpack.c.h.b16 %v2786
      %v2999 = vunpack.c.l.b16 %v2787
      %v3000 = vunpack.c.h.b16 %v2787
      %v3001 = vunpack.c.l.b16 %v2788
      %v3002 = vunpack.c.h.b16 %v2788
      %v3003 = vunpack.c.l.b16 %v2789
      %v3004 = vunpack.c.h.b16 %v2789
      %v3005 = vunpack.c.l.b16 %v2790
      %v3006 = vunpack.c.h.b16 %v2790
      %v3007 = vunpack.c.l.b16 %v2791
      %v3008 = vunpack.c.h.b16 %v2791
      %v3009 = vunpack.c.l.b16 %v2792
      %v3010 = vunpack.c.h.b16 %v2792
      %v3011 = vunpack.c.l.b16 %v2793
      %v3012 = vunpack.c.h.b16 %v2793
      %v3013 = vunpack.c.l.b16 %v2794
      %v3014 = vunpack.c.h.b16 %v2794
      %v3015 = vunpack.c.l.b16 %v2795
      %v3016 = vunpack.c.h.b16 %v2795
      %v3017 = vunpack.c.l.b16 %v2796
      %v3018 = vunpack.c.h.b16 %v2796
      %v3019 = vunpack.c.l.b16 %v2797
      %v3020 = vunpack.c.h.b16 %v2797
      %v3021 = vunpack.c.l.b16 %v2798
      %v3022 = vunpack.c.h.b16 %v2798
      %v3023 = vunpack.c.l.b16 %v2799
      %v3024 = vunpack.c.h.b16 %v2799
      %v3025 = vunpack.c.l.b16 %v2800
      %v3026 = vunpack.c.h.b16 %v2800
      %v3027 = vunpack.c.l.b16 %v2801
      %v3028 = vunpack.c.h.b16 %v2801
      %v3029 = vunpack.c.l.b16 %v2802
      %v3030 = vunpack.c.h.b16 %v2802
      %v3031 = vunpack.c.l.b16 %v2803
      %v3032 = vunpack.c.h.b16 %v2803
      %v3033 = vunpack.c.l.b16 %v2804
      %v3034 = vunpack.c.h.b16 %v2804
      %v3035 = vunpack.c.l.b16 %v2805
      %v3036 = vunpack.c.h.b16 %v2805
      %v3037 = vunpack.c.l.b16 %v2806
      %v3038 = vunpack.c.h.b16 %v2806
      %v3039 = vunpack.c.l.b16 %v2807
      %v3040 = vunpack.c.h.b16 %v2807
      %v3041 = vunpack.c.l.b16 %v2808
      %v3042 = vunpack.c.h.b16 %v2808
      %v3043 = vunpack.c.l.b16 %v2809
      %v3044 = vunpack.c.h.b16 %v2809
      %v3045 = vunpack.c.l.b16 %v2810
      %v3046 = vunpack.c.h.b16 %v2810
      %v3047 = vunpack.c.l.b16 %v2811
      %v3048 = vunpack.c.h.b16 %v2811
      %v3049 = vunpack.c.l.b16 %v2812
      %v3050 = vunpack.c.h.b16 %v2812
      %v3051 = vunpack.c.l.b16 %v2813
      %v3052 = vunpack.c.h.b16 %v2813
      %v3053 = vunpack.c.l.b16 %v2814
      %v3054 = vunpack.c.h.b16 %v2814
      %v3055 = vunpack.c.l.b16 %v2815
      %v3056 = vunpack.c.h.b16 %v2815
      %v3057 = vunpack.c.l.b16 %v2816
      %v3058 = vunpack.c.h.b16 %v2816
      %v3059 = vunpack.c.l.b16 %v2817
      %v3060 = vunpack.c.h.b16 %v2817
      %v3061 = vunpack.c.l.b16 %v2818
      %v3062 = vunpack.c.h.b16 %v2818
      %v3063 = vunpack.c.l.b16 %v2819
      %v3064 = vunpack.c.h.b16 %v2819
      %v3065 = vunpack.c.l.b16 %v2820
      %v3066 = vunpack.c.h.b16 %v2820
      %v3067 = vunpack.c.l.b16 %v2821
      %v3068 = vunpack.c.h.b16 %v2821
      %v3069 = vunpack.c.l.b16 %v2822
      %v3070 = vunpack.c.h.b16 %v2822
      %v3071 = vunpack.c.l.b16 %v2823
      %v3072 = vunpack.c.h.b16 %v2823
      %v3073 = vunpack.c.l.b16 %v2824
      %v3074 = vunpack.c.h.b16 %v2824
      %v3075 = vunpack.c.l.b16 %v2825
      %v3076 = vunpack.c.h.b16 %v2825
      %v3077 = vunpack.c.l.b16 %v2826
      %v3078 = vunpack.c.h.b16 %v2826
      %v3079 = vunpack.c.l.b16 %v2827
      %v3080 = vunpack.c.h.b16 %v2827
      %v3081 = vunpack.c.l.b16 %v2828
      %v3082 = vunpack.c.h.b16 %v2828
      %v3083 = vunpack.c.l.b16 %v2829
      %v3084 = vunpack.c.h.b16 %v2829
      %v3085 = vunpack.c.l.b16 %v2830
      %v3086 = vunpack.c.h.b16 %v2830
      %v3087 = vpack.c.b16 %v2967, %v2959
      %v3088 = vpack.c.b16 %v2968, %v2960
      %v3089 = vpack.c.b16 %v2969, %v2961
      %v3090 = vpack.c.b16 %v2970, %v2962
      %v3091 = vpack.c.b16 %v2971, %v2963
      %v3092 = vpack.c.b16 %v2972, %v2964
      %v3093 = vpack.c.b16 %v2973, %v2965
      %v3094 = vpack.c.b16 %v2974, %v2966
      %v3095 = vpack.c.b16 %v2983, %v2975
      %v3096 = vpack.c.b16 %v2984, %v2976
      %v3097 = vpack.c.b16 %v2985, %v2977
      %v3098 = vpack.c.b16 %v2986, %v2978
      %v3099 = vpack.c.b16 %v2987, %v2979
      %v3100 = vpack.c.b16 %v2988, %v2980
      %v3101 = vpack.c.b16 %v2989, %v2981
      %v3102 = vpack.c.b16 %v2990, %v2982
      %v3103 = vpack.c.b16 %v2999, %v2991
      %v3104 = vpack.c.b16 %v3000, %v2992
      %v3105 = vpack.c.b16 %v3001, %v2993
      %v3106 = vpack.c.b16 %v3002, %v2994
      %v3107 = vpack.c.b16 %v3003, %v2995
      %v3108 = vpack.c.b16 %v3004, %v2996
      %v3109 = vpack.c.b16 %v3005, %v2997
      %v3110 = vpack.c.b16 %v3006, %v2998
      %v3111 = vpack.c.b16 %v3015, %v3007
      %v3112 = vpack.c.b16 %v3016, %v3008
      %v3113 = vpack.c.b16 %v3017, %v3009
      %v3114 = vpack.c.b16 %v3018, %v3010
      %v3115 = vpack.c.b16 %v3019, %v3011
      %v3116 = vpack.c.b16 %v3020, %v3012
      %v3117 = vpack.c.b16 %v3021, %v3013
      %v3118 = vpack.c.b16 %v3022, %v3014
      %v3119 = vpack.c.b16 %v3031, %v3023
      %v3120 = vpack.c.b16 %v3032, %v3024
      %v3121 = vpack.c.b16 %v3033, %v3025
      %v3122 = vpack.c.b16 %v3034, %v3026
      %v3123 = vpack.c.b16 %v3035, %v3027
      %v3124 = vpack.c.b16 %v3036, %v3028
      %v3125 = vpack.c.b16 %v3037, %v3029
      %v3126 = vpack.c.b16 %v3038, %v3030
      %v3127 = vpack.c.b16 %v3047, %v3039
      %v3128 = vpack.c.b16 %v3048, %v3040
      %v3129 = vpack.c.b16 %v3049, %v3041
      %v3130 = vpack.c.b16 %v3050, %v3042
      %v3131 = vpack.c.b16 %v3051, %v3043
      %v3132 = vpack.c.b16 %v3052, %v3044
      %v3133 = vpack.c.b16 %v3053, %v3045
      %v3134 = vpack.c.b16 %v3054, %v3046
      %v3135 = vpack.c.b16 %v3063, %v3055
      %v3136 = vpack.c.b16 %v3064, %v3056
      %v3137 = vpack.c.b16 %v3065, %v3057
      %v3138 = vpack.c.b16 %v3066, %v3058
      %v3139 = vpack.c.b16 %v3067, %v3059
      %v3140 = vpack.c.b16 %v3068, %v3060
      %v3141 = vpack.c.b16 %v3069, %v3061
      %v3142 = vpack.c.b16 %v3070, %v3062
      %v3143 = vpack.c.b16 %v3079, %v3071
      %v3144 = vpack.c.b16 %v3080, %v3072
      %v3145 = vpack.c.b16 %v3081, %v3073
      %v3146 = vpack.c.b16 %v3082, %v3074
      %v3147 = vpack.c.b16 %v3083, %v3075
      %v3148 = vpack.c.b16 %v3084, %v3076
      %v3149 = vpack.c.b16 %v3085, %v3077
      %v3150 = vpack.c.b16 %v3086, %v3078
      %3215 = vmatprep.subr.bf16.mxu0 0
      %3216 = vmatpush1.bf16.msra.mxu0 %v2831
      %3217 = vmatprep.subr.bf16.mxu0 0
      %3218 = vmatpush1.bf16.msra.mxu0 %v2832
      %3219 = vmatprep.subr.bf16.mxu0 0
      %3220 = vmatpush1.bf16.msra.mxu0 %v2833
      %3221 = vmatprep.subr.bf16.mxu0 0
      %3222 = vmatpush1.bf16.msra.mxu0 %v2834
      %3223 = vmatprep.subr.bf16.mxu0 0
      %3224 = vmatpush1.bf16.msra.mxu0 %v2835
      %3225 = vmatprep.subr.bf16.mxu0 0
      %3226 = vmatpush1.bf16.msra.mxu0 %v2836
      %3227 = vmatprep.subr.bf16.mxu0 0
      %3228 = vmatpush1.bf16.msra.mxu0 %v2837
      %3229 = vmatprep.subr.bf16.mxu0 0
      %3230 = vmatpush1.bf16.msra.mxu0 %v2838
      %3231 = vmatprep.subr.bf16.mxu0 0
      %3232 = vmatpush1.bf16.msra.mxu0 %v2839
      %3233 = vmatprep.subr.bf16.mxu0 0
      %3234 = vmatpush1.bf16.msra.mxu0 %v2840
      %3235 = vmatprep.subr.bf16.mxu0 0
      %3236 = vmatpush1.bf16.msra.mxu0 %v2841
      %3237 = vmatprep.subr.bf16.mxu0 0
      %3238 = vmatpush1.bf16.msra.mxu0 %v2842
      %3239 = vmatprep.subr.bf16.mxu0 0
      %3240 = vmatpush1.bf16.msra.mxu0 %v2843
      %3241 = vmatprep.subr.bf16.mxu0 0
      %3242 = vmatpush1.bf16.msra.mxu0 %v2844
      %3243 = vmatprep.subr.bf16.mxu0 0
      %3244 = vmatpush1.bf16.msra.mxu0 %v2845
      %3245 = vmatprep.subr.bf16.mxu0 0
      %3246 = vmatpush1.bf16.msra.mxu0 %v2846
      %3247 = vmatprep.mubr.bf16.mxu0 %v3088
      %3248 = vmatmul.mubr.bf16.gmra.mrb[0].mxu0 %v3087
      %v3249 = vpop.f32.mrb[0].mxu0
      %v3250 = vadd.f32 0.0, %v3249
      %v3251 = vpop.f32.mrb[0].mxu0
      %v3252 = vpop.f32.mrb[0].mxu0
      %v3253 = vadd.f32 0.0, %v3252
      %v3254 = vpop.f32.mrb[0].mxu0
      %3255 = vmatprep.mubr.bf16.mxu0 %v3096
      %3256 = vmatmul.mubr.bf16.gmra.mrb[0].mxu0 %v3095
      %v3257 = vpop.f32.mrb[0].mxu0
      %v3258 = vadd.f32 0.0, %v3257
      %v3259 = vpop.f32.mrb[0].mxu0
      %v3260 = vpop.f32.mrb[0].mxu0
      %v3261 = vadd.f32 0.0, %v3260
      %v3262 = vpop.f32.mrb[0].mxu0
      %3263 = vmatprep.mubr.bf16.mxu0 %v3104
      %3264 = vmatmul.mubr.bf16.gmra.mrb[0].mxu0 %v3103
      %v3265 = vpop.f32.mrb[0].mxu0
      %v3266 = vadd.f32 0.0, %v3265
      %v3267 = vpop.f32.mrb[0].mxu0
      %v3268 = vpop.f32.mrb[0].mxu0
      %v3269 = vadd.f32 0.0, %v3268
      %v3270 = vpop.f32.mrb[0].mxu0
      %3271 = vmatprep.mubr.bf16.mxu0 %v3112
      %3272 = vmatmul.mubr.bf16.gmra.mrb[0].mxu0 %v3111
      %v3273 = vpop.f32.mrb[0].mxu0
      %v3274 = vadd.f32 0.0, %v3273
      %v3275 = vpop.f32.mrb[0].mxu0
      %v3276 = vpop.f32.mrb[0].mxu0
      %v3277 = vadd.f32 0.0, %v3276
      %v3278 = vpop.f32.mrb[0].mxu0
      %3279 = vmatprep.mubr.bf16.mxu0 %v3120
      %3280 = vmatmul.mubr.bf16.gmra.mrb[0].mxu0 %v3119
      %v3281 = vpop.f32.mrb[0].mxu0
      %v3282 = vadd.f32 0.0, %v3281
      %v3283 = vpop.f32.mrb[0].mxu0
      %v3284 = vpop.f32.mrb[0].mxu0
      %v3285 = vadd.f32 0.0, %v3284
      %v3286 = vpop.f32.mrb[0].mxu0
      %3287 = vmatprep.mubr.bf16.mxu0 %v3128
      %3288 = vmatmul.mubr.bf16.gmra.mrb[0].mxu0 %v3127
      %v3289 = vpop.f32.mrb[0].mxu0
      %v3290 = vadd.f32 0.0, %v3289
      %v3291 = vpop.f32.mrb[0].mxu0
      %v3292 = vpop.f32.mrb[0].mxu0
      %v3293 = vadd.f32 0.0, %v3292
      %v3294 = vpop.f32.mrb[0].mxu0
      %3295 = vmatprep.mubr.bf16.mxu0 %v3136
      %3296 = vmatmul.mubr.bf16.gmra.mrb[0].mxu0 %v3135
      %v3297 = vpop.f32.mrb[0].mxu0
      %v3298 = vadd.f32 0.0, %v3297
      %v3299 = vpop.f32.mrb[0].mxu0
      %v3300 = vpop.f32.mrb[0].mxu0
      %v3301 = vadd.f32 0.0, %v3300
      %v3302 = vpop.f32.mrb[0].mxu0
      %3303 = vmatprep.mubr.bf16.mxu0 %v3144
      %3304 = vmatmul.mubr.bf16.gmra.mrb[0].mxu0 %v3143
      %v3305 = vpop.f32.mrb[0].mxu0
      %v3306 = vadd.f32 0.0, %v3305
      %v3307 = vpop.f32.mrb[0].mxu0
      %v3308 = vpop.f32.mrb[0].mxu0
      %v3309 = vadd.f32 0.0, %v3308
      %v3310 = vpop.f32.mrb[0].mxu0
      %3311 = vdwg.mxu0
      %3312 = vmatprep.subr.bf16.mxu0 0
      %3313 = vmatpush1.bf16.msra.mxu0 %v2847
      %3314 = vmatprep.subr.bf16.mxu0 0
      %3315 = vmatpush1.bf16.msra.mxu0 %v2848
      %3316 = vmatprep.subr.bf16.mxu0 0
      %3317 = vmatpush1.bf16.msra.mxu0 %v2849
      %3318 = vmatprep.subr.bf16.mxu0 0
      %3319 = vmatpush1.bf16.msra.mxu0 %v2850
      %3320 = vmatprep.subr.bf16.mxu0 0
      %3321 = vmatpush1.bf16.msra.mxu0 %v2851
      %3322 = vmatprep.subr.bf16.mxu0 0
      %3323 = vmatpush1.bf16.msra.mxu0 %v2852
      %3324 = vmatprep.subr.bf16.mxu0 0
      %3325 = vmatpush1.bf16.msra.mxu0 %v2853
      %3326 = vmatprep.subr.bf16.mxu0 0
      %3327 = vmatpush1.bf16.msra.mxu0 %v2854
      %3328 = vmatprep.subr.bf16.mxu0 0
      %3329 = vmatpush1.bf16.msra.mxu0 %v2855
      %3330 = vmatprep.subr.bf16.mxu0 0
      %3331 = vmatpush1.bf16.msra.mxu0 %v2856
      %3332 = vmatprep.subr.bf16.mxu0 0
      %3333 = vmatpush1.bf16.msra.mxu0 %v2857
      %3334 = vmatprep.subr.bf16.mxu0 0
      %3335 = vmatpush1.bf16.msra.mxu0 %v2858
      %3336 = vmatprep.subr.bf16.mxu0 0
      %3337 = vmatpush1.bf16.msra.mxu0 %v2859
      %3338 = vmatprep.subr.bf16.mxu0 0
      %3339 = vmatpush1.bf16.msra.mxu0 %v2860
      %3340 = vmatprep.subr.bf16.mxu0 0
      %3341 = vmatpush1.bf16.msra.mxu0 %v2861
      %3342 = vmatprep.subr.bf16.mxu0 0
      %3343 = vmatpush1.bf16.msra.mxu0 %v2862
      %3344 = vmatprep.mubr.bf16.mxu0 %v3090
      %3345 = vmatmul.mubr.bf16.gmra.mrb[0].mxu0 %v3089
      %v3346 = vpop.f32.mrb[0].mxu0
      %v3347 = vadd.f32 %v3250, %v3346
      %v3348 = vpop.f32.mrb[0].mxu0
      %v3349 = vpop.f32.mrb[0].mxu0
      %v3350 = vadd.f32 %v3253, %v3349
      %v3351 = vpop.f32.mrb[0].mxu0
      %3352 = vmatprep.mubr.bf16.mxu0 %v3098
      %3353 = vmatmul.mubr.bf16.gmra.mrb[0].mxu0 %v3097
      %v3354 = vpop.f32.mrb[0].mxu0
      %v3355 = vadd.f32 %v3258, %v3354
      %v3356 = vpop.f32.mrb[0].mxu0
      %v3357 = vpop.f32.mrb[0].mxu0
      %v3358 = vadd.f32 %v3261, %v3357
      %v3359 = vpop.f32.mrb[0].mxu0
      %3360 = vmatprep.mubr.bf16.mxu0 %v3106
      %3361 = vmatmul.mubr.bf16.gmra.mrb[0].mxu0 %v3105
      %v3362 = vpop.f32.mrb[0].mxu0
      %v3363 = vadd.f32 %v3266, %v3362
      %v3364 = vpop.f32.mrb[0].mxu0
      %v3365 = vpop.f32.mrb[0].mxu0
      %v3366 = vadd.f32 %v3269, %v3365
      %v3367 = vpop.f32.mrb[0].mxu0
      %3368 = vmatprep.mubr.bf16.mxu0 %v3114
      %3369 = vmatmul.mubr.bf16.gmra.mrb[0].mxu0 %v3113
      %v3370 = vpop.f32.mrb[0].mxu0
      %v3371 = vadd.f32 %v3274, %v3370
      %v3372 = vpop.f32.mrb[0].mxu0
      %v3373 = vpop.f32.mrb[0].mxu0
      %v3374 = vadd.f32 %v3277, %v3373
      %v3375 = vpop.f32.mrb[0].mxu0
      %3376 = vmatprep.mubr.bf16.mxu0 %v3122
      %3377 = vmatmul.mubr.bf16.gmra.mrb[0].mxu0 %v3121
      %v3378 = vpop.f32.mrb[0].mxu0
      %v3379 = vadd.f32 %v3282, %v3378
      %v3380 = vpop.f32.mrb[0].mxu0
      %v3381 = vpop.f32.mrb[0].mxu0
      %v3382 = vadd.f32 %v3285, %v3381
      %v3383 = vpop.f32.mrb[0].mxu0
      %3384 = vmatprep.mubr.bf16.mxu0 %v3130
      %3385 = vmatmul.mubr.bf16.gmra.mrb[0].mxu0 %v3129
      %v3386 = vpop.f32.mrb[0].mxu0
      %v3387 = vadd.f32 %v3290, %v3386
      %v3388 = vpop.f32.mrb[0].mxu0
      %v3389 = vpop.f32.mrb[0].mxu0
      %v3390 = vadd.f32 %v3293, %v3389
      %v3391 = vpop.f32.mrb[0].mxu0
      %3392 = vmatprep.mubr.bf16.mxu0 %v3138
      %3393 = vmatmul.mubr.bf16.gmra.mrb[0].mxu0 %v3137
      %v3394 = vpop.f32.mrb[0].mxu0
      %v3395 = vadd.f32 %v3298, %v3394
      %v3396 = vpop.f32.mrb[0].mxu0
      %v3397 = vpop.f32.mrb[0].mxu0
      %v3398 = vadd.f32 %v3301, %v3397
      %v3399 = vpop.f32.mrb[0].mxu0
      %3400 = vmatprep.mubr.bf16.mxu0 %v3146
      %3401 = vmatmul.mubr.bf16.gmra.mrb[0].mxu0 %v3145
      %v3402 = vpop.f32.mrb[0].mxu0
      %v3403 = vadd.f32 %v3306, %v3402
      %v3404 = vpop.f32.mrb[0].mxu0
      %v3405 = vpop.f32.mrb[0].mxu0
      %v3406 = vadd.f32 %v3309, %v3405
      %v3407 = vpop.f32.mrb[0].mxu0
      %3408 = vdwg.mxu0
      %3409 = vmatprep.subr.bf16.mxu0 0
      %3410 = vmatpush1.bf16.msra.mxu0 %v2863
      %3411 = vmatprep.subr.bf16.mxu0 0
      %3412 = vmatpush1.bf16.msra.mxu0 %v2864
      %3413 = vmatprep.subr.bf16.mxu0 0
      %3414 = vmatpush1.bf16.msra.mxu0 %v2865
      %3415 = vmatprep.subr.bf16.mxu0 0
      %3416 = vmatpush1.bf16.msra.mxu0 %v2866
      %3417 = vmatprep.subr.bf16.mxu0 0
      %3418 = vmatpush1.bf16.msra.mxu0 %v2867
      %3419 = vmatprep.subr.bf16.mxu0 0
      %3420 = vmatpush1.bf16.msra.mxu0 %v2868
      %3421 = vmatprep.subr.bf16.mxu0 0
      %3422 = vmatpush1.bf16.msra.mxu0 %v2869
      %3423 = vmatprep.subr.bf16.mxu0 0
      %3424 = vmatpush1.bf16.msra.mxu0 %v2870
      %3425 = vmatprep.subr.bf16.mxu0 0
      %3426 = vmatpush1.bf16.msra.mxu0 %v2871
      %3427 = vmatprep.subr.bf16.mxu0 0
      %3428 = vmatpush1.bf16.msra.mxu0 %v2872
      %3429 = vmatprep.subr.bf16.mxu0 0
      %3430 = vmatpush1.bf16.msra.mxu0 %v2873
      %3431 = vmatprep.subr.bf16.mxu0 0
      %3432 = vmatpush1.bf16.msra.mxu0 %v2874
      %3433 = vmatprep.subr.bf16.mxu0 0
      %3434 = vmatpush1.bf16.msra.mxu0 %v2875
      %3435 = vmatprep.subr.bf16.mxu0 0
      %3436 = vmatpush1.bf16.msra.mxu0 %v2876
      %3437 = vmatprep.subr.bf16.mxu0 0
      %3438 = vmatpush1.bf16.msra.mxu0 %v2877
      %3439 = vmatprep.subr.bf16.mxu0 0
      %3440 = vmatpush1.bf16.msra.mxu0 %v2878
      %3441 = vmatprep.mubr.bf16.mxu0 %v3092
      %3442 = vmatmul.mubr.bf16.gmra.mrb[0].mxu0 %v3091
      %v3443 = vpop.f32.mrb[0].mxu0
      %v3444 = vadd.f32 %v3347, %v3443
      %v3445 = vpop.f32.mrb[0].mxu0
      %v3446 = vpop.f32.mrb[0].mxu0
      %v3447 = vadd.f32 %v3350, %v3446
      %v3448 = vpop.f32.mrb[0].mxu0
      %3449 = vmatprep.mubr.bf16.mxu0 %v3100
      %3450 = vmatmul.mubr.bf16.gmra.mrb[0].mxu0 %v3099
      %v3451 = vpop.f32.mrb[0].mxu0
      %v3452 = vadd.f32 %v3355, %v3451
      %v3453 = vpop.f32.mrb[0].mxu0
      %v3454 = vpop.f32.mrb[0].mxu0
      %v3455 = vadd.f32 %v3358, %v3454
      %v3456 = vpop.f32.mrb[0].mxu0
      %3457 = vmatprep.mubr.bf16.mxu0 %v3108
      %3458 = vmatmul.mubr.bf16.gmra.mrb[0].mxu0 %v3107
      %v3459 = vpop.f32.mrb[0].mxu0
      %v3460 = vadd.f32 %v3363, %v3459
      %v3461 = vpop.f32.mrb[0].mxu0
      %v3462 = vpop.f32.mrb[0].mxu0
      %v3463 = vadd.f32 %v3366, %v3462
      %v3464 = vpop.f32.mrb[0].mxu0
      %3465 = vmatprep.mubr.bf16.mxu0 %v3116
      %3466 = vmatmul.mubr.bf16.gmra.mrb[0].mxu0 %v3115
      %v3467 = vpop.f32.mrb[0].mxu0
      %v3468 = vadd.f32 %v3371, %v3467
      %v3469 = vpop.f32.mrb[0].mxu0
      %v3470 = vpop.f32.mrb[0].mxu0
      %v3471 = vadd.f32 %v3374, %v3470
      %v3472 = vpop.f32.mrb[0].mxu0
      %3473 = vmatprep.mubr.bf16.mxu0 %v3124
      %3474 = vmatmul.mubr.bf16.gmra.mrb[0].mxu0 %v3123
      %v3475 = vpop.f32.mrb[0].mxu0
      %v3476 = vadd.f32 %v3379, %v3475
      %v3477 = vpop.f32.mrb[0].mxu0
      %v3478 = vpop.f32.mrb[0].mxu0
      %v3479 = vadd.f32 %v3382, %v3478
      %v3480 = vpop.f32.mrb[0].mxu0
      %3481 = vmatprep.mubr.bf16.mxu0 %v3132
      %3482 = vmatmul.mubr.bf16.gmra.mrb[0].mxu0 %v3131
      %v3483 = vpop.f32.mrb[0].mxu0
      %v3484 = vadd.f32 %v3387, %v3483
      %v3485 = vpop.f32.mrb[0].mxu0
      %v3486 = vpop.f32.mrb[0].mxu0
      %v3487 = vadd.f32 %v3390, %v3486
      %v3488 = vpop.f32.mrb[0].mxu0
      %3489 = vmatprep.mubr.bf16.mxu0 %v3140
      %3490 = vmatmul.mubr.bf16.gmra.mrb[0].mxu0 %v3139
      %v3491 = vpop.f32.mrb[0].mxu0
      %v3492 = vadd.f32 %v3395, %v3491
      %v3493 = vpop.f32.mrb[0].mxu0
      %v3494 = vpop.f32.mrb[0].mxu0
      %v3495 = vadd.f32 %v3398, %v3494
      %v3496 = vpop.f32.mrb[0].mxu0
      %3497 = vmatprep.mubr.bf16.mxu0 %v3148
      %3498 = vmatmul.mubr.bf16.gmra.mrb[0].mxu0 %v3147
      %v3499 = vpop.f32.mrb[0].mxu0
      %v3500 = vadd.f32 %v3403, %v3499
      %v3501 = vpop.f32.mrb[0].mxu0
      %v3502 = vpop.f32.mrb[0].mxu0
      %v3503 = vadd.f32 %v3406, %v3502
      %v3504 = vpop.f32.mrb[0].mxu0
      %3505 = vdwg.mxu0
      %3506 = vmatprep.subr.bf16.mxu0 0
      %3507 = vmatpush1.bf16.msra.mxu0 %v2879
      %3508 = vmatprep.subr.bf16.mxu0 0
      %3509 = vmatpush1.bf16.msra.mxu0 %v2880
      %3510 = vmatprep.subr.bf16.mxu0 0
      %3511 = vmatpush1.bf16.msra.mxu0 %v2881
      %3512 = vmatprep.subr.bf16.mxu0 0
      %3513 = vmatpush1.bf16.msra.mxu0 %v2882
      %3514 = vmatprep.subr.bf16.mxu0 0
      %3515 = vmatpush1.bf16.msra.mxu0 %v2883
      %3516 = vmatprep.subr.bf16.mxu0 0
      %3517 = vmatpush1.bf16.msra.mxu0 %v2884
      %3518 = vmatprep.subr.bf16.mxu0 0
      %3519 = vmatpush1.bf16.msra.mxu0 %v2885
      %3520 = vmatprep.subr.bf16.mxu0 0
      %3521 = vmatpush1.bf16.msra.mxu0 %v2886
      %3522 = vmatprep.subr.bf16.mxu0 0
      %3523 = vmatpush1.bf16.msra.mxu0 %v2887
      %3524 = vmatprep.subr.bf16.mxu0 0
      %3525 = vmatpush1.bf16.msra.mxu0 %v2888
      %3526 = vmatprep.subr.bf16.mxu0 0
      %3527 = vmatpush1.bf16.msra.mxu0 %v2889
      %3528 = vmatprep.subr.bf16.mxu0 0
      %3529 = vmatpush1.bf16.msra.mxu0 %v2890
      %3530 = vmatprep.subr.bf16.mxu0 0
      %3531 = vmatpush1.bf16.msra.mxu0 %v2891
      %3532 = vmatprep.subr.bf16.mxu0 0
      %3533 = vmatpush1.bf16.msra.mxu0 %v2892
      %3534 = vmatprep.subr.bf16.mxu0 0
      %3535 = vmatpush1.bf16.msra.mxu0 %v2893
      %3536 = vmatprep.subr.bf16.mxu0 0
      %3537 = vmatpush1.bf16.msra.mxu0 %v2894
      %3538 = vmatprep.mubr.bf16.mxu0 %v3094
      %3539 = vmatmul.mubr.bf16.gmra.mrb[0].mxu0 %v3093
      %v3540 = vpop.f32.mrb[0].mxu0
      %v3541 = vadd.f32 %v3444, %v3540
      %v3542 = vpop.f32.mrb[0].mxu0
      %v3543 = vpop.f32.mrb[0].mxu0
      %v3544 = vadd.f32 %v3447, %v3543
      %v3545 = vpop.f32.mrb[0].mxu0
      %3546 = vmatprep.mubr.bf16.mxu0 %v3102
      %3547 = vmatmul.mubr.bf16.gmra.mrb[0].mxu0 %v3101
      %v3548 = vpop.f32.mrb[0].mxu0
      %v3549 = vadd.f32 %v3452, %v3548
      %v3550 = vpop.f32.mrb[0].mxu0
      %v3551 = vpop.f32.mrb[0].mxu0
      %v3552 = vadd.f32 %v3455, %v3551
      %v3553 = vpop.f32.mrb[0].mxu0
      %3554 = vmatprep.mubr.bf16.mxu0 %v3110
      %3555 = vmatmul.mubr.bf16.gmra.mrb[0].mxu0 %v3109
      %v3556 = vpop.f32.mrb[0].mxu0
      %v3557 = vadd.f32 %v3460, %v3556
      %v3558 = vpop.f32.mrb[0].mxu0
      %v3559 = vpop.f32.mrb[0].mxu0
      %v3560 = vadd.f32 %v3463, %v3559
      %v3561 = vpop.f32.mrb[0].mxu0
      %3562 = vmatprep.mubr.bf16.mxu0 %v3118
      %3563 = vmatmul.mubr.bf16.gmra.mrb[0].mxu0 %v3117
      %v3564 = vpop.f32.mrb[0].mxu0
      %v3565 = vadd.f32 %v3468, %v3564
      %v3566 = vpop.f32.mrb[0].mxu0
      %v3567 = vpop.f32.mrb[0].mxu0
      %v3568 = vadd.f32 %v3471, %v3567
      %v3569 = vpop.f32.mrb[0].mxu0
      %3570 = vmatprep.mubr.bf16.mxu0 %v3126
      %3571 = vmatmul.mubr.bf16.gmra.mrb[0].mxu0 %v3125
      %v3572 = vpop.f32.mrb[0].mxu0
      %v3573 = vadd.f32 %v3476, %v3572
      %v3574 = vpop.f32.mrb[0].mxu0
      %v3575 = vpop.f32.mrb[0].mxu0
      %v3576 = vadd.f32 %v3479, %v3575
      %v3577 = vpop.f32.mrb[0].mxu0
      %3578 = vmatprep.mubr.bf16.mxu0 %v3134
      %3579 = vmatmul.mubr.bf16.gmra.mrb[0].mxu0 %v3133
      %v3580 = vpop.f32.mrb[0].mxu0
      %v3581 = vadd.f32 %v3484, %v3580
      %v3582 = vpop.f32.mrb[0].mxu0
      %v3583 = vpop.f32.mrb[0].mxu0
      %v3584 = vadd.f32 %v3487, %v3583
      %v3585 = vpop.f32.mrb[0].mxu0
      %3586 = vmatprep.mubr.bf16.mxu0 %v3142
      %3587 = vmatmul.mubr.bf16.gmra.mrb[0].mxu0 %v3141
      %v3588 = vpop.f32.mrb[0].mxu0
      %v3589 = vadd.f32 %v3492, %v3588
      %v3590 = vpop.f32.mrb[0].mxu0
      %v3591 = vpop.f32.mrb[0].mxu0
      %v3592 = vadd.f32 %v3495, %v3591
      %v3593 = vpop.f32.mrb[0].mxu0
      %3594 = vmatprep.mubr.bf16.mxu0 %v3150
      %3595 = vmatmul.mubr.bf16.gmra.mrb[0].mxu0 %v3149
      %v3596 = vpop.f32.mrb[0].mxu0
      %v3597 = vadd.f32 %v3500, %v3596
      %v3598 = vpop.f32.mrb[0].mxu0
      %v3599 = vpop.f32.mrb[0].mxu0
      %v3600 = vadd.f32 %v3503, %v3599
      %v3601 = vpop.f32.mrb[0].mxu0
      %3602 = vdwg.mxu0
      %v3603 = vsel %vm2526, %v3541, 0.0
      %3604 = vadd.xlane.f32.xlu0 %v3603
      %v3605 = vpop.xlane.xlu0 %3604
      %v3606 = vsel %vm2526, %v3544, 0.0
      %3607 = vadd.xlane.f32.xlu0 %v3606
      %v3608 = vpop.xlane.xlu0 %3607
      %v3609 = vsel %vm2526, %v3549, 0.0
      %3610 = vadd.xlane.f32.xlu0 %v3609
      %v3611 = vpop.xlane.xlu0 %3610
      %v3612 = vsel %vm2526, %v3552, 0.0
      %3613 = vadd.xlane.f32.xlu0 %v3612
      %v3614 = vpop.xlane.xlu0 %3613
      %v3615 = vsel %vm2526, %v3557, 0.0
      %3616 = vadd.xlane.f32.xlu0 %v3615
      %v3617 = vpop.xlane.xlu0 %3616
      %v3618 = vsel %vm2526, %v3560, 0.0
      %3619 = vadd.xlane.f32.xlu0 %v3618
      %v3620 = vpop.xlane.xlu0 %3619
      %v3621 = vsel %vm2526, %v3565, 0.0
      %3622 = vadd.xlane.f32.xlu0 %v3621
      %v3623 = vpop.xlane.xlu0 %3622
      %v3624 = vsel %vm2526, %v3568, 0.0
      %3625 = vadd.xlane.f32.xlu0 %v3624
      %v3626 = vpop.xlane.xlu0 %3625
      %v3627 = vsel %vm2526, %v3573, 0.0
      %3628 = vadd.xlane.f32.xlu0 %v3627
      %v3629 = vpop.xlane.xlu0 %3628
      %v3630 = vsel %vm2526, %v3576, 0.0
      %3631 = vadd.xlane.f32.xlu0 %v3630
      %v3632 = vpop.xlane.xlu0 %3631
      %v3633 = vsel %vm2526, %v3581, 0.0
      %3634 = vadd.xlane.f32.xlu0 %v3633
      %v3635 = vpop.xlane.xlu0 %3634
      %v3636 = vsel %vm2526, %v3584, 0.0
      %3637 = vadd.xlane.f32.xlu0 %v3636
      %v3638 = vpop.xlane.xlu0 %3637
      %v3639 = vsel %vm2526, %v3589, 0.0
      %3640 = vadd.xlane.f32.xlu0 %v3639
      %v3641 = vpop.xlane.xlu0 %3640
      %v3642 = vsel %vm2526, %v3592, 0.0
      %3643 = vadd.xlane.f32.xlu0 %v3642
      %v3644 = vpop.xlane.xlu0 %3643
      %v3645 = vsel %vm2526, %v3597, 0.0
      %3646 = vadd.xlane.f32.xlu0 %v3645
      %v3647 = vpop.xlane.xlu0 %3646
      %v3648 = vsel %vm2526, %v3600, 0.0
      %3649 = vadd.xlane.f32.xlu0 %v3648
      %v3650 = vpop.xlane.xlu0 %3649
      %v3651 = vrcp.pop 16.0
      %v3652 = vmul.f32 %v3605, %v3651
      %v3653 = vmul.f32 %v3608, %v3651
      %v3654 = vmul.f32 %v3611, %v3651
      %v3655 = vmul.f32 %v3614, %v3651
      %v3656 = vmul.f32 %v3617, %v3651
      %v3657 = vmul.f32 %v3620, %v3651
      %v3658 = vmul.f32 %v3623, %v3651
      %v3659 = vmul.f32 %v3626, %v3651
      %v3660 = vmul.f32 %v3629, %v3651
      %v3661 = vmul.f32 %v3632, %v3651
      %v3662 = vmul.f32 %v3635, %v3651
      %v3663 = vmul.f32 %v3638, %v3651
      %v3664 = vmul.f32 %v3641, %v3651
      %v3665 = vmul.f32 %v3644, %v3651
      %v3666 = vmul.f32 %v3647, %v3651
      %v3667 = vmul.f32 %v3650, %v3651
      %v3668 = vsub.f32 %v3541, %v3652
      %v3669 = vsub.f32 %v3544, %v3653
      %v3670 = vsub.f32 %v3549, %v3654
      %v3671 = vsub.f32 %v3552, %v3655
      %v3672 = vsub.f32 %v3557, %v3656
      %v3673 = vsub.f32 %v3560, %v3657
      %v3674 = vsub.f32 %v3565, %v3658
      %v3675 = vsub.f32 %v3568, %v3659
      %v3676 = vsub.f32 %v3573, %v3660
      %v3677 = vsub.f32 %v3576, %v3661
      %v3678 = vsub.f32 %v3581, %v3662
      %v3679 = vsub.f32 %v3584, %v3663
      %v3680 = vsub.f32 %v3589, %v3664
      %v3681 = vsub.f32 %v3592, %v3665
      %v3682 = vsub.f32 %v3597, %v3666
      %v3683 = vsub.f32 %v3600, %v3667
      %v3684 = vmul.f32 %v3668, %v3668
      %v3685 = vmul.f32 %v3669, %v3669
      %v3686 = vmul.f32 %v3670, %v3670
      %v3687 = vmul.f32 %v3671, %v3671
      %v3688 = vmul.f32 %v3672, %v3672
      %v3689 = vmul.f32 %v3673, %v3673
      %v3690 = vmul.f32 %v3674, %v3674
      %v3691 = vmul.f32 %v3675, %v3675
      %v3692 = vmul.f32 %v3676, %v3676
      %v3693 = vmul.f32 %v3677, %v3677
      %v3694 = vmul.f32 %v3678, %v3678
      %v3695 = vmul.f32 %v3679, %v3679
      %v3696 = vmul.f32 %v3680, %v3680
      %v3697 = vmul.f32 %v3681, %v3681
      %v3698 = vmul.f32 %v3682, %v3682
      %v3699 = vmul.f32 %v3683, %v3683
      %v3700 = vsel %vm2526, %v3684, 0.0
      %3701 = vadd.xlane.f32.xlu0 %v3700
      %v3702 = vpop.xlane.xlu0 %3701
      %v3703 = vsel %vm2526, %v3685, 0.0
      %3704 = vadd.xlane.f32.xlu0 %v3703
      %v3705 = vpop.xlane.xlu0 %3704
      %v3706 = vsel %vm2526, %v3686, 0.0
      %3707 = vadd.xlane.f32.xlu0 %v3706
      %v3708 = vpop.xlane.xlu0 %3707
      %v3709 = vsel %vm2526, %v3687, 0.0
      %3710 = vadd.xlane.f32.xlu0 %v3709
      %v3711 = vpop.xlane.xlu0 %3710
      %v3712 = vsel %vm2526, %v3688, 0.0
      %3713 = vadd.xlane.f32.xlu0 %v3712
      %v3714 = vpop.xlane.xlu0 %3713
      %v3715 = vsel %vm2526, %v3689, 0.0
      %3716 = vadd.xlane.f32.xlu0 %v3715
      %v3717 = vpop.xlane.xlu0 %3716
      %v3718 = vsel %vm2526, %v3690, 0.0
      %3719 = vadd.xlane.f32.xlu0 %v3718
      %v3720 = vpop.xlane.xlu0 %3719
      %v3721 = vsel %vm2526, %v3691, 0.0
      %3722 = vadd.xlane.f32.xlu0 %v3721
      %v3723 = vpop.xlane.xlu0 %3722
      %v3724 = vsel %vm2526, %v3692, 0.0
      %3725 = vadd.xlane.f32.xlu0 %v3724
      %v3726 = vpop.xlane.xlu0 %3725
      %v3727 = vsel %vm2526, %v3693, 0.0
      %3728 = vadd.xlane.f32.xlu0 %v3727
      %v3729 = vpop.xlane.xlu0 %3728
      %v3730 = vsel %vm2526, %v3694, 0.0
      %3731 = vadd.xlane.f32.xlu0 %v3730
      %v3732 = vpop.xlane.xlu0 %3731
      %v3733 = vsel %vm2526, %v3695, 0.0
      %3734 = vadd.xlane.f32.xlu0 %v3733
      %v3735 = vpop.xlane.xlu0 %3734
      %v3736 = vsel %vm2526, %v3696, 0.0
      %3737 = vadd.xlane.f32.xlu0 %v3736
      %v3738 = vpop.xlane.xlu0 %3737
      %v3739 = vsel %vm2526, %v3697, 0.0
      %3740 = vadd.xlane.f32.xlu0 %v3739
      %v3741 = vpop.xlane.xlu0 %3740
      %v3742 = vsel %vm2526, %v3698, 0.0
      %3743 = vadd.xlane.f32.xlu0 %v3742
      %v3744 = vpop.xlane.xlu0 %3743
      %v3745 = vsel %vm2526, %v3699, 0.0
      %3746 = vadd.xlane.f32.xlu0 %v3745
      %v3747 = vpop.xlane.xlu0 %3746
      %v3748 = vmul.f32 %v3702, %v3651
      %v3749 = vmul.f32 %v3705, %v3651
      %v3750 = vmul.f32 %v3708, %v3651
      %v3751 = vmul.f32 %v3711, %v3651
      %v3752 = vmul.f32 %v3714, %v3651
      %v3753 = vmul.f32 %v3717, %v3651
      %v3754 = vmul.f32 %v3720, %v3651
      %v3755 = vmul.f32 %v3723, %v3651
      %v3756 = vmul.f32 %v3726, %v3651
      %v3757 = vmul.f32 %v3729, %v3651
      %v3758 = vmul.f32 %v3732, %v3651
      %v3759 = vmul.f32 %v3735, %v3651
      %v3760 = vmul.f32 %v3738, %v3651
      %v3761 = vmul.f32 %v3741, %v3651
      %v3762 = vmul.f32 %v3744, %v3651
      %v3763 = vmul.f32 %v3747, %v3651
      %v3764 = vadd.f32 %v3748, 1e-05
      %v3765 = vadd.f32 %v3749, 1e-05
      %v3766 = vadd.f32 %v3750, 1e-05
      %v3767 = vadd.f32 %v3751, 1e-05
      %v3768 = vadd.f32 %v3752, 1e-05
      %v3769 = vadd.f32 %v3753, 1e-05
      %v3770 = vadd.f32 %v3754, 1e-05
      %v3771 = vadd.f32 %v3755, 1e-05
      %v3772 = vadd.f32 %v3756, 1e-05
      %v3773 = vadd.f32 %v3757, 1e-05
      %v3774 = vadd.f32 %v3758, 1e-05
      %v3775 = vadd.f32 %v3759, 1e-05
      %v3776 = vadd.f32 %v3760, 1e-05
      %v3777 = vadd.f32 %v3761, 1e-05
      %v3778 = vadd.f32 %v3762, 1e-05
      %v3779 = vadd.f32 %v3763, 1e-05
      %v3780 = vrsqrt.pop %v3764
      %v3781 = vrsqrt.pop %v3765
      %v3782 = vrsqrt.pop %v3766
      %v3783 = vrsqrt.pop %v3767
      %v3784 = vrsqrt.pop %v3768
      %v3785 = vrsqrt.pop %v3769
      %v3786 = vrsqrt.pop %v3770
      %v3787 = vrsqrt.pop %v3771
      %v3788 = vrsqrt.pop %v3772
      %v3789 = vrsqrt.pop %v3773
      %v3790 = vrsqrt.pop %v3774
      %v3791 = vrsqrt.pop %v3775
      %v3792 = vrsqrt.pop %v3776
      %v3793 = vrsqrt.pop %v3777
      %v3794 = vrsqrt.pop %v3778
      %v3795 = vrsqrt.pop %v3779
      %v3796 = vmul.f32 %v3668, %v3780
      %v3797 = vmul.f32 %v3669, %v3781
      %v3798 = vmul.f32 %v3670, %v3782
      %v3799 = vmul.f32 %v3671, %v3783
      %v3800 = vmul.f32 %v3672, %v3784
      %v3801 = vmul.f32 %v3673, %v3785
      %v3802 = vmul.f32 %v3674, %v3786
      %v3803 = vmul.f32 %v3675, %v3787
      %v3804 = vmul.f32 %v3676, %v3788
      %v3805 = vmul.f32 %v3677, %v3789
      %v3806 = vmul.f32 %v3678, %v3790
      %v3807 = vmul.f32 %v3679, %v3791
      %v3808 = vmul.f32 %v3680, %v3792
      %v3809 = vmul.f32 %v3681, %v3793
      %v3810 = vmul.f32 %v3682, %v3794
      %v3811 = vmul.f32 %v3683, %v3795
      %v3812 = vld [vmem:[%s8] sm:$0xff]
      %v3813 = vld [vmem:[%s8 + $0x8] sm:$0xff]
      %v3814 = vld [vmem:[%s8 + $0x10] sm:$0xff]
      %v3815 = vld [vmem:[%s8 + $0x18] sm:$0xff]
      %v3816 = vld [vmem:[%s8 + $0x20] sm:$0xff]
      %v3817 = vld [vmem:[%s8 + $0x28] sm:$0xff]
      %v3818 = vld [vmem:[%s8 + $0x30] sm:$0xff]
      %v3819 = vld [vmem:[%s8 + $0x38] sm:$0xff]
      %v3820 = vld [vmem:[%s8 + $0x40] sm:$0xff]
      %v3821 = vld [vmem:[%s8 + $0x48] sm:$0xff]
      %v3822 = vld [vmem:[%s8 + $0x50] sm:$0xff]
      %v3823 = vld [vmem:[%s8 + $0x58] sm:$0xff]
      %v3824 = vld [vmem:[%s8 + $0x60] sm:$0xff]
      %v3825 = vld [vmem:[%s8 + $0x68] sm:$0xff]
      %v3826 = vld [vmem:[%s8 + $0x70] sm:$0xff]
      %v3827 = vld [vmem:[%s8 + $0x78] sm:$0xff]
      %3829 = vset.pattern.permute.xlu0 0
      %3830 = vperm.xlu0 %3829, %v3812
      %v3831 = vpop.permute.xlu0 %3830
      %3834 = vset.pattern.permute.xlu0 0
      %3835 = vperm.xlu0 %3834, %v3813
      %v3836 = vpop.permute.xlu0 %3835
      %3839 = vset.pattern.permute.xlu0 0
      %3840 = vperm.xlu0 %3839, %v3814
      %v3841 = vpop.permute.xlu0 %3840
      %3844 = vset.pattern.permute.xlu0 0
      %3845 = vperm.xlu0 %3844, %v3815
      %v3846 = vpop.permute.xlu0 %3845
      %3849 = vset.pattern.permute.xlu0 0
      %3850 = vperm.xlu0 %3849, %v3816
      %v3851 = vpop.permute.xlu0 %3850
      %3854 = vset.pattern.permute.xlu0 0
      %3855 = vperm.xlu0 %3854, %v3817
      %v3856 = vpop.permute.xlu0 %3855
      %3859 = vset.pattern.permute.xlu0 0
      %3860 = vperm.xlu0 %3859, %v3818
      %v3861 = vpop.permute.xlu0 %3860
      %3864 = vset.pattern.permute.xlu0 0
      %3865 = vperm.xlu0 %3864, %v3819
      %v3866 = vpop.permute.xlu0 %3865
      %3869 = vset.pattern.permute.xlu0 0
      %3870 = vperm.xlu0 %3869, %v3820
      %v3871 = vpop.permute.xlu0 %3870
      %3874 = vset.pattern.permute.xlu0 0
      %3875 = vperm.xlu0 %3874, %v3821
      %v3876 = vpop.permute.xlu0 %3875
      %3879 = vset.pattern.permute.xlu0 0
      %3880 = vperm.xlu0 %3879, %v3822
      %v3881 = vpop.permute.xlu0 %3880
      %3884 = vset.pattern.permute.xlu0 0
      %3885 = vperm.xlu0 %3884, %v3823
      %v3886 = vpop.permute.xlu0 %3885
      %3889 = vset.pattern.permute.xlu0 0
      %3890 = vperm.xlu0 %3889, %v3824
      %v3891 = vpop.permute.xlu0 %3890
      %3894 = vset.pattern.permute.xlu0 0
      %3895 = vperm.xlu0 %3894, %v3825
      %v3896 = vpop.permute.xlu0 %3895
      %3899 = vset.pattern.permute.xlu0 0
      %3900 = vperm.xlu0 %3899, %v3826
      %v3901 = vpop.permute.xlu0 %3900
      %3904 = vset.pattern.permute.xlu0 0
      %3905 = vperm.xlu0 %3904, %v3827
      %v3906 = vpop.permute.xlu0 %3905
      %v3908 = vmul.f32 %v3796, %v3831
      %v3909 = vmul.f32 %v3797, %v3836
      %v3910 = vmul.f32 %v3798, %v3841
      %v3911 = vmul.f32 %v3799, %v3846
      %v3912 = vmul.f32 %v3800, %v3851
      %v3913 = vmul.f32 %v3801, %v3856
      %v3914 = vmul.f32 %v3802, %v3861
      %v3915 = vmul.f32 %v3803, %v3866
      %v3916 = vmul.f32 %v3804, %v3871
      %v3917 = vmul.f32 %v3805, %v3876
      %v3918 = vmul.f32 %v3806, %v3881
      %v3919 = vmul.f32 %v3807, %v3886
      %v3920 = vmul.f32 %v3808, %v3891
      %v3921 = vmul.f32 %v3809, %v3896
      %v3922 = vmul.f32 %v3810, %v3901
      %v3923 = vmul.f32 %v3811, %v3906
      %v3924 = vld [vmem:[%s9] sm:$0xff]
      %v3925 = vld [vmem:[%s9 + $0x8] sm:$0xff]
      %v3926 = vld [vmem:[%s9 + $0x10] sm:$0xff]
      %v3927 = vld [vmem:[%s9 + $0x18] sm:$0xff]
      %v3928 = vld [vmem:[%s9 + $0x20] sm:$0xff]
      %v3929 = vld [vmem:[%s9 + $0x28] sm:$0xff]
      %v3930 = vld [vmem:[%s9 + $0x30] sm:$0xff]
      %v3931 = vld [vmem:[%s9 + $0x38] sm:$0xff]
      %v3932 = vld [vmem:[%s9 + $0x40] sm:$0xff]
      %v3933 = vld [vmem:[%s9 + $0x48] sm:$0xff]
      %v3934 = vld [vmem:[%s9 + $0x50] sm:$0xff]
      %v3935 = vld [vmem:[%s9 + $0x58] sm:$0xff]
      %v3936 = vld [vmem:[%s9 + $0x60] sm:$0xff]
      %v3937 = vld [vmem:[%s9 + $0x68] sm:$0xff]
      %v3938 = vld [vmem:[%s9 + $0x70] sm:$0xff]
      %v3939 = vld [vmem:[%s9 + $0x78] sm:$0xff]
      %3941 = vset.pattern.permute.xlu0 0
      %3942 = vperm.xlu0 %3941, %v3924
      %v3943 = vpop.permute.xlu0 %3942
      %3946 = vset.pattern.permute.xlu0 0
      %3947 = vperm.xlu0 %3946, %v3925
      %v3948 = vpop.permute.xlu0 %3947
      %3951 = vset.pattern.permute.xlu0 0
      %3952 = vperm.xlu0 %3951, %v3926
      %v3953 = vpop.permute.xlu0 %3952
      %3956 = vset.pattern.permute.xlu0 0
      %3957 = vperm.xlu0 %3956, %v3927
      %v3958 = vpop.permute.xlu0 %3957
      %3961 = vset.pattern.permute.xlu0 0
      %3962 = vperm.xlu0 %3961, %v3928
      %v3963 = vpop.permute.xlu0 %3962
      %3966 = vset.pattern.permute.xlu0 0
      %3967 = vperm.xlu0 %3966, %v3929
      %v3968 = vpop.permute.xlu0 %3967
      %3971 = vset.pattern.permute.xlu0 0
      %3972 = vperm.xlu0 %3971, %v3930
      %v3973 = vpop.permute.xlu0 %3972
      %3976 = vset.pattern.permute.xlu0 0
      %3977 = vperm.xlu0 %3976, %v3931
      %v3978 = vpop.permute.xlu0 %3977
      %3981 = vset.pattern.permute.xlu0 0
      %3982 = vperm.xlu0 %3981, %v3932
      %v3983 = vpop.permute.xlu0 %3982
      %3986 = vset.pattern.permute.xlu0 0
      %3987 = vperm.xlu0 %3986, %v3933
      %v3988 = vpop.permute.xlu0 %3987
      %3991 = vset.pattern.permute.xlu0 0
      %3992 = vperm.xlu0 %3991, %v3934
      %v3993 = vpop.permute.xlu0 %3992
      %3996 = vset.pattern.permute.xlu0 0
      %3997 = vperm.xlu0 %3996, %v3935
      %v3998 = vpop.permute.xlu0 %3997
      %4001 = vset.pattern.permute.xlu0 0
      %4002 = vperm.xlu0 %4001, %v3936
      %v4003 = vpop.permute.xlu0 %4002
      %4006 = vset.pattern.permute.xlu0 0
      %4007 = vperm.xlu0 %4006, %v3937
      %v4008 = vpop.permute.xlu0 %4007
      %4011 = vset.pattern.permute.xlu0 0
      %4012 = vperm.xlu0 %4011, %v3938
      %v4013 = vpop.permute.xlu0 %4012
      %4016 = vset.pattern.permute.xlu0 0
      %4017 = vperm.xlu0 %4016, %v3939
      %v4018 = vpop.permute.xlu0 %4017
      %v4020 = vadd.f32 %v3908, %v3943
      %v4021 = vadd.f32 %v3909, %v3948
      %v4022 = vadd.f32 %v3910, %v3953
      %v4023 = vadd.f32 %v3911, %v3958
      %v4024 = vadd.f32 %v3912, %v3963
      %v4025 = vadd.f32 %v3913, %v3968
      %v4026 = vadd.f32 %v3914, %v3973
      %v4027 = vadd.f32 %v3915, %v3978
      %v4028 = vadd.f32 %v3916, %v3983
      %v4029 = vadd.f32 %v3917, %v3988
      %v4030 = vadd.f32 %v3918, %v3993
      %v4031 = vadd.f32 %v3919, %v3998
      %v4032 = vadd.f32 %v3920, %v4003
      %v4033 = vadd.f32 %v3921, %v4008
      %v4034 = vadd.f32 %v3922, %v4013
      %v4035 = vadd.f32 %v3923, %v4018
      %vm4036 = vcmp.gt.f32.partialorder %v4020, 0.0
      %vm4037 = vcmp.gt.f32.partialorder %v4021, 0.0
      %vm4038 = vcmp.gt.f32.partialorder %v4022, 0.0
      %vm4039 = vcmp.gt.f32.partialorder %v4023, 0.0
      %vm4040 = vcmp.gt.f32.partialorder %v4024, 0.0
      %vm4041 = vcmp.gt.f32.partialorder %v4025, 0.0
      %vm4042 = vcmp.gt.f32.partialorder %v4026, 0.0
      %vm4043 = vcmp.gt.f32.partialorder %v4027, 0.0
      %vm4044 = vcmp.gt.f32.partialorder %v4028, 0.0
      %vm4045 = vcmp.gt.f32.partialorder %v4029, 0.0
      %vm4046 = vcmp.gt.f32.partialorder %v4030, 0.0
      %vm4047 = vcmp.gt.f32.partialorder %v4031, 0.0
      %vm4048 = vcmp.gt.f32.partialorder %v4032, 0.0
      %vm4049 = vcmp.gt.f32.partialorder %v4033, 0.0
      %vm4050 = vcmp.gt.f32.partialorder %v4034, 0.0
      %vm4051 = vcmp.gt.f32.partialorder %v4035, 0.0
      %v4052 = vmul.f32 %v4020, 0.2
      %v4053 = vmul.f32 %v4021, 0.2
      %v4054 = vmul.f32 %v4022, 0.2
      %v4055 = vmul.f32 %v4023, 0.2
      %v4056 = vmul.f32 %v4024, 0.2
      %v4057 = vmul.f32 %v4025, 0.2
      %v4058 = vmul.f32 %v4026, 0.2
      %v4059 = vmul.f32 %v4027, 0.2
      %v4060 = vmul.f32 %v4028, 0.2
      %v4061 = vmul.f32 %v4029, 0.2
      %v4062 = vmul.f32 %v4030, 0.2
      %v4063 = vmul.f32 %v4031, 0.2
      %v4064 = vmul.f32 %v4032, 0.2
      %v4065 = vmul.f32 %v4033, 0.2
      %v4066 = vmul.f32 %v4034, 0.2
      %v4067 = vmul.f32 %v4035, 0.2
      %v4068 = vsel %vm4036, %v4020, %v4052
      %v4069 = vsel %vm4037, %v4021, %v4053
      %v4070 = vsel %vm4038, %v4022, %v4054
      %v4071 = vsel %vm4039, %v4023, %v4055
      %v4072 = vsel %vm4040, %v4024, %v4056
      %v4073 = vsel %vm4041, %v4025, %v4057
      %v4074 = vsel %vm4042, %v4026, %v4058
      %v4075 = vsel %vm4043, %v4027, %v4059
      %v4076 = vsel %vm4044, %v4028, %v4060
      %v4077 = vsel %vm4045, %v4029, %v4061
      %v4078 = vsel %vm4046, %v4030, %v4062
      %v4079 = vsel %vm4047, %v4031, %v4063
      %v4080 = vsel %vm4048, %v4032, %v4064
      %v4081 = vsel %vm4049, %v4033, %v4065
      %v4082 = vsel %vm4050, %v4034, %v4066
      %v4083 = vsel %vm4051, %v4035, %v4067
      %v4084 = vpack.c.bf16 %v4069, %v4068
      %v4085 = vpack.c.bf16 %v4071, %v4070
      %v4086 = vpack.c.bf16 %v4073, %v4072
      %v4087 = vpack.c.bf16 %v4075, %v4074
      %v4088 = vpack.c.bf16 %v4077, %v4076
      %v4089 = vpack.c.bf16 %v4079, %v4078
      %v4090 = vpack.c.bf16 %v4081, %v4080
      %v4091 = vpack.c.bf16 %v4083, %v4082
      %v4092 = vld [vmem:[%s10] sm:$0xf]
      %v4093 = vld [vmem:[%s10 + $0x4] sm:$0xf]
      %v4096 = vunpack.c.l.b16 %v4092
      %v4097 = vunpack.c.l.b16 %v4093
      %v4098 = vpack.c.b16 %v4097, %v4096
      %v4101 = vsel %vm2526, %v4084, 0
      %v4104 = vsel %vm2526, %v4085, 0
      %v4107 = vsel %vm2526, %v4086, 0
      %v4110 = vsel %vm2526, %v4087, 0
      %v4113 = vsel %vm2526, %v4088, 0
      %v4116 = vsel %vm2526, %v4089, 0
      %v4119 = vsel %vm2526, %v4090, 0
      %v4122 = vsel %vm2526, %v4091, 0
      %4124 = vmatprep.subr.bf16.mxu0 0
      %4125 = vmatpush1.bf16.msra.mxu0 %v4098
      %4126 = vmatprep.subr.bf16.mxu0 0
      %4127 = vmatpush1.bf16.msra.mxu0 0
      %4128 = vmatprep.subr.bf16.mxu0 0
      %4129 = vmatpush1.bf16.msra.mxu0 0
      %4130 = vmatprep.subr.bf16.mxu0 0
      %4131 = vmatpush1.bf16.msra.mxu0 0
      %4132 = vmatprep.subr.bf16.mxu0 0
      %4133 = vmatpush1.bf16.msra.mxu0 0
      %4134 = vmatprep.subr.bf16.mxu0 0
      %4135 = vmatpush1.bf16.msra.mxu0 0
      %4136 = vmatprep.subr.bf16.mxu0 0
      %4137 = vmatpush1.bf16.msra.mxu0 0
      %4138 = vmatprep.subr.bf16.mxu0 0
      %4139 = vmatpush1.bf16.msra.mxu0 0
      %4140 = vmatprep.subr.bf16.mxu0 0
      %4141 = vmatpush1.bf16.msra.mxu0 0
      %4142 = vmatprep.subr.bf16.mxu0 0
      %4143 = vmatpush1.bf16.msra.mxu0 0
      %4144 = vmatprep.subr.bf16.mxu0 0
      %4145 = vmatpush1.bf16.msra.mxu0 0
      %4146 = vmatprep.subr.bf16.mxu0 0
      %4147 = vmatpush1.bf16.msra.mxu0 0
      %4148 = vmatprep.subr.bf16.mxu0 0
      %4149 = vmatpush1.bf16.msra.mxu0 0
      %4150 = vmatprep.subr.bf16.mxu0 0
      %4151 = vmatpush1.bf16.msra.mxu0 0
      %4152 = vmatprep.subr.bf16.mxu0 0
      %4153 = vmatpush1.bf16.msra.mxu0 0
      %4154 = vmatprep.subr.bf16.mxu0 0
      %4155 = vmatpush1.bf16.msra.mxu0 0
      %4156 = vmatprep.mubr.bf16.mxu0 0
      %4157 = vmatmul.mubr.bf16.gmra.mrb[0].mxu0 %v4101
      %v4158 = vpop.f32.mrb[0].mxu0
      %v4159 = vadd.f32 0.0, %v4158
      %v4160 = vpop.f32.mrb[0].mxu0
      %v4161 = vpop.f32.mrb[0].mxu0
      %v4162 = vadd.f32 0.0, %v4161
      %v4163 = vpop.f32.mrb[0].mxu0
      %4164 = vmatprep.mubr.bf16.mxu0 0
      %4165 = vmatmul.mubr.bf16.gmra.mrb[0].mxu0 %v4104
      %v4166 = vpop.f32.mrb[0].mxu0
      %v4167 = vadd.f32 0.0, %v4166
      %v4168 = vpop.f32.mrb[0].mxu0
      %v4169 = vpop.f32.mrb[0].mxu0
      %v4170 = vadd.f32 0.0, %v4169
      %v4171 = vpop.f32.mrb[0].mxu0
      %4172 = vmatprep.mubr.bf16.mxu0 0
      %4173 = vmatmul.mubr.bf16.gmra.mrb[0].mxu0 %v4107
      %v4174 = vpop.f32.mrb[0].mxu0
      %v4175 = vadd.f32 0.0, %v4174
      %v4176 = vpop.f32.mrb[0].mxu0
      %v4177 = vpop.f32.mrb[0].mxu0
      %v4178 = vadd.f32 0.0, %v4177
      %v4179 = vpop.f32.mrb[0].mxu0
      %4180 = vmatprep.mubr.bf16.mxu0 0
      %4181 = vmatmul.mubr.bf16.gmra.mrb[0].mxu0 %v4110
      %v4182 = vpop.f32.mrb[0].mxu0
      %v4183 = vadd.f32 0.0, %v4182
      %v4184 = vpop.f32.mrb[0].mxu0
      %v4185 = vpop.f32.mrb[0].mxu0
      %v4186 = vadd.f32 0.0, %v4185
      %v4187 = vpop.f32.mrb[0].mxu0
      %4188 = vmatprep.mubr.bf16.mxu0 0
      %4189 = vmatmul.mubr.bf16.gmra.mrb[0].mxu0 %v4113
      %v4190 = vpop.f32.mrb[0].mxu0
      %v4191 = vadd.f32 0.0, %v4190
      %v4192 = vpop.f32.mrb[0].mxu0
      %v4193 = vpop.f32.mrb[0].mxu0
      %v4194 = vadd.f32 0.0, %v4193
      %v4195 = vpop.f32.mrb[0].mxu0
      %4196 = vmatprep.mubr.bf16.mxu0 0
      %4197 = vmatmul.mubr.bf16.gmra.mrb[0].mxu0 %v4116
      %v4198 = vpop.f32.mrb[0].mxu0
      %v4199 = vadd.f32 0.0, %v4198
      %v4200 = vpop.f32.mrb[0].mxu0
      %v4201 = vpop.f32.mrb[0].mxu0
      %v4202 = vadd.f32 0.0, %v4201
      %v4203 = vpop.f32.mrb[0].mxu0
      %4204 = vmatprep.mubr.bf16.mxu0 0
      %4205 = vmatmul.mubr.bf16.gmra.mrb[0].mxu0 %v4119
      %v4206 = vpop.f32.mrb[0].mxu0
      %v4207 = vadd.f32 0.0, %v4206
      %v4208 = vpop.f32.mrb[0].mxu0
      %v4209 = vpop.f32.mrb[0].mxu0
      %v4210 = vadd.f32 0.0, %v4209
      %v4211 = vpop.f32.mrb[0].mxu0
      %4212 = vmatprep.mubr.bf16.mxu0 0
      %4213 = vmatmul.mubr.bf16.gmra.mrb[0].mxu0 %v4122
      %v4214 = vpop.f32.mrb[0].mxu0
      %v4215 = vadd.f32 0.0, %v4214
      %v4216 = vpop.f32.mrb[0].mxu0
      %v4217 = vpop.f32.mrb[0].mxu0
      %v4218 = vadd.f32 0.0, %v4217
      %v4219 = vpop.f32.mrb[0].mxu0
      %4220 = vdwg.mxu0
      %v4221 = vpack.c.bf16 %v4162, %v4159
      %v4222 = vpack.c.bf16 %v4170, %v4167
      %v4223 = vpack.c.bf16 %v4178, %v4175
      %v4224 = vpack.c.bf16 %v4186, %v4183
      %v4225 = vpack.c.bf16 %v4194, %v4191
      %v4226 = vpack.c.bf16 %v4202, %v4199
      %v4227 = vpack.c.bf16 %v4210, %v4207
      %v4228 = vpack.c.bf16 %v4218, %v4215
      %vm4229 = vcmask 31744
      %4230 = vst.msk [vmem:[#allocation4] sm:$0xff] %vm4229, %v4221
      %4231 = vst.msk [vmem:[#allocation4 + $0x8] sm:$0xff] %vm4229, %v4222
      %4232 = vst.msk [vmem:[#allocation4 + $0x10] sm:$0xff] %vm4229, %v4223
      %4233 = vst.msk [vmem:[#allocation4 + $0x18] sm:$0xff] %vm4229, %v4224
      %4234 = vst.msk [vmem:[#allocation4 + $0x20] sm:$0xff] %vm4229, %v4225
      %4235 = vst.msk [vmem:[#allocation4 + $0x28] sm:$0xff] %vm4229, %v4226
      %4236 = vst.msk [vmem:[#allocation4 + $0x30] sm:$0xff] %vm4229, %v4227
      %4237 = vst.msk [vmem:[#allocation4 + $0x38] sm:$0xff] %vm4229, %v4228
      %4246 = vrot.lane.b32.xlu0 %v4221, 124
      %v4247 = vpop.permute.xlu0 %4246
      %4248 = vrot.lane.b32.xlu0 %v4222, 124
      %v4249 = vpop.permute.xlu0 %4248
      %4250 = vrot.lane.b32.xlu0 %v4223, 124
      %v4251 = vpop.permute.xlu0 %4250
      %4252 = vrot.lane.b32.xlu0 %v4224, 124
      %v4253 = vpop.permute.xlu0 %4252
      %4254 = vrot.lane.b32.xlu0 %v4225, 124
      %v4255 = vpop.permute.xlu0 %4254
      %4256 = vrot.lane.b32.xlu0 %v4226, 124
      %v4257 = vpop.permute.xlu0 %4256
      %4258 = vrot.lane.b32.xlu0 %v4227, 124
      %v4259 = vpop.permute.xlu0 %4258
      %4260 = vrot.lane.b32.xlu0 %v4228, 124
      %v4261 = vpop.permute.xlu0 %4260
      %4270 = vst.msk [vmem:[#allocation4 + $0x40] sm:$0xff] %vm4229, %v4247
      %4271 = vst.msk [vmem:[#allocation4 + $0x48] sm:$0xff] %vm4229, %v4249
      %4272 = vst.msk [vmem:[#allocation4 + $0x50] sm:$0xff] %vm4229, %v4251
      %4273 = vst.msk [vmem:[#allocation4 + $0x58] sm:$0xff] %vm4229, %v4253
      %4274 = vst.msk [vmem:[#allocation4 + $0x60] sm:$0xff] %vm4229, %v4255
      %4275 = vst.msk [vmem:[#allocation4 + $0x68] sm:$0xff] %vm4229, %v4257
      %4276 = vst.msk [vmem:[#allocation4 + $0x70] sm:$0xff] %vm4229, %v4259
      %4277 = vst.msk [vmem:[#allocation4 + $0x78] sm:$0xff] %vm4229, %v4261
      %4278 = vrot.lane.b32.xlu0 %v4221, 120
      %v4279 = vpop.permute.xlu0 %4278
      %4280 = vrot.lane.b32.xlu0 %v4222, 120
      %v4281 = vpop.permute.xlu0 %4280
      %4282 = vrot.lane.b32.xlu0 %v4223, 120
      %v4283 = vpop.permute.xlu0 %4282
      %4284 = vrot.lane.b32.xlu0 %v4224, 120
      %v4285 = vpop.permute.xlu0 %4284
      %4286 = vrot.lane.b32.xlu0 %v4225, 120
      %v4287 = vpop.permute.xlu0 %4286
      %4288 = vrot.lane.b32.xlu0 %v4226, 120
      %v4289 = vpop.permute.xlu0 %4288
      %4290 = vrot.lane.b32.xlu0 %v4227, 120
      %v4291 = vpop.permute.xlu0 %4290
      %4292 = vrot.lane.b32.xlu0 %v4228, 120
      %v4293 = vpop.permute.xlu0 %4292
      %4302 = vst.msk [vmem:[#allocation4 + $0x80] sm:$0xff] %vm4229, %v4279
      %4303 = vst.msk [vmem:[#allocation4 + $0x88] sm:$0xff] %vm4229, %v4281
      %4304 = vst.msk [vmem:[#allocation4 + $0x90] sm:$0xff] %vm4229, %v4283
      %4305 = vst.msk [vmem:[#allocation4 + $0x98] sm:$0xff] %vm4229, %v4285
      %4306 = vst.msk [vmem:[#allocation4 + $0xa0] sm:$0xff] %vm4229, %v4287
      %4307 = vst.msk [vmem:[#allocation4 + $0xa8] sm:$0xff] %vm4229, %v4289
      %4308 = vst.msk [vmem:[#allocation4 + $0xb0] sm:$0xff] %vm4229, %v4291
      %4309 = vst.msk [vmem:[#allocation4 + $0xb8] sm:$0xff] %vm4229, %v4293
      %4310 = vrot.lane.b32.xlu0 %v4221, 116
      %v4311 = vpop.permute.xlu0 %4310
      %4312 = vrot.lane.b32.xlu0 %v4222, 116
      %v4313 = vpop.permute.xlu0 %4312
      %4314 = vrot.lane.b32.xlu0 %v4223, 116
      %v4315 = vpop.permute.xlu0 %4314
      %4316 = vrot.lane.b32.xlu0 %v4224, 116
      %v4317 = vpop.permute.xlu0 %4316
      %4318 = vrot.lane.b32.xlu0 %v4225, 116
      %v4319 = vpop.permute.xlu0 %4318
      %4320 = vrot.lane.b32.xlu0 %v4226, 116
      %v4321 = vpop.permute.xlu0 %4320
      %4322 = vrot.lane.b32.xlu0 %v4227, 116
      %v4323 = vpop.permute.xlu0 %4322
      %4324 = vrot.lane.b32.xlu0 %v4228, 116
      %v4325 = vpop.permute.xlu0 %4324
      %4334 = vst.msk [vmem:[#allocation4 + $0xc0] sm:$0xff] %vm4229, %v4311
      %4335 = vst.msk [vmem:[#allocation4 + $0xc8] sm:$0xff] %vm4229, %v4313
      %4336 = vst.msk [vmem:[#allocation4 + $0xd0] sm:$0xff] %vm4229, %v4315
      %4337 = vst.msk [vmem:[#allocation4 + $0xd8] sm:$0xff] %vm4229, %v4317
      %4338 = vst.msk [vmem:[#allocation4 + $0xe0] sm:$0xff] %vm4229, %v4319
      %4339 = vst.msk [vmem:[#allocation4 + $0xe8] sm:$0xff] %vm4229, %v4321
      %4340 = vst.msk [vmem:[#allocation4 + $0xf0] sm:$0xff] %vm4229, %v4323
      %4341 = vst.msk [vmem:[#allocation4 + $0xf8] sm:$0xff] %vm4229, %v4325
      %4342 = vrot.lane.b32.xlu0 %v4221, 112
      %v4343 = vpop.permute.xlu0 %4342
      %4344 = vrot.lane.b32.xlu0 %v4222, 112
      %v4345 = vpop.permute.xlu0 %4344
      %4346 = vrot.lane.b32.xlu0 %v4223, 112
      %v4347 = vpop.permute.xlu0 %4346
      %4348 = vrot.lane.b32.xlu0 %v4224, 112
      %v4349 = vpop.permute.xlu0 %4348
      %4350 = vrot.lane.b32.xlu0 %v4225, 112
      %v4351 = vpop.permute.xlu0 %4350
      %4352 = vrot.lane.b32.xlu0 %v4226, 112
      %v4353 = vpop.permute.xlu0 %4352
      %4354 = vrot.lane.b32.xlu0 %v4227, 112
      %v4355 = vpop.permute.xlu0 %4354
      %4356 = vrot.lane.b32.xlu0 %v4228, 112
      %v4357 = vpop.permute.xlu0 %4356
      %4366 = vst.msk [vmem:[#allocation4 + $0x100] sm:$0xff] %vm4229, %v4343
      %4367 = vst.msk [vmem:[#allocation4 + $0x108] sm:$0xff] %vm4229, %v4345
      %4368 = vst.msk [vmem:[#allocation4 + $0x110] sm:$0xff] %vm4229, %v4347
      %4369 = vst.msk [vmem:[#allocation4 + $0x118] sm:$0xff] %vm4229, %v4349
      %4370 = vst.msk [vmem:[#allocation4 + $0x120] sm:$0xff] %vm4229, %v4351
      %4371 = vst.msk [vmem:[#allocation4 + $0x128] sm:$0xff] %vm4229, %v4353
      %4372 = vst.msk [vmem:[#allocation4 + $0x130] sm:$0xff] %vm4229, %v4355
      %4373 = vst.msk [vmem:[#allocation4 + $0x138] sm:$0xff] %vm4229, %v4357
      %4374 = vrot.lane.b32.xlu0 %v4221, 108
      %v4375 = vpop.permute.xlu0 %4374
      %4376 = vrot.lane.b32.xlu0 %v4222, 108
      %v4377 = vpop.permute.xlu0 %4376
      %4378 = vrot.lane.b32.xlu0 %v4223, 108
      %v4379 = vpop.permute.xlu0 %4378
      %4380 = vrot.lane.b32.xlu0 %v4224, 108
      %v4381 = vpop.permute.xlu0 %4380
      %4382 = vrot.lane.b32.xlu0 %v4225, 108
      %v4383 = vpop.permute.xlu0 %4382
      %4384 = vrot.lane.b32.xlu0 %v4226, 108
      %v4385 = vpop.permute.xlu0 %4384
      %4386 = vrot.lane.b32.xlu0 %v4227, 108
      %v4387 = vpop.permute.xlu0 %4386
      %4388 = vrot.lane.b32.xlu0 %v4228, 108
      %v4389 = vpop.permute.xlu0 %4388
      %4398 = vst.msk [vmem:[#allocation4 + $0x140] sm:$0xff] %vm4229, %v4375
      %4399 = vst.msk [vmem:[#allocation4 + $0x148] sm:$0xff] %vm4229, %v4377
      %4400 = vst.msk [vmem:[#allocation4 + $0x150] sm:$0xff] %vm4229, %v4379
      %4401 = vst.msk [vmem:[#allocation4 + $0x158] sm:$0xff] %vm4229, %v4381
      %4402 = vst.msk [vmem:[#allocation4 + $0x160] sm:$0xff] %vm4229, %v4383
      %4403 = vst.msk [vmem:[#allocation4 + $0x168] sm:$0xff] %vm4229, %v4385
      %4404 = vst.msk [vmem:[#allocation4 + $0x170] sm:$0xff] %vm4229, %v4387
      %4405 = vst.msk [vmem:[#allocation4 + $0x178] sm:$0xff] %vm4229, %v4389
      %4406 = vrot.lane.b32.xlu0 %v4221, 104
      %v4407 = vpop.permute.xlu0 %4406
      %4408 = vrot.lane.b32.xlu0 %v4222, 104
      %v4409 = vpop.permute.xlu0 %4408
      %4410 = vrot.lane.b32.xlu0 %v4223, 104
      %v4411 = vpop.permute.xlu0 %4410
      %4412 = vrot.lane.b32.xlu0 %v4224, 104
      %v4413 = vpop.permute.xlu0 %4412
      %4414 = vrot.lane.b32.xlu0 %v4225, 104
      %v4415 = vpop.permute.xlu0 %4414
      %4416 = vrot.lane.b32.xlu0 %v4226, 104
      %v4417 = vpop.permute.xlu0 %4416
      %4418 = vrot.lane.b32.xlu0 %v4227, 104
      %v4419 = vpop.permute.xlu0 %4418
      %4420 = vrot.lane.b32.xlu0 %v4228, 104
      %v4421 = vpop.permute.xlu0 %4420
      %4430 = vst.msk [vmem:[#allocation4 + $0x180] sm:$0xff] %vm4229, %v4407
      %4431 = vst.msk [vmem:[#allocation4 + $0x188] sm:$0xff] %vm4229, %v4409
      %4432 = vst.msk [vmem:[#allocation4 + $0x190] sm:$0xff] %vm4229, %v4411
      %4433 = vst.msk [vmem:[#allocation4 + $0x198] sm:$0xff] %vm4229, %v4413
      %4434 = vst.msk [vmem:[#allocation4 + $0x1a0] sm:$0xff] %vm4229, %v4415
      %4435 = vst.msk [vmem:[#allocation4 + $0x1a8] sm:$0xff] %vm4229, %v4417
      %4436 = vst.msk [vmem:[#allocation4 + $0x1b0] sm:$0xff] %vm4229, %v4419
      %4437 = vst.msk [vmem:[#allocation4 + $0x1b8] sm:$0xff] %vm4229, %v4421
      %4438 = vrot.lane.b32.xlu0 %v4221, 100
      %v4439 = vpop.permute.xlu0 %4438
      %4440 = vrot.lane.b32.xlu0 %v4222, 100
      %v4441 = vpop.permute.xlu0 %4440
      %4442 = vrot.lane.b32.xlu0 %v4223, 100
      %v4443 = vpop.permute.xlu0 %4442
      %4444 = vrot.lane.b32.xlu0 %v4224, 100
      %v4445 = vpop.permute.xlu0 %4444
      %4446 = vrot.lane.b32.xlu0 %v4225, 100
      %v4447 = vpop.permute.xlu0 %4446
      %4448 = vrot.lane.b32.xlu0 %v4226, 100
      %v4449 = vpop.permute.xlu0 %4448
      %4450 = vrot.lane.b32.xlu0 %v4227, 100
      %v4451 = vpop.permute.xlu0 %4450
      %4452 = vrot.lane.b32.xlu0 %v4228, 100
      %v4453 = vpop.permute.xlu0 %4452
      %4462 = vst.msk [vmem:[#allocation4 + $0x1c0] sm:$0xff] %vm4229, %v4439
      %4463 = vst.msk [vmem:[#allocation4 + $0x1c8] sm:$0xff] %vm4229, %v4441
      %4464 = vst.msk [vmem:[#allocation4 + $0x1d0] sm:$0xff] %vm4229, %v4443
      %4465 = vst.msk [vmem:[#allocation4 + $0x1d8] sm:$0xff] %vm4229, %v4445
      %4466 = vst.msk [vmem:[#allocation4 + $0x1e0] sm:$0xff] %vm4229, %v4447
      %4467 = vst.msk [vmem:[#allocation4 + $0x1e8] sm:$0xff] %vm4229, %v4449
      %4468 = vst.msk [vmem:[#allocation4 + $0x1f0] sm:$0xff] %vm4229, %v4451
      %4469 = vst.msk [vmem:[#allocation4 + $0x1f8] sm:$0xff] %vm4229, %v4453
      %4470 = vrot.lane.b32.xlu0 %v4221, 96
      %v4471 = vpop.permute.xlu0 %4470
      %4472 = vrot.lane.b32.xlu0 %v4222, 96
      %v4473 = vpop.permute.xlu0 %4472
      %4474 = vrot.lane.b32.xlu0 %v4223, 96
      %v4475 = vpop.permute.xlu0 %4474
      %4476 = vrot.lane.b32.xlu0 %v4224, 96
      %v4477 = vpop.permute.xlu0 %4476
      %4478 = vrot.lane.b32.xlu0 %v4225, 96
      %v4479 = vpop.permute.xlu0 %4478
      %4480 = vrot.lane.b32.xlu0 %v4226, 96
      %v4481 = vpop.permute.xlu0 %4480
      %4482 = vrot.lane.b32.xlu0 %v4227, 96
      %v4483 = vpop.permute.xlu0 %4482
      %4484 = vrot.lane.b32.xlu0 %v4228, 96
      %v4485 = vpop.permute.xlu0 %4484
      %4494 = vst.msk [vmem:[#allocation4 + $0x200] sm:$0xff] %vm4229, %v4471
      %4495 = vst.msk [vmem:[#allocation4 + $0x208] sm:$0xff] %vm4229, %v4473
      %4496 = vst.msk [vmem:[#allocation4 + $0x210] sm:$0xff] %vm4229, %v4475
      %4497 = vst.msk [vmem:[#allocation4 + $0x218] sm:$0xff] %vm4229, %v4477
      %4498 = vst.msk [vmem:[#allocation4 + $0x220] sm:$0xff] %vm4229, %v4479
      %4499 = vst.msk [vmem:[#allocation4 + $0x228] sm:$0xff] %vm4229, %v4481
      %4500 = vst.msk [vmem:[#allocation4 + $0x230] sm:$0xff] %vm4229, %v4483
      %4501 = vst.msk [vmem:[#allocation4 + $0x238] sm:$0xff] %vm4229, %v4485
      %4502 = vrot.lane.b32.xlu0 %v4221, 92
      %v4503 = vpop.permute.xlu0 %4502
      %4504 = vrot.lane.b32.xlu0 %v4222, 92
      %v4505 = vpop.permute.xlu0 %4504
      %4506 = vrot.lane.b32.xlu0 %v4223, 92
      %v4507 = vpop.permute.xlu0 %4506
      %4508 = vrot.lane.b32.xlu0 %v4224, 92
      %v4509 = vpop.permute.xlu0 %4508
      %4510 = vrot.lane.b32.xlu0 %v4225, 92
      %v4511 = vpop.permute.xlu0 %4510
      %4512 = vrot.lane.b32.xlu0 %v4226, 92
      %v4513 = vpop.permute.xlu0 %4512
      %4514 = vrot.lane.b32.xlu0 %v4227, 92
      %v4515 = vpop.permute.xlu0 %4514
      %4516 = vrot.lane.b32.xlu0 %v4228, 92
      %v4517 = vpop.permute.xlu0 %4516
      %4526 = vst.msk [vmem:[#allocation4 + $0x240] sm:$0xff] %vm4229, %v4503
      %4527 = vst.msk [vmem:[#allocation4 + $0x248] sm:$0xff] %vm4229, %v4505
      %4528 = vst.msk [vmem:[#allocation4 + $0x250] sm:$0xff] %vm4229, %v4507
      %4529 = vst.msk [vmem:[#allocation4 + $0x258] sm:$0xff] %vm4229, %v4509
      %4530 = vst.msk [vmem:[#allocation4 + $0x260] sm:$0xff] %vm4229, %v4511
      %4531 = vst.msk [vmem:[#allocation4 + $0x268] sm:$0xff] %vm4229, %v4513
      %4532 = vst.msk [vmem:[#allocation4 + $0x270] sm:$0xff] %vm4229, %v4515
      %4533 = vst.msk [vmem:[#allocation4 + $0x278] sm:$0xff] %vm4229, %v4517
      %4534 = vrot.lane.b32.xlu0 %v4221, 88
      %v4535 = vpop.permute.xlu0 %4534
      %4536 = vrot.lane.b32.xlu0 %v4222, 88
      %v4537 = vpop.permute.xlu0 %4536
      %4538 = vrot.lane.b32.xlu0 %v4223, 88
      %v4539 = vpop.permute.xlu0 %4538
      %4540 = vrot.lane.b32.xlu0 %v4224, 88
      %v4541 = vpop.permute.xlu0 %4540
      %4542 = vrot.lane.b32.xlu0 %v4225, 88
      %v4543 = vpop.permute.xlu0 %4542
      %4544 = vrot.lane.b32.xlu0 %v4226, 88
      %v4545 = vpop.permute.xlu0 %4544
      %4546 = vrot.lane.b32.xlu0 %v4227, 88
      %v4547 = vpop.permute.xlu0 %4546
      %4548 = vrot.lane.b32.xlu0 %v4228, 88
      %v4549 = vpop.permute.xlu0 %4548
      %4558 = vst.msk [vmem:[#allocation4 + $0x280] sm:$0xff] %vm4229, %v4535
      %4559 = vst.msk [vmem:[#allocation4 + $0x288] sm:$0xff] %vm4229, %v4537
      %4560 = vst.msk [vmem:[#allocation4 + $0x290] sm:$0xff] %vm4229, %v4539
      %4561 = vst.msk [vmem:[#allocation4 + $0x298] sm:$0xff] %vm4229, %v4541
      %4562 = vst.msk [vmem:[#allocation4 + $0x2a0] sm:$0xff] %vm4229, %v4543
      %4563 = vst.msk [vmem:[#allocation4 + $0x2a8] sm:$0xff] %vm4229, %v4545
      %4564 = vst.msk [vmem:[#allocation4 + $0x2b0] sm:$0xff] %vm4229, %v4547
      %4565 = vst.msk [vmem:[#allocation4 + $0x2b8] sm:$0xff] %vm4229, %v4549
      %4566 = vrot.lane.b32.xlu0 %v4221, 84
      %v4567 = vpop.permute.xlu0 %4566
      %4568 = vrot.lane.b32.xlu0 %v4222, 84
      %v4569 = vpop.permute.xlu0 %4568
      %4570 = vrot.lane.b32.xlu0 %v4223, 84
      %v4571 = vpop.permute.xlu0 %4570
      %4572 = vrot.lane.b32.xlu0 %v4224, 84
      %v4573 = vpop.permute.xlu0 %4572
      %4574 = vrot.lane.b32.xlu0 %v4225, 84
      %v4575 = vpop.permute.xlu0 %4574
      %4576 = vrot.lane.b32.xlu0 %v4226, 84
      %v4577 = vpop.permute.xlu0 %4576
      %4578 = vrot.lane.b32.xlu0 %v4227, 84
      %v4579 = vpop.permute.xlu0 %4578
      %4580 = vrot.lane.b32.xlu0 %v4228, 84
      %v4581 = vpop.permute.xlu0 %4580
      %4590 = vst.msk [vmem:[#allocation4 + $0x2c0] sm:$0xff] %vm4229, %v4567
      %4591 = vst.msk [vmem:[#allocation4 + $0x2c8] sm:$0xff] %vm4229, %v4569
      %4592 = vst.msk [vmem:[#allocation4 + $0x2d0] sm:$0xff] %vm4229, %v4571
      %4593 = vst.msk [vmem:[#allocation4 + $0x2d8] sm:$0xff] %vm4229, %v4573
      %4594 = vst.msk [vmem:[#allocation4 + $0x2e0] sm:$0xff] %vm4229, %v4575
      %4595 = vst.msk [vmem:[#allocation4 + $0x2e8] sm:$0xff] %vm4229, %v4577
      %4596 = vst.msk [vmem:[#allocation4 + $0x2f0] sm:$0xff] %vm4229, %v4579
      %4597 = vst.msk [vmem:[#allocation4 + $0x2f8] sm:$0xff] %vm4229, %v4581
      %4598 = vrot.lane.b32.xlu0 %v4221, 80
      %v4599 = vpop.permute.xlu0 %4598
      %4600 = vrot.lane.b32.xlu0 %v4222, 80
      %v4601 = vpop.permute.xlu0 %4600
      %4602 = vrot.lane.b32.xlu0 %v4223, 80
      %v4603 = vpop.permute.xlu0 %4602
      %4604 = vrot.lane.b32.xlu0 %v4224, 80
      %v4605 = vpop.permute.xlu0 %4604
      %4606 = vrot.lane.b32.xlu0 %v4225, 80
      %v4607 = vpop.permute.xlu0 %4606
      %4608 = vrot.lane.b32.xlu0 %v4226, 80
      %v4609 = vpop.permute.xlu0 %4608
      %4610 = vrot.lane.b32.xlu0 %v4227, 80
      %v4611 = vpop.permute.xlu0 %4610
      %4612 = vrot.lane.b32.xlu0 %v4228, 80
      %v4613 = vpop.permute.xlu0 %4612
      %4622 = vst.msk [vmem:[#allocation4 + $0x300] sm:$0xff] %vm4229, %v4599
      %4623 = vst.msk [vmem:[#allocation4 + $0x308] sm:$0xff] %vm4229, %v4601
      %4624 = vst.msk [vmem:[#allocation4 + $0x310] sm:$0xff] %vm4229, %v4603
      %4625 = vst.msk [vmem:[#allocation4 + $0x318] sm:$0xff] %vm4229, %v4605
      %4626 = vst.msk [vmem:[#allocation4 + $0x320] sm:$0xff] %vm4229, %v4607
      %4627 = vst.msk [vmem:[#allocation4 + $0x328] sm:$0xff] %vm4229, %v4609
      %4628 = vst.msk [vmem:[#allocation4 + $0x330] sm:$0xff] %vm4229, %v4611
      %4629 = vst.msk [vmem:[#allocation4 + $0x338] sm:$0xff] %vm4229, %v4613
      %4630 = vrot.lane.b32.xlu0 %v4221, 76
      %v4631 = vpop.permute.xlu0 %4630
      %4632 = vrot.lane.b32.xlu0 %v4222, 76
      %v4633 = vpop.permute.xlu0 %4632
      %4634 = vrot.lane.b32.xlu0 %v4223, 76
      %v4635 = vpop.permute.xlu0 %4634
      %4636 = vrot.lane.b32.xlu0 %v4224, 76
      %v4637 = vpop.permute.xlu0 %4636
      %4638 = vrot.lane.b32.xlu0 %v4225, 76
      %v4639 = vpop.permute.xlu0 %4638
      %4640 = vrot.lane.b32.xlu0 %v4226, 76
      %v4641 = vpop.permute.xlu0 %4640
      %4642 = vrot.lane.b32.xlu0 %v4227, 76
      %v4643 = vpop.permute.xlu0 %4642
      %4644 = vrot.lane.b32.xlu0 %v4228, 76
      %v4645 = vpop.permute.xlu0 %4644
      %4654 = vst.msk [vmem:[#allocation4 + $0x340] sm:$0xff] %vm4229, %v4631
      %4655 = vst.msk [vmem:[#allocation4 + $0x348] sm:$0xff] %vm4229, %v4633
      %4656 = vst.msk [vmem:[#allocation4 + $0x350] sm:$0xff] %vm4229, %v4635
      %4657 = vst.msk [vmem:[#allocation4 + $0x358] sm:$0xff] %vm4229, %v4637
      %4658 = vst.msk [vmem:[#allocation4 + $0x360] sm:$0xff] %vm4229, %v4639
      %4659 = vst.msk [vmem:[#allocation4 + $0x368] sm:$0xff] %vm4229, %v4641
      %4660 = vst.msk [vmem:[#allocation4 + $0x370] sm:$0xff] %vm4229, %v4643
      %4661 = vst.msk [vmem:[#allocation4 + $0x378] sm:$0xff] %vm4229, %v4645
      %4662 = vrot.lane.b32.xlu0 %v4221, 72
      %v4663 = vpop.permute.xlu0 %4662
      %4664 = vrot.lane.b32.xlu0 %v4222, 72
      %v4665 = vpop.permute.xlu0 %4664
      %4666 = vrot.lane.b32.xlu0 %v4223, 72
      %v4667 = vpop.permute.xlu0 %4666
      %4668 = vrot.lane.b32.xlu0 %v4224, 72
      %v4669 = vpop.permute.xlu0 %4668
      %4670 = vrot.lane.b32.xlu0 %v4225, 72
      %v4671 = vpop.permute.xlu0 %4670
      %4672 = vrot.lane.b32.xlu0 %v4226, 72
      %v4673 = vpop.permute.xlu0 %4672
      %4674 = vrot.lane.b32.xlu0 %v4227, 72
      %v4675 = vpop.permute.xlu0 %4674
      %4676 = vrot.lane.b32.xlu0 %v4228, 72
      %v4677 = vpop.permute.xlu0 %4676
      %4686 = vst.msk [vmem:[#allocation4 + $0x380] sm:$0xff] %vm4229, %v4663
      %4687 = vst.msk [vmem:[#allocation4 + $0x388] sm:$0xff] %vm4229, %v4665
      %4688 = vst.msk [vmem:[#allocation4 + $0x390] sm:$0xff] %vm4229, %v4667
      %4689 = vst.msk [vmem:[#allocation4 + $0x398] sm:$0xff] %vm4229, %v4669
      %4690 = vst.msk [vmem:[#allocation4 + $0x3a0] sm:$0xff] %vm4229, %v4671
      %4691 = vst.msk [vmem:[#allocation4 + $0x3a8] sm:$0xff] %vm4229, %v4673
      %4692 = vst.msk [vmem:[#allocation4 + $0x3b0] sm:$0xff] %vm4229, %v4675
      %4693 = vst.msk [vmem:[#allocation4 + $0x3b8] sm:$0xff] %vm4229, %v4677
      %4694 = vrot.lane.b32.xlu0 %v4221, 68
      %v4695 = vpop.permute.xlu0 %4694
      %4696 = vrot.lane.b32.xlu0 %v4222, 68
      %v4697 = vpop.permute.xlu0 %4696
      %4698 = vrot.lane.b32.xlu0 %v4223, 68
      %v4699 = vpop.permute.xlu0 %4698
      %4700 = vrot.lane.b32.xlu0 %v4224, 68
      %v4701 = vpop.permute.xlu0 %4700
      %4702 = vrot.lane.b32.xlu0 %v4225, 68
      %v4703 = vpop.permute.xlu0 %4702
      %4704 = vrot.lane.b32.xlu0 %v4226, 68
      %v4705 = vpop.permute.xlu0 %4704
      %4706 = vrot.lane.b32.xlu0 %v4227, 68
      %v4707 = vpop.permute.xlu0 %4706
      %4708 = vrot.lane.b32.xlu0 %v4228, 68
      %v4709 = vpop.permute.xlu0 %4708
      %4718 = vst.msk [vmem:[#allocation4 + $0x3c0] sm:$0xff] %vm4229, %v4695
      %4719 = vst.msk [vmem:[#allocation4 + $0x3c8] sm:$0xff] %vm4229, %v4697
      %4720 = vst.msk [vmem:[#allocation4 + $0x3d0] sm:$0xff] %vm4229, %v4699
      %4721 = vst.msk [vmem:[#allocation4 + $0x3d8] sm:$0xff] %vm4229, %v4701
      %4722 = vst.msk [vmem:[#allocation4 + $0x3e0] sm:$0xff] %vm4229, %v4703
      %4723 = vst.msk [vmem:[#allocation4 + $0x3e8] sm:$0xff] %vm4229, %v4705
      %4724 = vst.msk [vmem:[#allocation4 + $0x3f0] sm:$0xff] %vm4229, %v4707
      %4725 = vst.msk [vmem:[#allocation4 + $0x3f8] sm:$0xff] %vm4229, %v4709
      %v4726 = vld [vmem:[%s11] sm:$0xff]
      %v4727 = vld [vmem:[%s11 + $0x8] sm:$0xff]
      %v4728 = vld [vmem:[%s11 + $0x10] sm:$0xff]
      %v4729 = vld [vmem:[%s11 + $0x18] sm:$0xff]
      %v4730 = vld [vmem:[%s11 + $0x20] sm:$0xff]
      %v4731 = vld [vmem:[%s11 + $0x28] sm:$0xff]
      %v4732 = vld [vmem:[%s11 + $0x30] sm:$0xff]
      %v4733 = vld [vmem:[%s11 + $0x38] sm:$0xff]
      %v4734 = vld [vmem:[%s11 + $0x40] sm:$0xff]
      %v4735 = vld [vmem:[%s11 + $0x48] sm:$0xff]
      %v4736 = vld [vmem:[%s11 + $0x50] sm:$0xff]
      %v4737 = vld [vmem:[%s11 + $0x58] sm:$0xff]
      %v4738 = vld [vmem:[%s11 + $0x60] sm:$0xff]
      %v4739 = vld [vmem:[%s11 + $0x68] sm:$0xff]
      %v4740 = vld [vmem:[%s11 + $0x70] sm:$0xff]
      %v4741 = vld [vmem:[%s11 + $0x78] sm:$0xff]
      %v4742 = vld [vmem:[%s11 + $0x80] sm:$0xff]
      %v4743 = vld [vmem:[%s11 + $0x88] sm:$0xff]
      %v4744 = vld [vmem:[%s11 + $0x90] sm:$0xff]
      %v4745 = vld [vmem:[%s11 + $0x98] sm:$0xff]
      %v4746 = vld [vmem:[%s11 + $0xa0] sm:$0xff]
      %v4747 = vld [vmem:[%s11 + $0xa8] sm:$0xff]
      %v4748 = vld [vmem:[%s11 + $0xb0] sm:$0xff]
      %v4749 = vld [vmem:[%s11 + $0xb8] sm:$0xff]
      %v4750 = vld [vmem:[%s11 + $0xc0] sm:$0xff]
      %v4751 = vld [vmem:[%s11 + $0xc8] sm:$0xff]
      %v4752 = vld [vmem:[%s11 + $0xd0] sm:$0xff]
      %v4753 = vld [vmem:[%s11 + $0xd8] sm:$0xff]
      %v4754 = vld [vmem:[%s11 + $0xe0] sm:$0xff]
      %v4755 = vld [vmem:[%s11 + $0xe8] sm:$0xff]
      %v4756 = vld [vmem:[%s11 + $0xf0] sm:$0xff]
      %v4757 = vld [vmem:[%s11 + $0xf8] sm:$0xff]
      %v4758 = vld [vmem:[%s11 + $0x100] sm:$0xff]
      %v4759 = vld [vmem:[%s11 + $0x108] sm:$0xff]
      %v4760 = vld [vmem:[%s11 + $0x110] sm:$0xff]
      %v4761 = vld [vmem:[%s11 + $0x118] sm:$0xff]
      %v4762 = vld [vmem:[%s11 + $0x120] sm:$0xff]
      %v4763 = vld [vmem:[%s11 + $0x128] sm:$0xff]
      %v4764 = vld [vmem:[%s11 + $0x130] sm:$0xff]
      %v4765 = vld [vmem:[%s11 + $0x138] sm:$0xff]
      %v4766 = vld [vmem:[%s11 + $0x140] sm:$0xff]
      %v4767 = vld [vmem:[%s11 + $0x148] sm:$0xff]
      %v4768 = vld [vmem:[%s11 + $0x150] sm:$0xff]
      %v4769 = vld [vmem:[%s11 + $0x158] sm:$0xff]
      %v4770 = vld [vmem:[%s11 + $0x160] sm:$0xff]
      %v4771 = vld [vmem:[%s11 + $0x168] sm:$0xff]
      %v4772 = vld [vmem:[%s11 + $0x170] sm:$0xff]
      %v4773 = vld [vmem:[%s11 + $0x178] sm:$0xff]
      %v4774 = vld [vmem:[%s11 + $0x180] sm:$0xff]
      %v4775 = vld [vmem:[%s11 + $0x188] sm:$0xff]
      %v4776 = vld [vmem:[%s11 + $0x190] sm:$0xff]
      %v4777 = vld [vmem:[%s11 + $0x198] sm:$0xff]
      %v4778 = vld [vmem:[%s11 + $0x1a0] sm:$0xff]
      %v4779 = vld [vmem:[%s11 + $0x1a8] sm:$0xff]
      %v4780 = vld [vmem:[%s11 + $0x1b0] sm:$0xff]
      %v4781 = vld [vmem:[%s11 + $0x1b8] sm:$0xff]
      %v4782 = vld [vmem:[%s11 + $0x1c0] sm:$0xff]
      %v4783 = vld [vmem:[%s11 + $0x1c8] sm:$0xff]
      %v4784 = vld [vmem:[%s11 + $0x1d0] sm:$0xff]
      %v4785 = vld [vmem:[%s11 + $0x1d8] sm:$0xff]
      %v4786 = vld [vmem:[%s11 + $0x1e0] sm:$0xff]
      %v4787 = vld [vmem:[%s11 + $0x1e8] sm:$0xff]
      %v4788 = vld [vmem:[%s11 + $0x1f0] sm:$0xff]
      %v4789 = vld [vmem:[%s11 + $0x1f8] sm:$0xff]
      %v4790 = vld [vmem:[%s11 + $0x200] sm:$0xff]
      %v4791 = vld [vmem:[%s11 + $0x208] sm:$0xff]
      %v4792 = vld [vmem:[%s11 + $0x210] sm:$0xff]
      %v4793 = vld [vmem:[%s11 + $0x218] sm:$0xff]
      %v4794 = vld [vmem:[%s11 + $0x220] sm:$0xff]
      %v4795 = vld [vmem:[%s11 + $0x228] sm:$0xff]
      %v4796 = vld [vmem:[%s11 + $0x230] sm:$0xff]
      %v4797 = vld [vmem:[%s11 + $0x238] sm:$0xff]
      %v4798 = vld [vmem:[%s11 + $0x240] sm:$0xff]
      %v4799 = vld [vmem:[%s11 + $0x248] sm:$0xff]
      %v4800 = vld [vmem:[%s11 + $0x250] sm:$0xff]
      %v4801 = vld [vmem:[%s11 + $0x258] sm:$0xff]
      %v4802 = vld [vmem:[%s11 + $0x260] sm:$0xff]
      %v4803 = vld [vmem:[%s11 + $0x268] sm:$0xff]
      %v4804 = vld [vmem:[%s11 + $0x270] sm:$0xff]
      %v4805 = vld [vmem:[%s11 + $0x278] sm:$0xff]
      %v4806 = vld [vmem:[%s11 + $0x280] sm:$0xff]
      %v4807 = vld [vmem:[%s11 + $0x288] sm:$0xff]
      %v4808 = vld [vmem:[%s11 + $0x290] sm:$0xff]
      %v4809 = vld [vmem:[%s11 + $0x298] sm:$0xff]
      %v4810 = vld [vmem:[%s11 + $0x2a0] sm:$0xff]
      %v4811 = vld [vmem:[%s11 + $0x2a8] sm:$0xff]
      %v4812 = vld [vmem:[%s11 + $0x2b0] sm:$0xff]
      %v4813 = vld [vmem:[%s11 + $0x2b8] sm:$0xff]
      %v4814 = vld [vmem:[%s11 + $0x2c0] sm:$0xff]
      %v4815 = vld [vmem:[%s11 + $0x2c8] sm:$0xff]
      %v4816 = vld [vmem:[%s11 + $0x2d0] sm:$0xff]
      %v4817 = vld [vmem:[%s11 + $0x2d8] sm:$0xff]
      %v4818 = vld [vmem:[%s11 + $0x2e0] sm:$0xff]
      %v4819 = vld [vmem:[%s11 + $0x2e8] sm:$0xff]
      %v4820 = vld [vmem:[%s11 + $0x2f0] sm:$0xff]
      %v4821 = vld [vmem:[%s11 + $0x2f8] sm:$0xff]
      %v4822 = vld [vmem:[%s11 + $0x300] sm:$0xff]
      %v4823 = vld [vmem:[%s11 + $0x308] sm:$0xff]
      %v4824 = vld [vmem:[%s11 + $0x310] sm:$0xff]
      %v4825 = vld [vmem:[%s11 + $0x318] sm:$0xff]
      %v4826 = vld [vmem:[%s11 + $0x320] sm:$0xff]
      %v4827 = vld [vmem:[%s11 + $0x328] sm:$0xff]
      %v4828 = vld [vmem:[%s11 + $0x330] sm:$0xff]
      %v4829 = vld [vmem:[%s11 + $0x338] sm:$0xff]
      %v4830 = vld [vmem:[%s11 + $0x340] sm:$0xff]
      %v4831 = vld [vmem:[%s11 + $0x348] sm:$0xff]
      %v4832 = vld [vmem:[%s11 + $0x350] sm:$0xff]
      %v4833 = vld [vmem:[%s11 + $0x358] sm:$0xff]
      %v4834 = vld [vmem:[%s11 + $0x360] sm:$0xff]
      %v4835 = vld [vmem:[%s11 + $0x368] sm:$0xff]
      %v4836 = vld [vmem:[%s11 + $0x370] sm:$0xff]
      %v4837 = vld [vmem:[%s11 + $0x378] sm:$0xff]
      %v4838 = vld [vmem:[%s11 + $0x380] sm:$0xff]
      %v4839 = vld [vmem:[%s11 + $0x388] sm:$0xff]
      %v4840 = vld [vmem:[%s11 + $0x390] sm:$0xff]
      %v4841 = vld [vmem:[%s11 + $0x398] sm:$0xff]
      %v4842 = vld [vmem:[%s11 + $0x3a0] sm:$0xff]
      %v4843 = vld [vmem:[%s11 + $0x3a8] sm:$0xff]
      %v4844 = vld [vmem:[%s11 + $0x3b0] sm:$0xff]
      %v4845 = vld [vmem:[%s11 + $0x3b8] sm:$0xff]
      %v4846 = vld [vmem:[%s11 + $0x3c0] sm:$0xff]
      %v4847 = vld [vmem:[%s11 + $0x3c8] sm:$0xff]
      %v4848 = vld [vmem:[%s11 + $0x3d0] sm:$0xff]
      %v4849 = vld [vmem:[%s11 + $0x3d8] sm:$0xff]
      %v4850 = vld [vmem:[%s11 + $0x3e0] sm:$0xff]
      %v4851 = vld [vmem:[%s11 + $0x3e8] sm:$0xff]
      %v4852 = vld [vmem:[%s11 + $0x3f0] sm:$0xff]
      %v4853 = vld [vmem:[%s11 + $0x3f8] sm:$0xff]
      %v4854 = vld [vmem:[%s11 + $0x400] sm:$0xff]
      %v4855 = vld [vmem:[%s11 + $0x408] sm:$0xff]
      %v4856 = vld [vmem:[%s11 + $0x410] sm:$0xff]
      %v4857 = vld [vmem:[%s11 + $0x418] sm:$0xff]
      %v4858 = vld [vmem:[%s11 + $0x420] sm:$0xff]
      %v4859 = vld [vmem:[%s11 + $0x428] sm:$0xff]
      %v4860 = vld [vmem:[%s11 + $0x430] sm:$0xff]
      %v4861 = vld [vmem:[%s11 + $0x438] sm:$0xff]
      %v4862 = vld [vmem:[%s11 + $0x440] sm:$0xff]
      %v4863 = vld [vmem:[%s11 + $0x448] sm:$0xff]
      %v4864 = vld [vmem:[%s11 + $0x450] sm:$0xff]
      %v4865 = vld [vmem:[%s11 + $0x458] sm:$0xff]
      %v4866 = vld [vmem:[%s11 + $0x460] sm:$0xff]
      %v4867 = vld [vmem:[%s11 + $0x468] sm:$0xff]
      %v4868 = vld [vmem:[%s11 + $0x470] sm:$0xff]
      %v4869 = vld [vmem:[%s11 + $0x478] sm:$0xff]
      %v4870 = vld [vmem:[%s11 + $0x480] sm:$0xff]
      %v4871 = vld [vmem:[%s11 + $0x488] sm:$0xff]
      %v4872 = vld [vmem:[%s11 + $0x490] sm:$0xff]
      %v4873 = vld [vmem:[%s11 + $0x498] sm:$0xff]
      %v4874 = vld [vmem:[%s11 + $0x4a0] sm:$0xff]
      %v4875 = vld [vmem:[%s11 + $0x4a8] sm:$0xff]
      %v4876 = vld [vmem:[%s11 + $0x4b0] sm:$0xff]
      %v4877 = vld [vmem:[%s11 + $0x4b8] sm:$0xff]
      %v4878 = vld [vmem:[%s11 + $0x4c0] sm:$0xff]
      %v4879 = vld [vmem:[%s11 + $0x4c8] sm:$0xff]
      %v4880 = vld [vmem:[%s11 + $0x4d0] sm:$0xff]
      %v4881 = vld [vmem:[%s11 + $0x4d8] sm:$0xff]
      %v4882 = vld [vmem:[%s11 + $0x4e0] sm:$0xff]
      %v4883 = vld [vmem:[%s11 + $0x4e8] sm:$0xff]
      %v4884 = vld [vmem:[%s11 + $0x4f0] sm:$0xff]
      %v4885 = vld [vmem:[%s11 + $0x4f8] sm:$0xff]
      %v4886 = vld [vmem:[%s11 + $0x500] sm:$0xff]
      %v4887 = vld [vmem:[%s11 + $0x508] sm:$0xff]
      %v4888 = vld [vmem:[%s11 + $0x510] sm:$0xff]
      %v4889 = vld [vmem:[%s11 + $0x518] sm:$0xff]
      %v4890 = vld [vmem:[%s11 + $0x520] sm:$0xff]
      %v4891 = vld [vmem:[%s11 + $0x528] sm:$0xff]
      %v4892 = vld [vmem:[%s11 + $0x530] sm:$0xff]
      %v4893 = vld [vmem:[%s11 + $0x538] sm:$0xff]
      %v4894 = vld [vmem:[%s11 + $0x540] sm:$0xff]
      %v4895 = vld [vmem:[%s11 + $0x548] sm:$0xff]
      %v4896 = vld [vmem:[%s11 + $0x550] sm:$0xff]
      %v4897 = vld [vmem:[%s11 + $0x558] sm:$0xff]
      %v4898 = vld [vmem:[%s11 + $0x560] sm:$0xff]
      %v4899 = vld [vmem:[%s11 + $0x568] sm:$0xff]
      %v4900 = vld [vmem:[%s11 + $0x570] sm:$0xff]
      %v4901 = vld [vmem:[%s11 + $0x578] sm:$0xff]
      %v4902 = vld [vmem:[%s11 + $0x580] sm:$0xff]
      %v4903 = vld [vmem:[%s11 + $0x588] sm:$0xff]
      %v4904 = vld [vmem:[%s11 + $0x590] sm:$0xff]
      %v4905 = vld [vmem:[%s11 + $0x598] sm:$0xff]
      %v4906 = vld [vmem:[%s11 + $0x5a0] sm:$0xff]
      %v4907 = vld [vmem:[%s11 + $0x5a8] sm:$0xff]
      %v4908 = vld [vmem:[%s11 + $0x5b0] sm:$0xff]
      %v4909 = vld [vmem:[%s11 + $0x5b8] sm:$0xff]
      %v4910 = vld [vmem:[%s11 + $0x5c0] sm:$0xff]
      %v4911 = vld [vmem:[%s11 + $0x5c8] sm:$0xff]
      %v4912 = vld [vmem:[%s11 + $0x5d0] sm:$0xff]
      %v4913 = vld [vmem:[%s11 + $0x5d8] sm:$0xff]
      %v4914 = vld [vmem:[%s11 + $0x5e0] sm:$0xff]
      %v4915 = vld [vmem:[%s11 + $0x5e8] sm:$0xff]
      %v4916 = vld [vmem:[%s11 + $0x5f0] sm:$0xff]
      %v4917 = vld [vmem:[%s11 + $0x5f8] sm:$0xff]
      %v4918 = vld [vmem:[%s11 + $0x600] sm:$0xff]
      %v4919 = vld [vmem:[%s11 + $0x608] sm:$0xff]
      %v4920 = vld [vmem:[%s11 + $0x610] sm:$0xff]
      %v4921 = vld [vmem:[%s11 + $0x618] sm:$0xff]
      %v4922 = vld [vmem:[%s11 + $0x620] sm:$0xff]
      %v4923 = vld [vmem:[%s11 + $0x628] sm:$0xff]
      %v4924 = vld [vmem:[%s11 + $0x630] sm:$0xff]
      %v4925 = vld [vmem:[%s11 + $0x638] sm:$0xff]
      %v4926 = vld [vmem:[%s11 + $0x640] sm:$0xff]
      %v4927 = vld [vmem:[%s11 + $0x648] sm:$0xff]
      %v4928 = vld [vmem:[%s11 + $0x650] sm:$0xff]
      %v4929 = vld [vmem:[%s11 + $0x658] sm:$0xff]
      %v4930 = vld [vmem:[%s11 + $0x660] sm:$0xff]
      %v4931 = vld [vmem:[%s11 + $0x668] sm:$0xff]
      %v4932 = vld [vmem:[%s11 + $0x670] sm:$0xff]
      %v4933 = vld [vmem:[%s11 + $0x678] sm:$0xff]
      %v4934 = vld [vmem:[%s11 + $0x680] sm:$0xff]
      %v4935 = vld [vmem:[%s11 + $0x688] sm:$0xff]
      %v4936 = vld [vmem:[%s11 + $0x690] sm:$0xff]
      %v4937 = vld [vmem:[%s11 + $0x698] sm:$0xff]
      %v4938 = vld [vmem:[%s11 + $0x6a0] sm:$0xff]
      %v4939 = vld [vmem:[%s11 + $0x6a8] sm:$0xff]
      %v4940 = vld [vmem:[%s11 + $0x6b0] sm:$0xff]
      %v4941 = vld [vmem:[%s11 + $0x6b8] sm:$0xff]
      %v4942 = vld [vmem:[%s11 + $0x6c0] sm:$0xff]
      %v4943 = vld [vmem:[%s11 + $0x6c8] sm:$0xff]
      %v4944 = vld [vmem:[%s11 + $0x6d0] sm:$0xff]
      %v4945 = vld [vmem:[%s11 + $0x6d8] sm:$0xff]
      %v4946 = vld [vmem:[%s11 + $0x6e0] sm:$0xff]
      %v4947 = vld [vmem:[%s11 + $0x6e8] sm:$0xff]
      %v4948 = vld [vmem:[%s11 + $0x6f0] sm:$0xff]
      %v4949 = vld [vmem:[%s11 + $0x6f8] sm:$0xff]
      %v4950 = vld [vmem:[%s11 + $0x700] sm:$0xff]
      %v4951 = vld [vmem:[%s11 + $0x708] sm:$0xff]
      %v4952 = vld [vmem:[%s11 + $0x710] sm:$0xff]
      %v4953 = vld [vmem:[%s11 + $0x718] sm:$0xff]
      %v4954 = vld [vmem:[%s11 + $0x720] sm:$0xff]
      %v4955 = vld [vmem:[%s11 + $0x728] sm:$0xff]
      %v4956 = vld [vmem:[%s11 + $0x730] sm:$0xff]
      %v4957 = vld [vmem:[%s11 + $0x738] sm:$0xff]
      %v4958 = vld [vmem:[%s11 + $0x740] sm:$0xff]
      %v4959 = vld [vmem:[%s11 + $0x748] sm:$0xff]
      %v4960 = vld [vmem:[%s11 + $0x750] sm:$0xff]
      %v4961 = vld [vmem:[%s11 + $0x758] sm:$0xff]
      %v4962 = vld [vmem:[%s11 + $0x760] sm:$0xff]
      %v4963 = vld [vmem:[%s11 + $0x768] sm:$0xff]
      %v4964 = vld [vmem:[%s11 + $0x770] sm:$0xff]
      %v4965 = vld [vmem:[%s11 + $0x778] sm:$0xff]
      %v4966 = vld [vmem:[%s11 + $0x780] sm:$0xff]
      %v4967 = vld [vmem:[%s11 + $0x788] sm:$0xff]
      %v4968 = vld [vmem:[%s11 + $0x790] sm:$0xff]
      %v4969 = vld [vmem:[%s11 + $0x798] sm:$0xff]
      %v4970 = vld [vmem:[%s11 + $0x7a0] sm:$0xff]
      %v4971 = vld [vmem:[%s11 + $0x7a8] sm:$0xff]
      %v4972 = vld [vmem:[%s11 + $0x7b0] sm:$0xff]
      %v4973 = vld [vmem:[%s11 + $0x7b8] sm:$0xff]
      %v4974 = vld [vmem:[%s11 + $0x7c0] sm:$0xff]
      %v4975 = vld [vmem:[%s11 + $0x7c8] sm:$0xff]
      %v4976 = vld [vmem:[%s11 + $0x7d0] sm:$0xff]
      %v4977 = vld [vmem:[%s11 + $0x7d8] sm:$0xff]
      %v4978 = vld [vmem:[%s11 + $0x7e0] sm:$0xff]
      %v4979 = vld [vmem:[%s11 + $0x7e8] sm:$0xff]
      %v4980 = vld [vmem:[%s11 + $0x7f0] sm:$0xff]
      %v4981 = vld [vmem:[%s11 + $0x7f8] sm:$0xff]
      %v4982 = vld [vmem:[#allocation4] sm:$0xff]
      %v4983 = vld [vmem:[#allocation4 + $0x8] sm:$0xff]
      %v4984 = vld [vmem:[#allocation4 + $0x10] sm:$0xff]
      %v4985 = vld [vmem:[#allocation4 + $0x18] sm:$0xff]
      %v4986 = vld [vmem:[#allocation4 + $0x20] sm:$0xff]
      %v4987 = vld [vmem:[#allocation4 + $0x28] sm:$0xff]
      %v4988 = vld [vmem:[#allocation4 + $0x30] sm:$0xff]
      %v4989 = vld [vmem:[#allocation4 + $0x38] sm:$0xff]
      %v4990 = vld [vmem:[#allocation4 + $0x40] sm:$0xff]
      %v4991 = vld [vmem:[#allocation4 + $0x48] sm:$0xff]
      %v4992 = vld [vmem:[#allocation4 + $0x50] sm:$0xff]
      %v4993 = vld [vmem:[#allocation4 + $0x58] sm:$0xff]
      %v4994 = vld [vmem:[#allocation4 + $0x60] sm:$0xff]
      %v4995 = vld [vmem:[#allocation4 + $0x68] sm:$0xff]
      %v4996 = vld [vmem:[#allocation4 + $0x70] sm:$0xff]
      %v4997 = vld [vmem:[#allocation4 + $0x78] sm:$0xff]
      %v4998 = vld [vmem:[#allocation4 + $0x80] sm:$0xff]
      %v4999 = vld [vmem:[#allocation4 + $0x88] sm:$0xff]
      %v5000 = vld [vmem:[#allocation4 + $0x90] sm:$0xff]
      %v5001 = vld [vmem:[#allocation4 + $0x98] sm:$0xff]
      %v5002 = vld [vmem:[#allocation4 + $0xa0] sm:$0xff]
      %v5003 = vld [vmem:[#allocation4 + $0xa8] sm:$0xff]
      %v5004 = vld [vmem:[#allocation4 + $0xb0] sm:$0xff]
      %v5005 = vld [vmem:[#allocation4 + $0xb8] sm:$0xff]
      %v5006 = vld [vmem:[#allocation4 + $0xc0] sm:$0xff]
      %v5007 = vld [vmem:[#allocation4 + $0xc8] sm:$0xff]
      %v5008 = vld [vmem:[#allocation4 + $0xd0] sm:$0xff]
      %v5009 = vld [vmem:[#allocation4 + $0xd8] sm:$0xff]
      %v5010 = vld [vmem:[#allocation4 + $0xe0] sm:$0xff]
      %v5011 = vld [vmem:[#allocation4 + $0xe8] sm:$0xff]
      %v5012 = vld [vmem:[#allocation4 + $0xf0] sm:$0xff]
      %v5013 = vld [vmem:[#allocation4 + $0xf8] sm:$0xff]
      %v5014 = vld [vmem:[#allocation4 + $0x100] sm:$0xff]
      %v5015 = vld [vmem:[#allocation4 + $0x108] sm:$0xff]
      %v5016 = vld [vmem:[#allocation4 + $0x110] sm:$0xff]
      %v5017 = vld [vmem:[#allocation4 + $0x118] sm:$0xff]
      %v5018 = vld [vmem:[#allocation4 + $0x120] sm:$0xff]
      %v5019 = vld [vmem:[#allocation4 + $0x128] sm:$0xff]
      %v5020 = vld [vmem:[#allocation4 + $0x130] sm:$0xff]
      %v5021 = vld [vmem:[#allocation4 + $0x138] sm:$0xff]
      %v5022 = vld [vmem:[#allocation4 + $0x140] sm:$0xff]
      %v5023 = vld [vmem:[#allocation4 + $0x148] sm:$0xff]
      %v5024 = vld [vmem:[#allocation4 + $0x150] sm:$0xff]
      %v5025 = vld [vmem:[#allocation4 + $0x158] sm:$0xff]
      %v5026 = vld [vmem:[#allocation4 + $0x160] sm:$0xff]
      %v5027 = vld [vmem:[#allocation4 + $0x168] sm:$0xff]
      %v5028 = vld [vmem:[#allocation4 + $0x170] sm:$0xff]
      %v5029 = vld [vmem:[#allocation4 + $0x178] sm:$0xff]
      %v5030 = vld [vmem:[#allocation4 + $0x180] sm:$0xff]
      %v5031 = vld [vmem:[#allocation4 + $0x188] sm:$0xff]
      %v5032 = vld [vmem:[#allocation4 + $0x190] sm:$0xff]
      %v5033 = vld [vmem:[#allocation4 + $0x198] sm:$0xff]
      %v5034 = vld [vmem:[#allocation4 + $0x1a0] sm:$0xff]
      %v5035 = vld [vmem:[#allocation4 + $0x1a8] sm:$0xff]
      %v5036 = vld [vmem:[#allocation4 + $0x1b0] sm:$0xff]
      %v5037 = vld [vmem:[#allocation4 + $0x1b8] sm:$0xff]
      %v5038 = vld [vmem:[#allocation4 + $0x1c0] sm:$0xff]
      %v5039 = vld [vmem:[#allocation4 + $0x1c8] sm:$0xff]
      %v5040 = vld [vmem:[#allocation4 + $0x1d0] sm:$0xff]
      %v5041 = vld [vmem:[#allocation4 + $0x1d8] sm:$0xff]
      %v5042 = vld [vmem:[#allocation4 + $0x1e0] sm:$0xff]
      %v5043 = vld [vmem:[#allocation4 + $0x1e8] sm:$0xff]
      %v5044 = vld [vmem:[#allocation4 + $0x1f0] sm:$0xff]
      %v5045 = vld [vmem:[#allocation4 + $0x1f8] sm:$0xff]
      %v5046 = vld [vmem:[#allocation4 + $0x200] sm:$0xff]
      %v5047 = vld [vmem:[#allocation4 + $0x208] sm:$0xff]
      %v5048 = vld [vmem:[#allocation4 + $0x210] sm:$0xff]
      %v5049 = vld [vmem:[#allocation4 + $0x218] sm:$0xff]
      %v5050 = vld [vmem:[#allocation4 + $0x220] sm:$0xff]
      %v5051 = vld [vmem:[#allocation4 + $0x228] sm:$0xff]
      %v5052 = vld [vmem:[#allocation4 + $0x230] sm:$0xff]
      %v5053 = vld [vmem:[#allocation4 + $0x238] sm:$0xff]
      %v5054 = vld [vmem:[#allocation4 + $0x240] sm:$0xff]
      %v5055 = vld [vmem:[#allocation4 + $0x248] sm:$0xff]
      %v5056 = vld [vmem:[#allocation4 + $0x250] sm:$0xff]
      %v5057 = vld [vmem:[#allocation4 + $0x258] sm:$0xff]
      %v5058 = vld [vmem:[#allocation4 + $0x260] sm:$0xff]
      %v5059 = vld [vmem:[#allocation4 + $0x268] sm:$0xff]
      %v5060 = vld [vmem:[#allocation4 + $0x270] sm:$0xff]
      %v5061 = vld [vmem:[#allocation4 + $0x278] sm:$0xff]
      %v5062 = vld [vmem:[#allocation4 + $0x280] sm:$0xff]
      %v5063 = vld [vmem:[#allocation4 + $0x288] sm:$0xff]
      %v5064 = vld [vmem:[#allocation4 + $0x290] sm:$0xff]
      %v5065 = vld [vmem:[#allocation4 + $0x298] sm:$0xff]
      %v5066 = vld [vmem:[#allocation4 + $0x2a0] sm:$0xff]
      %v5067 = vld [vmem:[#allocation4 + $0x2a8] sm:$0xff]
      %v5068 = vld [vmem:[#allocation4 + $0x2b0] sm:$0xff]
      %v5069 = vld [vmem:[#allocation4 + $0x2b8] sm:$0xff]
      %v5070 = vld [vmem:[#allocation4 + $0x2c0] sm:$0xff]
      %v5071 = vld [vmem:[#allocation4 + $0x2c8] sm:$0xff]
      %v5072 = vld [vmem:[#allocation4 + $0x2d0] sm:$0xff]
      %v5073 = vld [vmem:[#allocation4 + $0x2d8] sm:$0xff]
      %v5074 = vld [vmem:[#allocation4 + $0x2e0] sm:$0xff]
      %v5075 = vld [vmem:[#allocation4 + $0x2e8] sm:$0xff]
      %v5076 = vld [vmem:[#allocation4 + $0x2f0] sm:$0xff]
      %v5077 = vld [vmem:[#allocation4 + $0x2f8] sm:$0xff]
      %v5078 = vld [vmem:[#allocation4 + $0x300] sm:$0xff]
      %v5079 = vld [vmem:[#allocation4 + $0x308] sm:$0xff]
      %v5080 = vld [vmem:[#allocation4 + $0x310] sm:$0xff]
      %v5081 = vld [vmem:[#allocation4 + $0x318] sm:$0xff]
      %v5082 = vld [vmem:[#allocation4 + $0x320] sm:$0xff]
      %v5083 = vld [vmem:[#allocation4 + $0x328] sm:$0xff]
      %v5084 = vld [vmem:[#allocation4 + $0x330] sm:$0xff]
      %v5085 = vld [vmem:[#allocation4 + $0x338] sm:$0xff]
      %v5086 = vld [vmem:[#allocation4 + $0x340] sm:$0xff]
      %v5087 = vld [vmem:[#allocation4 + $0x348] sm:$0xff]
      %v5088 = vld [vmem:[#allocation4 + $0x350] sm:$0xff]
      %v5089 = vld [vmem:[#allocation4 + $0x358] sm:$0xff]
      %v5090 = vld [vmem:[#allocation4 + $0x360] sm:$0xff]
      %v5091 = vld [vmem:[#allocation4 + $0x368] sm:$0xff]
      %v5092 = vld [vmem:[#allocation4 + $0x370] sm:$0xff]
      %v5093 = vld [vmem:[#allocation4 + $0x378] sm:$0xff]
      %v5094 = vld [vmem:[#allocation4 + $0x380] sm:$0xff]
      %v5095 = vld [vmem:[#allocation4 + $0x388] sm:$0xff]
      %v5096 = vld [vmem:[#allocation4 + $0x390] sm:$0xff]
      %v5097 = vld [vmem:[#allocation4 + $0x398] sm:$0xff]
      %v5098 = vld [vmem:[#allocation4 + $0x3a0] sm:$0xff]
      %v5099 = vld [vmem:[#allocation4 + $0x3a8] sm:$0xff]
      %v5100 = vld [vmem:[#allocation4 + $0x3b0] sm:$0xff]
      %v5101 = vld [vmem:[#allocation4 + $0x3b8] sm:$0xff]
      %v5102 = vld [vmem:[#allocation4 + $0x3c0] sm:$0xff]
      %v5103 = vld [vmem:[#allocation4 + $0x3c8] sm:$0xff]
      %v5104 = vld [vmem:[#allocation4 + $0x3d0] sm:$0xff]
      %v5105 = vld [vmem:[#allocation4 + $0x3d8] sm:$0xff]
      %v5106 = vld [vmem:[#allocation4 + $0x3e0] sm:$0xff]
      %v5107 = vld [vmem:[#allocation4 + $0x3e8] sm:$0xff]
      %v5108 = vld [vmem:[#allocation4 + $0x3f0] sm:$0xff]
      %v5109 = vld [vmem:[#allocation4 + $0x3f8] sm:$0xff]
      %v5366 = vunpack.c.l.b16 %v4726
      %v5367 = vunpack.c.h.b16 %v4726
      %v5368 = vunpack.c.l.b16 %v4727
      %v5369 = vunpack.c.h.b16 %v4727
      %v5370 = vunpack.c.l.b16 %v4728
      %v5371 = vunpack.c.h.b16 %v4728
      %v5372 = vunpack.c.l.b16 %v4729
      %v5373 = vunpack.c.h.b16 %v4729
      %v5374 = vunpack.c.l.b16 %v4730
      %v5375 = vunpack.c.h.b16 %v4730
      %v5376 = vunpack.c.l.b16 %v4731
      %v5377 = vunpack.c.h.b16 %v4731
      %v5378 = vunpack.c.l.b16 %v4732
      %v5379 = vunpack.c.h.b16 %v4732
      %v5380 = vunpack.c.l.b16 %v4733
      %v5381 = vunpack.c.h.b16 %v4733
      %v5382 = vunpack.c.l.b16 %v4734
      %v5383 = vunpack.c.h.b16 %v4734
      %v5384 = vunpack.c.l.b16 %v4735
      %v5385 = vunpack.c.h.b16 %v4735
      %v5386 = vunpack.c.l.b16 %v4736
      %v5387 = vunpack.c.h.b16 %v4736
      %v5388 = vunpack.c.l.b16 %v4737
      %v5389 = vunpack.c.h.b16 %v4737
      %v5390 = vunpack.c.l.b16 %v4738
      %v5391 = vunpack.c.h.b16 %v4738
      %v5392 = vunpack.c.l.b16 %v4739
      %v5393 = vunpack.c.h.b16 %v4739
      %v5394 = vunpack.c.l.b16 %v4740
      %v5395 = vunpack.c.h.b16 %v4740
      %v5396 = vunpack.c.l.b16 %v4741
      %v5397 = vunpack.c.h.b16 %v4741
      %v5398 = vunpack.c.l.b16 %v4742
      %v5399 = vunpack.c.h.b16 %v4742
      %v5400 = vunpack.c.l.b16 %v4743
      %v5401 = vunpack.c.h.b16 %v4743
      %v5402 = vunpack.c.l.b16 %v4744
      %v5403 = vunpack.c.h.b16 %v4744
      %v5404 = vunpack.c.l.b16 %v4745
      %v5405 = vunpack.c.h.b16 %v4745
      %v5406 = vunpack.c.l.b16 %v4746
      %v5407 = vunpack.c.h.b16 %v4746
      %v5408 = vunpack.c.l.b16 %v4747
      %v5409 = vunpack.c.h.b16 %v4747
      %v5410 = vunpack.c.l.b16 %v4748
      %v5411 = vunpack.c.h.b16 %v4748
      %v5412 = vunpack.c.l.b16 %v4749
      %v5413 = vunpack.c.h.b16 %v4749
      %v5414 = vunpack.c.l.b16 %v4750
      %v5415 = vunpack.c.h.b16 %v4750
      %v5416 = vunpack.c.l.b16 %v4751
      %v5417 = vunpack.c.h.b16 %v4751
      %v5418 = vunpack.c.l.b16 %v4752
      %v5419 = vunpack.c.h.b16 %v4752
      %v5420 = vunpack.c.l.b16 %v4753
      %v5421 = vunpack.c.h.b16 %v4753
      %v5422 = vunpack.c.l.b16 %v4754
      %v5423 = vunpack.c.h.b16 %v4754
      %v5424 = vunpack.c.l.b16 %v4755
      %v5425 = vunpack.c.h.b16 %v4755
      %v5426 = vunpack.c.l.b16 %v4756
      %v5427 = vunpack.c.h.b16 %v4756
      %v5428 = vunpack.c.l.b16 %v4757
      %v5429 = vunpack.c.h.b16 %v4757
      %v5430 = vunpack.c.l.b16 %v4758
      %v5431 = vunpack.c.h.b16 %v4758
      %v5432 = vunpack.c.l.b16 %v4759
      %v5433 = vunpack.c.h.b16 %v4759
      %v5434 = vunpack.c.l.b16 %v4760
      %v5435 = vunpack.c.h.b16 %v4760
      %v5436 = vunpack.c.l.b16 %v4761
      %v5437 = vunpack.c.h.b16 %v4761
      %v5438 = vunpack.c.l.b16 %v4762
      %v5439 = vunpack.c.h.b16 %v4762
      %v5440 = vunpack.c.l.b16 %v4763
      %v5441 = vunpack.c.h.b16 %v4763
      %v5442 = vunpack.c.l.b16 %v4764
      %v5443 = vunpack.c.h.b16 %v4764
      %v5444 = vunpack.c.l.b16 %v4765
      %v5445 = vunpack.c.h.b16 %v4765
      %v5446 = vunpack.c.l.b16 %v4766
      %v5447 = vunpack.c.h.b16 %v4766
      %v5448 = vunpack.c.l.b16 %v4767
      %v5449 = vunpack.c.h.b16 %v4767
      %v5450 = vunpack.c.l.b16 %v4768
      %v5451 = vunpack.c.h.b16 %v4768
      %v5452 = vunpack.c.l.b16 %v4769
      %v5453 = vunpack.c.h.b16 %v4769
      %v5454 = vunpack.c.l.b16 %v4770
      %v5455 = vunpack.c.h.b16 %v4770
      %v5456 = vunpack.c.l.b16 %v4771
      %v5457 = vunpack.c.h.b16 %v4771
      %v5458 = vunpack.c.l.b16 %v4772
      %v5459 = vunpack.c.h.b16 %v4772
      %v5460 = vunpack.c.l.b16 %v4773
      %v5461 = vunpack.c.h.b16 %v4773
      %v5462 = vunpack.c.l.b16 %v4774
      %v5463 = vunpack.c.h.b16 %v4774
      %v5464 = vunpack.c.l.b16 %v4775
      %v5465 = vunpack.c.h.b16 %v4775
      %v5466 = vunpack.c.l.b16 %v4776
      %v5467 = vunpack.c.h.b16 %v4776
      %v5468 = vunpack.c.l.b16 %v4777
      %v5469 = vunpack.c.h.b16 %v4777
      %v5470 = vunpack.c.l.b16 %v4778
      %v5471 = vunpack.c.h.b16 %v4778
      %v5472 = vunpack.c.l.b16 %v4779
      %v5473 = vunpack.c.h.b16 %v4779
      %v5474 = vunpack.c.l.b16 %v4780
      %v5475 = vunpack.c.h.b16 %v4780
      %v5476 = vunpack.c.l.b16 %v4781
      %v5477 = vunpack.c.h.b16 %v4781
      %v5478 = vunpack.c.l.b16 %v4782
      %v5479 = vunpack.c.h.b16 %v4782
      %v5480 = vunpack.c.l.b16 %v4783
      %v5481 = vunpack.c.h.b16 %v4783
      %v5482 = vunpack.c.l.b16 %v4784
      %v5483 = vunpack.c.h.b16 %v4784
      %v5484 = vunpack.c.l.b16 %v4785
      %v5485 = vunpack.c.h.b16 %v4785
      %v5486 = vunpack.c.l.b16 %v4786
      %v5487 = vunpack.c.h.b16 %v4786
      %v5488 = vunpack.c.l.b16 %v4787
      %v5489 = vunpack.c.h.b16 %v4787
      %v5490 = vunpack.c.l.b16 %v4788
      %v5491 = vunpack.c.h.b16 %v4788
      %v5492 = vunpack.c.l.b16 %v4789
      %v5493 = vunpack.c.h.b16 %v4789
      %v5494 = vunpack.c.l.b16 %v4790
      %v5495 = vunpack.c.h.b16 %v4790
      %v5496 = vunpack.c.l.b16 %v4791
      %v5497 = vunpack.c.h.b16 %v4791
      %v5498 = vunpack.c.l.b16 %v4792
      %v5499 = vunpack.c.h.b16 %v4792
      %v5500 = vunpack.c.l.b16 %v4793
      %v5501 = vunpack.c.h.b16 %v4793
      %v5502 = vunpack.c.l.b16 %v4794
      %v5503 = vunpack.c.h.b16 %v4794
      %v5504 = vunpack.c.l.b16 %v4795
      %v5505 = vunpack.c.h.b16 %v4795
      %v5506 = vunpack.c.l.b16 %v4796
      %v5507 = vunpack.c.h.b16 %v4796
      %v5508 = vunpack.c.l.b16 %v4797
      %v5509 = vunpack.c.h.b16 %v4797
      %v5510 = vunpack.c.l.b16 %v4798
      %v5511 = vunpack.c.h.b16 %v4798
      %v5512 = vunpack.c.l.b16 %v4799
      %v5513 = vunpack.c.h.b16 %v4799
      %v5514 = vunpack.c.l.b16 %v4800
      %v5515 = vunpack.c.h.b16 %v4800
      %v5516 = vunpack.c.l.b16 %v4801
      %v5517 = vunpack.c.h.b16 %v4801
      %v5518 = vunpack.c.l.b16 %v4802
      %v5519 = vunpack.c.h.b16 %v4802
      %v5520 = vunpack.c.l.b16 %v4803
      %v5521 = vunpack.c.h.b16 %v4803
      %v5522 = vunpack.c.l.b16 %v4804
      %v5523 = vunpack.c.h.b16 %v4804
      %v5524 = vunpack.c.l.b16 %v4805
      %v5525 = vunpack.c.h.b16 %v4805
      %v5526 = vunpack.c.l.b16 %v4806
      %v5527 = vunpack.c.h.b16 %v4806
      %v5528 = vunpack.c.l.b16 %v4807
      %v5529 = vunpack.c.h.b16 %v4807
      %v5530 = vunpack.c.l.b16 %v4808
      %v5531 = vunpack.c.h.b16 %v4808
      %v5532 = vunpack.c.l.b16 %v4809
      %v5533 = vunpack.c.h.b16 %v4809
      %v5534 = vunpack.c.l.b16 %v4810
      %v5535 = vunpack.c.h.b16 %v4810
      %v5536 = vunpack.c.l.b16 %v4811
      %v5537 = vunpack.c.h.b16 %v4811
      %v5538 = vunpack.c.l.b16 %v4812
      %v5539 = vunpack.c.h.b16 %v4812
      %v5540 = vunpack.c.l.b16 %v4813
      %v5541 = vunpack.c.h.b16 %v4813
      %v5542 = vunpack.c.l.b16 %v4814
      %v5543 = vunpack.c.h.b16 %v4814
      %v5544 = vunpack.c.l.b16 %v4815
      %v5545 = vunpack.c.h.b16 %v4815
      %v5546 = vunpack.c.l.b16 %v4816
      %v5547 = vunpack.c.h.b16 %v4816
      %v5548 = vunpack.c.l.b16 %v4817
      %v5549 = vunpack.c.h.b16 %v4817
      %v5550 = vunpack.c.l.b16 %v4818
      %v5551 = vunpack.c.h.b16 %v4818
      %v5552 = vunpack.c.l.b16 %v4819
      %v5553 = vunpack.c.h.b16 %v4819
      %v5554 = vunpack.c.l.b16 %v4820
      %v5555 = vunpack.c.h.b16 %v4820
      %v5556 = vunpack.c.l.b16 %v4821
      %v5557 = vunpack.c.h.b16 %v4821
      %v5558 = vunpack.c.l.b16 %v4822
      %v5559 = vunpack.c.h.b16 %v4822
      %v5560 = vunpack.c.l.b16 %v4823
      %v5561 = vunpack.c.h.b16 %v4823
      %v5562 = vunpack.c.l.b16 %v4824
      %v5563 = vunpack.c.h.b16 %v4824
      %v5564 = vunpack.c.l.b16 %v4825
      %v5565 = vunpack.c.h.b16 %v4825
      %v5566 = vunpack.c.l.b16 %v4826
      %v5567 = vunpack.c.h.b16 %v4826
      %v5568 = vunpack.c.l.b16 %v4827
      %v5569 = vunpack.c.h.b16 %v4827
      %v5570 = vunpack.c.l.b16 %v4828
      %v5571 = vunpack.c.h.b16 %v4828
      %v5572 = vunpack.c.l.b16 %v4829
      %v5573 = vunpack.c.h.b16 %v4829
      %v5574 = vunpack.c.l.b16 %v4830
      %v5575 = vunpack.c.h.b16 %v4830
      %v5576 = vunpack.c.l.b16 %v4831
      %v5577 = vunpack.c.h.b16 %v4831
      %v5578 = vunpack.c.l.b16 %v4832
      %v5579 = vunpack.c.h.b16 %v4832
      %v5580 = vunpack.c.l.b16 %v4833
      %v5581 = vunpack.c.h.b16 %v4833
      %v5582 = vunpack.c.l.b16 %v4834
      %v5583 = vunpack.c.h.b16 %v4834
      %v5584 = vunpack.c.l.b16 %v4835
      %v5585 = vunpack.c.h.b16 %v4835
      %v5586 = vunpack.c.l.b16 %v4836
      %v5587 = vunpack.c.h.b16 %v4836
      %v5588 = vunpack.c.l.b16 %v4837
      %v5589 = vunpack.c.h.b16 %v4837
      %v5590 = vunpack.c.l.b16 %v4838
      %v5591 = vunpack.c.h.b16 %v4838
      %v5592 = vunpack.c.l.b16 %v4839
      %v5593 = vunpack.c.h.b16 %v4839
      %v5594 = vunpack.c.l.b16 %v4840
      %v5595 = vunpack.c.h.b16 %v4840
      %v5596 = vunpack.c.l.b16 %v4841
      %v5597 = vunpack.c.h.b16 %v4841
      %v5598 = vunpack.c.l.b16 %v4842
      %v5599 = vunpack.c.h.b16 %v4842
      %v5600 = vunpack.c.l.b16 %v4843
      %v5601 = vunpack.c.h.b16 %v4843
      %v5602 = vunpack.c.l.b16 %v4844
      %v5603 = vunpack.c.h.b16 %v4844
      %v5604 = vunpack.c.l.b16 %v4845
      %v5605 = vunpack.c.h.b16 %v4845
      %v5606 = vunpack.c.l.b16 %v4846
      %v5607 = vunpack.c.h.b16 %v4846
      %v5608 = vunpack.c.l.b16 %v4847
      %v5609 = vunpack.c.h.b16 %v4847
      %v5610 = vunpack.c.l.b16 %v4848
      %v5611 = vunpack.c.h.b16 %v4848
      %v5612 = vunpack.c.l.b16 %v4849
      %v5613 = vunpack.c.h.b16 %v4849
      %v5614 = vunpack.c.l.b16 %v4850
      %v5615 = vunpack.c.h.b16 %v4850
      %v5616 = vunpack.c.l.b16 %v4851
      %v5617 = vunpack.c.h.b16 %v4851
      %v5618 = vunpack.c.l.b16 %v4852
      %v5619 = vunpack.c.h.b16 %v4852
      %v5620 = vunpack.c.l.b16 %v4853
      %v5621 = vunpack.c.h.b16 %v4853
      %v5622 = vunpack.c.l.b16 %v4854
      %v5623 = vunpack.c.h.b16 %v4854
      %v5624 = vunpack.c.l.b16 %v4855
      %v5625 = vunpack.c.h.b16 %v4855
      %v5626 = vunpack.c.l.b16 %v4856
      %v5627 = vunpack.c.h.b16 %v4856
      %v5628 = vunpack.c.l.b16 %v4857
      %v5629 = vunpack.c.h.b16 %v4857
      %v5630 = vunpack.c.l.b16 %v4858
      %v5631 = vunpack.c.h.b16 %v4858
      %v5632 = vunpack.c.l.b16 %v4859
      %v5633 = vunpack.c.h.b16 %v4859
      %v5634 = vunpack.c.l.b16 %v4860
      %v5635 = vunpack.c.h.b16 %v4860
      %v5636 = vunpack.c.l.b16 %v4861
      %v5637 = vunpack.c.h.b16 %v4861
      %v5638 = vunpack.c.l.b16 %v4862
      %v5639 = vunpack.c.h.b16 %v4862
      %v5640 = vunpack.c.l.b16 %v4863
      %v5641 = vunpack.c.h.b16 %v4863
      %v5642 = vunpack.c.l.b16 %v4864
      %v5643 = vunpack.c.h.b16 %v4864
      %v5644 = vunpack.c.l.b16 %v4865
      %v5645 = vunpack.c.h.b16 %v4865
      %v5646 = vunpack.c.l.b16 %v4866
      %v5647 = vunpack.c.h.b16 %v4866
      %v5648 = vunpack.c.l.b16 %v4867
      %v5649 = vunpack.c.h.b16 %v4867
      %v5650 = vunpack.c.l.b16 %v4868
      %v5651 = vunpack.c.h.b16 %v4868
      %v5652 = vunpack.c.l.b16 %v4869
      %v5653 = vunpack.c.h.b16 %v4869
      %v5654 = vunpack.c.l.b16 %v4870
      %v5655 = vunpack.c.h.b16 %v4870
      %v5656 = vunpack.c.l.b16 %v4871
      %v5657 = vunpack.c.h.b16 %v4871
      %v5658 = vunpack.c.l.b16 %v4872
      %v5659 = vunpack.c.h.b16 %v4872
      %v5660 = vunpack.c.l.b16 %v4873
      %v5661 = vunpack.c.h.b16 %v4873
      %v5662 = vunpack.c.l.b16 %v4874
      %v5663 = vunpack.c.h.b16 %v4874
      %v5664 = vunpack.c.l.b16 %v4875
      %v5665 = vunpack.c.h.b16 %v4875
      %v5666 = vunpack.c.l.b16 %v4876
      %v5667 = vunpack.c.h.b16 %v4876
      %v5668 = vunpack.c.l.b16 %v4877
      %v5669 = vunpack.c.h.b16 %v4877
      %v5670 = vunpack.c.l.b16 %v4878
      %v5671 = vunpack.c.h.b16 %v4878
      %v5672 = vunpack.c.l.b16 %v4879
      %v5673 = vunpack.c.h.b16 %v4879
      %v5674 = vunpack.c.l.b16 %v4880
      %v5675 = vunpack.c.h.b16 %v4880
      %v5676 = vunpack.c.l.b16 %v4881
      %v5677 = vunpack.c.h.b16 %v4881
      %v5678 = vunpack.c.l.b16 %v4882
      %v5679 = vunpack.c.h.b16 %v4882
      %v5680 = vunpack.c.l.b16 %v4883
      %v5681 = vunpack.c.h.b16 %v4883
      %v5682 = vunpack.c.l.b16 %v4884
      %v5683 = vunpack.c.h.b16 %v4884
      %v5684 = vunpack.c.l.b16 %v4885
      %v5685 = vunpack.c.h.b16 %v4885
      %v5686 = vunpack.c.l.b16 %v4886
      %v5687 = vunpack.c.h.b16 %v4886
      %v5688 = vunpack.c.l.b16 %v4887
      %v5689 = vunpack.c.h.b16 %v4887
      %v5690 = vunpack.c.l.b16 %v4888
      %v5691 = vunpack.c.h.b16 %v4888
      %v5692 = vunpack.c.l.b16 %v4889
      %v5693 = vunpack.c.h.b16 %v4889
      %v5694 = vunpack.c.l.b16 %v4890
      %v5695 = vunpack.c.h.b16 %v4890
      %v5696 = vunpack.c.l.b16 %v4891
      %v5697 = vunpack.c.h.b16 %v4891
      %v5698 = vunpack.c.l.b16 %v4892
      %v5699 = vunpack.c.h.b16 %v4892
      %v5700 = vunpack.c.l.b16 %v4893
      %v5701 = vunpack.c.h.b16 %v4893
      %v5702 = vunpack.c.l.b16 %v4894
      %v5703 = vunpack.c.h.b16 %v4894
      %v5704 = vunpack.c.l.b16 %v4895
      %v5705 = vunpack.c.h.b16 %v4895
      %v5706 = vunpack.c.l.b16 %v4896
      %v5707 = vunpack.c.h.b16 %v4896
      %v5708 = vunpack.c.l.b16 %v4897
      %v5709 = vunpack.c.h.b16 %v4897
      %v5710 = vunpack.c.l.b16 %v4898
      %v5711 = vunpack.c.h.b16 %v4898
      %v5712 = vunpack.c.l.b16 %v4899
      %v5713 = vunpack.c.h.b16 %v4899
      %v5714 = vunpack.c.l.b16 %v4900
      %v5715 = vunpack.c.h.b16 %v4900
      %v5716 = vunpack.c.l.b16 %v4901
      %v5717 = vunpack.c.h.b16 %v4901
      %v5718 = vunpack.c.l.b16 %v4902
      %v5719 = vunpack.c.h.b16 %v4902
      %v5720 = vunpack.c.l.b16 %v4903
      %v5721 = vunpack.c.h.b16 %v4903
      %v5722 = vunpack.c.l.b16 %v4904
      %v5723 = vunpack.c.h.b16 %v4904
      %v5724 = vunpack.c.l.b16 %v4905
      %v5725 = vunpack.c.h.b16 %v4905
      %v5726 = vunpack.c.l.b16 %v4906
      %v5727 = vunpack.c.h.b16 %v4906
      %v5728 = vunpack.c.l.b16 %v4907
      %v5729 = vunpack.c.h.b16 %v4907
      %v5730 = vunpack.c.l.b16 %v4908
      %v5731 = vunpack.c.h.b16 %v4908
      %v5732 = vunpack.c.l.b16 %v4909
      %v5733 = vunpack.c.h.b16 %v4909
      %v5734 = vunpack.c.l.b16 %v4910
      %v5735 = vunpack.c.h.b16 %v4910
      %v5736 = vunpack.c.l.b16 %v4911
      %v5737 = vunpack.c.h.b16 %v4911
      %v5738 = vunpack.c.l.b16 %v4912
      %v5739 = vunpack.c.h.b16 %v4912
      %v5740 = vunpack.c.l.b16 %v4913
      %v5741 = vunpack.c.h.b16 %v4913
      %v5742 = vunpack.c.l.b16 %v4914
      %v5743 = vunpack.c.h.b16 %v4914
      %v5744 = vunpack.c.l.b16 %v4915
      %v5745 = vunpack.c.h.b16 %v4915
      %v5746 = vunpack.c.l.b16 %v4916
      %v5747 = vunpack.c.h.b16 %v4916
      %v5748 = vunpack.c.l.b16 %v4917
      %v5749 = vunpack.c.h.b16 %v4917
      %v5750 = vunpack.c.l.b16 %v4918
      %v5751 = vunpack.c.h.b16 %v4918
      %v5752 = vunpack.c.l.b16 %v4919
      %v5753 = vunpack.c.h.b16 %v4919
      %v5754 = vunpack.c.l.b16 %v4920
      %v5755 = vunpack.c.h.b16 %v4920
      %v5756 = vunpack.c.l.b16 %v4921
      %v5757 = vunpack.c.h.b16 %v4921
      %v5758 = vunpack.c.l.b16 %v4922
      %v5759 = vunpack.c.h.b16 %v4922
      %v5760 = vunpack.c.l.b16 %v4923
      %v5761 = vunpack.c.h.b16 %v4923
      %v5762 = vunpack.c.l.b16 %v4924
      %v5763 = vunpack.c.h.b16 %v4924
      %v5764 = vunpack.c.l.b16 %v4925
      %v5765 = vunpack.c.h.b16 %v4925
      %v5766 = vunpack.c.l.b16 %v4926
      %v5767 = vunpack.c.h.b16 %v4926
      %v5768 = vunpack.c.l.b16 %v4927
      %v5769 = vunpack.c.h.b16 %v4927
      %v5770 = vunpack.c.l.b16 %v4928
      %v5771 = vunpack.c.h.b16 %v4928
      %v5772 = vunpack.c.l.b16 %v4929
      %v5773 = vunpack.c.h.b16 %v4929
      %v5774 = vunpack.c.l.b16 %v4930
      %v5775 = vunpack.c.h.b16 %v4930
      %v5776 = vunpack.c.l.b16 %v4931
      %v5777 = vunpack.c.h.b16 %v4931
      %v5778 = vunpack.c.l.b16 %v4932
      %v5779 = vunpack.c.h.b16 %v4932
      %v5780 = vunpack.c.l.b16 %v4933
      %v5781 = vunpack.c.h.b16 %v4933
      %v5782 = vunpack.c.l.b16 %v4934
      %v5783 = vunpack.c.h.b16 %v4934
      %v5784 = vunpack.c.l.b16 %v4935
      %v5785 = vunpack.c.h.b16 %v4935
      %v5786 = vunpack.c.l.b16 %v4936
      %v5787 = vunpack.c.h.b16 %v4936
      %v5788 = vunpack.c.l.b16 %v4937
      %v5789 = vunpack.c.h.b16 %v4937
      %v5790 = vunpack.c.l.b16 %v4938
      %v5791 = vunpack.c.h.b16 %v4938
      %v5792 = vunpack.c.l.b16 %v4939
      %v5793 = vunpack.c.h.b16 %v4939
      %v5794 = vunpack.c.l.b16 %v4940
      %v5795 = vunpack.c.h.b16 %v4940
      %v5796 = vunpack.c.l.b16 %v4941
      %v5797 = vunpack.c.h.b16 %v4941
      %v5798 = vunpack.c.l.b16 %v4942
      %v5799 = vunpack.c.h.b16 %v4942
      %v5800 = vunpack.c.l.b16 %v4943
      %v5801 = vunpack.c.h.b16 %v4943
      %v5802 = vunpack.c.l.b16 %v4944
      %v5803 = vunpack.c.h.b16 %v4944
      %v5804 = vunpack.c.l.b16 %v4945
      %v5805 = vunpack.c.h.b16 %v4945
      %v5806 = vunpack.c.l.b16 %v4946
      %v5807 = vunpack.c.h.b16 %v4946
      %v5808 = vunpack.c.l.b16 %v4947
      %v5809 = vunpack.c.h.b16 %v4947
      %v5810 = vunpack.c.l.b16 %v4948
      %v5811 = vunpack.c.h.b16 %v4948
      %v5812 = vunpack.c.l.b16 %v4949
      %v5813 = vunpack.c.h.b16 %v4949
      %v5814 = vunpack.c.l.b16 %v4950
      %v5815 = vunpack.c.h.b16 %v4950
      %v5816 = vunpack.c.l.b16 %v4951
      %v5817 = vunpack.c.h.b16 %v4951
      %v5818 = vunpack.c.l.b16 %v4952
      %v5819 = vunpack.c.h.b16 %v4952
      %v5820 = vunpack.c.l.b16 %v4953
      %v5821 = vunpack.c.h.b16 %v4953
      %v5822 = vunpack.c.l.b16 %v4954
      %v5823 = vunpack.c.h.b16 %v4954
      %v5824 = vunpack.c.l.b16 %v4955
      %v5825 = vunpack.c.h.b16 %v4955
      %v5826 = vunpack.c.l.b16 %v4956
      %v5827 = vunpack.c.h.b16 %v4956
      %v5828 = vunpack.c.l.b16 %v4957
      %v5829 = vunpack.c.h.b16 %v4957
      %v5830 = vunpack.c.l.b16 %v4958
      %v5831 = vunpack.c.h.b16 %v4958
      %v5832 = vunpack.c.l.b16 %v4959
      %v5833 = vunpack.c.h.b16 %v4959
      %v5834 = vunpack.c.l.b16 %v4960
      %v5835 = vunpack.c.h.b16 %v4960
      %v5836 = vunpack.c.l.b16 %v4961
      %v5837 = vunpack.c.h.b16 %v4961
      %v5838 = vunpack.c.l.b16 %v4962
      %v5839 = vunpack.c.h.b16 %v4962
      %v5840 = vunpack.c.l.b16 %v4963
      %v5841 = vunpack.c.h.b16 %v4963
      %v5842 = vunpack.c.l.b16 %v4964
      %v5843 = vunpack.c.h.b16 %v4964
      %v5844 = vunpack.c.l.b16 %v4965
      %v5845 = vunpack.c.h.b16 %v4965
      %v5846 = vunpack.c.l.b16 %v4966
      %v5847 = vunpack.c.h.b16 %v4966
      %v5848 = vunpack.c.l.b16 %v4967
      %v5849 = vunpack.c.h.b16 %v4967
      %v5850 = vunpack.c.l.b16 %v4968
      %v5851 = vunpack.c.h.b16 %v4968
      %v5852 = vunpack.c.l.b16 %v4969
      %v5853 = vunpack.c.h.b16 %v4969
      %v5854 = vunpack.c.l.b16 %v4970
      %v5855 = vunpack.c.h.b16 %v4970
      %v5856 = vunpack.c.l.b16 %v4971
      %v5857 = vunpack.c.h.b16 %v4971
      %v5858 = vunpack.c.l.b16 %v4972
      %v5859 = vunpack.c.h.b16 %v4972
      %v5860 = vunpack.c.l.b16 %v4973
      %v5861 = vunpack.c.h.b16 %v4973
      %v5862 = vunpack.c.l.b16 %v4974
      %v5863 = vunpack.c.h.b16 %v4974
      %v5864 = vunpack.c.l.b16 %v4975
      %v5865 = vunpack.c.h.b16 %v4975
      %v5866 = vunpack.c.l.b16 %v4976
      %v5867 = vunpack.c.h.b16 %v4976
      %v5868 = vunpack.c.l.b16 %v4977
      %v5869 = vunpack.c.h.b16 %v4977
      %v5870 = vunpack.c.l.b16 %v4978
      %v5871 = vunpack.c.h.b16 %v4978
      %v5872 = vunpack.c.l.b16 %v4979
      %v5873 = vunpack.c.h.b16 %v4979
      %v5874 = vunpack.c.l.b16 %v4980
      %v5875 = vunpack.c.h.b16 %v4980
      %v5876 = vunpack.c.l.b16 %v4981
      %v5877 = vunpack.c.h.b16 %v4981
      %v5878 = vpack.c.b16 %v5382, %v5366
      %v5879 = vpack.c.b16 %v5383, %v5367
      %v5880 = vpack.c.b16 %v5384, %v5368
      %v5881 = vpack.c.b16 %v5385, %v5369
      %v5882 = vpack.c.b16 %v5386, %v5370
      %v5883 = vpack.c.b16 %v5387, %v5371
      %v5884 = vpack.c.b16 %v5388, %v5372
      %v5885 = vpack.c.b16 %v5389, %v5373
      %v5886 = vpack.c.b16 %v5390, %v5374
      %v5887 = vpack.c.b16 %v5391, %v5375
      %v5888 = vpack.c.b16 %v5392, %v5376
      %v5889 = vpack.c.b16 %v5393, %v5377
      %v5890 = vpack.c.b16 %v5394, %v5378
      %v5891 = vpack.c.b16 %v5395, %v5379
      %v5892 = vpack.c.b16 %v5396, %v5380
      %v5893 = vpack.c.b16 %v5397, %v5381
      %v5894 = vpack.c.b16 %v5414, %v5398
      %v5895 = vpack.c.b16 %v5415, %v5399
      %v5896 = vpack.c.b16 %v5416, %v5400
      %v5897 = vpack.c.b16 %v5417, %v5401
      %v5898 = vpack.c.b16 %v5418, %v5402
      %v5899 = vpack.c.b16 %v5419, %v5403
      %v5900 = vpack.c.b16 %v5420, %v5404
      %v5901 = vpack.c.b16 %v5421, %v5405
      %v5902 = vpack.c.b16 %v5422, %v5406
      %v5903 = vpack.c.b16 %v5423, %v5407
      %v5904 = vpack.c.b16 %v5424, %v5408
      %v5905 = vpack.c.b16 %v5425, %v5409
      %v5906 = vpack.c.b16 %v5426, %v5410
      %v5907 = vpack.c.b16 %v5427, %v5411
      %v5908 = vpack.c.b16 %v5428, %v5412
      %v5909 = vpack.c.b16 %v5429, %v5413
      %v5910 = vpack.c.b16 %v5446, %v5430
      %v5911 = vpack.c.b16 %v5447, %v5431
      %v5912 = vpack.c.b16 %v5448, %v5432
      %v5913 = vpack.c.b16 %v5449, %v5433
      %v5914 = vpack.c.b16 %v5450, %v5434
      %v5915 = vpack.c.b16 %v5451, %v5435
      %v5916 = vpack.c.b16 %v5452, %v5436
      %v5917 = vpack.c.b16 %v5453, %v5437
      %v5918 = vpack.c.b16 %v5454, %v5438
      %v5919 = vpack.c.b16 %v5455, %v5439
      %v5920 = vpack.c.b16 %v5456, %v5440
      %v5921 = vpack.c.b16 %v5457, %v5441
      %v5922 = vpack.c.b16 %v5458, %v5442
      %v5923 = vpack.c.b16 %v5459, %v5443
      %v5924 = vpack.c.b16 %v5460, %v5444
      %v5925 = vpack.c.b16 %v5461, %v5445
      %v5926 = vpack.c.b16 %v5478, %v5462
      %v5927 = vpack.c.b16 %v5479, %v5463
      %v5928 = vpack.c.b16 %v5480, %v5464
      %v5929 = vpack.c.b16 %v5481, %v5465
      %v5930 = vpack.c.b16 %v5482, %v5466
      %v5931 = vpack.c.b16 %v5483, %v5467
      %v5932 = vpack.c.b16 %v5484, %v5468
      %v5933 = vpack.c.b16 %v5485, %v5469
      %v5934 = vpack.c.b16 %v5486, %v5470
      %v5935 = vpack.c.b16 %v5487, %v5471
      %v5936 = vpack.c.b16 %v5488, %v5472
      %v5937 = vpack.c.b16 %v5489, %v5473
      %v5938 = vpack.c.b16 %v5490, %v5474
      %v5939 = vpack.c.b16 %v5491, %v5475
      %v5940 = vpack.c.b16 %v5492, %v5476
      %v5941 = vpack.c.b16 %v5493, %v5477
      %v5942 = vpack.c.b16 %v5510, %v5494
      %v5943 = vpack.c.b16 %v5511, %v5495
      %v5944 = vpack.c.b16 %v5512, %v5496
      %v5945 = vpack.c.b16 %v5513, %v5497
      %v5946 = vpack.c.b16 %v5514, %v5498
      %v5947 = vpack.c.b16 %v5515, %v5499
      %v5948 = vpack.c.b16 %v5516, %v5500
      %v5949 = vpack.c.b16 %v5517, %v5501
      %v5950 = vpack.c.b16 %v5518, %v5502
      %v5951 = vpack.c.b16 %v5519, %v5503
      %v5952 = vpack.c.b16 %v5520, %v5504
      %v5953 = vpack.c.b16 %v5521, %v5505
      %v5954 = vpack.c.b16 %v5522, %v5506
      %v5955 = vpack.c.b16 %v5523, %v5507
      %v5956 = vpack.c.b16 %v5524, %v5508
      %v5957 = vpack.c.b16 %v5525, %v5509
      %v5958 = vpack.c.b16 %v5542, %v5526
      %v5959 = vpack.c.b16 %v5543, %v5527
      %v5960 = vpack.c.b16 %v5544, %v5528
      %v5961 = vpack.c.b16 %v5545, %v5529
      %v5962 = vpack.c.b16 %v5546, %v5530
      %v5963 = vpack.c.b16 %v5547, %v5531
      %v5964 = vpack.c.b16 %v5548, %v5532
      %v5965 = vpack.c.b16 %v5549, %v5533
      %v5966 = vpack.c.b16 %v5550, %v5534
      %v5967 = vpack.c.b16 %v5551, %v5535
      %v5968 = vpack.c.b16 %v5552, %v5536
      %v5969 = vpack.c.b16 %v5553, %v5537
      %v5970 = vpack.c.b16 %v5554, %v5538
      %v5971 = vpack.c.b16 %v5555, %v5539
      %v5972 = vpack.c.b16 %v5556, %v5540
      %v5973 = vpack.c.b16 %v5557, %v5541
      %v5974 = vpack.c.b16 %v5574, %v5558
      %v5975 = vpack.c.b16 %v5575, %v5559
      %v5976 = vpack.c.b16 %v5576, %v5560
      %v5977 = vpack.c.b16 %v5577, %v5561
      %v5978 = vpack.c.b16 %v5578, %v5562
      %v5979 = vpack.c.b16 %v5579, %v5563
      %v5980 = vpack.c.b16 %v5580, %v5564
      %v5981 = vpack.c.b16 %v5581, %v5565
      %v5982 = vpack.c.b16 %v5582, %v5566
      %v5983 = vpack.c.b16 %v5583, %v5567
      %v5984 = vpack.c.b16 %v5584, %v5568
      %v5985 = vpack.c.b16 %v5585, %v5569
      %v5986 = vpack.c.b16 %v5586, %v5570
      %v5987 = vpack.c.b16 %v5587, %v5571
      %v5988 = vpack.c.b16 %v5588, %v5572
      %v5989 = vpack.c.b16 %v5589, %v5573
      %v5990 = vpack.c.b16 %v5606, %v5590
      %v5991 = vpack.c.b16 %v5607, %v5591
      %v5992 = vpack.c.b16 %v5608, %v5592
      %v5993 = vpack.c.b16 %v5609, %v5593
      %v5994 = vpack.c.b16 %v5610, %v5594
      %v5995 = vpack.c.b16 %v5611, %v5595
      %v5996 = vpack.c.b16 %v5612, %v5596
      %v5997 = vpack.c.b16 %v5613, %v5597
      %v5998 = vpack.c.b16 %v5614, %v5598
      %v5999 = vpack.c.b16 %v5615, %v5599
      %v6000 = vpack.c.b16 %v5616, %v5600
      %v6001 = vpack.c.b16 %v5617, %v5601
      %v6002 = vpack.c.b16 %v5618, %v5602
      %v6003 = vpack.c.b16 %v5619, %v5603
      %v6004 = vpack.c.b16 %v5620, %v5604
      %v6005 = vpack.c.b16 %v5621, %v5605
      %v6006 = vpack.c.b16 %v5638, %v5622
      %v6007 = vpack.c.b16 %v5639, %v5623
      %v6008 = vpack.c.b16 %v5640, %v5624
      %v6009 = vpack.c.b16 %v5641, %v5625
      %v6010 = vpack.c.b16 %v5642, %v5626
      %v6011 = vpack.c.b16 %v5643, %v5627
      %v6012 = vpack.c.b16 %v5644, %v5628
      %v6013 = vpack.c.b16 %v5645, %v5629
      %v6014 = vpack.c.b16 %v5646, %v5630
      %v6015 = vpack.c.b16 %v5647, %v5631
      %v6016 = vpack.c.b16 %v5648, %v5632
      %v6017 = vpack.c.b16 %v5649, %v5633
      %v6018 = vpack.c.b16 %v5650, %v5634
      %v6019 = vpack.c.b16 %v5651, %v5635
      %v6020 = vpack.c.b16 %v5652, %v5636
      %v6021 = vpack.c.b16 %v5653, %v5637
      %v6022 = vpack.c.b16 %v5670, %v5654
      %v6023 = vpack.c.b16 %v5671, %v5655
      %v6024 = vpack.c.b16 %v5672, %v5656
      %v6025 = vpack.c.b16 %v5673, %v5657
      %v6026 = vpack.c.b16 %v5674, %v5658
      %v6027 = vpack.c.b16 %v5675, %v5659
      %v6028 = vpack.c.b16 %v5676, %v5660
      %v6029 = vpack.c.b16 %v5677, %v5661
      %v6030 = vpack.c.b16 %v5678, %v5662
      %v6031 = vpack.c.b16 %v5679, %v5663
      %v6032 = vpack.c.b16 %v5680, %v5664
      %v6033 = vpack.c.b16 %v5681, %v5665
      %v6034 = vpack.c.b16 %v5682, %v5666
      %v6035 = vpack.c.b16 %v5683, %v5667
      %v6036 = vpack.c.b16 %v5684, %v5668
      %v6037 = vpack.c.b16 %v5685, %v5669
      %v6038 = vpack.c.b16 %v5702, %v5686
      %v6039 = vpack.c.b16 %v5703, %v5687
      %v6040 = vpack.c.b16 %v5704, %v5688
      %v6041 = vpack.c.b16 %v5705, %v5689
      %v6042 = vpack.c.b16 %v5706, %v5690
      %v6043 = vpack.c.b16 %v5707, %v5691
      %v6044 = vpack.c.b16 %v5708, %v5692
      %v6045 = vpack.c.b16 %v5709, %v5693
      %v6046 = vpack.c.b16 %v5710, %v5694
      %v6047 = vpack.c.b16 %v5711, %v5695
      %v6048 = vpack.c.b16 %v5712, %v5696
      %v6049 = vpack.c.b16 %v5713, %v5697
      %v6050 = vpack.c.b16 %v5714, %v5698
      %v6051 = vpack.c.b16 %v5715, %v5699
      %v6052 = vpack.c.b16 %v5716, %v5700
      %v6053 = vpack.c.b16 %v5717, %v5701
      %v6054 = vpack.c.b16 %v5734, %v5718
      %v6055 = vpack.c.b16 %v5735, %v5719
      %v6056 = vpack.c.b16 %v5736, %v5720
      %v6057 = vpack.c.b16 %v5737, %v5721
      %v6058 = vpack.c.b16 %v5738, %v5722
      %v6059 = vpack.c.b16 %v5739, %v5723
      %v6060 = vpack.c.b16 %v5740, %v5724
      %v6061 = vpack.c.b16 %v5741, %v5725
      %v6062 = vpack.c.b16 %v5742, %v5726
      %v6063 = vpack.c.b16 %v5743, %v5727
      %v6064 = vpack.c.b16 %v5744, %v5728
      %v6065 = vpack.c.b16 %v5745, %v5729
      %v6066 = vpack.c.b16 %v5746, %v5730
      %v6067 = vpack.c.b16 %v5747, %v5731
      %v6068 = vpack.c.b16 %v5748, %v5732
      %v6069 = vpack.c.b16 %v5749, %v5733
      %v6070 = vpack.c.b16 %v5766, %v5750
      %v6071 = vpack.c.b16 %v5767, %v5751
      %v6072 = vpack.c.b16 %v5768, %v5752
      %v6073 = vpack.c.b16 %v5769, %v5753
      %v6074 = vpack.c.b16 %v5770, %v5754
      %v6075 = vpack.c.b16 %v5771, %v5755
      %v6076 = vpack.c.b16 %v5772, %v5756
      %v6077 = vpack.c.b16 %v5773, %v5757
      %v6078 = vpack.c.b16 %v5774, %v5758
      %v6079 = vpack.c.b16 %v5775, %v5759
      %v6080 = vpack.c.b16 %v5776, %v5760
      %v6081 = vpack.c.b16 %v5777, %v5761
      %v6082 = vpack.c.b16 %v5778, %v5762
      %v6083 = vpack.c.b16 %v5779, %v5763
      %v6084 = vpack.c.b16 %v5780, %v5764
      %v6085 = vpack.c.b16 %v5781, %v5765
      %v6086 = vpack.c.b16 %v5798, %v5782
      %v6087 = vpack.c.b16 %v5799, %v5783
      %v6088 = vpack.c.b16 %v5800, %v5784
      %v6089 = vpack.c.b16 %v5801, %v5785
      %v6090 = vpack.c.b16 %v5802, %v5786
      %v6091 = vpack.c.b16 %v5803, %v5787
      %v6092 = vpack.c.b16 %v5804, %v5788
      %v6093 = vpack.c.b16 %v5805, %v5789
      %v6094 = vpack.c.b16 %v5806, %v5790
      %v6095 = vpack.c.b16 %v5807, %v5791
      %v6096 = vpack.c.b16 %v5808, %v5792
      %v6097 = vpack.c.b16 %v5809, %v5793
      %v6098 = vpack.c.b16 %v5810, %v5794
      %v6099 = vpack.c.b16 %v5811, %v5795
      %v6100 = vpack.c.b16 %v5812, %v5796
      %v6101 = vpack.c.b16 %v5813, %v5797
      %v6102 = vpack.c.b16 %v5830, %v5814
      %v6103 = vpack.c.b16 %v5831, %v5815
      %v6104 = vpack.c.b16 %v5832, %v5816
      %v6105 = vpack.c.b16 %v5833, %v5817
      %v6106 = vpack.c.b16 %v5834, %v5818
      %v6107 = vpack.c.b16 %v5835, %v5819
      %v6108 = vpack.c.b16 %v5836, %v5820
      %v6109 = vpack.c.b16 %v5837, %v5821
      %v6110 = vpack.c.b16 %v5838, %v5822
      %v6111 = vpack.c.b16 %v5839, %v5823
      %v6112 = vpack.c.b16 %v5840, %v5824
      %v6113 = vpack.c.b16 %v5841, %v5825
      %v6114 = vpack.c.b16 %v5842, %v5826
      %v6115 = vpack.c.b16 %v5843, %v5827
      %v6116 = vpack.c.b16 %v5844, %v5828
      %v6117 = vpack.c.b16 %v5845, %v5829
      %v6118 = vpack.c.b16 %v5862, %v5846
      %v6119 = vpack.c.b16 %v5863, %v5847
      %v6120 = vpack.c.b16 %v5864, %v5848
      %v6121 = vpack.c.b16 %v5865, %v5849
      %v6122 = vpack.c.b16 %v5866, %v5850
      %v6123 = vpack.c.b16 %v5867, %v5851
      %v6124 = vpack.c.b16 %v5868, %v5852
      %v6125 = vpack.c.b16 %v5869, %v5853
      %v6126 = vpack.c.b16 %v5870, %v5854
      %v6127 = vpack.c.b16 %v5871, %v5855
      %v6128 = vpack.c.b16 %v5872, %v5856
      %v6129 = vpack.c.b16 %v5873, %v5857
      %v6130 = vpack.c.b16 %v5874, %v5858
      %v6131 = vpack.c.b16 %v5875, %v5859
      %v6132 = vpack.c.b16 %v5876, %v5860
      %v6133 = vpack.c.b16 %v5877, %v5861
      %6390 = vmatprep.subr.bf16.mxu0 0
      %6391 = vmatpush1.bf16.msra.mxu0 %v4982
      %6392 = vmatprep.subr.bf16.mxu0 0
      %6393 = vmatpush1.bf16.msra.mxu0 %v4983
      %6394 = vmatprep.subr.bf16.mxu0 0
      %6395 = vmatpush1.bf16.msra.mxu0 %v4984
      %6396 = vmatprep.subr.bf16.mxu0 0
      %6397 = vmatpush1.bf16.msra.mxu0 %v4985
      %6398 = vmatprep.subr.bf16.mxu0 0
      %6399 = vmatpush1.bf16.msra.mxu0 %v4986
      %6400 = vmatprep.subr.bf16.mxu0 0
      %6401 = vmatpush1.bf16.msra.mxu0 %v4987
      %6402 = vmatprep.subr.bf16.mxu0 0
      %6403 = vmatpush1.bf16.msra.mxu0 %v4988
      %6404 = vmatprep.subr.bf16.mxu0 0
      %6405 = vmatpush1.bf16.msra.mxu0 %v4989
      %6406 = vmatprep.subr.bf16.mxu0 0
      %6407 = vmatpush1.bf16.msra.mxu0 %v4990
      %6408 = vmatprep.subr.bf16.mxu0 0
      %6409 = vmatpush1.bf16.msra.mxu0 %v4991
      %6410 = vmatprep.subr.bf16.mxu0 0
      %6411 = vmatpush1.bf16.msra.mxu0 %v4992
      %6412 = vmatprep.subr.bf16.mxu0 0
      %6413 = vmatpush1.bf16.msra.mxu0 %v4993
      %6414 = vmatprep.subr.bf16.mxu0 0
      %6415 = vmatpush1.bf16.msra.mxu0 %v4994
      %6416 = vmatprep.subr.bf16.mxu0 0
      %6417 = vmatpush1.bf16.msra.mxu0 %v4995
      %6418 = vmatprep.subr.bf16.mxu0 0
      %6419 = vmatpush1.bf16.msra.mxu0 %v4996
      %6420 = vmatprep.subr.bf16.mxu0 0
      %6421 = vmatpush1.bf16.msra.mxu0 %v4997
      %6422 = vmatprep.mubr.bf16.mxu0 %v5879
      %6423 = vmatmul.mubr.bf16.gmra.mrb[0].mxu0 %v5878
      %v6424 = vpop.f32.mrb[0].mxu0
      %v6425 = vadd.f32 0.0, %v6424
      %v6426 = vpop.f32.mrb[0].mxu0
      %v6427 = vpop.f32.mrb[0].mxu0
      %v6428 = vadd.f32 0.0, %v6427
      %v6429 = vpop.f32.mrb[0].mxu0
      %6430 = vmatprep.mubr.bf16.mxu0 %v5895
      %6431 = vmatmul.mubr.bf16.gmra.mrb[0].mxu0 %v5894
      %v6432 = vpop.f32.mrb[0].mxu0
      %v6433 = vadd.f32 0.0, %v6432
      %v6434 = vpop.f32.mrb[0].mxu0
      %v6435 = vpop.f32.mrb[0].mxu0
      %v6436 = vadd.f32 0.0, %v6435
      %v6437 = vpop.f32.mrb[0].mxu0
      %6438 = vmatprep.mubr.bf16.mxu0 %v5911
      %6439 = vmatmul.mubr.bf16.gmra.mrb[0].mxu0 %v5910
      %v6440 = vpop.f32.mrb[0].mxu0
      %v6441 = vadd.f32 0.0, %v6440
      %v6442 = vpop.f32.mrb[0].mxu0
      %v6443 = vpop.f32.mrb[0].mxu0
      %v6444 = vadd.f32 0.0, %v6443
      %v6445 = vpop.f32.mrb[0].mxu0
      %6446 = vmatprep.mubr.bf16.mxu0 %v5927
      %6447 = vmatmul.mubr.bf16.gmra.mrb[0].mxu0 %v5926
      %v6448 = vpop.f32.mrb[0].mxu0
      %v6449 = vadd.f32 0.0, %v6448
      %v6450 = vpop.f32.mrb[0].mxu0
      %v6451 = vpop.f32.mrb[0].mxu0
      %v6452 = vadd.f32 0.0, %v6451
      %v6453 = vpop.f32.mrb[0].mxu0
      %6454 = vmatprep.mubr.bf16.mxu0 %v5943
      %6455 = vmatmul.mubr.bf16.gmra.mrb[0].mxu0 %v5942
      %v6456 = vpop.f32.mrb[0].mxu0
      %v6457 = vadd.f32 0.0, %v6456
      %v6458 = vpop.f32.mrb[0].mxu0
      %v6459 = vpop.f32.mrb[0].mxu0
      %v6460 = vadd.f32 0.0, %v6459
      %v6461 = vpop.f32.mrb[0].mxu0
      %6462 = vmatprep.mubr.bf16.mxu0 %v5959
      %6463 = vmatmul.mubr.bf16.gmra.mrb[0].mxu0 %v5958
      %v6464 = vpop.f32.mrb[0].mxu0
      %v6465 = vadd.f32 0.0, %v6464
      %v6466 = vpop.f32.mrb[0].mxu0
      %v6467 = vpop.f32.mrb[0].mxu0
      %v6468 = vadd.f32 0.0, %v6467
      %v6469 = vpop.f32.mrb[0].mxu0
      %6470 = vmatprep.mubr.bf16.mxu0 %v5975
      %6471 = vmatmul.mubr.bf16.gmra.mrb[0].mxu0 %v5974
      %v6472 = vpop.f32.mrb[0].mxu0
      %v6473 = vadd.f32 0.0, %v6472
      %v6474 = vpop.f32.mrb[0].mxu0
      %v6475 = vpop.f32.mrb[0].mxu0
      %v6476 = vadd.f32 0.0, %v6475
      %v6477 = vpop.f32.mrb[0].mxu0
      %6478 = vmatprep.mubr.bf16.mxu0 %v5991
      %6479 = vmatmul.mubr.bf16.gmra.mrb[0].mxu0 %v5990
      %v6480 = vpop.f32.mrb[0].mxu0
      %v6481 = vadd.f32 0.0, %v6480
      %v6482 = vpop.f32.mrb[0].mxu0
      %v6483 = vpop.f32.mrb[0].mxu0
      %v6484 = vadd.f32 0.0, %v6483
      %v6485 = vpop.f32.mrb[0].mxu0
      %6486 = vmatprep.mubr.bf16.mxu0 %v6007
      %6487 = vmatmul.mubr.bf16.gmra.mrb[0].mxu0 %v6006
      %v6488 = vpop.f32.mrb[0].mxu0
      %v6489 = vadd.f32 0.0, %v6488
      %v6490 = vpop.f32.mrb[0].mxu0
      %v6491 = vpop.f32.mrb[0].mxu0
      %v6492 = vadd.f32 0.0, %v6491
      %v6493 = vpop.f32.mrb[0].mxu0
      %6494 = vmatprep.mubr.bf16.mxu0 %v6023
      %6495 = vmatmul.mubr.bf16.gmra.mrb[0].mxu0 %v6022
      %v6496 = vpop.f32.mrb[0].mxu0
      %v6497 = vadd.f32 0.0, %v6496
      %v6498 = vpop.f32.mrb[0].mxu0
      %v6499 = vpop.f32.mrb[0].mxu0
      %v6500 = vadd.f32 0.0, %v6499
      %v6501 = vpop.f32.mrb[0].mxu0
      %6502 = vmatprep.mubr.bf16.mxu0 %v6039
      %6503 = vmatmul.mubr.bf16.gmra.mrb[0].mxu0 %v6038
      %v6504 = vpop.f32.mrb[0].mxu0
      %v6505 = vadd.f32 0.0, %v6504
      %v6506 = vpop.f32.mrb[0].mxu0
      %v6507 = vpop.f32.mrb[0].mxu0
      %v6508 = vadd.f32 0.0, %v6507
      %v6509 = vpop.f32.mrb[0].mxu0
      %6510 = vmatprep.mubr.bf16.mxu0 %v6055
      %6511 = vmatmul.mubr.bf16.gmra.mrb[0].mxu0 %v6054
      %v6512 = vpop.f32.mrb[0].mxu0
      %v6513 = vadd.f32 0.0, %v6512
      %v6514 = vpop.f32.mrb[0].mxu0
      %v6515 = vpop.f32.mrb[0].mxu0
      %v6516 = vadd.f32 0.0, %v6515
      %v6517 = vpop.f32.mrb[0].mxu0
      %6518 = vmatprep.mubr.bf16.mxu0 %v6071
      %6519 = vmatmul.mubr.bf16.gmra.mrb[0].mxu0 %v6070
      %v6520 = vpop.f32.mrb[0].mxu0
      %v6521 = vadd.f32 0.0, %v6520
      %v6522 = vpop.f32.mrb[0].mxu0
      %v6523 = vpop.f32.mrb[0].mxu0
      %v6524 = vadd.f32 0.0, %v6523
      %v6525 = vpop.f32.mrb[0].mxu0
      %6526 = vmatprep.mubr.bf16.mxu0 %v6087
      %6527 = vmatmul.mubr.bf16.gmra.mrb[0].mxu0 %v6086
      %v6528 = vpop.f32.mrb[0].mxu0
      %v6529 = vadd.f32 0.0, %v6528
      %v6530 = vpop.f32.mrb[0].mxu0
      %v6531 = vpop.f32.mrb[0].mxu0
      %v6532 = vadd.f32 0.0, %v6531
      %v6533 = vpop.f32.mrb[0].mxu0
      %6534 = vmatprep.mubr.bf16.mxu0 %v6103
      %6535 = vmatmul.mubr.bf16.gmra.mrb[0].mxu0 %v6102
      %v6536 = vpop.f32.mrb[0].mxu0
      %v6537 = vadd.f32 0.0, %v6536
      %v6538 = vpop.f32.mrb[0].mxu0
      %v6539 = vpop.f32.mrb[0].mxu0
      %v6540 = vadd.f32 0.0, %v6539
      %v6541 = vpop.f32.mrb[0].mxu0
      %6542 = vmatprep.mubr.bf16.mxu0 %v6119
      %6543 = vmatmul.mubr.bf16.gmra.mrb[0].mxu0 %v6118
      %v6544 = vpop.f32.mrb[0].mxu0
      %v6545 = vadd.f32 0.0, %v6544
      %v6546 = vpop.f32.mrb[0].mxu0
      %v6547 = vpop.f32.mrb[0].mxu0
      %v6548 = vadd.f32 0.0, %v6547
      %v6549 = vpop.f32.mrb[0].mxu0
      %6550 = vdwg.mxu0
      %6551 = vmatprep.subr.bf16.mxu0 0
      %6552 = vmatpush1.bf16.msra.mxu0 %v4998
      %6553 = vmatprep.subr.bf16.mxu0 0
      %6554 = vmatpush1.bf16.msra.mxu0 %v4999
      %6555 = vmatprep.subr.bf16.mxu0 0
      %6556 = vmatpush1.bf16.msra.mxu0 %v5000
      %6557 = vmatprep.subr.bf16.mxu0 0
      %6558 = vmatpush1.bf16.msra.mxu0 %v5001
      %6559 = vmatprep.subr.bf16.mxu0 0
      %6560 = vmatpush1.bf16.msra.mxu0 %v5002
      %6561 = vmatprep.subr.bf16.mxu0 0
      %6562 = vmatpush1.bf16.msra.mxu0 %v5003
      %6563 = vmatprep.subr.bf16.mxu0 0
      %6564 = vmatpush1.bf16.msra.mxu0 %v5004
      %6565 = vmatprep.subr.bf16.mxu0 0
      %6566 = vmatpush1.bf16.msra.mxu0 %v5005
      %6567 = vmatprep.subr.bf16.mxu0 0
      %6568 = vmatpush1.bf16.msra.mxu0 %v5006
      %6569 = vmatprep.subr.bf16.mxu0 0
      %6570 = vmatpush1.bf16.msra.mxu0 %v5007
      %6571 = vmatprep.subr.bf16.mxu0 0
      %6572 = vmatpush1.bf16.msra.mxu0 %v5008
      %6573 = vmatprep.subr.bf16.mxu0 0
      %6574 = vmatpush1.bf16.msra.mxu0 %v5009
      %6575 = vmatprep.subr.bf16.mxu0 0
      %6576 = vmatpush1.bf16.msra.mxu0 %v5010
      %6577 = vmatprep.subr.bf16.mxu0 0
      %6578 = vmatpush1.bf16.msra.mxu0 %v5011
      %6579 = vmatprep.subr.bf16.mxu0 0
      %6580 = vmatpush1.bf16.msra.mxu0 %v5012
      %6581 = vmatprep.subr.bf16.mxu0 0
      %6582 = vmatpush1.bf16.msra.mxu0 %v5013
      %6583 = vmatprep.mubr.bf16.mxu0 %v5881
      %6584 = vmatmul.mubr.bf16.gmra.mrb[0].mxu0 %v5880
      %v6585 = vpop.f32.mrb[0].mxu0
      %v6586 = vadd.f32 %v6425, %v6585
      %v6587 = vpop.f32.mrb[0].mxu0
      %v6588 = vpop.f32.mrb[0].mxu0
      %v6589 = vadd.f32 %v6428, %v6588
      %v6590 = vpop.f32.mrb[0].mxu0
      %6591 = vmatprep.mubr.bf16.mxu0 %v5897
      %6592 = vmatmul.mubr.bf16.gmra.mrb[0].mxu0 %v5896
      %v6593 = vpop.f32.mrb[0].mxu0
      %v6594 = vadd.f32 %v6433, %v6593
      %v6595 = vpop.f32.mrb[0].mxu0
      %v6596 = vpop.f32.mrb[0].mxu0
      %v6597 = vadd.f32 %v6436, %v6596
      %v6598 = vpop.f32.mrb[0].mxu0
      %6599 = vmatprep.mubr.bf16.mxu0 %v5913
      %6600 = vmatmul.mubr.bf16.gmra.mrb[0].mxu0 %v5912
      %v6601 = vpop.f32.mrb[0].mxu0
      %v6602 = vadd.f32 %v6441, %v6601
      %v6603 = vpop.f32.mrb[0].mxu0
      %v6604 = vpop.f32.mrb[0].mxu0
      %v6605 = vadd.f32 %v6444, %v6604
      %v6606 = vpop.f32.mrb[0].mxu0
      %6607 = vmatprep.mubr.bf16.mxu0 %v5929
      %6608 = vmatmul.mubr.bf16.gmra.mrb[0].mxu0 %v5928
      %v6609 = vpop.f32.mrb[0].mxu0
      %v6610 = vadd.f32 %v6449, %v6609
      %v6611 = vpop.f32.mrb[0].mxu0
      %v6612 = vpop.f32.mrb[0].mxu0
      %v6613 = vadd.f32 %v6452, %v6612
      %v6614 = vpop.f32.mrb[0].mxu0
      %6615 = vmatprep.mubr.bf16.mxu0 %v5945
      %6616 = vmatmul.mubr.bf16.gmra.mrb[0].mxu0 %v5944
      %v6617 = vpop.f32.mrb[0].mxu0
      %v6618 = vadd.f32 %v6457, %v6617
      %v6619 = vpop.f32.mrb[0].mxu0
      %v6620 = vpop.f32.mrb[0].mxu0
      %v6621 = vadd.f32 %v6460, %v6620
      %v6622 = vpop.f32.mrb[0].mxu0
      %6623 = vmatprep.mubr.bf16.mxu0 %v5961
      %6624 = vmatmul.mubr.bf16.gmra.mrb[0].mxu0 %v5960
      %v6625 = vpop.f32.mrb[0].mxu0
      %v6626 = vadd.f32 %v6465, %v6625
      %v6627 = vpop.f32.mrb[0].mxu0
      %v6628 = vpop.f32.mrb[0].mxu0
      %v6629 = vadd.f32 %v6468, %v6628
      %v6630 = vpop.f32.mrb[0].mxu0
      %6631 = vmatprep.mubr.bf16.mxu0 %v5977
      %6632 = vmatmul.mubr.bf16.gmra.mrb[0].mxu0 %v5976
      %v6633 = vpop.f32.mrb[0].mxu0
      %v6634 = vadd.f32 %v6473, %v6633
      %v6635 = vpop.f32.mrb[0].mxu0
      %v6636 = vpop.f32.mrb[0].mxu0
      %v6637 = vadd.f32 %v6476, %v6636
      %v6638 = vpop.f32.mrb[0].mxu0
      %6639 = vmatprep.mubr.bf16.mxu0 %v5993
      %6640 = vmatmul.mubr.bf16.gmra.mrb[0].mxu0 %v5992
      %v6641 = vpop.f32.mrb[0].mxu0
      %v6642 = vadd.f32 %v6481, %v6641
      %v6643 = vpop.f32.mrb[0].mxu0
      %v6644 = vpop.f32.mrb[0].mxu0
      %v6645 = vadd.f32 %v6484, %v6644
      %v6646 = vpop.f32.mrb[0].mxu0
      %6647 = vmatprep.mubr.bf16.mxu0 %v6009
      %6648 = vmatmul.mubr.bf16.gmra.mrb[0].mxu0 %v6008
      %v6649 = vpop.f32.mrb[0].mxu0
      %v6650 = vadd.f32 %v6489, %v6649
      %v6651 = vpop.f32.mrb[0].mxu0
      %v6652 = vpop.f32.mrb[0].mxu0
      %v6653 = vadd.f32 %v6492, %v6652
      %v6654 = vpop.f32.mrb[0].mxu0
      %6655 = vmatprep.mubr.bf16.mxu0 %v6025
      %6656 = vmatmul.mubr.bf16.gmra.mrb[0].mxu0 %v6024
      %v6657 = vpop.f32.mrb[0].mxu0
      %v6658 = vadd.f32 %v6497, %v6657
      %v6659 = vpop.f32.mrb[0].mxu0
      %v6660 = vpop.f32.mrb[0].mxu0
      %v6661 = vadd.f32 %v6500, %v6660
      %v6662 = vpop.f32.mrb[0].mxu0
      %6663 = vmatprep.mubr.bf16.mxu0 %v6041
      %6664 = vmatmul.mubr.bf16.gmra.mrb[0].mxu0 %v6040
      %v6665 = vpop.f32.mrb[0].mxu0
      %v6666 = vadd.f32 %v6505, %v6665
      %v6667 = vpop.f32.mrb[0].mxu0
      %v6668 = vpop.f32.mrb[0].mxu0
      %v6669 = vadd.f32 %v6508, %v6668
      %v6670 = vpop.f32.mrb[0].mxu0
      %6671 = vmatprep.mubr.bf16.mxu0 %v6057
      %6672 = vmatmul.mubr.bf16.gmra.mrb[0].mxu0 %v6056
      %v6673 = vpop.f32.mrb[0].mxu0
      %v6674 = vadd.f32 %v6513, %v6673
      %v6675 = vpop.f32.mrb[0].mxu0
      %v6676 = vpop.f32.mrb[0].mxu0
      %v6677 = vadd.f32 %v6516, %v6676
      %v6678 = vpop.f32.mrb[0].mxu0
      %6679 = vmatprep.mubr.bf16.mxu0 %v6073
      %6680 = vmatmul.mubr.bf16.gmra.mrb[0].mxu0 %v6072
      %v6681 = vpop.f32.mrb[0].mxu0
      %v6682 = vadd.f32 %v6521, %v6681
      %v6683 = vpop.f32.mrb[0].mxu0
      %v6684 = vpop.f32.mrb[0].mxu0
      %v6685 = vadd.f32 %v6524, %v6684
      %v6686 = vpop.f32.mrb[0].mxu0
      %6687 = vmatprep.mubr.bf16.mxu0 %v6089
      %6688 = vmatmul.mubr.bf16.gmra.mrb[0].mxu0 %v6088
      %v6689 = vpop.f32.mrb[0].mxu0
      %v6690 = vadd.f32 %v6529, %v6689
      %v6691 = vpop.f32.mrb[0].mxu0
      %v6692 = vpop.f32.mrb[0].mxu0
      %v6693 = vadd.f32 %v6532, %v6692
      %v6694 = vpop.f32.mrb[0].mxu0
      %6695 = vmatprep.mubr.bf16.mxu0 %v6105
      %6696 = vmatmul.mubr.bf16.gmra.mrb[0].mxu0 %v6104
      %v6697 = vpop.f32.mrb[0].mxu0
      %v6698 = vadd.f32 %v6537, %v6697
      %v6699 = vpop.f32.mrb[0].mxu0
      %v6700 = vpop.f32.mrb[0].mxu0
      %v6701 = vadd.f32 %v6540, %v6700
      %v6702 = vpop.f32.mrb[0].mxu0
      %6703 = vmatprep.mubr.bf16.mxu0 %v6121
      %6704 = vmatmul.mubr.bf16.gmra.mrb[0].mxu0 %v6120
      %v6705 = vpop.f32.mrb[0].mxu0
      %v6706 = vadd.f32 %v6545, %v6705
      %v6707 = vpop.f32.mrb[0].mxu0
      %v6708 = vpop.f32.mrb[0].mxu0
      %v6709 = vadd.f32 %v6548, %v6708
      %v6710 = vpop.f32.mrb[0].mxu0
      %6711 = vdwg.mxu0
      %6712 = vmatprep.subr.bf16.mxu0 0
      %6713 = vmatpush1.bf16.msra.mxu0 %v5014
      %6714 = vmatprep.subr.bf16.mxu0 0
      %6715 = vmatpush1.bf16.msra.mxu0 %v5015
      %6716 = vmatprep.subr.bf16.mxu0 0
      %6717 = vmatpush1.bf16.msra.mxu0 %v5016
      %6718 = vmatprep.subr.bf16.mxu0 0
      %6719 = vmatpush1.bf16.msra.mxu0 %v5017
      %6720 = vmatprep.subr.bf16.mxu0 0
      %6721 = vmatpush1.bf16.msra.mxu0 %v5018
      %6722 = vmatprep.subr.bf16.mxu0 0
      %6723 = vmatpush1.bf16.msra.mxu0 %v5019
      %6724 = vmatprep.subr.bf16.mxu0 0
      %6725 = vmatpush1.bf16.msra.mxu0 %v5020
      %6726 = vmatprep.subr.bf16.mxu0 0
      %6727 = vmatpush1.bf16.msra.mxu0 %v5021
      %6728 = vmatprep.subr.bf16.mxu0 0
      %6729 = vmatpush1.bf16.msra.mxu0 %v5022
      %6730 = vmatprep.subr.bf16.mxu0 0
      %6731 = vmatpush1.bf16.msra.mxu0 %v5023
      %6732 = vmatprep.subr.bf16.mxu0 0
      %6733 = vmatpush1.bf16.msra.mxu0 %v5024
      %6734 = vmatprep.subr.bf16.mxu0 0
      %6735 = vmatpush1.bf16.msra.mxu0 %v5025
      %6736 = vmatprep.subr.bf16.mxu0 0
      %6737 = vmatpush1.bf16.msra.mxu0 %v5026
      %6738 = vmatprep.subr.bf16.mxu0 0
      %6739 = vmatpush1.bf16.msra.mxu0 %v5027
      %6740 = vmatprep.subr.bf16.mxu0 0
      %6741 = vmatpush1.bf16.msra.mxu0 %v5028
      %6742 = vmatprep.subr.bf16.mxu0 0
      %6743 = vmatpush1.bf16.msra.mxu0 %v5029
      %6744 = vmatprep.mubr.bf16.mxu0 %v5883
      %6745 = vmatmul.mubr.bf16.gmra.mrb[0].mxu0 %v5882
      %v6746 = vpop.f32.mrb[0].mxu0
      %v6747 = vadd.f32 %v6586, %v6746
      %v6748 = vpop.f32.mrb[0].mxu0
      %v6749 = vpop.f32.mrb[0].mxu0
      %v6750 = vadd.f32 %v6589, %v6749
      %v6751 = vpop.f32.mrb[0].mxu0
      %6752 = vmatprep.mubr.bf16.mxu0 %v5899
      %6753 = vmatmul.mubr.bf16.gmra.mrb[0].mxu0 %v5898
      %v6754 = vpop.f32.mrb[0].mxu0
      %v6755 = vadd.f32 %v6594, %v6754
      %v6756 = vpop.f32.mrb[0].mxu0
      %v6757 = vpop.f32.mrb[0].mxu0
      %v6758 = vadd.f32 %v6597, %v6757
      %v6759 = vpop.f32.mrb[0].mxu0
      %6760 = vmatprep.mubr.bf16.mxu0 %v5915
      %6761 = vmatmul.mubr.bf16.gmra.mrb[0].mxu0 %v5914
      %v6762 = vpop.f32.mrb[0].mxu0
      %v6763 = vadd.f32 %v6602, %v6762
      %v6764 = vpop.f32.mrb[0].mxu0
      %v6765 = vpop.f32.mrb[0].mxu0
      %v6766 = vadd.f32 %v6605, %v6765
      %v6767 = vpop.f32.mrb[0].mxu0
      %6768 = vmatprep.mubr.bf16.mxu0 %v5931
      %6769 = vmatmul.mubr.bf16.gmra.mrb[0].mxu0 %v5930
      %v6770 = vpop.f32.mrb[0].mxu0
      %v6771 = vadd.f32 %v6610, %v6770
      %v6772 = vpop.f32.mrb[0].mxu0
      %v6773 = vpop.f32.mrb[0].mxu0
      %v6774 = vadd.f32 %v6613, %v6773
      %v6775 = vpop.f32.mrb[0].mxu0
      %6776 = vmatprep.mubr.bf16.mxu0 %v5947
      %6777 = vmatmul.mubr.bf16.gmra.mrb[0].mxu0 %v5946
      %v6778 = vpop.f32.mrb[0].mxu0
      %v6779 = vadd.f32 %v6618, %v6778
      %v6780 = vpop.f32.mrb[0].mxu0
      %v6781 = vpop.f32.mrb[0].mxu0
      %v6782 = vadd.f32 %v6621, %v6781
      %v6783 = vpop.f32.mrb[0].mxu0
      %6784 = vmatprep.mubr.bf16.mxu0 %v5963
      %6785 = vmatmul.mubr.bf16.gmra.mrb[0].mxu0 %v5962
      %v6786 = vpop.f32.mrb[0].mxu0
      %v6787 = vadd.f32 %v6626, %v6786
      %v6788 = vpop.f32.mrb[0].mxu0
      %v6789 = vpop.f32.mrb[0].mxu0
      %v6790 = vadd.f32 %v6629, %v6789
      %v6791 = vpop.f32.mrb[0].mxu0
      %6792 = vmatprep.mubr.bf16.mxu0 %v5979
      %6793 = vmatmul.mubr.bf16.gmra.mrb[0].mxu0 %v5978
      %v6794 = vpop.f32.mrb[0].mxu0
      %v6795 = vadd.f32 %v6634, %v6794
      %v6796 = vpop.f32.mrb[0].mxu0
      %v6797 = vpop.f32.mrb[0].mxu0
      %v6798 = vadd.f32 %v6637, %v6797
      %v6799 = vpop.f32.mrb[0].mxu0
      %6800 = vmatprep.mubr.bf16.mxu0 %v5995
      %6801 = vmatmul.mubr.bf16.gmra.mrb[0].mxu0 %v5994
      %v6802 = vpop.f32.mrb[0].mxu0
      %v6803 = vadd.f32 %v6642, %v6802
      %v6804 = vpop.f32.mrb[0].mxu0
      %v6805 = vpop.f32.mrb[0].mxu0
      %v6806 = vadd.f32 %v6645, %v6805
      %v6807 = vpop.f32.mrb[0].mxu0
      %6808 = vmatprep.mubr.bf16.mxu0 %v6011
      %6809 = vmatmul.mubr.bf16.gmra.mrb[0].mxu0 %v6010
      %v6810 = vpop.f32.mrb[0].mxu0
      %v6811 = vadd.f32 %v6650, %v6810
      %v6812 = vpop.f32.mrb[0].mxu0
      %v6813 = vpop.f32.mrb[0].mxu0
      %v6814 = vadd.f32 %v6653, %v6813
      %v6815 = vpop.f32.mrb[0].mxu0
      %6816 = vmatprep.mubr.bf16.mxu0 %v6027
      %6817 = vmatmul.mubr.bf16.gmra.mrb[0].mxu0 %v6026
      %v6818 = vpop.f32.mrb[0].mxu0
      %v6819 = vadd.f32 %v6658, %v6818
      %v6820 = vpop.f32.mrb[0].mxu0
      %v6821 = vpop.f32.mrb[0].mxu0
      %v6822 = vadd.f32 %v6661, %v6821
      %v6823 = vpop.f32.mrb[0].mxu0
      %6824 = vmatprep.mubr.bf16.mxu0 %v6043
      %6825 = vmatmul.mubr.bf16.gmra.mrb[0].mxu0 %v6042
      %v6826 = vpop.f32.mrb[0].mxu0
      %v6827 = vadd.f32 %v6666, %v6826
      %v6828 = vpop.f32.mrb[0].mxu0
      %v6829 = vpop.f32.mrb[0].mxu0
      %v6830 = vadd.f32 %v6669, %v6829
      %v6831 = vpop.f32.mrb[0].mxu0
      %6832 = vmatprep.mubr.bf16.mxu0 %v6059
      %6833 = vmatmul.mubr.bf16.gmra.mrb[0].mxu0 %v6058
      %v6834 = vpop.f32.mrb[0].mxu0
      %v6835 = vadd.f32 %v6674, %v6834
      %v6836 = vpop.f32.mrb[0].mxu0
      %v6837 = vpop.f32.mrb[0].mxu0
      %v6838 = vadd.f32 %v6677, %v6837
      %v6839 = vpop.f32.mrb[0].mxu0
      %6840 = vmatprep.mubr.bf16.mxu0 %v6075
      %6841 = vmatmul.mubr.bf16.gmra.mrb[0].mxu0 %v6074
      %v6842 = vpop.f32.mrb[0].mxu0
      %v6843 = vadd.f32 %v6682, %v6842
      %v6844 = vpop.f32.mrb[0].mxu0
      %v6845 = vpop.f32.mrb[0].mxu0
      %v6846 = vadd.f32 %v6685, %v6845
      %v6847 = vpop.f32.mrb[0].mxu0
      %6848 = vmatprep.mubr.bf16.mxu0 %v6091
      %6849 = vmatmul.mubr.bf16.gmra.mrb[0].mxu0 %v6090
      %v6850 = vpop.f32.mrb[0].mxu0
      %v6851 = vadd.f32 %v6690, %v6850
      %v6852 = vpop.f32.mrb[0].mxu0
      %v6853 = vpop.f32.mrb[0].mxu0
      %v6854 = vadd.f32 %v6693, %v6853
      %v6855 = vpop.f32.mrb[0].mxu0
      %6856 = vmatprep.mubr.bf16.mxu0 %v6107
      %6857 = vmatmul.mubr.bf16.gmra.mrb[0].mxu0 %v6106
      %v6858 = vpop.f32.mrb[0].mxu0
      %v6859 = vadd.f32 %v6698, %v6858
      %v6860 = vpop.f32.mrb[0].mxu0
      %v6861 = vpop.f32.mrb[0].mxu0
      %v6862 = vadd.f32 %v6701, %v6861
      %v6863 = vpop.f32.mrb[0].mxu0
      %6864 = vmatprep.mubr.bf16.mxu0 %v6123
      %6865 = vmatmul.mubr.bf16.gmra.mrb[0].mxu0 %v6122
      %v6866 = vpop.f32.mrb[0].mxu0
      %v6867 = vadd.f32 %v6706, %v6866
      %v6868 = vpop.f32.mrb[0].mxu0
      %v6869 = vpop.f32.mrb[0].mxu0
      %v6870 = vadd.f32 %v6709, %v6869
      %v6871 = vpop.f32.mrb[0].mxu0
      %6872 = vdwg.mxu0
      %6873 = vmatprep.subr.bf16.mxu0 0
      %6874 = vmatpush1.bf16.msra.mxu0 %v5030
      %6875 = vmatprep.subr.bf16.mxu0 0
      %6876 = vmatpush1.bf16.msra.mxu0 %v5031
      %6877 = vmatprep.subr.bf16.mxu0 0
      %6878 = vmatpush1.bf16.msra.mxu0 %v5032
      %6879 = vmatprep.subr.bf16.mxu0 0
      %6880 = vmatpush1.bf16.msra.mxu0 %v5033
      %6881 = vmatprep.subr.bf16.mxu0 0
      %6882 = vmatpush1.bf16.msra.mxu0 %v5034
      %6883 = vmatprep.subr.bf16.mxu0 0
      %6884 = vmatpush1.bf16.msra.mxu0 %v5035
      %6885 = vmatprep.subr.bf16.mxu0 0
      %6886 = vmatpush1.bf16.msra.mxu0 %v5036
      %6887 = vmatprep.subr.bf16.mxu0 0
      %6888 = vmatpush1.bf16.msra.mxu0 %v5037
      %6889 = vmatprep.subr.bf16.mxu0 0
      %6890 = vmatpush1.bf16.msra.mxu0 %v5038
      %6891 = vmatprep.subr.bf16.mxu0 0
      %6892 = vmatpush1.bf16.msra.mxu0 %v5039
      %6893 = vmatprep.subr.bf16.mxu0 0
      %6894 = vmatpush1.bf16.msra.mxu0 %v5040
      %6895 = vmatprep.subr.bf16.mxu0 0
      %6896 = vmatpush1.bf16.msra.mxu0 %v5041
      %6897 = vmatprep.subr.bf16.mxu0 0
      %6898 = vmatpush1.bf16.msra.mxu0 %v5042
      %6899 = vmatprep.subr.bf16.mxu0 0
      %6900 = vmatpush1.bf16.msra.mxu0 %v5043
      %6901 = vmatprep.subr.bf16.mxu0 0
      %6902 = vmatpush1.bf16.msra.mxu0 %v5044
      %6903 = vmatprep.subr.bf16.mxu0 0
      %6904 = vmatpush1.bf16.msra.mxu0 %v5045
      %6905 = vmatprep.mubr.bf16.mxu0 %v5885
      %6906 = vmatmul.mubr.bf16.gmra.mrb[0].mxu0 %v5884
      %v6907 = vpop.f32.mrb[0].mxu0
      %v6908 = vadd.f32 %v6747, %v6907
      %v6909 = vpop.f32.mrb[0].mxu0
      %v6910 = vpop.f32.mrb[0].mxu0
      %v6911 = vadd.f32 %v6750, %v6910
      %v6912 = vpop.f32.mrb[0].mxu0
      %6913 = vmatprep.mubr.bf16.mxu0 %v5901
      %6914 = vmatmul.mubr.bf16.gmra.mrb[0].mxu0 %v5900
      %v6915 = vpop.f32.mrb[0].mxu0
      %v6916 = vadd.f32 %v6755, %v6915
      %v6917 = vpop.f32.mrb[0].mxu0
      %v6918 = vpop.f32.mrb[0].mxu0
      %v6919 = vadd.f32 %v6758, %v6918
      %v6920 = vpop.f32.mrb[0].mxu0
      %6921 = vmatprep.mubr.bf16.mxu0 %v5917
      %6922 = vmatmul.mubr.bf16.gmra.mrb[0].mxu0 %v5916
      %v6923 = vpop.f32.mrb[0].mxu0
      %v6924 = vadd.f32 %v6763, %v6923
      %v6925 = vpop.f32.mrb[0].mxu0
      %v6926 = vpop.f32.mrb[0].mxu0
      %v6927 = vadd.f32 %v6766, %v6926
      %v6928 = vpop.f32.mrb[0].mxu0
      %6929 = vmatprep.mubr.bf16.mxu0 %v5933
      %6930 = vmatmul.mubr.bf16.gmra.mrb[0].mxu0 %v5932
      %v6931 = vpop.f32.mrb[0].mxu0
      %v6932 = vadd.f32 %v6771, %v6931
      %v6933 = vpop.f32.mrb[0].mxu0
      %v6934 = vpop.f32.mrb[0].mxu0
      %v6935 = vadd.f32 %v6774, %v6934
      %v6936 = vpop.f32.mrb[0].mxu0
      %6937 = vmatprep.mubr.bf16.mxu0 %v5949
      %6938 = vmatmul.mubr.bf16.gmra.mrb[0].mxu0 %v5948
      %v6939 = vpop.f32.mrb[0].mxu0
      %v6940 = vadd.f32 %v6779, %v6939
      %v6941 = vpop.f32.mrb[0].mxu0
      %v6942 = vpop.f32.mrb[0].mxu0
      %v6943 = vadd.f32 %v6782, %v6942
      %v6944 = vpop.f32.mrb[0].mxu0
      %6945 = vmatprep.mubr.bf16.mxu0 %v5965
      %6946 = vmatmul.mubr.bf16.gmra.mrb[0].mxu0 %v5964
      %v6947 = vpop.f32.mrb[0].mxu0
      %v6948 = vadd.f32 %v6787, %v6947
      %v6949 = vpop.f32.mrb[0].mxu0
      %v6950 = vpop.f32.mrb[0].mxu0
      %v6951 = vadd.f32 %v6790, %v6950
      %v6952 = vpop.f32.mrb[0].mxu0
      %6953 = vmatprep.mubr.bf16.mxu0 %v5981
      %6954 = vmatmul.mubr.bf16.gmra.mrb[0].mxu0 %v5980
      %v6955 = vpop.f32.mrb[0].mxu0
      %v6956 = vadd.f32 %v6795, %v6955
      %v6957 = vpop.f32.mrb[0].mxu0
      %v6958 = vpop.f32.mrb[0].mxu0
      %v6959 = vadd.f32 %v6798, %v6958
      %v6960 = vpop.f32.mrb[0].mxu0
      %6961 = vmatprep.mubr.bf16.mxu0 %v5997
      %6962 = vmatmul.mubr.bf16.gmra.mrb[0].mxu0 %v5996
      %v6963 = vpop.f32.mrb[0].mxu0
      %v6964 = vadd.f32 %v6803, %v6963
      %v6965 = vpop.f32.mrb[0].mxu0
      %v6966 = vpop.f32.mrb[0].mxu0
      %v6967 = vadd.f32 %v6806, %v6966
      %v6968 = vpop.f32.mrb[0].mxu0
      %6969 = vmatprep.mubr.bf16.mxu0 %v6013
      %6970 = vmatmul.mubr.bf16.gmra.mrb[0].mxu0 %v6012
      %v6971 = vpop.f32.mrb[0].mxu0
      %v6972 = vadd.f32 %v6811, %v6971
      %v6973 = vpop.f32.mrb[0].mxu0
      %v6974 = vpop.f32.mrb[0].mxu0
      %v6975 = vadd.f32 %v6814, %v6974
      %v6976 = vpop.f32.mrb[0].mxu0
      %6977 = vmatprep.mubr.bf16.mxu0 %v6029
      %6978 = vmatmul.mubr.bf16.gmra.mrb[0].mxu0 %v6028
      %v6979 = vpop.f32.mrb[0].mxu0
      %v6980 = vadd.f32 %v6819, %v6979
      %v6981 = vpop.f32.mrb[0].mxu0
      %v6982 = vpop.f32.mrb[0].mxu0
      %v6983 = vadd.f32 %v6822, %v6982
      %v6984 = vpop.f32.mrb[0].mxu0
      %6985 = vmatprep.mubr.bf16.mxu0 %v6045
      %6986 = vmatmul.mubr.bf16.gmra.mrb[0].mxu0 %v6044
      %v6987 = vpop.f32.mrb[0].mxu0
      %v6988 = vadd.f32 %v6827, %v6987
      %v6989 = vpop.f32.mrb[0].mxu0
      %v6990 = vpop.f32.mrb[0].mxu0
      %v6991 = vadd.f32 %v6830, %v6990
      %v6992 = vpop.f32.mrb[0].mxu0
      %6993 = vmatprep.mubr.bf16.mxu0 %v6061
      %6994 = vmatmul.mubr.bf16.gmra.mrb[0].mxu0 %v6060
      %v6995 = vpop.f32.mrb[0].mxu0
      %v6996 = vadd.f32 %v6835, %v6995
      %v6997 = vpop.f32.mrb[0].mxu0
      %v6998 = vpop.f32.mrb[0].mxu0
      %v6999 = vadd.f32 %v6838, %v6998
      %v7000 = vpop.f32.mrb[0].mxu0
      %7001 = vmatprep.mubr.bf16.mxu0 %v6077
      %7002 = vmatmul.mubr.bf16.gmra.mrb[0].mxu0 %v6076
      %v7003 = vpop.f32.mrb[0].mxu0
      %v7004 = vadd.f32 %v6843, %v7003
      %v7005 = vpop.f32.mrb[0].mxu0
      %v7006 = vpop.f32.mrb[0].mxu0
      %v7007 = vadd.f32 %v6846, %v7006
      %v7008 = vpop.f32.mrb[0].mxu0
      %7009 = vmatprep.mubr.bf16.mxu0 %v6093
      %7010 = vmatmul.mubr.bf16.gmra.mrb[0].mxu0 %v6092
      %v7011 = vpop.f32.mrb[0].mxu0
      %v7012 = vadd.f32 %v6851, %v7011
      %v7013 = vpop.f32.mrb[0].mxu0
      %v7014 = vpop.f32.mrb[0].mxu0
      %v7015 = vadd.f32 %v6854, %v7014
      %v7016 = vpop.f32.mrb[0].mxu0
      %7017 = vmatprep.mubr.bf16.mxu0 %v6109
      %7018 = vmatmul.mubr.bf16.gmra.mrb[0].mxu0 %v6108
      %v7019 = vpop.f32.mrb[0].mxu0
      %v7020 = vadd.f32 %v6859, %v7019
      %v7021 = vpop.f32.mrb[0].mxu0
      %v7022 = vpop.f32.mrb[0].mxu0
      %v7023 = vadd.f32 %v6862, %v7022
      %v7024 = vpop.f32.mrb[0].mxu0
      %7025 = vmatprep.mubr.bf16.mxu0 %v6125
      %7026 = vmatmul.mubr.bf16.gmra.mrb[0].mxu0 %v6124
      %v7027 = vpop.f32.mrb[0].mxu0
      %v7028 = vadd.f32 %v6867, %v7027
      %v7029 = vpop.f32.mrb[0].mxu0
      %v7030 = vpop.f32.mrb[0].mxu0
      %v7031 = vadd.f32 %v6870, %v7030
      %v7032 = vpop.f32.mrb[0].mxu0
      %7033 = vdwg.mxu0
      %7034 = vmatprep.subr.bf16.mxu0 0
      %7035 = vmatpush1.bf16.msra.mxu0 %v5046
      %7036 = vmatprep.subr.bf16.mxu0 0
      %7037 = vmatpush1.bf16.msra.mxu0 %v5047
      %7038 = vmatprep.subr.bf16.mxu0 0
      %7039 = vmatpush1.bf16.msra.mxu0 %v5048
      %7040 = vmatprep.subr.bf16.mxu0 0
      %7041 = vmatpush1.bf16.msra.mxu0 %v5049
      %7042 = vmatprep.subr.bf16.mxu0 0
      %7043 = vmatpush1.bf16.msra.mxu0 %v5050
      %7044 = vmatprep.subr.bf16.mxu0 0
      %7045 = vmatpush1.bf16.msra.mxu0 %v5051
      %7046 = vmatprep.subr.bf16.mxu0 0
      %7047 = vmatpush1.bf16.msra.mxu0 %v5052
      %7048 = vmatprep.subr.bf16.mxu0 0
      %7049 = vmatpush1.bf16.msra.mxu0 %v5053
      %7050 = vmatprep.subr.bf16.mxu0 0
      %7051 = vmatpush1.bf16.msra.mxu0 %v5054
      %7052 = vmatprep.subr.bf16.mxu0 0
      %7053 = vmatpush1.bf16.msra.mxu0 %v5055
      %7054 = vmatprep.subr.bf16.mxu0 0
      %7055 = vmatpush1.bf16.msra.mxu0 %v5056
      %7056 = vmatprep.subr.bf16.mxu0 0
      %7057 = vmatpush1.bf16.msra.mxu0 %v5057
      %7058 = vmatprep.subr.bf16.mxu0 0
      %7059 = vmatpush1.bf16.msra.mxu0 %v5058
      %7060 = vmatprep.subr.bf16.mxu0 0
      %7061 = vmatpush1.bf16.msra.mxu0 %v5059
      %7062 = vmatprep.subr.bf16.mxu0 0
      %7063 = vmatpush1.bf16.msra.mxu0 %v5060
      %7064 = vmatprep.subr.bf16.mxu0 0
      %7065 = vmatpush1.bf16.msra.mxu0 %v5061
      %7066 = vmatprep.mubr.bf16.mxu0 %v5887
      %7067 = vmatmul.mubr.bf16.gmra.mrb[0].mxu0 %v5886
      %v7068 = vpop.f32.mrb[0].mxu0
      %v7069 = vadd.f32 %v6908, %v7068
      %v7070 = vpop.f32.mrb[0].mxu0
      %v7071 = vpop.f32.mrb[0].mxu0
      %v7072 = vadd.f32 %v6911, %v7071
      %v7073 = vpop.f32.mrb[0].mxu0
      %7074 = vmatprep.mubr.bf16.mxu0 %v5903
      %7075 = vmatmul.mubr.bf16.gmra.mrb[0].mxu0 %v5902
      %v7076 = vpop.f32.mrb[0].mxu0
      %v7077 = vadd.f32 %v6916, %v7076
      %v7078 = vpop.f32.mrb[0].mxu0
      %v7079 = vpop.f32.mrb[0].mxu0
      %v7080 = vadd.f32 %v6919, %v7079
      %v7081 = vpop.f32.mrb[0].mxu0
      %7082 = vmatprep.mubr.bf16.mxu0 %v5919
      %7083 = vmatmul.mubr.bf16.gmra.mrb[0].mxu0 %v5918
      %v7084 = vpop.f32.mrb[0].mxu0
      %v7085 = vadd.f32 %v6924, %v7084
      %v7086 = vpop.f32.mrb[0].mxu0
      %v7087 = vpop.f32.mrb[0].mxu0
      %v7088 = vadd.f32 %v6927, %v7087
      %v7089 = vpop.f32.mrb[0].mxu0
      %7090 = vmatprep.mubr.bf16.mxu0 %v5935
      %7091 = vmatmul.mubr.bf16.gmra.mrb[0].mxu0 %v5934
      %v7092 = vpop.f32.mrb[0].mxu0
      %v7093 = vadd.f32 %v6932, %v7092
      %v7094 = vpop.f32.mrb[0].mxu0
      %v7095 = vpop.f32.mrb[0].mxu0
      %v7096 = vadd.f32 %v6935, %v7095
      %v7097 = vpop.f32.mrb[0].mxu0
      %7098 = vmatprep.mubr.bf16.mxu0 %v5951
      %7099 = vmatmul.mubr.bf16.gmra.mrb[0].mxu0 %v5950
      %v7100 = vpop.f32.mrb[0].mxu0
      %v7101 = vadd.f32 %v6940, %v7100
      %v7102 = vpop.f32.mrb[0].mxu0
      %v7103 = vpop.f32.mrb[0].mxu0
      %v7104 = vadd.f32 %v6943, %v7103
      %v7105 = vpop.f32.mrb[0].mxu0
      %7106 = vmatprep.mubr.bf16.mxu0 %v5967
      %7107 = vmatmul.mubr.bf16.gmra.mrb[0].mxu0 %v5966
      %v7108 = vpop.f32.mrb[0].mxu0
      %v7109 = vadd.f32 %v6948, %v7108
      %v7110 = vpop.f32.mrb[0].mxu0
      %v7111 = vpop.f32.mrb[0].mxu0
      %v7112 = vadd.f32 %v6951, %v7111
      %v7113 = vpop.f32.mrb[0].mxu0
      %7114 = vmatprep.mubr.bf16.mxu0 %v5983
      %7115 = vmatmul.mubr.bf16.gmra.mrb[0].mxu0 %v5982
      %v7116 = vpop.f32.mrb[0].mxu0
      %v7117 = vadd.f32 %v6956, %v7116
      %v7118 = vpop.f32.mrb[0].mxu0
      %v7119 = vpop.f32.mrb[0].mxu0
      %v7120 = vadd.f32 %v6959, %v7119
      %v7121 = vpop.f32.mrb[0].mxu0
      %7122 = vmatprep.mubr.bf16.mxu0 %v5999
      %7123 = vmatmul.mubr.bf16.gmra.mrb[0].mxu0 %v5998
      %v7124 = vpop.f32.mrb[0].mxu0
      %v7125 = vadd.f32 %v6964, %v7124
      %v7126 = vpop.f32.mrb[0].mxu0
      %v7127 = vpop.f32.mrb[0].mxu0
      %v7128 = vadd.f32 %v6967, %v7127
      %v7129 = vpop.f32.mrb[0].mxu0
      %7130 = vmatprep.mubr.bf16.mxu0 %v6015
      %7131 = vmatmul.mubr.bf16.gmra.mrb[0].mxu0 %v6014
      %v7132 = vpop.f32.mrb[0].mxu0
      %v7133 = vadd.f32 %v6972, %v7132
      %v7134 = vpop.f32.mrb[0].mxu0
      %v7135 = vpop.f32.mrb[0].mxu0
      %v7136 = vadd.f32 %v6975, %v7135
      %v7137 = vpop.f32.mrb[0].mxu0
      %7138 = vmatprep.mubr.bf16.mxu0 %v6031
      %7139 = vmatmul.mubr.bf16.gmra.mrb[0].mxu0 %v6030
      %v7140 = vpop.f32.mrb[0].mxu0
      %v7141 = vadd.f32 %v6980, %v7140
      %v7142 = vpop.f32.mrb[0].mxu0
      %v7143 = vpop.f32.mrb[0].mxu0
      %v7144 = vadd.f32 %v6983, %v7143
      %v7145 = vpop.f32.mrb[0].mxu0
      %7146 = vmatprep.mubr.bf16.mxu0 %v6047
      %7147 = vmatmul.mubr.bf16.gmra.mrb[0].mxu0 %v6046
      %v7148 = vpop.f32.mrb[0].mxu0
      %v7149 = vadd.f32 %v6988, %v7148
      %v7150 = vpop.f32.mrb[0].mxu0
      %v7151 = vpop.f32.mrb[0].mxu0
      %v7152 = vadd.f32 %v6991, %v7151
      %v7153 = vpop.f32.mrb[0].mxu0
      %7154 = vmatprep.mubr.bf16.mxu0 %v6063
      %7155 = vmatmul.mubr.bf16.gmra.mrb[0].mxu0 %v6062
      %v7156 = vpop.f32.mrb[0].mxu0
      %v7157 = vadd.f32 %v6996, %v7156
      %v7158 = vpop.f32.mrb[0].mxu0
      %v7159 = vpop.f32.mrb[0].mxu0
      %v7160 = vadd.f32 %v6999, %v7159
      %v7161 = vpop.f32.mrb[0].mxu0
      %7162 = vmatprep.mubr.bf16.mxu0 %v6079
      %7163 = vmatmul.mubr.bf16.gmra.mrb[0].mxu0 %v6078
      %v7164 = vpop.f32.mrb[0].mxu0
      %v7165 = vadd.f32 %v7004, %v7164
      %v7166 = vpop.f32.mrb[0].mxu0
      %v7167 = vpop.f32.mrb[0].mxu0
      %v7168 = vadd.f32 %v7007, %v7167
      %v7169 = vpop.f32.mrb[0].mxu0
      %7170 = vmatprep.mubr.bf16.mxu0 %v6095
      %7171 = vmatmul.mubr.bf16.gmra.mrb[0].mxu0 %v6094
      %v7172 = vpop.f32.mrb[0].mxu0
      %v7173 = vadd.f32 %v7012, %v7172
      %v7174 = vpop.f32.mrb[0].mxu0
      %v7175 = vpop.f32.mrb[0].mxu0
      %v7176 = vadd.f32 %v7015, %v7175
      %v7177 = vpop.f32.mrb[0].mxu0
      %7178 = vmatprep.mubr.bf16.mxu0 %v6111
      %7179 = vmatmul.mubr.bf16.gmra.mrb[0].mxu0 %v6110
      %v7180 = vpop.f32.mrb[0].mxu0
      %v7181 = vadd.f32 %v7020, %v7180
      %v7182 = vpop.f32.mrb[0].mxu0
      %v7183 = vpop.f32.mrb[0].mxu0
      %v7184 = vadd.f32 %v7023, %v7183
      %v7185 = vpop.f32.mrb[0].mxu0
      %7186 = vmatprep.mubr.bf16.mxu0 %v6127
      %7187 = vmatmul.mubr.bf16.gmra.mrb[0].mxu0 %v6126
      %v7188 = vpop.f32.mrb[0].mxu0
      %v7189 = vadd.f32 %v7028, %v7188
      %v7190 = vpop.f32.mrb[0].mxu0
      %v7191 = vpop.f32.mrb[0].mxu0
      %v7192 = vadd.f32 %v7031, %v7191
      %v7193 = vpop.f32.mrb[0].mxu0
      %7194 = vdwg.mxu0
      %7195 = vmatprep.subr.bf16.mxu0 0
      %7196 = vmatpush1.bf16.msra.mxu0 %v5062
      %7197 = vmatprep.subr.bf16.mxu0 0
      %7198 = vmatpush1.bf16.msra.mxu0 %v5063
      %7199 = vmatprep.subr.bf16.mxu0 0
      %7200 = vmatpush1.bf16.msra.mxu0 %v5064
      %7201 = vmatprep.subr.bf16.mxu0 0
      %7202 = vmatpush1.bf16.msra.mxu0 %v5065
      %7203 = vmatprep.subr.bf16.mxu0 0
      %7204 = vmatpush1.bf16.msra.mxu0 %v5066
      %7205 = vmatprep.subr.bf16.mxu0 0
      %7206 = vmatpush1.bf16.msra.mxu0 %v5067
      %7207 = vmatprep.subr.bf16.mxu0 0
      %7208 = vmatpush1.bf16.msra.mxu0 %v5068
      %7209 = vmatprep.subr.bf16.mxu0 0
      %7210 = vmatpush1.bf16.msra.mxu0 %v5069
      %7211 = vmatprep.subr.bf16.mxu0 0
      %7212 = vmatpush1.bf16.msra.mxu0 %v5070
      %7213 = vmatprep.subr.bf16.mxu0 0
      %7214 = vmatpush1.bf16.msra.mxu0 %v5071
      %7215 = vmatprep.subr.bf16.mxu0 0
      %7216 = vmatpush1.bf16.msra.mxu0 %v5072
      %7217 = vmatprep.subr.bf16.mxu0 0
      %7218 = vmatpush1.bf16.msra.mxu0 %v5073
      %7219 = vmatprep.subr.bf16.mxu0 0
      %7220 = vmatpush1.bf16.msra.mxu0 %v5074
      %7221 = vmatprep.subr.bf16.mxu0 0
      %7222 = vmatpush1.bf16.msra.mxu0 %v5075
      %7223 = vmatprep.subr.bf16.mxu0 0
      %7224 = vmatpush1.bf16.msra.mxu0 %v5076
      %7225 = vmatprep.subr.bf16.mxu0 0
      %7226 = vmatpush1.bf16.msra.mxu0 %v5077
      %7227 = vmatprep.mubr.bf16.mxu0 %v5889
      %7228 = vmatmul.mubr.bf16.gmra.mrb[0].mxu0 %v5888
      %v7229 = vpop.f32.mrb[0].mxu0
      %v7230 = vadd.f32 %v7069, %v7229
      %v7231 = vpop.f32.mrb[0].mxu0
      %v7232 = vpop.f32.mrb[0].mxu0
      %v7233 = vadd.f32 %v7072, %v7232
      %v7234 = vpop.f32.mrb[0].mxu0
      %7235 = vmatprep.mubr.bf16.mxu0 %v5905
      %7236 = vmatmul.mubr.bf16.gmra.mrb[0].mxu0 %v5904
      %v7237 = vpop.f32.mrb[0].mxu0
      %v7238 = vadd.f32 %v7077, %v7237
      %v7239 = vpop.f32.mrb[0].mxu0
      %v7240 = vpop.f32.mrb[0].mxu0
      %v7241 = vadd.f32 %v7080, %v7240
      %v7242 = vpop.f32.mrb[0].mxu0
      %7243 = vmatprep.mubr.bf16.mxu0 %v5921
      %7244 = vmatmul.mubr.bf16.gmra.mrb[0].mxu0 %v5920
      %v7245 = vpop.f32.mrb[0].mxu0
      %v7246 = vadd.f32 %v7085, %v7245
      %v7247 = vpop.f32.mrb[0].mxu0
      %v7248 = vpop.f32.mrb[0].mxu0
      %v7249 = vadd.f32 %v7088, %v7248
      %v7250 = vpop.f32.mrb[0].mxu0
      %7251 = vmatprep.mubr.bf16.mxu0 %v5937
      %7252 = vmatmul.mubr.bf16.gmra.mrb[0].mxu0 %v5936
      %v7253 = vpop.f32.mrb[0].mxu0
      %v7254 = vadd.f32 %v7093, %v7253
      %v7255 = vpop.f32.mrb[0].mxu0
      %v7256 = vpop.f32.mrb[0].mxu0
      %v7257 = vadd.f32 %v7096, %v7256
      %v7258 = vpop.f32.mrb[0].mxu0
      %7259 = vmatprep.mubr.bf16.mxu0 %v5953
      %7260 = vmatmul.mubr.bf16.gmra.mrb[0].mxu0 %v5952
      %v7261 = vpop.f32.mrb[0].mxu0
      %v7262 = vadd.f32 %v7101, %v7261
      %v7263 = vpop.f32.mrb[0].mxu0
      %v7264 = vpop.f32.mrb[0].mxu0
      %v7265 = vadd.f32 %v7104, %v7264
      %v7266 = vpop.f32.mrb[0].mxu0
      %7267 = vmatprep.mubr.bf16.mxu0 %v5969
      %7268 = vmatmul.mubr.bf16.gmra.mrb[0].mxu0 %v5968
      %v7269 = vpop.f32.mrb[0].mxu0
      %v7270 = vadd.f32 %v7109, %v7269
      %v7271 = vpop.f32.mrb[0].mxu0
      %v7272 = vpop.f32.mrb[0].mxu0
      %v7273 = vadd.f32 %v7112, %v7272
      %v7274 = vpop.f32.mrb[0].mxu0
      %7275 = vmatprep.mubr.bf16.mxu0 %v5985
      %7276 = vmatmul.mubr.bf16.gmra.mrb[0].mxu0 %v5984
      %v7277 = vpop.f32.mrb[0].mxu0
      %v7278 = vadd.f32 %v7117, %v7277
      %v7279 = vpop.f32.mrb[0].mxu0
      %v7280 = vpop.f32.mrb[0].mxu0
      %v7281 = vadd.f32 %v7120, %v7280
      %v7282 = vpop.f32.mrb[0].mxu0
      %7283 = vmatprep.mubr.bf16.mxu0 %v6001
      %7284 = vmatmul.mubr.bf16.gmra.mrb[0].mxu0 %v6000
      %v7285 = vpop.f32.mrb[0].mxu0
      %v7286 = vadd.f32 %v7125, %v7285
      %v7287 = vpop.f32.mrb[0].mxu0
      %v7288 = vpop.f32.mrb[0].mxu0
      %v7289 = vadd.f32 %v7128, %v7288
      %v7290 = vpop.f32.mrb[0].mxu0
      %7291 = vmatprep.mubr.bf16.mxu0 %v6017
      %7292 = vmatmul.mubr.bf16.gmra.mrb[0].mxu0 %v6016
      %v7293 = vpop.f32.mrb[0].mxu0
      %v7294 = vadd.f32 %v7133, %v7293
      %v7295 = vpop.f32.mrb[0].mxu0
      %v7296 = vpop.f32.mrb[0].mxu0
      %v7297 = vadd.f32 %v7136, %v7296
      %v7298 = vpop.f32.mrb[0].mxu0
      %7299 = vmatprep.mubr.bf16.mxu0 %v6033
      %7300 = vmatmul.mubr.bf16.gmra.mrb[0].mxu0 %v6032
      %v7301 = vpop.f32.mrb[0].mxu0
      %v7302 = vadd.f32 %v7141, %v7301
      %v7303 = vpop.f32.mrb[0].mxu0
      %v7304 = vpop.f32.mrb[0].mxu0
      %v7305 = vadd.f32 %v7144, %v7304
      %v7306 = vpop.f32.mrb[0].mxu0
      %7307 = vmatprep.mubr.bf16.mxu0 %v6049
      %7308 = vmatmul.mubr.bf16.gmra.mrb[0].mxu0 %v6048
      %v7309 = vpop.f32.mrb[0].mxu0
      %v7310 = vadd.f32 %v7149, %v7309
      %v7311 = vpop.f32.mrb[0].mxu0
      %v7312 = vpop.f32.mrb[0].mxu0
      %v7313 = vadd.f32 %v7152, %v7312
      %v7314 = vpop.f32.mrb[0].mxu0
      %7315 = vmatprep.mubr.bf16.mxu0 %v6065
      %7316 = vmatmul.mubr.bf16.gmra.mrb[0].mxu0 %v6064
      %v7317 = vpop.f32.mrb[0].mxu0
      %v7318 = vadd.f32 %v7157, %v7317
      %v7319 = vpop.f32.mrb[0].mxu0
      %v7320 = vpop.f32.mrb[0].mxu0
      %v7321 = vadd.f32 %v7160, %v7320
      %v7322 = vpop.f32.mrb[0].mxu0
      %7323 = vmatprep.mubr.bf16.mxu0 %v6081
      %7324 = vmatmul.mubr.bf16.gmra.mrb[0].mxu0 %v6080
      %v7325 = vpop.f32.mrb[0].mxu0
      %v7326 = vadd.f32 %v7165, %v7325
      %v7327 = vpop.f32.mrb[0].mxu0
      %v7328 = vpop.f32.mrb[0].mxu0
      %v7329 = vadd.f32 %v7168, %v7328
      %v7330 = vpop.f32.mrb[0].mxu0
      %7331 = vmatprep.mubr.bf16.mxu0 %v6097
      %7332 = vmatmul.mubr.bf16.gmra.mrb[0].mxu0 %v6096
      %v7333 = vpop.f32.mrb[0].mxu0
      %v7334 = vadd.f32 %v7173, %v7333
      %v7335 = vpop.f32.mrb[0].mxu0
      %v7336 = vpop.f32.mrb[0].mxu0
      %v7337 = vadd.f32 %v7176, %v7336
      %v7338 = vpop.f32.mrb[0].mxu0
      %7339 = vmatprep.mubr.bf16.mxu0 %v6113
      %7340 = vmatmul.mubr.bf16.gmra.mrb[0].mxu0 %v6112
      %v7341 = vpop.f32.mrb[0].mxu0
      %v7342 = vadd.f32 %v7181, %v7341
      %v7343 = vpop.f32.mrb[0].mxu0
      %v7344 = vpop.f32.mrb[0].mxu0
      %v7345 = vadd.f32 %v7184, %v7344
      %v7346 = vpop.f32.mrb[0].mxu0
      %7347 = vmatprep.mubr.bf16.mxu0 %v6129
      %7348 = vmatmul.mubr.bf16.gmra.mrb[0].mxu0 %v6128
      %v7349 = vpop.f32.mrb[0].mxu0
      %v7350 = vadd.f32 %v7189, %v7349
      %v7351 = vpop.f32.mrb[0].mxu0
      %v7352 = vpop.f32.mrb[0].mxu0
      %v7353 = vadd.f32 %v7192, %v7352
      %v7354 = vpop.f32.mrb[0].mxu0
      %7355 = vdwg.mxu0
      %7356 = vmatprep.subr.bf16.mxu0 0
      %7357 = vmatpush1.bf16.msra.mxu0 %v5078
      %7358 = vmatprep.subr.bf16.mxu0 0
      %7359 = vmatpush1.bf16.msra.mxu0 %v5079
      %7360 = vmatprep.subr.bf16.mxu0 0
      %7361 = vmatpush1.bf16.msra.mxu0 %v5080
      %7362 = vmatprep.subr.bf16.mxu0 0
      %7363 = vmatpush1.bf16.msra.mxu0 %v5081
      %7364 = vmatprep.subr.bf16.mxu0 0
      %7365 = vmatpush1.bf16.msra.mxu0 %v5082
      %7366 = vmatprep.subr.bf16.mxu0 0
      %7367 = vmatpush1.bf16.msra.mxu0 %v5083
      %7368 = vmatprep.subr.bf16.mxu0 0
      %7369 = vmatpush1.bf16.msra.mxu0 %v5084
      %7370 = vmatprep.subr.bf16.mxu0 0
      %7371 = vmatpush1.bf16.msra.mxu0 %v5085
      %7372 = vmatprep.subr.bf16.mxu0 0
      %7373 = vmatpush1.bf16.msra.mxu0 %v5086
      %7374 = vmatprep.subr.bf16.mxu0 0
      %7375 = vmatpush1.bf16.msra.mxu0 %v5087
      %7376 = vmatprep.subr.bf16.mxu0 0
      %7377 = vmatpush1.bf16.msra.mxu0 %v5088
      %7378 = vmatprep.subr.bf16.mxu0 0
      %7379 = vmatpush1.bf16.msra.mxu0 %v5089
      %7380 = vmatprep.subr.bf16.mxu0 0
      %7381 = vmatpush1.bf16.msra.mxu0 %v5090
      %7382 = vmatprep.subr.bf16.mxu0 0
      %7383 = vmatpush1.bf16.msra.mxu0 %v5091
      %7384 = vmatprep.subr.bf16.mxu0 0
      %7385 = vmatpush1.bf16.msra.mxu0 %v5092
      %7386 = vmatprep.subr.bf16.mxu0 0
      %7387 = vmatpush1.bf16.msra.mxu0 %v5093
      %7388 = vmatprep.mubr.bf16.mxu0 %v5891
      %7389 = vmatmul.mubr.bf16.gmra.mrb[0].mxu0 %v5890
      %v7390 = vpop.f32.mrb[0].mxu0
      %v7391 = vadd.f32 %v7230, %v7390
      %v7392 = vpop.f32.mrb[0].mxu0
      %v7393 = vpop.f32.mrb[0].mxu0
      %v7394 = vadd.f32 %v7233, %v7393
      %v7395 = vpop.f32.mrb[0].mxu0
      %7396 = vmatprep.mubr.bf16.mxu0 %v5907
      %7397 = vmatmul.mubr.bf16.gmra.mrb[0].mxu0 %v5906
      %v7398 = vpop.f32.mrb[0].mxu0
      %v7399 = vadd.f32 %v7238, %v7398
      %v7400 = vpop.f32.mrb[0].mxu0
      %v7401 = vpop.f32.mrb[0].mxu0
      %v7402 = vadd.f32 %v7241, %v7401
      %v7403 = vpop.f32.mrb[0].mxu0
      %7404 = vmatprep.mubr.bf16.mxu0 %v5923
      %7405 = vmatmul.mubr.bf16.gmra.mrb[0].mxu0 %v5922
      %v7406 = vpop.f32.mrb[0].mxu0
      %v7407 = vadd.f32 %v7246, %v7406
      %v7408 = vpop.f32.mrb[0].mxu0
      %v7409 = vpop.f32.mrb[0].mxu0
      %v7410 = vadd.f32 %v7249, %v7409
      %v7411 = vpop.f32.mrb[0].mxu0
      %7412 = vmatprep.mubr.bf16.mxu0 %v5939
      %7413 = vmatmul.mubr.bf16.gmra.mrb[0].mxu0 %v5938
      %v7414 = vpop.f32.mrb[0].mxu0
      %v7415 = vadd.f32 %v7254, %v7414
      %v7416 = vpop.f32.mrb[0].mxu0
      %v7417 = vpop.f32.mrb[0].mxu0
      %v7418 = vadd.f32 %v7257, %v7417
      %v7419 = vpop.f32.mrb[0].mxu0
      %7420 = vmatprep.mubr.bf16.mxu0 %v5955
      %7421 = vmatmul.mubr.bf16.gmra.mrb[0].mxu0 %v5954
      %v7422 = vpop.f32.mrb[0].mxu0
      %v7423 = vadd.f32 %v7262, %v7422
      %v7424 = vpop.f32.mrb[0].mxu0
      %v7425 = vpop.f32.mrb[0].mxu0
      %v7426 = vadd.f32 %v7265, %v7425
      %v7427 = vpop.f32.mrb[0].mxu0
      %7428 = vmatprep.mubr.bf16.mxu0 %v5971
      %7429 = vmatmul.mubr.bf16.gmra.mrb[0].mxu0 %v5970
      %v7430 = vpop.f32.mrb[0].mxu0
      %v7431 = vadd.f32 %v7270, %v7430
      %v7432 = vpop.f32.mrb[0].mxu0
      %v7433 = vpop.f32.mrb[0].mxu0
      %v7434 = vadd.f32 %v7273, %v7433
      %v7435 = vpop.f32.mrb[0].mxu0
      %7436 = vmatprep.mubr.bf16.mxu0 %v5987
      %7437 = vmatmul.mubr.bf16.gmra.mrb[0].mxu0 %v5986
      %v7438 = vpop.f32.mrb[0].mxu0
      %v7439 = vadd.f32 %v7278, %v7438
      %v7440 = vpop.f32.mrb[0].mxu0
      %v7441 = vpop.f32.mrb[0].mxu0
      %v7442 = vadd.f32 %v7281, %v7441
      %v7443 = vpop.f32.mrb[0].mxu0
      %7444 = vmatprep.mubr.bf16.mxu0 %v6003
      %7445 = vmatmul.mubr.bf16.gmra.mrb[0].mxu0 %v6002
      %v7446 = vpop.f32.mrb[0].mxu0
      %v7447 = vadd.f32 %v7286, %v7446
      %v7448 = vpop.f32.mrb[0].mxu0
      %v7449 = vpop.f32.mrb[0].mxu0
      %v7450 = vadd.f32 %v7289, %v7449
      %v7451 = vpop.f32.mrb[0].mxu0
      %7452 = vmatprep.mubr.bf16.mxu0 %v6019
      %7453 = vmatmul.mubr.bf16.gmra.mrb[0].mxu0 %v6018
      %v7454 = vpop.f32.mrb[0].mxu0
      %v7455 = vadd.f32 %v7294, %v7454
      %v7456 = vpop.f32.mrb[0].mxu0
      %v7457 = vpop.f32.mrb[0].mxu0
      %v7458 = vadd.f32 %v7297, %v7457
      %v7459 = vpop.f32.mrb[0].mxu0
      %7460 = vmatprep.mubr.bf16.mxu0 %v6035
      %7461 = vmatmul.mubr.bf16.gmra.mrb[0].mxu0 %v6034
      %v7462 = vpop.f32.mrb[0].mxu0
      %v7463 = vadd.f32 %v7302, %v7462
      %v7464 = vpop.f32.mrb[0].mxu0
      %v7465 = vpop.f32.mrb[0].mxu0
      %v7466 = vadd.f32 %v7305, %v7465
      %v7467 = vpop.f32.mrb[0].mxu0
      %7468 = vmatprep.mubr.bf16.mxu0 %v6051
      %7469 = vmatmul.mubr.bf16.gmra.mrb[0].mxu0 %v6050
      %v7470 = vpop.f32.mrb[0].mxu0
      %v7471 = vadd.f32 %v7310, %v7470
      %v7472 = vpop.f32.mrb[0].mxu0
      %v7473 = vpop.f32.mrb[0].mxu0
      %v7474 = vadd.f32 %v7313, %v7473
      %v7475 = vpop.f32.mrb[0].mxu0
      %7476 = vmatprep.mubr.bf16.mxu0 %v6067
      %7477 = vmatmul.mubr.bf16.gmra.mrb[0].mxu0 %v6066
      %v7478 = vpop.f32.mrb[0].mxu0
      %v7479 = vadd.f32 %v7318, %v7478
      %v7480 = vpop.f32.mrb[0].mxu0
      %v7481 = vpop.f32.mrb[0].mxu0
      %v7482 = vadd.f32 %v7321, %v7481
      %v7483 = vpop.f32.mrb[0].mxu0
      %7484 = vmatprep.mubr.bf16.mxu0 %v6083
      %7485 = vmatmul.mubr.bf16.gmra.mrb[0].mxu0 %v6082
      %v7486 = vpop.f32.mrb[0].mxu0
      %v7487 = vadd.f32 %v7326, %v7486
      %v7488 = vpop.f32.mrb[0].mxu0
      %v7489 = vpop.f32.mrb[0].mxu0
      %v7490 = vadd.f32 %v7329, %v7489
      %v7491 = vpop.f32.mrb[0].mxu0
      %7492 = vmatprep.mubr.bf16.mxu0 %v6099
      %7493 = vmatmul.mubr.bf16.gmra.mrb[0].mxu0 %v6098
      %v7494 = vpop.f32.mrb[0].mxu0
      %v7495 = vadd.f32 %v7334, %v7494
      %v7496 = vpop.f32.mrb[0].mxu0
      %v7497 = vpop.f32.mrb[0].mxu0
      %v7498 = vadd.f32 %v7337, %v7497
      %v7499 = vpop.f32.mrb[0].mxu0
      %7500 = vmatprep.mubr.bf16.mxu0 %v6115
      %7501 = vmatmul.mubr.bf16.gmra.mrb[0].mxu0 %v6114
      %v7502 = vpop.f32.mrb[0].mxu0
      %v7503 = vadd.f32 %v7342, %v7502
      %v7504 = vpop.f32.mrb[0].mxu0
      %v7505 = vpop.f32.mrb[0].mxu0
      %v7506 = vadd.f32 %v7345, %v7505
      %v7507 = vpop.f32.mrb[0].mxu0
      %7508 = vmatprep.mubr.bf16.mxu0 %v6131
      %7509 = vmatmul.mubr.bf16.gmra.mrb[0].mxu0 %v6130
      %v7510 = vpop.f32.mrb[0].mxu0
      %v7511 = vadd.f32 %v7350, %v7510
      %v7512 = vpop.f32.mrb[0].mxu0
      %v7513 = vpop.f32.mrb[0].mxu0
      %v7514 = vadd.f32 %v7353, %v7513
      %v7515 = vpop.f32.mrb[0].mxu0
      %7516 = vdwg.mxu0
      %7517 = vmatprep.subr.bf16.mxu0 0
      %7518 = vmatpush1.bf16.msra.mxu0 %v5094
      %7519 = vmatprep.subr.bf16.mxu0 0
      %7520 = vmatpush1.bf16.msra.mxu0 %v5095
      %7521 = vmatprep.subr.bf16.mxu0 0
      %7522 = vmatpush1.bf16.msra.mxu0 %v5096
      %7523 = vmatprep.subr.bf16.mxu0 0
      %7524 = vmatpush1.bf16.msra.mxu0 %v5097
      %7525 = vmatprep.subr.bf16.mxu0 0
      %7526 = vmatpush1.bf16.msra.mxu0 %v5098
      %7527 = vmatprep.subr.bf16.mxu0 0
      %7528 = vmatpush1.bf16.msra.mxu0 %v5099
      %7529 = vmatprep.subr.bf16.mxu0 0
      %7530 = vmatpush1.bf16.msra.mxu0 %v5100
      %7531 = vmatprep.subr.bf16.mxu0 0
      %7532 = vmatpush1.bf16.msra.mxu0 %v5101
      %7533 = vmatprep.subr.bf16.mxu0 0
      %7534 = vmatpush1.bf16.msra.mxu0 %v5102
      %7535 = vmatprep.subr.bf16.mxu0 0
      %7536 = vmatpush1.bf16.msra.mxu0 %v5103
      %7537 = vmatprep.subr.bf16.mxu0 0
      %7538 = vmatpush1.bf16.msra.mxu0 %v5104
      %7539 = vmatprep.subr.bf16.mxu0 0
      %7540 = vmatpush1.bf16.msra.mxu0 %v5105
      %7541 = vmatprep.subr.bf16.mxu0 0
      %7542 = vmatpush1.bf16.msra.mxu0 %v5106
      %7543 = vmatprep.subr.bf16.mxu0 0
      %7544 = vmatpush1.bf16.msra.mxu0 %v5107
      %7545 = vmatprep.subr.bf16.mxu0 0
      %7546 = vmatpush1.bf16.msra.mxu0 %v5108
      %7547 = vmatprep.subr.bf16.mxu0 0
      %7548 = vmatpush1.bf16.msra.mxu0 %v5109
      %7549 = vmatprep.mubr.bf16.mxu0 %v5893
      %7550 = vmatmul.mubr.bf16.gmra.mrb[0].mxu0 %v5892
      %v7551 = vpop.f32.mrb[0].mxu0
      %v7552 = vadd.f32 %v7391, %v7551
      %v7553 = vpop.f32.mrb[0].mxu0
      %v7554 = vpop.f32.mrb[0].mxu0
      %v7555 = vadd.f32 %v7394, %v7554
      %v7556 = vpop.f32.mrb[0].mxu0
      %7557 = vmatprep.mubr.bf16.mxu0 %v5909
      %7558 = vmatmul.mubr.bf16.gmra.mrb[0].mxu0 %v5908
      %v7559 = vpop.f32.mrb[0].mxu0
      %v7560 = vadd.f32 %v7399, %v7559
      %v7561 = vpop.f32.mrb[0].mxu0
      %v7562 = vpop.f32.mrb[0].mxu0
      %v7563 = vadd.f32 %v7402, %v7562
      %v7564 = vpop.f32.mrb[0].mxu0
      %7565 = vmatprep.mubr.bf16.mxu0 %v5925
      %7566 = vmatmul.mubr.bf16.gmra.mrb[0].mxu0 %v5924
      %v7567 = vpop.f32.mrb[0].mxu0
      %v7568 = vadd.f32 %v7407, %v7567
      %v7569 = vpop.f32.mrb[0].mxu0
      %v7570 = vpop.f32.mrb[0].mxu0
      %v7571 = vadd.f32 %v7410, %v7570
      %v7572 = vpop.f32.mrb[0].mxu0
      %7573 = vmatprep.mubr.bf16.mxu0 %v5941
      %7574 = vmatmul.mubr.bf16.gmra.mrb[0].mxu0 %v5940
      %v7575 = vpop.f32.mrb[0].mxu0
      %v7576 = vadd.f32 %v7415, %v7575
      %v7577 = vpop.f32.mrb[0].mxu0
      %v7578 = vpop.f32.mrb[0].mxu0
      %v7579 = vadd.f32 %v7418, %v7578
      %v7580 = vpop.f32.mrb[0].mxu0
      %7581 = vmatprep.mubr.bf16.mxu0 %v5957
      %7582 = vmatmul.mubr.bf16.gmra.mrb[0].mxu0 %v5956
      %v7583 = vpop.f32.mrb[0].mxu0
      %v7584 = vadd.f32 %v7423, %v7583
      %v7585 = vpop.f32.mrb[0].mxu0
      %v7586 = vpop.f32.mrb[0].mxu0
      %v7587 = vadd.f32 %v7426, %v7586
      %v7588 = vpop.f32.mrb[0].mxu0
      %7589 = vmatprep.mubr.bf16.mxu0 %v5973
      %7590 = vmatmul.mubr.bf16.gmra.mrb[0].mxu0 %v5972
      %v7591 = vpop.f32.mrb[0].mxu0
      %v7592 = vadd.f32 %v7431, %v7591
      %v7593 = vpop.f32.mrb[0].mxu0
      %v7594 = vpop.f32.mrb[0].mxu0
      %v7595 = vadd.f32 %v7434, %v7594
      %v7596 = vpop.f32.mrb[0].mxu0
      %7597 = vmatprep.mubr.bf16.mxu0 %v5989
      %7598 = vmatmul.mubr.bf16.gmra.mrb[0].mxu0 %v5988
      %v7599 = vpop.f32.mrb[0].mxu0
      %v7600 = vadd.f32 %v7439, %v7599
      %v7601 = vpop.f32.mrb[0].mxu0
      %v7602 = vpop.f32.mrb[0].mxu0
      %v7603 = vadd.f32 %v7442, %v7602
      %v7604 = vpop.f32.mrb[0].mxu0
      %7605 = vmatprep.mubr.bf16.mxu0 %v6005
      %7606 = vmatmul.mubr.bf16.gmra.mrb[0].mxu0 %v6004
      %v7607 = vpop.f32.mrb[0].mxu0
      %v7608 = vadd.f32 %v7447, %v7607
      %v7609 = vpop.f32.mrb[0].mxu0
      %v7610 = vpop.f32.mrb[0].mxu0
      %v7611 = vadd.f32 %v7450, %v7610
      %v7612 = vpop.f32.mrb[0].mxu0
      %7613 = vmatprep.mubr.bf16.mxu0 %v6021
      %7614 = vmatmul.mubr.bf16.gmra.mrb[0].mxu0 %v6020
      %v7615 = vpop.f32.mrb[0].mxu0
      %v7616 = vadd.f32 %v7455, %v7615
      %v7617 = vpop.f32.mrb[0].mxu0
      %v7618 = vpop.f32.mrb[0].mxu0
      %v7619 = vadd.f32 %v7458, %v7618
      %v7620 = vpop.f32.mrb[0].mxu0
      %7621 = vmatprep.mubr.bf16.mxu0 %v6037
      %7622 = vmatmul.mubr.bf16.gmra.mrb[0].mxu0 %v6036
      %v7623 = vpop.f32.mrb[0].mxu0
      %v7624 = vadd.f32 %v7463, %v7623
      %v7625 = vpop.f32.mrb[0].mxu0
      %v7626 = vpop.f32.mrb[0].mxu0
      %v7627 = vadd.f32 %v7466, %v7626
      %v7628 = vpop.f32.mrb[0].mxu0
      %7629 = vmatprep.mubr.bf16.mxu0 %v6053
      %7630 = vmatmul.mubr.bf16.gmra.mrb[0].mxu0 %v6052
      %v7631 = vpop.f32.mrb[0].mxu0
      %v7632 = vadd.f32 %v7471, %v7631
      %v7633 = vpop.f32.mrb[0].mxu0
      %v7634 = vpop.f32.mrb[0].mxu0
      %v7635 = vadd.f32 %v7474, %v7634
      %v7636 = vpop.f32.mrb[0].mxu0
      %7637 = vmatprep.mubr.bf16.mxu0 %v6069
      %7638 = vmatmul.mubr.bf16.gmra.mrb[0].mxu0 %v6068
      %v7639 = vpop.f32.mrb[0].mxu0
      %v7640 = vadd.f32 %v7479, %v7639
      %v7641 = vpop.f32.mrb[0].mxu0
      %v7642 = vpop.f32.mrb[0].mxu0
      %v7643 = vadd.f32 %v7482, %v7642
      %v7644 = vpop.f32.mrb[0].mxu0
      %7645 = vmatprep.mubr.bf16.mxu0 %v6085
      %7646 = vmatmul.mubr.bf16.gmra.mrb[0].mxu0 %v6084
      %v7647 = vpop.f32.mrb[0].mxu0
      %v7648 = vadd.f32 %v7487, %v7647
      %v7649 = vpop.f32.mrb[0].mxu0
      %v7650 = vpop.f32.mrb[0].mxu0
      %v7651 = vadd.f32 %v7490, %v7650
      %v7652 = vpop.f32.mrb[0].mxu0
      %7653 = vmatprep.mubr.bf16.mxu0 %v6101
      %7654 = vmatmul.mubr.bf16.gmra.mrb[0].mxu0 %v6100
      %v7655 = vpop.f32.mrb[0].mxu0
      %v7656 = vadd.f32 %v7495, %v7655
      %v7657 = vpop.f32.mrb[0].mxu0
      %v7658 = vpop.f32.mrb[0].mxu0
      %v7659 = vadd.f32 %v7498, %v7658
      %v7660 = vpop.f32.mrb[0].mxu0
      %7661 = vmatprep.mubr.bf16.mxu0 %v6117
      %7662 = vmatmul.mubr.bf16.gmra.mrb[0].mxu0 %v6116
      %v7663 = vpop.f32.mrb[0].mxu0
      %v7664 = vadd.f32 %v7503, %v7663
      %v7665 = vpop.f32.mrb[0].mxu0
      %v7666 = vpop.f32.mrb[0].mxu0
      %v7667 = vadd.f32 %v7506, %v7666
      %v7668 = vpop.f32.mrb[0].mxu0
      %7669 = vmatprep.mubr.bf16.mxu0 %v6133
      %7670 = vmatmul.mubr.bf16.gmra.mrb[0].mxu0 %v6132
      %v7671 = vpop.f32.mrb[0].mxu0
      %v7672 = vadd.f32 %v7511, %v7671
      %v7673 = vpop.f32.mrb[0].mxu0
      %v7674 = vpop.f32.mrb[0].mxu0
      %v7675 = vadd.f32 %v7514, %v7674
      %v7676 = vpop.f32.mrb[0].mxu0
      %7677 = vdwg.mxu0
      %v7678 = vsel %vm4229, %v7552, 0.0
      %7679 = vadd.xlane.f32.xlu0 %v7678
      %v7680 = vpop.xlane.xlu0 %7679
      %v7681 = vsel %vm4229, %v7555, 0.0
      %7682 = vadd.xlane.f32.xlu0 %v7681
      %v7683 = vpop.xlane.xlu0 %7682
      %v7684 = vsel %vm4229, %v7560, 0.0
      %7685 = vadd.xlane.f32.xlu0 %v7684
      %v7686 = vpop.xlane.xlu0 %7685
      %v7687 = vsel %vm4229, %v7563, 0.0
      %7688 = vadd.xlane.f32.xlu0 %v7687
      %v7689 = vpop.xlane.xlu0 %7688
      %v7690 = vsel %vm4229, %v7568, 0.0
      %7691 = vadd.xlane.f32.xlu0 %v7690
      %v7692 = vpop.xlane.xlu0 %7691
      %v7693 = vsel %vm4229, %v7571, 0.0
      %7694 = vadd.xlane.f32.xlu0 %v7693
      %v7695 = vpop.xlane.xlu0 %7694
      %v7696 = vsel %vm4229, %v7576, 0.0
      %7697 = vadd.xlane.f32.xlu0 %v7696
      %v7698 = vpop.xlane.xlu0 %7697
      %v7699 = vsel %vm4229, %v7579, 0.0
      %7700 = vadd.xlane.f32.xlu0 %v7699
      %v7701 = vpop.xlane.xlu0 %7700
      %v7702 = vsel %vm4229, %v7584, 0.0
      %7703 = vadd.xlane.f32.xlu0 %v7702
      %v7704 = vpop.xlane.xlu0 %7703
      %v7705 = vsel %vm4229, %v7587, 0.0
      %7706 = vadd.xlane.f32.xlu0 %v7705
      %v7707 = vpop.xlane.xlu0 %7706
      %v7708 = vsel %vm4229, %v7592, 0.0
      %7709 = vadd.xlane.f32.xlu0 %v7708
      %v7710 = vpop.xlane.xlu0 %7709
      %v7711 = vsel %vm4229, %v7595, 0.0
      %7712 = vadd.xlane.f32.xlu0 %v7711
      %v7713 = vpop.xlane.xlu0 %7712
      %v7714 = vsel %vm4229, %v7600, 0.0
      %7715 = vadd.xlane.f32.xlu0 %v7714
      %v7716 = vpop.xlane.xlu0 %7715
      %v7717 = vsel %vm4229, %v7603, 0.0
      %7718 = vadd.xlane.f32.xlu0 %v7717
      %v7719 = vpop.xlane.xlu0 %7718
      %v7720 = vsel %vm4229, %v7608, 0.0
      %7721 = vadd.xlane.f32.xlu0 %v7720
      %v7722 = vpop.xlane.xlu0 %7721
      %v7723 = vsel %vm4229, %v7611, 0.0
      %7724 = vadd.xlane.f32.xlu0 %v7723
      %v7725 = vpop.xlane.xlu0 %7724
      %v7726 = vsel %vm4229, %v7616, 0.0
      %7727 = vadd.xlane.f32.xlu0 %v7726
      %v7728 = vpop.xlane.xlu0 %7727
      %v7729 = vsel %vm4229, %v7619, 0.0
      %7730 = vadd.xlane.f32.xlu0 %v7729
      %v7731 = vpop.xlane.xlu0 %7730
      %v7732 = vsel %vm4229, %v7624, 0.0
      %7733 = vadd.xlane.f32.xlu0 %v7732
      %v7734 = vpop.xlane.xlu0 %7733
      %v7735 = vsel %vm4229, %v7627, 0.0
      %7736 = vadd.xlane.f32.xlu0 %v7735
      %v7737 = vpop.xlane.xlu0 %7736
      %v7738 = vsel %vm4229, %v7632, 0.0
      %7739 = vadd.xlane.f32.xlu0 %v7738
      %v7740 = vpop.xlane.xlu0 %7739
      %v7741 = vsel %vm4229, %v7635, 0.0
      %7742 = vadd.xlane.f32.xlu0 %v7741
      %v7743 = vpop.xlane.xlu0 %7742
      %v7744 = vsel %vm4229, %v7640, 0.0
      %7745 = vadd.xlane.f32.xlu0 %v7744
      %v7746 = vpop.xlane.xlu0 %7745
      %v7747 = vsel %vm4229, %v7643, 0.0
      %7748 = vadd.xlane.f32.xlu0 %v7747
      %v7749 = vpop.xlane.xlu0 %7748
      %v7750 = vsel %vm4229, %v7648, 0.0
      %7751 = vadd.xlane.f32.xlu0 %v7750
      %v7752 = vpop.xlane.xlu0 %7751
      %v7753 = vsel %vm4229, %v7651, 0.0
      %7754 = vadd.xlane.f32.xlu0 %v7753
      %v7755 = vpop.xlane.xlu0 %7754
      %v7756 = vsel %vm4229, %v7656, 0.0
      %7757 = vadd.xlane.f32.xlu0 %v7756
      %v7758 = vpop.xlane.xlu0 %7757
      %v7759 = vsel %vm4229, %v7659, 0.0
      %7760 = vadd.xlane.f32.xlu0 %v7759
      %v7761 = vpop.xlane.xlu0 %7760
      %v7762 = vsel %vm4229, %v7664, 0.0
      %7763 = vadd.xlane.f32.xlu0 %v7762
      %v7764 = vpop.xlane.xlu0 %7763
      %v7765 = vsel %vm4229, %v7667, 0.0
      %7766 = vadd.xlane.f32.xlu0 %v7765
      %v7767 = vpop.xlane.xlu0 %7766
      %v7768 = vsel %vm4229, %v7672, 0.0
      %7769 = vadd.xlane.f32.xlu0 %v7768
      %v7770 = vpop.xlane.xlu0 %7769
      %v7771 = vsel %vm4229, %v7675, 0.0
      %7772 = vadd.xlane.f32.xlu0 %v7771
      %v7773 = vpop.xlane.xlu0 %7772
      %v7774 = vrcp.pop 4.0
      %v7775 = vmul.f32 %v7680, %v7774
      %v7776 = vmul.f32 %v7683, %v7774
      %v7777 = vmul.f32 %v7686, %v7774
      %v7778 = vmul.f32 %v7689, %v7774
      %v7779 = vmul.f32 %v7692, %v7774
      %v7780 = vmul.f32 %v7695, %v7774
      %v7781 = vmul.f32 %v7698, %v7774
      %v7782 = vmul.f32 %v7701, %v7774
      %v7783 = vmul.f32 %v7704, %v7774
      %v7784 = vmul.f32 %v7707, %v7774
      %v7785 = vmul.f32 %v7710, %v7774
      %v7786 = vmul.f32 %v7713, %v7774
      %v7787 = vmul.f32 %v7716, %v7774
      %v7788 = vmul.f32 %v7719, %v7774
      %v7789 = vmul.f32 %v7722, %v7774
      %v7790 = vmul.f32 %v7725, %v7774
      %v7791 = vmul.f32 %v7728, %v7774
      %v7792 = vmul.f32 %v7731, %v7774
      %v7793 = vmul.f32 %v7734, %v7774
      %v7794 = vmul.f32 %v7737, %v7774
      %v7795 = vmul.f32 %v7740, %v7774
      %v7796 = vmul.f32 %v7743, %v7774
      %v7797 = vmul.f32 %v7746, %v7774
      %v7798 = vmul.f32 %v7749, %v7774
      %v7799 = vmul.f32 %v7752, %v7774
      %v7800 = vmul.f32 %v7755, %v7774
      %v7801 = vmul.f32 %v7758, %v7774
      %v7802 = vmul.f32 %v7761, %v7774
      %v7803 = vmul.f32 %v7764, %v7774
      %v7804 = vmul.f32 %v7767, %v7774
      %v7805 = vmul.f32 %v7770, %v7774
      %v7806 = vmul.f32 %v7773, %v7774
      %v7807 = vsub.f32 %v7552, %v7775
      %v7808 = vsub.f32 %v7555, %v7776
      %v7809 = vsub.f32 %v7560, %v7777
      %v7810 = vsub.f32 %v7563, %v7778
      %v7811 = vsub.f32 %v7568, %v7779
      %v7812 = vsub.f32 %v7571, %v7780
      %v7813 = vsub.f32 %v7576, %v7781
      %v7814 = vsub.f32 %v7579, %v7782
      %v7815 = vsub.f32 %v7584, %v7783
      %v7816 = vsub.f32 %v7587, %v7784
      %v7817 = vsub.f32 %v7592, %v7785
      %v7818 = vsub.f32 %v7595, %v7786
      %v7819 = vsub.f32 %v7600, %v7787
      %v7820 = vsub.f32 %v7603, %v7788
      %v7821 = vsub.f32 %v7608, %v7789
      %v7822 = vsub.f32 %v7611, %v7790
      %v7823 = vsub.f32 %v7616, %v7791
      %v7824 = vsub.f32 %v7619, %v7792
      %v7825 = vsub.f32 %v7624, %v7793
      %v7826 = vsub.f32 %v7627, %v7794
      %v7827 = vsub.f32 %v7632, %v7795
      %v7828 = vsub.f32 %v7635, %v7796
      %v7829 = vsub.f32 %v7640, %v7797
      %v7830 = vsub.f32 %v7643, %v7798
      %v7831 = vsub.f32 %v7648, %v7799
      %v7832 = vsub.f32 %v7651, %v7800
      %v7833 = vsub.f32 %v7656, %v7801
      %v7834 = vsub.f32 %v7659, %v7802
      %v7835 = vsub.f32 %v7664, %v7803
      %v7836 = vsub.f32 %v7667, %v7804
      %v7837 = vsub.f32 %v7672, %v7805
      %v7838 = vsub.f32 %v7675, %v7806
      %v7839 = vmul.f32 %v7807, %v7807
      %v7840 = vmul.f32 %v7808, %v7808
      %v7841 = vmul.f32 %v7809, %v7809
      %v7842 = vmul.f32 %v7810, %v7810
      %v7843 = vmul.f32 %v7811, %v7811
      %v7844 = vmul.f32 %v7812, %v7812
      %v7845 = vmul.f32 %v7813, %v7813
      %v7846 = vmul.f32 %v7814, %v7814
      %v7847 = vmul.f32 %v7815, %v7815
      %v7848 = vmul.f32 %v7816, %v7816
      %v7849 = vmul.f32 %v7817, %v7817
      %v7850 = vmul.f32 %v7818, %v7818
      %v7851 = vmul.f32 %v7819, %v7819
      %v7852 = vmul.f32 %v7820, %v7820
      %v7853 = vmul.f32 %v7821, %v7821
      %v7854 = vmul.f32 %v7822, %v7822
      %v7855 = vmul.f32 %v7823, %v7823
      %v7856 = vmul.f32 %v7824, %v7824
      %v7857 = vmul.f32 %v7825, %v7825
      %v7858 = vmul.f32 %v7826, %v7826
      %v7859 = vmul.f32 %v7827, %v7827
      %v7860 = vmul.f32 %v7828, %v7828
      %v7861 = vmul.f32 %v7829, %v7829
      %v7862 = vmul.f32 %v7830, %v7830
      %v7863 = vmul.f32 %v7831, %v7831
      %v7864 = vmul.f32 %v7832, %v7832
      %v7865 = vmul.f32 %v7833, %v7833
      %v7866 = vmul.f32 %v7834, %v7834
      %v7867 = vmul.f32 %v7835, %v7835
      %v7868 = vmul.f32 %v7836, %v7836
      %v7869 = vmul.f32 %v7837, %v7837
      %v7870 = vmul.f32 %v7838, %v7838
      %v7871 = vsel %vm4229, %v7839, 0.0
      %7872 = vadd.xlane.f32.xlu0 %v7871
      %v7873 = vpop.xlane.xlu0 %7872
      %v7874 = vsel %vm4229, %v7840, 0.0
      %7875 = vadd.xlane.f32.xlu0 %v7874
      %v7876 = vpop.xlane.xlu0 %7875
      %v7877 = vsel %vm4229, %v7841, 0.0
      %7878 = vadd.xlane.f32.xlu0 %v7877
      %v7879 = vpop.xlane.xlu0 %7878
      %v7880 = vsel %vm4229, %v7842, 0.0
      %7881 = vadd.xlane.f32.xlu0 %v7880
      %v7882 = vpop.xlane.xlu0 %7881
      %v7883 = vsel %vm4229, %v7843, 0.0
      %7884 = vadd.xlane.f32.xlu0 %v7883
      %v7885 = vpop.xlane.xlu0 %7884
      %v7886 = vsel %vm4229, %v7844, 0.0
      %7887 = vadd.xlane.f32.xlu0 %v7886
      %v7888 = vpop.xlane.xlu0 %7887
      %v7889 = vsel %vm4229, %v7845, 0.0
      %7890 = vadd.xlane.f32.xlu0 %v7889
      %v7891 = vpop.xlane.xlu0 %7890
      %v7892 = vsel %vm4229, %v7846, 0.0
      %7893 = vadd.xlane.f32.xlu0 %v7892
      %v7894 = vpop.xlane.xlu0 %7893
      %v7895 = vsel %vm4229, %v7847, 0.0
      %7896 = vadd.xlane.f32.xlu0 %v7895
      %v7897 = vpop.xlane.xlu0 %7896
      %v7898 = vsel %vm4229, %v7848, 0.0
      %7899 = vadd.xlane.f32.xlu0 %v7898
      %v7900 = vpop.xlane.xlu0 %7899
      %v7901 = vsel %vm4229, %v7849, 0.0
      %7902 = vadd.xlane.f32.xlu0 %v7901
      %v7903 = vpop.xlane.xlu0 %7902
      %v7904 = vsel %vm4229, %v7850, 0.0
      %7905 = vadd.xlane.f32.xlu0 %v7904
      %v7906 = vpop.xlane.xlu0 %7905
      %v7907 = vsel %vm4229, %v7851, 0.0
      %7908 = vadd.xlane.f32.xlu0 %v7907
      %v7909 = vpop.xlane.xlu0 %7908
      %v7910 = vsel %vm4229, %v7852, 0.0
      %7911 = vadd.xlane.f32.xlu0 %v7910
      %v7912 = vpop.xlane.xlu0 %7911
      %v7913 = vsel %vm4229, %v7853, 0.0
      %7914 = vadd.xlane.f32.xlu0 %v7913
      %v7915 = vpop.xlane.xlu0 %7914
      %v7916 = vsel %vm4229, %v7854, 0.0
      %7917 = vadd.xlane.f32.xlu0 %v7916
      %v7918 = vpop.xlane.xlu0 %7917
      %v7919 = vsel %vm4229, %v7855, 0.0
      %7920 = vadd.xlane.f32.xlu0 %v7919
      %v7921 = vpop.xlane.xlu0 %7920
      %v7922 = vsel %vm4229, %v7856, 0.0
      %7923 = vadd.xlane.f32.xlu0 %v7922
      %v7924 = vpop.xlane.xlu0 %7923
      %v7925 = vsel %vm4229, %v7857, 0.0
      %7926 = vadd.xlane.f32.xlu0 %v7925
      %v7927 = vpop.xlane.xlu0 %7926
      %v7928 = vsel %vm4229, %v7858, 0.0
      %7929 = vadd.xlane.f32.xlu0 %v7928
      %v7930 = vpop.xlane.xlu0 %7929
      %v7931 = vsel %vm4229, %v7859, 0.0
      %7932 = vadd.xlane.f32.xlu0 %v7931
      %v7933 = vpop.xlane.xlu0 %7932
      %v7934 = vsel %vm4229, %v7860, 0.0
      %7935 = vadd.xlane.f32.xlu0 %v7934
      %v7936 = vpop.xlane.xlu0 %7935
      %v7937 = vsel %vm4229, %v7861, 0.0
      %7938 = vadd.xlane.f32.xlu0 %v7937
      %v7939 = vpop.xlane.xlu0 %7938
      %v7940 = vsel %vm4229, %v7862, 0.0
      %7941 = vadd.xlane.f32.xlu0 %v7940
      %v7942 = vpop.xlane.xlu0 %7941
      %v7943 = vsel %vm4229, %v7863, 0.0
      %7944 = vadd.xlane.f32.xlu0 %v7943
      %v7945 = vpop.xlane.xlu0 %7944
      %v7946 = vsel %vm4229, %v7864, 0.0
      %7947 = vadd.xlane.f32.xlu0 %v7946
      %v7948 = vpop.xlane.xlu0 %7947
      %v7949 = vsel %vm4229, %v7865, 0.0
      %7950 = vadd.xlane.f32.xlu0 %v7949
      %v7951 = vpop.xlane.xlu0 %7950
      %v7952 = vsel %vm4229, %v7866, 0.0
      %7953 = vadd.xlane.f32.xlu0 %v7952
      %v7954 = vpop.xlane.xlu0 %7953
      %v7955 = vsel %vm4229, %v7867, 0.0
      %7956 = vadd.xlane.f32.xlu0 %v7955
      %v7957 = vpop.xlane.xlu0 %7956
      %v7958 = vsel %vm4229, %v7868, 0.0
      %7959 = vadd.xlane.f32.xlu0 %v7958
      %v7960 = vpop.xlane.xlu0 %7959
      %v7961 = vsel %vm4229, %v7869, 0.0
      %7962 = vadd.xlane.f32.xlu0 %v7961
      %v7963 = vpop.xlane.xlu0 %7962
      %v7964 = vsel %vm4229, %v7870, 0.0
      %7965 = vadd.xlane.f32.xlu0 %v7964
      %v7966 = vpop.xlane.xlu0 %7965
      %v7967 = vmul.f32 %v7873, %v7774
      %v7968 = vmul.f32 %v7876, %v7774
      %v7969 = vmul.f32 %v7879, %v7774
      %v7970 = vmul.f32 %v7882, %v7774
      %v7971 = vmul.f32 %v7885, %v7774
      %v7972 = vmul.f32 %v7888, %v7774
      %v7973 = vmul.f32 %v7891, %v7774
      %v7974 = vmul.f32 %v7894, %v7774
      %v7975 = vmul.f32 %v7897, %v7774
      %v7976 = vmul.f32 %v7900, %v7774
      %v7977 = vmul.f32 %v7903, %v7774
      %v7978 = vmul.f32 %v7906, %v7774
      %v7979 = vmul.f32 %v7909, %v7774
      %v7980 = vmul.f32 %v7912, %v7774
      %v7981 = vmul.f32 %v7915, %v7774
      %v7982 = vmul.f32 %v7918, %v7774
      %v7983 = vmul.f32 %v7921, %v7774
      %v7984 = vmul.f32 %v7924, %v7774
      %v7985 = vmul.f32 %v7927, %v7774
      %v7986 = vmul.f32 %v7930, %v7774
      %v7987 = vmul.f32 %v7933, %v7774
      %v7988 = vmul.f32 %v7936, %v7774
      %v7989 = vmul.f32 %v7939, %v7774
      %v7990 = vmul.f32 %v7942, %v7774
      %v7991 = vmul.f32 %v7945, %v7774
      %v7992 = vmul.f32 %v7948, %v7774
      %v7993 = vmul.f32 %v7951, %v7774
      %v7994 = vmul.f32 %v7954, %v7774
      %v7995 = vmul.f32 %v7957, %v7774
      %v7996 = vmul.f32 %v7960, %v7774
      %v7997 = vmul.f32 %v7963, %v7774
      %v7998 = vmul.f32 %v7966, %v7774
      %v7999 = vadd.f32 %v7967, 1e-05
      %v8000 = vadd.f32 %v7968, 1e-05
      %v8001 = vadd.f32 %v7969, 1e-05
      %v8002 = vadd.f32 %v7970, 1e-05
      %v8003 = vadd.f32 %v7971, 1e-05
      %v8004 = vadd.f32 %v7972, 1e-05
      %v8005 = vadd.f32 %v7973, 1e-05
      %v8006 = vadd.f32 %v7974, 1e-05
      %v8007 = vadd.f32 %v7975, 1e-05
      %v8008 = vadd.f32 %v7976, 1e-05
      %v8009 = vadd.f32 %v7977, 1e-05
      %v8010 = vadd.f32 %v7978, 1e-05
      %v8011 = vadd.f32 %v7979, 1e-05
      %v8012 = vadd.f32 %v7980, 1e-05
      %v8013 = vadd.f32 %v7981, 1e-05
      %v8014 = vadd.f32 %v7982, 1e-05
      %v8015 = vadd.f32 %v7983, 1e-05
      %v8016 = vadd.f32 %v7984, 1e-05
      %v8017 = vadd.f32 %v7985, 1e-05
      %v8018 = vadd.f32 %v7986, 1e-05
      %v8019 = vadd.f32 %v7987, 1e-05
      %v8020 = vadd.f32 %v7988, 1e-05
      %v8021 = vadd.f32 %v7989, 1e-05
      %v8022 = vadd.f32 %v7990, 1e-05
      %v8023 = vadd.f32 %v7991, 1e-05
      %v8024 = vadd.f32 %v7992, 1e-05
      %v8025 = vadd.f32 %v7993, 1e-05
      %v8026 = vadd.f32 %v7994, 1e-05
      %v8027 = vadd.f32 %v7995, 1e-05
      %v8028 = vadd.f32 %v7996, 1e-05
      %v8029 = vadd.f32 %v7997, 1e-05
      %v8030 = vadd.f32 %v7998, 1e-05
      %v8031 = vrsqrt.pop %v7999
      %v8032 = vrsqrt.pop %v8000
      %v8033 = vrsqrt.pop %v8001
      %v8034 = vrsqrt.pop %v8002
      %v8035 = vrsqrt.pop %v8003
      %v8036 = vrsqrt.pop %v8004
      %v8037 = vrsqrt.pop %v8005
      %v8038 = vrsqrt.pop %v8006
      %v8039 = vrsqrt.pop %v8007
      %v8040 = vrsqrt.pop %v8008
      %v8041 = vrsqrt.pop %v8009
      %v8042 = vrsqrt.pop %v8010
      %v8043 = vrsqrt.pop %v8011
      %v8044 = vrsqrt.pop %v8012
      %v8045 = vrsqrt.pop %v8013
      %v8046 = vrsqrt.pop %v8014
      %v8047 = vrsqrt.pop %v8015
      %v8048 = vrsqrt.pop %v8016
      %v8049 = vrsqrt.pop %v8017
      %v8050 = vrsqrt.pop %v8018
      %v8051 = vrsqrt.pop %v8019
      %v8052 = vrsqrt.pop %v8020
      %v8053 = vrsqrt.pop %v8021
      %v8054 = vrsqrt.pop %v8022
      %v8055 = vrsqrt.pop %v8023
      %v8056 = vrsqrt.pop %v8024
      %v8057 = vrsqrt.pop %v8025
      %v8058 = vrsqrt.pop %v8026
      %v8059 = vrsqrt.pop %v8027
      %v8060 = vrsqrt.pop %v8028
      %v8061 = vrsqrt.pop %v8029
      %v8062 = vrsqrt.pop %v8030
      %v8063 = vmul.f32 %v7807, %v8031
      %v8064 = vmul.f32 %v7808, %v8032
      %v8065 = vmul.f32 %v7809, %v8033
      %v8066 = vmul.f32 %v7810, %v8034
      %v8067 = vmul.f32 %v7811, %v8035
      %v8068 = vmul.f32 %v7812, %v8036
      %v8069 = vmul.f32 %v7813, %v8037
      %v8070 = vmul.f32 %v7814, %v8038
      %v8071 = vmul.f32 %v7815, %v8039
      %v8072 = vmul.f32 %v7816, %v8040
      %v8073 = vmul.f32 %v7817, %v8041
      %v8074 = vmul.f32 %v7818, %v8042
      %v8075 = vmul.f32 %v7819, %v8043
      %v8076 = vmul.f32 %v7820, %v8044
      %v8077 = vmul.f32 %v7821, %v8045
      %v8078 = vmul.f32 %v7822, %v8046
      %v8079 = vmul.f32 %v7823, %v8047
      %v8080 = vmul.f32 %v7824, %v8048
      %v8081 = vmul.f32 %v7825, %v8049
      %v8082 = vmul.f32 %v7826, %v8050
      %v8083 = vmul.f32 %v7827, %v8051
      %v8084 = vmul.f32 %v7828, %v8052
      %v8085 = vmul.f32 %v7829, %v8053
      %v8086 = vmul.f32 %v7830, %v8054
      %v8087 = vmul.f32 %v7831, %v8055
      %v8088 = vmul.f32 %v7832, %v8056
      %v8089 = vmul.f32 %v7833, %v8057
      %v8090 = vmul.f32 %v7834, %v8058
      %v8091 = vmul.f32 %v7835, %v8059
      %v8092 = vmul.f32 %v7836, %v8060
      %v8093 = vmul.f32 %v7837, %v8061
      %v8094 = vmul.f32 %v7838, %v8062
      %v8095 = vld [vmem:[%s12] sm:$0xff]
      %v8096 = vld [vmem:[%s12 + $0x8] sm:$0xff]
      %v8097 = vld [vmem:[%s12 + $0x10] sm:$0xff]
      %v8098 = vld [vmem:[%s12 + $0x18] sm:$0xff]
      %v8099 = vld [vmem:[%s12 + $0x20] sm:$0xff]
      %v8100 = vld [vmem:[%s12 + $0x28] sm:$0xff]
      %v8101 = vld [vmem:[%s12 + $0x30] sm:$0xff]
      %v8102 = vld [vmem:[%s12 + $0x38] sm:$0xff]
      %v8103 = vld [vmem:[%s12 + $0x40] sm:$0xff]
      %v8104 = vld [vmem:[%s12 + $0x48] sm:$0xff]
      %v8105 = vld [vmem:[%s12 + $0x50] sm:$0xff]
      %v8106 = vld [vmem:[%s12 + $0x58] sm:$0xff]
      %v8107 = vld [vmem:[%s12 + $0x60] sm:$0xff]
      %v8108 = vld [vmem:[%s12 + $0x68] sm:$0xff]
      %v8109 = vld [vmem:[%s12 + $0x70] sm:$0xff]
      %v8110 = vld [vmem:[%s12 + $0x78] sm:$0xff]
      %v8111 = vld [vmem:[%s12 + $0x80] sm:$0xff]
      %v8112 = vld [vmem:[%s12 + $0x88] sm:$0xff]
      %v8113 = vld [vmem:[%s12 + $0x90] sm:$0xff]
      %v8114 = vld [vmem:[%s12 + $0x98] sm:$0xff]
      %v8115 = vld [vmem:[%s12 + $0xa0] sm:$0xff]
      %v8116 = vld [vmem:[%s12 + $0xa8] sm:$0xff]
      %v8117 = vld [vmem:[%s12 + $0xb0] sm:$0xff]
      %v8118 = vld [vmem:[%s12 + $0xb8] sm:$0xff]
      %v8119 = vld [vmem:[%s12 + $0xc0] sm:$0xff]
      %v8120 = vld [vmem:[%s12 + $0xc8] sm:$0xff]
      %v8121 = vld [vmem:[%s12 + $0xd0] sm:$0xff]
      %v8122 = vld [vmem:[%s12 + $0xd8] sm:$0xff]
      %v8123 = vld [vmem:[%s12 + $0xe0] sm:$0xff]
      %v8124 = vld [vmem:[%s12 + $0xe8] sm:$0xff]
      %v8125 = vld [vmem:[%s12 + $0xf0] sm:$0xff]
      %v8126 = vld [vmem:[%s12 + $0xf8] sm:$0xff]
      %8128 = vset.pattern.permute.xlu0 0
      %8129 = vperm.xlu0 %8128, %v8095
      %v8130 = vpop.permute.xlu0 %8129
      %8133 = vset.pattern.permute.xlu0 0
      %8134 = vperm.xlu0 %8133, %v8096
      %v8135 = vpop.permute.xlu0 %8134
      %8138 = vset.pattern.permute.xlu0 0
      %8139 = vperm.xlu0 %8138, %v8097
      %v8140 = vpop.permute.xlu0 %8139
      %8143 = vset.pattern.permute.xlu0 0
      %8144 = vperm.xlu0 %8143, %v8098
      %v8145 = vpop.permute.xlu0 %8144
      %8148 = vset.pattern.permute.xlu0 0
      %8149 = vperm.xlu0 %8148, %v8099
      %v8150 = vpop.permute.xlu0 %8149
      %8153 = vset.pattern.permute.xlu0 0
      %8154 = vperm.xlu0 %8153, %v8100
      %v8155 = vpop.permute.xlu0 %8154
      %8158 = vset.pattern.permute.xlu0 0
      %8159 = vperm.xlu0 %8158, %v8101
      %v8160 = vpop.permute.xlu0 %8159
      %8163 = vset.pattern.permute.xlu0 0
      %8164 = vperm.xlu0 %8163, %v8102
      %v8165 = vpop.permute.xlu0 %8164
      %8168 = vset.pattern.permute.xlu0 0
      %8169 = vperm.xlu0 %8168, %v8103
      %v8170 = vpop.permute.xlu0 %8169
      %8173 = vset.pattern.permute.xlu0 0
      %8174 = vperm.xlu0 %8173, %v8104
      %v8175 = vpop.permute.xlu0 %8174
      %8178 = vset.pattern.permute.xlu0 0
      %8179 = vperm.xlu0 %8178, %v8105
      %v8180 = vpop.permute.xlu0 %8179
      %8183 = vset.pattern.permute.xlu0 0
      %8184 = vperm.xlu0 %8183, %v8106
      %v8185 = vpop.permute.xlu0 %8184
      %8188 = vset.pattern.permute.xlu0 0
      %8189 = vperm.xlu0 %8188, %v8107
      %v8190 = vpop.permute.xlu0 %8189
      %8193 = vset.pattern.permute.xlu0 0
      %8194 = vperm.xlu0 %8193, %v8108
      %v8195 = vpop.permute.xlu0 %8194
      %8198 = vset.pattern.permute.xlu0 0
      %8199 = vperm.xlu0 %8198, %v8109
      %v8200 = vpop.permute.xlu0 %8199
      %8203 = vset.pattern.permute.xlu0 0
      %8204 = vperm.xlu0 %8203, %v8110
      %v8205 = vpop.permute.xlu0 %8204
      %8208 = vset.pattern.permute.xlu0 0
      %8209 = vperm.xlu0 %8208, %v8111
      %v8210 = vpop.permute.xlu0 %8209
      %8213 = vset.pattern.permute.xlu0 0
      %8214 = vperm.xlu0 %8213, %v8112
      %v8215 = vpop.permute.xlu0 %8214
      %8218 = vset.pattern.permute.xlu0 0
      %8219 = vperm.xlu0 %8218, %v8113
      %v8220 = vpop.permute.xlu0 %8219
      %8223 = vset.pattern.permute.xlu0 0
      %8224 = vperm.xlu0 %8223, %v8114
      %v8225 = vpop.permute.xlu0 %8224
      %8228 = vset.pattern.permute.xlu0 0
      %8229 = vperm.xlu0 %8228, %v8115
      %v8230 = vpop.permute.xlu0 %8229
      %8233 = vset.pattern.permute.xlu0 0
      %8234 = vperm.xlu0 %8233, %v8116
      %v8235 = vpop.permute.xlu0 %8234
      %8238 = vset.pattern.permute.xlu0 0
      %8239 = vperm.xlu0 %8238, %v8117
      %v8240 = vpop.permute.xlu0 %8239
      %8243 = vset.pattern.permute.xlu0 0
      %8244 = vperm.xlu0 %8243, %v8118
      %v8245 = vpop.permute.xlu0 %8244
      %8248 = vset.pattern.permute.xlu0 0
      %8249 = vperm.xlu0 %8248, %v8119
      %v8250 = vpop.permute.xlu0 %8249
      %8253 = vset.pattern.permute.xlu0 0
      %8254 = vperm.xlu0 %8253, %v8120
      %v8255 = vpop.permute.xlu0 %8254
      %8258 = vset.pattern.permute.xlu0 0
      %8259 = vperm.xlu0 %8258, %v8121
      %v8260 = vpop.permute.xlu0 %8259
      %8263 = vset.pattern.permute.xlu0 0
      %8264 = vperm.xlu0 %8263, %v8122
      %v8265 = vpop.permute.xlu0 %8264
      %8268 = vset.pattern.permute.xlu0 0
      %8269 = vperm.xlu0 %8268, %v8123
      %v8270 = vpop.permute.xlu0 %8269
      %8273 = vset.pattern.permute.xlu0 0
      %8274 = vperm.xlu0 %8273, %v8124
      %v8275 = vpop.permute.xlu0 %8274
      %8278 = vset.pattern.permute.xlu0 0
      %8279 = vperm.xlu0 %8278, %v8125
      %v8280 = vpop.permute.xlu0 %8279
      %8283 = vset.pattern.permute.xlu0 0
      %8284 = vperm.xlu0 %8283, %v8126
      %v8285 = vpop.permute.xlu0 %8284
      %v8287 = vmul.f32 %v8063, %v8130
      %v8288 = vmul.f32 %v8064, %v8135
      %v8289 = vmul.f32 %v8065, %v8140
      %v8290 = vmul.f32 %v8066, %v8145
      %v8291 = vmul.f32 %v8067, %v8150
      %v8292 = vmul.f32 %v8068, %v8155
      %v8293 = vmul.f32 %v8069, %v8160
      %v8294 = vmul.f32 %v8070, %v8165
      %v8295 = vmul.f32 %v8071, %v8170
      %v8296 = vmul.f32 %v8072, %v8175
      %v8297 = vmul.f32 %v8073, %v8180
      %v8298 = vmul.f32 %v8074, %v8185
      %v8299 = vmul.f32 %v8075, %v8190
      %v8300 = vmul.f32 %v8076, %v8195
      %v8301 = vmul.f32 %v8077, %v8200
      %v8302 = vmul.f32 %v8078, %v8205
      %v8303 = vmul.f32 %v8079, %v8210
      %v8304 = vmul.f32 %v8080, %v8215
      %v8305 = vmul.f32 %v8081, %v8220
      %v8306 = vmul.f32 %v8082, %v8225
      %v8307 = vmul.f32 %v8083, %v8230
      %v8308 = vmul.f32 %v8084, %v8235
      %v8309 = vmul.f32 %v8085, %v8240
      %v8310 = vmul.f32 %v8086, %v8245
      %v8311 = vmul.f32 %v8087, %v8250
      %v8312 = vmul.f32 %v8088, %v8255
      %v8313 = vmul.f32 %v8089, %v8260
      %v8314 = vmul.f32 %v8090, %v8265
      %v8315 = vmul.f32 %v8091, %v8270
      %v8316 = vmul.f32 %v8092, %v8275
      %v8317 = vmul.f32 %v8093, %v8280
      %v8318 = vmul.f32 %v8094, %v8285
      %v8319 = vld [vmem:[%s13] sm:$0xff]
      %v8320 = vld [vmem:[%s13 + $0x8] sm:$0xff]
      %v8321 = vld [vmem:[%s13 + $0x10] sm:$0xff]
      %v8322 = vld [vmem:[%s13 + $0x18] sm:$0xff]
      %v8323 = vld [vmem:[%s13 + $0x20] sm:$0xff]
      %v8324 = vld [vmem:[%s13 + $0x28] sm:$0xff]
      %v8325 = vld [vmem:[%s13 + $0x30] sm:$0xff]
      %v8326 = vld [vmem:[%s13 + $0x38] sm:$0xff]
      %v8327 = vld [vmem:[%s13 + $0x40] sm:$0xff]
      %v8328 = vld [vmem:[%s13 + $0x48] sm:$0xff]
      %v8329 = vld [vmem:[%s13 + $0x50] sm:$0xff]
      %v8330 = vld [vmem:[%s13 + $0x58] sm:$0xff]
      %v8331 = vld [vmem:[%s13 + $0x60] sm:$0xff]
      %v8332 = vld [vmem:[%s13 + $0x68] sm:$0xff]
      %v8333 = vld [vmem:[%s13 + $0x70] sm:$0xff]
      %v8334 = vld [vmem:[%s13 + $0x78] sm:$0xff]
      %v8335 = vld [vmem:[%s13 + $0x80] sm:$0xff]
      %v8336 = vld [vmem:[%s13 + $0x88] sm:$0xff]
      %v8337 = vld [vmem:[%s13 + $0x90] sm:$0xff]
      %v8338 = vld [vmem:[%s13 + $0x98] sm:$0xff]
      %v8339 = vld [vmem:[%s13 + $0xa0] sm:$0xff]
      %v8340 = vld [vmem:[%s13 + $0xa8] sm:$0xff]
      %v8341 = vld [vmem:[%s13 + $0xb0] sm:$0xff]
      %v8342 = vld [vmem:[%s13 + $0xb8] sm:$0xff]
      %v8343 = vld [vmem:[%s13 + $0xc0] sm:$0xff]
      %v8344 = vld [vmem:[%s13 + $0xc8] sm:$0xff]
      %v8345 = vld [vmem:[%s13 + $0xd0] sm:$0xff]
      %v8346 = vld [vmem:[%s13 + $0xd8] sm:$0xff]
      %v8347 = vld [vmem:[%s13 + $0xe0] sm:$0xff]
      %v8348 = vld [vmem:[%s13 + $0xe8] sm:$0xff]
      %v8349 = vld [vmem:[%s13 + $0xf0] sm:$0xff]
      %v8350 = vld [vmem:[%s13 + $0xf8] sm:$0xff]
      %8352 = vset.pattern.permute.xlu0 0
      %8353 = vperm.xlu0 %8352, %v8319
      %v8354 = vpop.permute.xlu0 %8353
      %8357 = vset.pattern.permute.xlu0 0
      %8358 = vperm.xlu0 %8357, %v8320
      %v8359 = vpop.permute.xlu0 %8358
      %8362 = vset.pattern.permute.xlu0 0
      %8363 = vperm.xlu0 %8362, %v8321
      %v8364 = vpop.permute.xlu0 %8363
      %8367 = vset.pattern.permute.xlu0 0
      %8368 = vperm.xlu0 %8367, %v8322
      %v8369 = vpop.permute.xlu0 %8368
      %8372 = vset.pattern.permute.xlu0 0
      %8373 = vperm.xlu0 %8372, %v8323
      %v8374 = vpop.permute.xlu0 %8373
      %8377 = vset.pattern.permute.xlu0 0
      %8378 = vperm.xlu0 %8377, %v8324
      %v8379 = vpop.permute.xlu0 %8378
      %8382 = vset.pattern.permute.xlu0 0
      %8383 = vperm.xlu0 %8382, %v8325
      %v8384 = vpop.permute.xlu0 %8383
      %8387 = vset.pattern.permute.xlu0 0
      %8388 = vperm.xlu0 %8387, %v8326
      %v8389 = vpop.permute.xlu0 %8388
      %8392 = vset.pattern.permute.xlu0 0
      %8393 = vperm.xlu0 %8392, %v8327
      %v8394 = vpop.permute.xlu0 %8393
      %8397 = vset.pattern.permute.xlu0 0
      %8398 = vperm.xlu0 %8397, %v8328
      %v8399 = vpop.permute.xlu0 %8398
      %8402 = vset.pattern.permute.xlu0 0
      %8403 = vperm.xlu0 %8402, %v8329
      %v8404 = vpop.permute.xlu0 %8403
      %8407 = vset.pattern.permute.xlu0 0
      %8408 = vperm.xlu0 %8407, %v8330
      %v8409 = vpop.permute.xlu0 %8408
      %8412 = vset.pattern.permute.xlu0 0
      %8413 = vperm.xlu0 %8412, %v8331
      %v8414 = vpop.permute.xlu0 %8413
      %8417 = vset.pattern.permute.xlu0 0
      %8418 = vperm.xlu0 %8417, %v8332
      %v8419 = vpop.permute.xlu0 %8418
      %8422 = vset.pattern.permute.xlu0 0
      %8423 = vperm.xlu0 %8422, %v8333
      %v8424 = vpop.permute.xlu0 %8423
      %8427 = vset.pattern.permute.xlu0 0
      %8428 = vperm.xlu0 %8427, %v8334
      %v8429 = vpop.permute.xlu0 %8428
      %8432 = vset.pattern.permute.xlu0 0
      %8433 = vperm.xlu0 %8432, %v8335
      %v8434 = vpop.permute.xlu0 %8433
      %8437 = vset.pattern.permute.xlu0 0
      %8438 = vperm.xlu0 %8437, %v8336
      %v8439 = vpop.permute.xlu0 %8438
      %8442 = vset.pattern.permute.xlu0 0
      %8443 = vperm.xlu0 %8442, %v8337
      %v8444 = vpop.permute.xlu0 %8443
      %8447 = vset.pattern.permute.xlu0 0
      %8448 = vperm.xlu0 %8447, %v8338
      %v8449 = vpop.permute.xlu0 %8448
      %8452 = vset.pattern.permute.xlu0 0
      %8453 = vperm.xlu0 %8452, %v8339
      %v8454 = vpop.permute.xlu0 %8453
      %8457 = vset.pattern.permute.xlu0 0
      %8458 = vperm.xlu0 %8457, %v8340
      %v8459 = vpop.permute.xlu0 %8458
      %8462 = vset.pattern.permute.xlu0 0
      %8463 = vperm.xlu0 %8462, %v8341
      %v8464 = vpop.permute.xlu0 %8463
      %8467 = vset.pattern.permute.xlu0 0
      %8468 = vperm.xlu0 %8467, %v8342
      %v8469 = vpop.permute.xlu0 %8468
      %8472 = vset.pattern.permute.xlu0 0
      %8473 = vperm.xlu0 %8472, %v8343
      %v8474 = vpop.permute.xlu0 %8473
      %8477 = vset.pattern.permute.xlu0 0
      %8478 = vperm.xlu0 %8477, %v8344
      %v8479 = vpop.permute.xlu0 %8478
      %8482 = vset.pattern.permute.xlu0 0
      %8483 = vperm.xlu0 %8482, %v8345
      %v8484 = vpop.permute.xlu0 %8483
      %8487 = vset.pattern.permute.xlu0 0
      %8488 = vperm.xlu0 %8487, %v8346
      %v8489 = vpop.permute.xlu0 %8488
      %8492 = vset.pattern.permute.xlu0 0
      %8493 = vperm.xlu0 %8492, %v8347
      %v8494 = vpop.permute.xlu0 %8493
      %8497 = vset.pattern.permute.xlu0 0
      %8498 = vperm.xlu0 %8497, %v8348
      %v8499 = vpop.permute.xlu0 %8498
      %8502 = vset.pattern.permute.xlu0 0
      %8503 = vperm.xlu0 %8502, %v8349
      %v8504 = vpop.permute.xlu0 %8503
      %8507 = vset.pattern.permute.xlu0 0
      %8508 = vperm.xlu0 %8507, %v8350
      %v8509 = vpop.permute.xlu0 %8508
      %v8511 = vadd.f32 %v8287, %v8354
      %v8512 = vadd.f32 %v8288, %v8359
      %v8513 = vadd.f32 %v8289, %v8364
      %v8514 = vadd.f32 %v8290, %v8369
      %v8515 = vadd.f32 %v8291, %v8374
      %v8516 = vadd.f32 %v8292, %v8379
      %v8517 = vadd.f32 %v8293, %v8384
      %v8518 = vadd.f32 %v8294, %v8389
      %v8519 = vadd.f32 %v8295, %v8394
      %v8520 = vadd.f32 %v8296, %v8399
      %v8521 = vadd.f32 %v8297, %v8404
      %v8522 = vadd.f32 %v8298, %v8409
      %v8523 = vadd.f32 %v8299, %v8414
      %v8524 = vadd.f32 %v8300, %v8419
      %v8525 = vadd.f32 %v8301, %v8424
      %v8526 = vadd.f32 %v8302, %v8429
      %v8527 = vadd.f32 %v8303, %v8434
      %v8528 = vadd.f32 %v8304, %v8439
      %v8529 = vadd.f32 %v8305, %v8444
      %v8530 = vadd.f32 %v8306, %v8449
      %v8531 = vadd.f32 %v8307, %v8454
      %v8532 = vadd.f32 %v8308, %v8459
      %v8533 = vadd.f32 %v8309, %v8464
      %v8534 = vadd.f32 %v8310, %v8469
      %v8535 = vadd.f32 %v8311, %v8474
      %v8536 = vadd.f32 %v8312, %v8479
      %v8537 = vadd.f32 %v8313, %v8484
      %v8538 = vadd.f32 %v8314, %v8489
      %v8539 = vadd.f32 %v8315, %v8494
      %v8540 = vadd.f32 %v8316, %v8499
      %v8541 = vadd.f32 %v8317, %v8504
      %v8542 = vadd.f32 %v8318, %v8509
      %vm8543 = vcmp.gt.f32.partialorder %v8511, 0.0
      %vm8544 = vcmp.gt.f32.partialorder %v8512, 0.0
      %vm8545 = vcmp.gt.f32.partialorder %v8513, 0.0
      %vm8546 = vcmp.gt.f32.partialorder %v8514, 0.0
      %vm8547 = vcmp.gt.f32.partialorder %v8515, 0.0
      %vm8548 = vcmp.gt.f32.partialorder %v8516, 0.0
      %vm8549 = vcmp.gt.f32.partialorder %v8517, 0.0
      %vm8550 = vcmp.gt.f32.partialorder %v8518, 0.0
      %vm8551 = vcmp.gt.f32.partialorder %v8519, 0.0
      %vm8552 = vcmp.gt.f32.partialorder %v8520, 0.0
      %vm8553 = vcmp.gt.f32.partialorder %v8521, 0.0
      %vm8554 = vcmp.gt.f32.partialorder %v8522, 0.0
      %vm8555 = vcmp.gt.f32.partialorder %v8523, 0.0
      %vm8556 = vcmp.gt.f32.partialorder %v8524, 0.0
      %vm8557 = vcmp.gt.f32.partialorder %v8525, 0.0
      %vm8558 = vcmp.gt.f32.partialorder %v8526, 0.0
      %vm8559 = vcmp.gt.f32.partialorder %v8527, 0.0
      %vm8560 = vcmp.gt.f32.partialorder %v8528, 0.0
      %vm8561 = vcmp.gt.f32.partialorder %v8529, 0.0
      %vm8562 = vcmp.gt.f32.partialorder %v8530, 0.0
      %vm8563 = vcmp.gt.f32.partialorder %v8531, 0.0
      %vm8564 = vcmp.gt.f32.partialorder %v8532, 0.0
      %vm8565 = vcmp.gt.f32.partialorder %v8533, 0.0
      %vm8566 = vcmp.gt.f32.partialorder %v8534, 0.0
      %vm8567 = vcmp.gt.f32.partialorder %v8535, 0.0
      %vm8568 = vcmp.gt.f32.partialorder %v8536, 0.0
      %vm8569 = vcmp.gt.f32.partialorder %v8537, 0.0
      %vm8570 = vcmp.gt.f32.partialorder %v8538, 0.0
      %vm8571 = vcmp.gt.f32.partialorder %v8539, 0.0
      %vm8572 = vcmp.gt.f32.partialorder %v8540, 0.0
      %vm8573 = vcmp.gt.f32.partialorder %v8541, 0.0
      %vm8574 = vcmp.gt.f32.partialorder %v8542, 0.0
      %v8575 = vmul.f32 %v8511, 0.2
      %v8576 = vmul.f32 %v8512, 0.2
      %v8577 = vmul.f32 %v8513, 0.2
      %v8578 = vmul.f32 %v8514, 0.2
      %v8579 = vmul.f32 %v8515, 0.2
      %v8580 = vmul.f32 %v8516, 0.2
      %v8581 = vmul.f32 %v8517, 0.2
      %v8582 = vmul.f32 %v8518, 0.2
      %v8583 = vmul.f32 %v8519, 0.2
      %v8584 = vmul.f32 %v8520, 0.2
      %v8585 = vmul.f32 %v8521, 0.2
      %v8586 = vmul.f32 %v8522, 0.2
      %v8587 = vmul.f32 %v8523, 0.2
      %v8588 = vmul.f32 %v8524, 0.2
      %v8589 = vmul.f32 %v8525, 0.2
      %v8590 = vmul.f32 %v8526, 0.2
      %v8591 = vmul.f32 %v8527, 0.2
      %v8592 = vmul.f32 %v8528, 0.2
      %v8593 = vmul.f32 %v8529, 0.2
      %v8594 = vmul.f32 %v8530, 0.2
      %v8595 = vmul.f32 %v8531, 0.2
      %v8596 = vmul.f32 %v8532, 0.2
      %v8597 = vmul.f32 %v8533, 0.2
      %v8598 = vmul.f32 %v8534, 0.2
      %v8599 = vmul.f32 %v8535, 0.2
      %v8600 = vmul.f32 %v8536, 0.2
      %v8601 = vmul.f32 %v8537, 0.2
      %v8602 = vmul.f32 %v8538, 0.2
      %v8603 = vmul.f32 %v8539, 0.2
      %v8604 = vmul.f32 %v8540, 0.2
      %v8605 = vmul.f32 %v8541, 0.2
      %v8606 = vmul.f32 %v8542, 0.2
      %v8607 = vsel %vm8543, %v8511, %v8575
      %v8608 = vsel %vm8544, %v8512, %v8576
      %v8609 = vsel %vm8545, %v8513, %v8577
      %v8610 = vsel %vm8546, %v8514, %v8578
      %v8611 = vsel %vm8547, %v8515, %v8579
      %v8612 = vsel %vm8548, %v8516, %v8580
      %v8613 = vsel %vm8549, %v8517, %v8581
      %v8614 = vsel %vm8550, %v8518, %v8582
      %v8615 = vsel %vm8551, %v8519, %v8583
      %v8616 = vsel %vm8552, %v8520, %v8584
      %v8617 = vsel %vm8553, %v8521, %v8585
      %v8618 = vsel %vm8554, %v8522, %v8586
      %v8619 = vsel %vm8555, %v8523, %v8587
      %v8620 = vsel %vm8556, %v8524, %v8588
      %v8621 = vsel %vm8557, %v8525, %v8589
      %v8622 = vsel %vm8558, %v8526, %v8590
      %v8623 = vsel %vm8559, %v8527, %v8591
      %v8624 = vsel %vm8560, %v8528, %v8592
      %v8625 = vsel %vm8561, %v8529, %v8593
      %v8626 = vsel %vm8562, %v8530, %v8594
      %v8627 = vsel %vm8563, %v8531, %v8595
      %v8628 = vsel %vm8564, %v8532, %v8596
      %v8629 = vsel %vm8565, %v8533, %v8597
      %v8630 = vsel %vm8566, %v8534, %v8598
      %v8631 = vsel %vm8567, %v8535, %v8599
      %v8632 = vsel %vm8568, %v8536, %v8600
      %v8633 = vsel %vm8569, %v8537, %v8601
      %v8634 = vsel %vm8570, %v8538, %v8602
      %v8635 = vsel %vm8571, %v8539, %v8603
      %v8636 = vsel %vm8572, %v8540, %v8604
      %v8637 = vsel %vm8573, %v8541, %v8605
      %v8638 = vsel %vm8574, %v8542, %v8606
      %v8639 = vld [vmem:[%s14] sm:$0xff]
      %v8640 = vld [vmem:[%s14 + $0x8] sm:$0xff]
      %v8641 = vld [vmem:[%s14 + $0x10] sm:$0xff]
      %v8642 = vld [vmem:[%s14 + $0x18] sm:$0xff]
      %v8643 = vld [vmem:[%s14 + $0x20] sm:$0xff]
      %v8644 = vld [vmem:[%s14 + $0x28] sm:$0xff]
      %v8645 = vld [vmem:[%s14 + $0x30] sm:$0xff]
      %v8646 = vld [vmem:[%s14 + $0x38] sm:$0xff]
      %v8647 = vld [vmem:[%s14 + $0x40] sm:$0xff]
      %v8648 = vld [vmem:[%s14 + $0x48] sm:$0xff]
      %v8649 = vld [vmem:[%s14 + $0x50] sm:$0xff]
      %v8650 = vld [vmem:[%s14 + $0x58] sm:$0xff]
      %v8651 = vld [vmem:[%s14 + $0x60] sm:$0xff]
      %v8652 = vld [vmem:[%s14 + $0x68] sm:$0xff]
      %v8653 = vld [vmem:[%s14 + $0x70] sm:$0xff]
      %v8654 = vld [vmem:[%s14 + $0x78] sm:$0xff]
      %v8655 = vld [vmem:[%s14 + $0x80] sm:$0xff]
      %v8656 = vld [vmem:[%s14 + $0x88] sm:$0xff]
      %v8657 = vld [vmem:[%s14 + $0x90] sm:$0xff]
      %v8658 = vld [vmem:[%s14 + $0x98] sm:$0xff]
      %v8659 = vld [vmem:[%s14 + $0xa0] sm:$0xff]
      %v8660 = vld [vmem:[%s14 + $0xa8] sm:$0xff]
      %v8661 = vld [vmem:[%s14 + $0xb0] sm:$0xff]
      %v8662 = vld [vmem:[%s14 + $0xb8] sm:$0xff]
      %v8663 = vld [vmem:[%s14 + $0xc0] sm:$0xff]
      %v8664 = vld [vmem:[%s14 + $0xc8] sm:$0xff]
      %v8665 = vld [vmem:[%s14 + $0xd0] sm:$0xff]
      %v8666 = vld [vmem:[%s14 + $0xd8] sm:$0xff]
      %v8667 = vld [vmem:[%s14 + $0xe0] sm:$0xff]
      %v8668 = vld [vmem:[%s14 + $0xe8] sm:$0xff]
      %v8669 = vld [vmem:[%s14 + $0xf0] sm:$0xff]
      %v8670 = vld [vmem:[%s14 + $0xf8] sm:$0xff]
      %v8671 = vmul.f32 %v8607, %v8639
      %v8672 = vmul.f32 %v8608, %v8640
      %v8673 = vmul.f32 %v8609, %v8641
      %v8674 = vmul.f32 %v8610, %v8642
      %v8675 = vmul.f32 %v8611, %v8643
      %v8676 = vmul.f32 %v8612, %v8644
      %v8677 = vmul.f32 %v8613, %v8645
      %v8678 = vmul.f32 %v8614, %v8646
      %v8679 = vmul.f32 %v8615, %v8647
      %v8680 = vmul.f32 %v8616, %v8648
      %v8681 = vmul.f32 %v8617, %v8649
      %v8682 = vmul.f32 %v8618, %v8650
      %v8683 = vmul.f32 %v8619, %v8651
      %v8684 = vmul.f32 %v8620, %v8652
      %v8685 = vmul.f32 %v8621, %v8653
      %v8686 = vmul.f32 %v8622, %v8654
      %v8687 = vmul.f32 %v8623, %v8655
      %v8688 = vmul.f32 %v8624, %v8656
      %v8689 = vmul.f32 %v8625, %v8657
      %v8690 = vmul.f32 %v8626, %v8658
      %v8691 = vmul.f32 %v8627, %v8659
      %v8692 = vmul.f32 %v8628, %v8660
      %v8693 = vmul.f32 %v8629, %v8661
      %v8694 = vmul.f32 %v8630, %v8662
      %v8695 = vmul.f32 %v8631, %v8663
      %v8696 = vmul.f32 %v8632, %v8664
      %v8697 = vmul.f32 %v8633, %v8665
      %v8698 = vmul.f32 %v8634, %v8666
      %v8699 = vmul.f32 %v8635, %v8667
      %v8700 = vmul.f32 %v8636, %v8668
      %v8701 = vmul.f32 %v8637, %v8669
      %v8702 = vmul.f32 %v8638, %v8670
      %v8703 = vsel %vm4229, %v8671, 0.0
      %8704 = vadd.xlane.f32.xlu0 %v8703
      %v8705 = vpop.xlane.xlu0 %8704
      %v8706 = vsel %vm4229, %v8672, 0.0
      %8707 = vadd.xlane.f32.xlu0 %v8706
      %v8708 = vpop.xlane.xlu0 %8707
      %v8709 = vsel %vm4229, %v8673, 0.0
      %8710 = vadd.xlane.f32.xlu0 %v8709
      %v8711 = vpop.xlane.xlu0 %8710
      %v8712 = vsel %vm4229, %v8674, 0.0
      %8713 = vadd.xlane.f32.xlu0 %v8712
      %v8714 = vpop.xlane.xlu0 %8713
      %v8715 = vsel %vm4229, %v8675, 0.0
      %8716 = vadd.xlane.f32.xlu0 %v8715
      %v8717 = vpop.xlane.xlu0 %8716
      %v8718 = vsel %vm4229, %v8676, 0.0
      %8719 = vadd.xlane.f32.xlu0 %v8718
      %v8720 = vpop.xlane.xlu0 %8719
      %v8721 = vsel %vm4229, %v8677, 0.0
      %8722 = vadd.xlane.f32.xlu0 %v8721
      %v8723 = vpop.xlane.xlu0 %8722
      %v8724 = vsel %vm4229, %v8678, 0.0
      %8725 = vadd.xlane.f32.xlu0 %v8724
      %v8726 = vpop.xlane.xlu0 %8725
      %v8727 = vsel %vm4229, %v8679, 0.0
      %8728 = vadd.xlane.f32.xlu0 %v8727
      %v8729 = vpop.xlane.xlu0 %8728
      %v8730 = vsel %vm4229, %v8680, 0.0
      %8731 = vadd.xlane.f32.xlu0 %v8730
      %v8732 = vpop.xlane.xlu0 %8731
      %v8733 = vsel %vm4229, %v8681, 0.0
      %8734 = vadd.xlane.f32.xlu0 %v8733
      %v8735 = vpop.xlane.xlu0 %8734
      %v8736 = vsel %vm4229, %v8682, 0.0
      %8737 = vadd.xlane.f32.xlu0 %v8736
      %v8738 = vpop.xlane.xlu0 %8737
      %v8739 = vsel %vm4229, %v8683, 0.0
      %8740 = vadd.xlane.f32.xlu0 %v8739
      %v8741 = vpop.xlane.xlu0 %8740
      %v8742 = vsel %vm4229, %v8684, 0.0
      %8743 = vadd.xlane.f32.xlu0 %v8742
      %v8744 = vpop.xlane.xlu0 %8743
      %v8745 = vsel %vm4229, %v8685, 0.0
      %8746 = vadd.xlane.f32.xlu0 %v8745
      %v8747 = vpop.xlane.xlu0 %8746
      %v8748 = vsel %vm4229, %v8686, 0.0
      %8749 = vadd.xlane.f32.xlu0 %v8748
      %v8750 = vpop.xlane.xlu0 %8749
      %v8751 = vsel %vm4229, %v8687, 0.0
      %8752 = vadd.xlane.f32.xlu0 %v8751
      %v8753 = vpop.xlane.xlu0 %8752
      %v8754 = vsel %vm4229, %v8688, 0.0
      %8755 = vadd.xlane.f32.xlu0 %v8754
      %v8756 = vpop.xlane.xlu0 %8755
      %v8757 = vsel %vm4229, %v8689, 0.0
      %8758 = vadd.xlane.f32.xlu0 %v8757
      %v8759 = vpop.xlane.xlu0 %8758
      %v8760 = vsel %vm4229, %v8690, 0.0
      %8761 = vadd.xlane.f32.xlu0 %v8760
      %v8762 = vpop.xlane.xlu0 %8761
      %v8763 = vsel %vm4229, %v8691, 0.0
      %8764 = vadd.xlane.f32.xlu0 %v8763
      %v8765 = vpop.xlane.xlu0 %8764
      %v8766 = vsel %vm4229, %v8692, 0.0
      %8767 = vadd.xlane.f32.xlu0 %v8766
      %v8768 = vpop.xlane.xlu0 %8767
      %v8769 = vsel %vm4229, %v8693, 0.0
      %8770 = vadd.xlane.f32.xlu0 %v8769
      %v8771 = vpop.xlane.xlu0 %8770
      %v8772 = vsel %vm4229, %v8694, 0.0
      %8773 = vadd.xlane.f32.xlu0 %v8772
      %v8774 = vpop.xlane.xlu0 %8773
      %v8775 = vsel %vm4229, %v8695, 0.0
      %8776 = vadd.xlane.f32.xlu0 %v8775
      %v8777 = vpop.xlane.xlu0 %8776
      %v8778 = vsel %vm4229, %v8696, 0.0
      %8779 = vadd.xlane.f32.xlu0 %v8778
      %v8780 = vpop.xlane.xlu0 %8779
      %v8781 = vsel %vm4229, %v8697, 0.0
      %8782 = vadd.xlane.f32.xlu0 %v8781
      %v8783 = vpop.xlane.xlu0 %8782
      %v8784 = vsel %vm4229, %v8698, 0.0
      %8785 = vadd.xlane.f32.xlu0 %v8784
      %v8786 = vpop.xlane.xlu0 %8785
      %v8787 = vsel %vm4229, %v8699, 0.0
      %8788 = vadd.xlane.f32.xlu0 %v8787
      %v8789 = vpop.xlane.xlu0 %8788
      %v8790 = vsel %vm4229, %v8700, 0.0
      %8791 = vadd.xlane.f32.xlu0 %v8790
      %v8792 = vpop.xlane.xlu0 %8791
      %v8793 = vsel %vm4229, %v8701, 0.0
      %8794 = vadd.xlane.f32.xlu0 %v8793
      %v8795 = vpop.xlane.xlu0 %8794
      %v8796 = vsel %vm4229, %v8702, 0.0
      %8797 = vadd.xlane.f32.xlu0 %v8796
      %v8798 = vpop.xlane.xlu0 %8797
      %v8831 = vlaneseq
      %v8832 = vand.u32 %v8831, 127
      %v8833 = vlaneseq
      %v8834 = vshrl.u32 %v8833, 7
      %v8835 = vsub.s32 %v8832, %v8834
      %v8836 = vrot.slane %v8705, %v8835
      %v8837 = vadd.s32 %v8832, 4294967288
      %v8838 = vlaneseq
      %v8839 = vshrl.u32 %v8838, 7
      %v8840 = vsub.s32 %v8837, %v8839
      %v8841 = vrot.slane %v8708, %v8840
      %vm8842 = vcmask 130112
      %v8843 = vsel %vm8842, %v8841, %v8836
      %v8844 = vadd.s32 %v8832, 4294967280
      %v8845 = vlaneseq
      %v8846 = vshrl.u32 %v8845, 7
      %v8847 = vsub.s32 %v8844, %v8846
      %v8848 = vrot.slane %v8711, %v8847
      %vm8849 = vcmask 195712
      %v8850 = vsel %vm8849, %v8848, %v8843
      %v8851 = vadd.s32 %v8832, 4294967272
      %v8852 = vlaneseq
      %v8853 = vshrl.u32 %v8852, 7
      %v8854 = vsub.s32 %v8851, %v8853
      %v8855 = vrot.slane %v8714, %v8854
      %vm8856 = vcmask 261312
      %v8857 = vsel %vm8856, %v8855, %v8850
      %v8858 = vadd.s32 %v8832, 4294967264
      %v8859 = vlaneseq
      %v8860 = vshrl.u32 %v8859, 7
      %v8861 = vsub.s32 %v8858, %v8860
      %v8862 = vrot.slane %v8717, %v8861
      %vm8863 = vcmask 326912
      %v8864 = vsel %vm8863, %v8862, %v8857
      %v8865 = vadd.s32 %v8832, 4294967256
      %v8866 = vlaneseq
      %v8867 = vshrl.u32 %v8866, 7
      %v8868 = vsub.s32 %v8865, %v8867
      %v8869 = vrot.slane %v8720, %v8868
      %vm8870 = vcmask 392512
      %v8871 = vsel %vm8870, %v8869, %v8864
      %v8872 = vadd.s32 %v8832, 4294967248
      %v8873 = vlaneseq
      %v8874 = vshrl.u32 %v8873, 7
      %v8875 = vsub.s32 %v8872, %v8874
      %v8876 = vrot.slane %v8723, %v8875
      %vm8877 = vcmask 458112
      %v8878 = vsel %vm8877, %v8876, %v8871
      %v8879 = vadd.s32 %v8832, 4294967240
      %v8880 = vlaneseq
      %v8881 = vshrl.u32 %v8880, 7
      %v8882 = vsub.s32 %v8879, %v8881
      %v8883 = vrot.slane %v8726, %v8882
      %vm8884 = vcmask 523712
      %v8885 = vsel %vm8884, %v8883, %v8878
      %v8886 = vlaneseq
      %v8887 = vshrl.u32 %v8886, 7
      %v8888 = vsub.s32 %v8832, %v8887
      %v8889 = vrot.slane %v8729, %v8888
      %v8890 = vlaneseq
      %v8891 = vshrl.u32 %v8890, 7
      %v8892 = vsub.s32 %v8837, %v8891
      %v8893 = vrot.slane %v8732, %v8892
      %v8894 = vsel %vm8842, %v8893, %v8889
      %v8895 = vlaneseq
      %v8896 = vshrl.u32 %v8895, 7
      %v8897 = vsub.s32 %v8844, %v8896
      %v8898 = vrot.slane %v8735, %v8897
      %v8899 = vsel %vm8849, %v8898, %v8894
      %v8900 = vlaneseq
      %v8901 = vshrl.u32 %v8900, 7
      %v8902 = vsub.s32 %v8851, %v8901
      %v8903 = vrot.slane %v8738, %v8902
      %v8904 = vsel %vm8856, %v8903, %v8899
      %v8905 = vlaneseq
      %v8906 = vshrl.u32 %v8905, 7
      %v8907 = vsub.s32 %v8858, %v8906
      %v8908 = vrot.slane %v8741, %v8907
      %v8909 = vsel %vm8863, %v8908, %v8904
      %v8910 = vlaneseq
      %v8911 = vshrl.u32 %v8910, 7
      %v8912 = vsub.s32 %v8865, %v8911
      %v8913 = vrot.slane %v8744, %v8912
      %v8914 = vsel %vm8870, %v8913, %v8909
      %v8915 = vlaneseq
      %v8916 = vshrl.u32 %v8915, 7
      %v8917 = vsub.s32 %v8872, %v8916
      %v8918 = vrot.slane %v8747, %v8917
      %v8919 = vsel %vm8877, %v8918, %v8914
      %v8920 = vlaneseq
      %v8921 = vshrl.u32 %v8920, 7
      %v8922 = vsub.s32 %v8879, %v8921
      %v8923 = vrot.slane %v8750, %v8922
      %v8924 = vsel %vm8884, %v8923, %v8919
      %v8925 = vlaneseq
      %v8926 = vshrl.u32 %v8925, 7
      %v8927 = vsub.s32 %v8832, %v8926
      %v8928 = vrot.slane %v8753, %v8927
      %v8929 = vlaneseq
      %v8930 = vshrl.u32 %v8929, 7
      %v8931 = vsub.s32 %v8837, %v8930
      %v8932 = vrot.slane %v8756, %v8931
      %v8933 = vsel %vm8842, %v8932, %v8928
      %v8934 = vlaneseq
      %v8935 = vshrl.u32 %v8934, 7
      %v8936 = vsub.s32 %v8844, %v8935
      %v8937 = vrot.slane %v8759, %v8936
      %v8938 = vsel %vm8849, %v8937, %v8933
      %v8939 = vlaneseq
      %v8940 = vshrl.u32 %v8939, 7
      %v8941 = vsub.s32 %v8851, %v8940
      %v8942 = vrot.slane %v8762, %v8941
      %v8943 = vsel %vm8856, %v8942, %v8938
      %v8944 = vlaneseq
      %v8945 = vshrl.u32 %v8944, 7
      %v8946 = vsub.s32 %v8858, %v8945
      %v8947 = vrot.slane %v8765, %v8946
      %v8948 = vsel %vm8863, %v8947, %v8943
      %v8949 = vlaneseq
      %v8950 = vshrl.u32 %v8949, 7
      %v8951 = vsub.s32 %v8865, %v8950
      %v8952 = vrot.slane %v8768, %v8951
      %v8953 = vsel %vm8870, %v8952, %v8948
      %v8954 = vlaneseq
      %v8955 = vshrl.u32 %v8954, 7
      %v8956 = vsub.s32 %v8872, %v8955
      %v8957 = vrot.slane %v8771, %v8956
      %v8958 = vsel %vm8877, %v8957, %v8953
      %v8959 = vlaneseq
      %v8960 = vshrl.u32 %v8959, 7
      %v8961 = vsub.s32 %v8879, %v8960
      %v8962 = vrot.slane %v8774, %v8961
      %v8963 = vsel %vm8884, %v8962, %v8958
      %v8964 = vlaneseq
      %v8965 = vshrl.u32 %v8964, 7
      %v8966 = vsub.s32 %v8832, %v8965
      %v8967 = vrot.slane %v8777, %v8966
      %v8968 = vlaneseq
      %v8969 = vshrl.u32 %v8968, 7
      %v8970 = vsub.s32 %v8837, %v8969
      %v8971 = vrot.slane %v8780, %v8970
      %v8972 = vsel %vm8842, %v8971, %v8967
      %v8973 = vlaneseq
      %v8974 = vshrl.u32 %v8973, 7
      %v8975 = vsub.s32 %v8844, %v8974
      %v8976 = vrot.slane %v8783, %v8975
      %v8977 = vsel %vm8849, %v8976, %v8972
      %v8978 = vlaneseq
      %v8979 = vshrl.u32 %v8978, 7
      %v8980 = vsub.s32 %v8851, %v8979
      %v8981 = vrot.slane %v8786, %v8980
      %v8982 = vsel %vm8856, %v8981, %v8977
      %v8983 = vlaneseq
      %v8984 = vshrl.u32 %v8983, 7
      %v8985 = vsub.s32 %v8858, %v8984
      %v8986 = vrot.slane %v8789, %v8985
      %v8987 = vsel %vm8863, %v8986, %v8982
      %v8988 = vlaneseq
      %v8989 = vshrl.u32 %v8988, 7
      %v8990 = vsub.s32 %v8865, %v8989
      %v8991 = vrot.slane %v8792, %v8990
      %v8992 = vsel %vm8870, %v8991, %v8987
      %v8993 = vlaneseq
      %v8994 = vshrl.u32 %v8993, 7
      %v8995 = vsub.s32 %v8872, %v8994
      %v8996 = vrot.slane %v8795, %v8995
      %v8997 = vsel %vm8877, %v8996, %v8992
      %v8998 = vlaneseq
      %v8999 = vshrl.u32 %v8998, 7
      %v9000 = vsub.s32 %v8879, %v8999
      %v9001 = vrot.slane %v8798, %v9000
      %v9002 = vsel %vm8884, %v9001, %v8997
      %vm9003 = vcmask 1041409
      %v9004 = vsel %vm9003, %v8924, %v8885
      %vm9005 = vcmask 1042434
      %v9006 = vsel %vm9005, %v8963, %v9004
      %vm9007 = vcmask 1043459
      %v9008 = vsel %vm9007, %v9002, %v9006
      %vm9010 = vcmask 519168
      %v9011 = vsel %vm9010, %v9008, 0.0
      %9012 = vadd.xlane.f32.xlu0 %v9011
      %v9013 = vpop.xlane.xlu0 %9012
      %v9015 = vlaneseq
      %v9016 = vshrl.u32 %v9015, 7
      %v9017 = vsub.s32 %v8832, %v9016
      %v9018 = vrot.slane %v9013, %v9017
      %vm9020 = vcmask 24576
      %9021 = vst.msk [vmem:[%s490] sm:$0x1] %vm9020, %v9018
      %p9022 = scmp.lt.s32.totalorder %s26, 1
      %s9023 = scalar_select %p9022, %s26, 1
      %s9024 = scalar_lea.vmem %s15, %s9023
      // Predicated region
      $region81: #{a_call__.1} parent=79 // pred_check
        %p9025 = pneg %p364
      $region82: #{a_call__.1} parent=79 // pred_check_branch
        %9027 = sbr.rel (%p9025) target = $region84
      $region83: #{a_call__.1} parent=79 // pred_region
        _
      $region84: #{a_call__.1} parent=79 // pred_fallthru
        _
    $region80: #{a_call__.1} parent=5 // pred_fallthru
      _
    %p9028 = scmp.le.s32.totalorder 2, %s21
    // Predicated region
    $region85: #{a_call__.1} parent=5 // pred_check
      %p9029 = pneg %p9028
    $region86: #{a_call__.1} parent=5 // pred_check_branch
      %9031 = sbr.rel (%p9029) target = $region88
    $region87: #{a_call__.1} parent=5 // pred_region
      %s9032 = ssub.s32 %s21, 2
      // Predicated region
      $region89: #{a_call__.1} parent=87 // pred_check
        %p9033 = pneg %p370
      $region90: #{a_call__.1} parent=87 // pred_check_branch
        %9035 = sbr.rel (%p9033) target = $region92
      $region91: #{a_call__.1} parent=87 // pred_region
        %p9036 = scmp.lt.s32.totalorder %s27, 1
        %s9037 = scalar_select %p9036, %s27, 1
        %s9038 = scalar_lea.vmem %s15, %s9037
      $region92: #{a_call__.1} parent=87 // pred_fallthru
        _
    $region88: #{a_call__.1} parent=5 // pred_fallthru
      _
  $region6: #{a_call__.1} parent=0 // loop_footer
    %s25 = sadd.s32 1, %s21
  $region7: #{a_call__.1} parent=0 // loop_footer_branch
    %20 = sbr.rel target = $region3
  $region8: #{a_call__.1} parent=0 // loop_exit
    _

</llo_original>
